<compile_context>
chip_gen: v5e
topology: v5e:2x2
jax: 0.10.0
libtpu: 0.0.40
codegen_flags: <defaults>
</compile_context>

<pallas_src>
import functools
import math

import numpy as np
import jax
import jax.numpy as jnp
from jax.experimental import pallas as pl
from jax.experimental.pallas import tpu as pltpu

H1, H3, H4 = 28, 14, 7        # spatial sizes at scales 1/2, 3 and 4
_BN_EPS = 1e-5
_IN_CH_PAD = 8                # pad 3 input channels to 8 (zero columns in wb1)


# ----------------------------------------------------------------------------
# Host-side constant builders: PER-SAMPLE spatial operators
# ----------------------------------------------------------------------------
def _pool_matrix(h_in, h_out):
    """(h_out^2, h_in^2) average-pool operator (uniform windows)."""
    f = h_in // h_out
    m = np.zeros((h_out * h_out, h_in * h_in), np.float32)
    w = 1.0 / (f * f)
    for i in range(h_out):
        for j in range(h_out):
            r = i * h_out + j
            for di in range(f):
                for dj in range(f):
                    m[r, (i * f + di) * h_in + (j * f + dj)] = w
    return m


def _stride_select_matrix(h_in, stride):
    """(h_out^2, h_in^2) operator selecting x[::stride, ::stride]."""
    h_out = h_in // stride
    m = np.zeros((h_out * h_out, h_in * h_in), np.float32)
    for i in range(h_out):
        for j in range(h_out):
            m[i * h_out + j, i * stride * h_in + j * stride] = 1.0
    return m


# ----------------------------------------------------------------------------
# Parameter preparation (BN folding, bf16 casting, sibling-weight fusion)
# ----------------------------------------------------------------------------
def _fold_bn(w_mat, conv_b, bn):
    """Fold eval-mode BN into a (Cin, Cout) weight + (1, Cout) bias."""
    scale = bn["gamma"] / jnp.sqrt(bn["var"] + _BN_EPS)
    bias = (conv_b - bn["mean"]) * scale + bn["beta"]
    return (w_mat * scale[None, :]).astype(jnp.float32), bias[None, :].astype(jnp.float32)


def _prepare_constants(p, n_classes):
    bf16 = jnp.bfloat16
    c = {}

    def w1x1(w):  # (Cout, Cin, 1, 1) -> (Cin, Cout)
        return jnp.transpose(w[:, :, 0, 0], (1, 0)).astype(jnp.float32)

    def plain(wk, bk):
        return w1x1(p[wk]).astype(bf16), p[bk][None, :].astype(jnp.float32)

    def folded(wk, bk, bnk):
        w, b = _fold_bn(w1x1(p[wk]), p[bk], p[bnk])
        return w.astype(bf16), b

    # backbone stand-ins (TODO(synk): resnet34 not provided)
    wb1, c["bb1"] = plain("base1_w", "base1_b")
    c["wb1"] = jnp.pad(wb1, ((0, _IN_CH_PAD - wb1.shape[0]), (0, 0)))   # Cin 3 -> 8
    wb2, bb2 = plain("base2_w", "base2_b")
    c["wb3"], c["bb3"] = plain("base3_w", "base3_b")
    c["wb4"], c["bb4"] = plain("base4_w", "base4_b")

    # GMFANet 1x1 convs with folded BN
    wc2, bc2 = folded("conv2_w", "conv2_b", "bn2")
    c["wc13"], c["bc13"] = folded("conv1_3_w", "conv1_3_b", "bn1_3")
    c["wc3"], c["bc3"] = folded("conv3_w", "conv3_b", "bn3")
    c["wc14"], c["bc14"] = folded("conv1_4_w", "conv1_4_b", "bn1_4")
    c["wc4"], c["bc4"] = folded("conv4_w", "conv4_b", "bn4")

    # MultiScaleAttention coefficients (host floats, fixed at trace time: the
    # reference's python-level `if sigmoid(alpha1) < 0.12` is evaluated here).
    s1 = float(p["msa2_s1"])
    mask2 = 0.0 if s1 < 0.12 else s1
    c["mask2"] = mask2
    c["use_msa2"] = mask2 != 0.0
    c["s31"], c["s32"] = float(p["msa3_s1"]), float(p["msa3_s2"])
    c["s41"], c["s42"] = float(p["msa4_s1"]), float(p["msa4_s2"])

    # Fuse layer2 stand-in with conv2 (share the x1_in operand); when mask==0
    # the conv2 branch is dead (x2 == x2_in) and is skipped entirely.
    if c["use_msa2"]:
        c["wb2c2"] = jnp.concatenate([wb2, wc2], axis=1)      # (64, 256)
        c["bb2c2"] = jnp.concatenate([bb2, bc2], axis=1)      # (1, 256)
    else:
        c["wb2c2"], c["bb2c2"] = wb2, bb2                     # (64, 128)

    # FC head
    c["wfc"] = jnp.transpose(p["fc_w"], (1, 0)).astype(bf16)
    c["bfc"] = p["fc_b"][None, :].astype(jnp.float32)

    # Per-sample spatial operators (0 / 1 / 0.25 values, bf16-exact).
    c["pool_28_14"] = jnp.asarray(_pool_matrix(H1, H3), dtype=bf16)       # (196, 784)
    c["sel_28_14"] = jnp.asarray(_stride_select_matrix(H1, 2), dtype=bf16)
    sel_14_7 = _stride_select_matrix(H3, 2)
    pool_14_7 = _pool_matrix(H3, H4)
    c["selpool_14_7"] = jnp.asarray(np.concatenate([sel_14_7, pool_14_7], 0),
                                    dtype=bf16)                           # (98, 196)
    c["pool_14_7"] = jnp.asarray(pool_14_7, dtype=bf16)                   # (49, 196)
    return c


# ----------------------------------------------------------------------------
# The fused Pallas kernel (one grid step == one sample)
# ----------------------------------------------------------------------------
def _gmfanet_kernel(
    x_ref,
    wb1, bb1, wb2c2, bb2c2,
    wb3, bb3, wc13, bc13, wc3, bc3,
    wb4, bb4, wc14, bc14, wc4, bc4,
    wfc, bfc,
    pool_28_14, sel_28_14, selpool_14_7, pool_14_7,
    logits_ref, att_ref,
    *, mask2, s31, s32, s41, s42, use_msa2,
):
    f32, bf16 = jnp.float32, jnp.bfloat16

    def mm(a, w_ref):                     # activation @ weight (bf16 MXU, f32 acc)
        return jnp.dot(a.astype(bf16), w_ref[...], preferred_element_type=f32)

    def opmm(op_ref, a):                  # spatial operator @ activation
        return jnp.dot(op_ref[...], a.astype(bf16), preferred_element_type=f32)

    def conv(a, w_ref, b_ref):            # 1x1 conv (+ folded BN) + ReLU
        return jnp.maximum(mm(a, w_ref) + b_ref[...], 0.0)

    # ---- scales 1 / 2 (28x28) ----------------------------------------------
    x = x_ref[0]                                       # (784, 8) bf16
    x1_in = conv(x, wb1, bb1)                          # (784, 64)  get_features stand-in
    # avg_pool2 -> (28, 28) is the identity at this input size
    if use_msa2:
        y = conv(x1_in, wb2c2, bb2c2)                  # (784, 256) = [layer2 | conv2+bn2]
        x2_in, y2 = y[:, :128], y[:, 128:]
        x2 = mask2 * y2 + (1.0 - mask2) * x2_in        # MultiScaleAttention2 (ops=2)
    else:
        # sigmoid(alpha1) < 0.12  ->  mask == 0  ->  x2 == layer2 output
        x2 = conv(x1_in, wb2c2, bb2c2)                 # (784, 128)

    # ---- scale 3 (14x14) -----------------------------------------------------
    cat21 = jnp.concatenate([x2, x1_in], axis=1)       # (784, 192) shared pool operand
    p14 = opmm(pool_28_14, cat21)                      # (196, 192)
    x2_p14, x1_p14 = p14[:, :128], p14[:, 128:]
    x3_in = conv(opmm(sel_28_14, x2), wb3, bb3)        # layer3 stand-in (stride 2)
    x1_3 = conv(x1_p14, wc13, bc13)                    # conv1_3 + bn1_3
    x3_m = conv(x2_p14, wc3, bc3)                      # conv3 + bn3
    t3 = (1.0 - s31) * x1_3 + s31 * x3_m               # MSA3 (sample_index == 0)
    x3 = (1.0 - s32) * t3 + s32 * x3_in                # (196, 256)

    # ---- scale 4 (7x7) -------------------------------------------------------
    sp = opmm(selpool_14_7, x3)                        # (98, 256): [stride-2 sel ; pool]
    x4_sel_in, x4_p7 = sp[:H4 * H4, :], sp[H4 * H4:, :]
    x4_in = conv(x4_sel_in, wb4, bb4)                  # layer4 stand-in (stride 2)
    x1_4 = conv(opmm(pool_14_7, x1_p14), wc14, bc14)   # 28->7 pool composed as 14->7(28->14)
    # TODO(synk): x2_4 branch skipped; torch.randint sample index fixed to 0.
    x4_m = conv(x4_p7, wc4, bc4)                       # conv4 + bn4
    t4 = (1.0 - s41) * x1_4 + s41 * x4_m
    x4 = (1.0 - s42) * t4 + s42 * x4_in                # (49, 512)

    # ---- head ---------------------------------------------------------------
    # FAM elided: with tau = 0, att_norm == 1 everywhere (see header proof),
    # so x4 * att_norm == x4 and the logits are bit-identical.
    pooled = jnp.mean(x4, axis=0, keepdims=True)       # (1, 512) global avg pool
    logits = mm(pooled, wfc) + bfc[...]                # (1, n_cls)
    logits_ref[...] = logits.reshape(logits_ref.shape).astype(logits_ref.dtype)
    att_ref[...] = jnp.ones_like(att_ref)


# ----------------------------------------------------------------------------
# Forward wrapper
# ----------------------------------------------------------------------------
def gmfanet_forward(x_nchw, params, n_classes=8):
    batch, in_ch = x_nchw.shape[0], x_nchw.shape[1]
    c = _prepare_constants(params, n_classes)

    # NCHW -> (B, H*W, C) rows (channels on lanes); zero-pad channels 3 -> 8
    # (wb1 rows are zero-padded to match), cast to bf16.
    x_rows = jnp.transpose(x_nchw, (0, 2, 3, 1)).reshape(batch, H1 * H1, in_ch)
    x_rows = jnp.pad(x_rows, ((0, 0), (0, 0), (0, _IN_CH_PAD - in_ch)))
    x_rows = x_rows.astype(jnp.bfloat16)

    kernel = functools.partial(
        _gmfanet_kernel,
        mask2=c["mask2"], s31=c["s31"], s32=c["s32"],
        s41=c["s41"], s42=c["s42"], use_msa2=c["use_msa2"],
    )

    weight_args = (
        c["wb1"], c["bb1"], c["wb2c2"], c["bb2c2"],
        c["wb3"], c["bb3"], c["wc13"], c["bc13"], c["wc3"], c["bc3"],
        c["wb4"], c["bb4"], c["wc14"], c["bc14"], c["wc4"], c["bc4"],
        c["wfc"], c["bfc"],
        c["pool_28_14"], c["sel_28_14"], c["selpool_14_7"], c["pool_14_7"],
    )

    def const_spec(a):
        nd = len(a.shape)
        # Constant block index -> loaded into VMEM once, no per-step re-DMA.
        return pl.BlockSpec(a.shape, lambda b, _nd=nd: (0,) * _nd)

    in_specs = (
        [pl.BlockSpec((1, H1 * H1, _IN_CH_PAD), lambda b: (b, 0, 0))]
        + [const_spec(a) for a in weight_args]
    )

    logits, att = pl.pallas_call(
        kernel,
        grid=(batch,),
        out_shape=(
            jax.ShapeDtypeStruct((batch, 1, n_classes), jnp.float32),
            jax.ShapeDtypeStruct((batch, 1, H4 * H4), jnp.float32),
        ),
        in_specs=in_specs,
        out_specs=(
            pl.BlockSpec((1, 1, n_classes), lambda b: (b, 0, 0)),
            pl.BlockSpec((1, 1, H4 * H4), lambda b: (b, 0, 0)),
        ),
        compiler_params=pltpu.CompilerParams(
            dimension_semantics=("parallel",),          # v7x: one sample per TC
            vmem_limit_bytes=32 * 1024 * 1024),
    )(x_rows, *weight_args)

    return logits.reshape(batch, n_classes), att.reshape(batch, 1, H4, H4)


# ----------------------------------------------------------------------------
# Deterministic parameter init (mirrors the PyTorch module's parameter set)
# ----------------------------------------------------------------------------
def init_params(key, n_classes=8):
    p = {}

    def nxt():
        nonlocal key
        key, sub = jax.random.split(key)
        return sub

    def conv_w(cout, cin, kh=1, kw=1, std=0.05):
        return std * jax.random.normal(nxt(), (cout, cin, kh, kw), jnp.float32)

    def cbias(cc):
        return 0.01 * jax.random.normal(nxt(), (cc,), jnp.float32)

    def bn(cc):
        return dict(gamma=jnp.ones((cc,), jnp.float32),
                    beta=jnp.zeros((cc,), jnp.float32),
                    mean=jnp.zeros((cc,), jnp.float32),
                    var=jnp.ones((cc,), jnp.float32))

    # backbone stand-ins
    p["base1_w"], p["base1_b"] = conv_w(64, 3), cbias(64)
    p["base2_w"], p["base2_b"] = conv_w(128, 64), cbias(128)
    p["base3_w"], p["base3_b"] = conv_w(256, 128), cbias(256)
    p["base4_w"], p["base4_b"] = conv_w(512, 256), cbias(512)
    # GMFANet 1x1 convs + BNs
    p["conv2_w"], p["conv2_b"], p["bn2"] = conv_w(128, 64), cbias(128), bn(128)
    p["conv3_w"], p["conv3_b"], p["bn3"] = conv_w(256, 128), cbias(256), bn(256)
    p["conv1_3_w"], p["conv1_3_b"], p["bn1_3"] = conv_w(256, 64), cbias(256), bn(256)
    p["conv4_w"], p["conv4_b"], p["bn4"] = conv_w(512, 256), cbias(512), bn(512)
    p["conv1_4_w"], p["conv1_4_b"], p["bn1_4"] = conv_w(512, 64), cbias(512), bn(512)
    p["conv2_4_w"], p["conv2_4_b"], p["bn2_4"] = conv_w(512, 128), cbias(512), bn(512)
    # FAM parameters exist on the module but its output is provably all-ones
    # for tau = 0, so the fused kernel does not consume them.
    p["fam_conv0_w"], p["fam_conv0_b"], p["fam_bn0"] = (
        conv_w(n_classes, 512, 7, 7), cbias(n_classes), bn(n_classes))
    p["fam_conv1_w"], p["fam_conv1_b"], p["fam_bn1"] = (
        conv_w(512, n_classes, 7, 7), cbias(512), bn(512))
    # FC head
    p["fc_w"] = 0.05 * jax.random.normal(nxt(), (n_classes, 512), jnp.float32)
    p["fc_b"] = 0.01 * jax.random.normal(nxt(), (n_classes,), jnp.float32)
    # MultiScaleAttention alphas (xavier_normal on (1,1) -> std 1), sigmoids as
    # host floats so trace-time branching matches the reference python `if`.
    for name in ("msa2", "msa3", "msa4"):
        a1 = float(jax.random.normal(nxt(), ()))
        a2 = float(jax.random.normal(nxt(), ()))
        p[name + "_s1"] = 1.0 / (1.0 + math.exp(-a1))
        p[name + "_s2"] = 1.0 / (1.0 + math.exp(-a2))
    return p


if __name__ == "__main__":
    n_classes = 8
    key = jax.random.PRNGKey(0)
    key, xkey = jax.random.split(key)
    x = jax.random.normal(xkey, (2, 3, 28, 28), jnp.float32)   # NCHW input
    params = init_params(key, n_classes)

    fwd = jax.jit(functools.partial(gmfanet_forward, params=params,
                                    n_classes=n_classes))
    logits, att_norm = fwd(x)
    jax.block_until_ready((logits, att_norm))

    assert logits.shape == (2, n_classes)
    assert att_norm.shape == (2, 1, 7, 7)
    assert bool(jnp.all(jnp.isfinite(logits)))
    assert bool(jnp.all(att_norm == 1.0))   # tau=0 => att_norm is all ones
    print("KERNEL_OK")
</pallas_src>

<mosaic_0001>
module attributes {stable_mosaic.version = 11 : i64} {
  func.func @_gmfanet_kernel(%arg0: i32, %arg1: memref<1x784x8xbf16, #tpu.memory_space<vmem>>, %arg2: memref<8x64xbf16, #tpu.memory_space<vmem>>, %arg3: memref<1x64xf32, #tpu.memory_space<vmem>>, %arg4: memref<64x256xbf16, #tpu.memory_space<vmem>>, %arg5: memref<1x256xf32, #tpu.memory_space<vmem>>, %arg6: memref<128x256xbf16, #tpu.memory_space<vmem>>, %arg7: memref<1x256xf32, #tpu.memory_space<vmem>>, %arg8: memref<64x256xbf16, #tpu.memory_space<vmem>>, %arg9: memref<1x256xf32, #tpu.memory_space<vmem>>, %arg10: memref<128x256xbf16, #tpu.memory_space<vmem>>, %arg11: memref<1x256xf32, #tpu.memory_space<vmem>>, %arg12: memref<256x512xbf16, #tpu.memory_space<vmem>>, %arg13: memref<1x512xf32, #tpu.memory_space<vmem>>, %arg14: memref<64x512xbf16, #tpu.memory_space<vmem>>, %arg15: memref<1x512xf32, #tpu.memory_space<vmem>>, %arg16: memref<256x512xbf16, #tpu.memory_space<vmem>>, %arg17: memref<1x512xf32, #tpu.memory_space<vmem>>, %arg18: memref<512x8xbf16, #tpu.memory_space<vmem>>, %arg19: memref<1x8xf32, #tpu.memory_space<vmem>>, %arg20: memref<196x784xbf16, #tpu.memory_space<vmem>>, %arg21: memref<196x784xbf16, #tpu.memory_space<vmem>>, %arg22: memref<98x196xbf16, #tpu.memory_space<vmem>>, %arg23: memref<49x196xbf16, #tpu.memory_space<vmem>>, %arg24: memref<1x1x8xf32, #tpu.memory_space<vmem>>, %arg25: memref<1x1x49xf32, #tpu.memory_space<vmem>>) attributes {dimension_semantics = [#tpu.dimension_semantics<parallel>], iteration_bounds = array<i64: 2>, scalar_prefetch = 0 : i64, scratch_operands = 0 : i64, tpu.core_type = #tpu.core_type<tc>, window_params = [{transform_indices = @transform_0, window_bounds = array<i64: 1, 784, 8>}, {pipeline_mode = #tpu.pipeline_mode<synchronous>, transform_indices = @transform_1, window_bounds = array<i64: 8, 64>}, {pipeline_mode = #tpu.pipeline_mode<synchronous>, transform_indices = @transform_2, window_bounds = array<i64: 1, 64>}, {pipeline_mode = #tpu.pipeline_mode<synchronous>, transform_indices = @transform_3, window_bounds = array<i64: 64, 256>}, {pipeline_mode = #tpu.pipeline_mode<synchronous>, transform_indices = @transform_4, window_bounds = array<i64: 1, 256>}, {pipeline_mode = #tpu.pipeline_mode<synchronous>, transform_indices = @transform_5, window_bounds = array<i64: 128, 256>}, {pipeline_mode = #tpu.pipeline_mode<synchronous>, transform_indices = @transform_6, window_bounds = array<i64: 1, 256>}, {pipeline_mode = #tpu.pipeline_mode<synchronous>, transform_indices = @transform_7, window_bounds = array<i64: 64, 256>}, {pipeline_mode = #tpu.pipeline_mode<synchronous>, transform_indices = @transform_8, window_bounds = array<i64: 1, 256>}, {pipeline_mode = #tpu.pipeline_mode<synchronous>, transform_indices = @transform_9, window_bounds = array<i64: 128, 256>}, {pipeline_mode = #tpu.pipeline_mode<synchronous>, transform_indices = @transform_10, window_bounds = array<i64: 1, 256>}, {pipeline_mode = #tpu.pipeline_mode<synchronous>, transform_indices = @transform_11, window_bounds = array<i64: 256, 512>}, {pipeline_mode = #tpu.pipeline_mode<synchronous>, transform_indices = @transform_12, window_bounds = array<i64: 1, 512>}, {pipeline_mode = #tpu.pipeline_mode<synchronous>, transform_indices = @transform_13, window_bounds = array<i64: 64, 512>}, {pipeline_mode = #tpu.pipeline_mode<synchronous>, transform_indices = @transform_14, window_bounds = array<i64: 1, 512>}, {pipeline_mode = #tpu.pipeline_mode<synchronous>, transform_indices = @transform_15, window_bounds = array<i64: 256, 512>}, {pipeline_mode = #tpu.pipeline_mode<synchronous>, transform_indices = @transform_16, window_bounds = array<i64: 1, 512>}, {pipeline_mode = #tpu.pipeline_mode<synchronous>, transform_indices = @transform_17, window_bounds = array<i64: 512, 8>}, {pipeline_mode = #tpu.pipeline_mode<synchronous>, transform_indices = @transform_18, window_bounds = array<i64: 1, 8>}, {pipeline_mode = #tpu.pipeline_mode<synchronous>, transform_indices = @transform_19, window_bounds = array<i64: 196, 784>}, {pipeline_mode = #tpu.pipeline_mode<synchronous>, transform_indices = @transform_20, window_bounds = array<i64: 196, 784>}, {pipeline_mode = #tpu.pipeline_mode<synchronous>, transform_indices = @transform_21, window_bounds = array<i64: 98, 196>}, {pipeline_mode = #tpu.pipeline_mode<synchronous>, transform_indices = @transform_22, window_bounds = array<i64: 49, 196>}, {transform_indices = @transform_23, window_bounds = array<i64: 1, 1, 8>}, {transform_indices = @transform_24, window_bounds = array<i64: 1, 1, 49>}]} {
    %c0 = arith.constant 0 : index
    %c0_0 = arith.constant 0 : index
    %c0_1 = arith.constant 0 : index
    %0 = vector.load %arg1[%c0, %c0_0, %c0_1] : memref<1x784x8xbf16, #tpu.memory_space<vmem>>, vector<1x784x8xbf16>
    %1 = vector.shape_cast %0 : vector<1x784x8xbf16> to vector<784x8xbf16>
    %c0_2 = arith.constant 0 : index
    %c0_3 = arith.constant 0 : index
    %2 = vector.load %arg2[%c0_2, %c0_3] : memref<8x64xbf16, #tpu.memory_space<vmem>>, vector<8x64xbf16>
    %cst = arith.constant dense<0.000000e+00> : vector<784x64xf32>
    %3 = tpu.matmul %1, %2, %cst {dimension_numbers = #tpu.dot_dimension_numbers<[1], [0], [0], [1], [0, 0, 1, 1], [], []>} : vector<784x8xbf16>, vector<8x64xbf16>, vector<784x64xf32> -> vector<784x64xf32>
    %c0_4 = arith.constant 0 : index
    %c0_5 = arith.constant 0 : index
    %4 = vector.load %arg3[%c0_4, %c0_5] : memref<1x64xf32, #tpu.memory_space<vmem>>, vector<1x64xf32>
    %5 = vector.broadcast %4 : vector<1x64xf32> to vector<784x64xf32>
    %6 = arith.addf %3, %5 : vector<784x64xf32>
    %cst_6 = arith.constant 0.000000e+00 : f32
    %7 = vector.broadcast %cst_6 : f32 to vector<784x64xf32>
    %8 = arith.maximumf %6, %7 : vector<784x64xf32>
    %9 = arith.truncf %8 : vector<784x64xf32> to vector<784x64xbf16>
    %c0_7 = arith.constant 0 : index
    %c0_8 = arith.constant 0 : index
    %10 = vector.load %arg4[%c0_7, %c0_8] : memref<64x256xbf16, #tpu.memory_space<vmem>>, vector<64x256xbf16>
    %cst_9 = arith.constant dense<0.000000e+00> : vector<784x256xf32>
    %11 = tpu.matmul %9, %10, %cst_9 {dimension_numbers = #tpu.dot_dimension_numbers<[1], [0], [0], [1], [0, 0, 1, 1], [], []>} : vector<784x64xbf16>, vector<64x256xbf16>, vector<784x256xf32> -> vector<784x256xf32>
    %c0_10 = arith.constant 0 : index
    %c0_11 = arith.constant 0 : index
    %12 = vector.load %arg5[%c0_10, %c0_11] : memref<1x256xf32, #tpu.memory_space<vmem>>, vector<1x256xf32>
    %13 = vector.broadcast %12 : vector<1x256xf32> to vector<784x256xf32>
    %14 = arith.addf %11, %13 : vector<784x256xf32>
    %cst_12 = arith.constant 0.000000e+00 : f32
    %15 = vector.broadcast %cst_12 : f32 to vector<784x256xf32>
    %16 = arith.maximumf %14, %15 : vector<784x256xf32>
    %17 = vector.extract_strided_slice %16 {offsets = [0, 0], sizes = [784, 128], strides = [1, 1]} : vector<784x256xf32> to vector<784x128xf32>
    %18 = vector.extract_strided_slice %16 {offsets = [0, 128], sizes = [784, 128], strides = [1, 1]} : vector<784x256xf32> to vector<784x128xf32>
    %cst_13 = arith.constant 0.208515272 : f32
    %19 = vector.broadcast %cst_13 : f32 to vector<784x128xf32>
    %20 = arith.mulf %19, %18 : vector<784x128xf32>
    %cst_14 = arith.constant 0.791484713 : f32
    %21 = vector.broadcast %cst_14 : f32 to vector<784x128xf32>
    %22 = arith.mulf %21, %17 : vector<784x128xf32>
    %23 = arith.addf %20, %22 : vector<784x128xf32>
    %24 = tpu.concatenate %23, %8 in 1 : vector<784x128xf32>, vector<784x64xf32> -> vector<784x192xf32>
    %c0_15 = arith.constant 0 : index
    %c0_16 = arith.constant 0 : index
    %25 = vector.load %arg20[%c0_15, %c0_16] : memref<196x784xbf16, #tpu.memory_space<vmem>>, vector<196x784xbf16>
    %26 = arith.truncf %24 : vector<784x192xf32> to vector<784x192xbf16>
    %cst_17 = arith.constant dense<0.000000e+00> : vector<196x192xf32>
    %27 = tpu.matmul %25, %26, %cst_17 {dimension_numbers = #tpu.dot_dimension_numbers<[1], [0], [0], [1], [0, 0, 1, 1], [], []>} : vector<196x784xbf16>, vector<784x192xbf16>, vector<196x192xf32> -> vector<196x192xf32>
    %28 = vector.extract_strided_slice %27 {offsets = [0, 0], sizes = [196, 128], strides = [1, 1]} : vector<196x192xf32> to vector<196x128xf32>
    %29 = vector.extract_strided_slice %27 {offsets = [0, 128], sizes = [196, 64], strides = [1, 1]} : vector<196x192xf32> to vector<196x64xf32>
    %c0_18 = arith.constant 0 : index
    %c0_19 = arith.constant 0 : index
    %30 = vector.load %arg21[%c0_18, %c0_19] : memref<196x784xbf16, #tpu.memory_space<vmem>>, vector<196x784xbf16>
    %31 = arith.truncf %23 : vector<784x128xf32> to vector<784x128xbf16>
    %cst_20 = arith.constant dense<0.000000e+00> : vector<196x128xf32>
    %32 = tpu.matmul %30, %31, %cst_20 {dimension_numbers = #tpu.dot_dimension_numbers<[1], [0], [0], [1], [0, 0, 1, 1], [], []>} : vector<196x784xbf16>, vector<784x128xbf16>, vector<196x128xf32> -> vector<196x128xf32>
    %33 = arith.truncf %32 : vector<196x128xf32> to vector<196x128xbf16>
    %c0_21 = arith.constant 0 : index
    %c0_22 = arith.constant 0 : index
    %34 = vector.load %arg6[%c0_21, %c0_22] : memref<128x256xbf16, #tpu.memory_space<vmem>>, vector<128x256xbf16>
    %cst_23 = arith.constant dense<0.000000e+00> : vector<196x256xf32>
    %35 = tpu.matmul %33, %34, %cst_23 {dimension_numbers = #tpu.dot_dimension_numbers<[1], [0], [0], [1], [0, 0, 1, 1], [], []>} : vector<196x128xbf16>, vector<128x256xbf16>, vector<196x256xf32> -> vector<196x256xf32>
    %c0_24 = arith.constant 0 : index
    %c0_25 = arith.constant 0 : index
    %36 = vector.load %arg7[%c0_24, %c0_25] : memref<1x256xf32, #tpu.memory_space<vmem>>, vector<1x256xf32>
    %37 = vector.broadcast %36 : vector<1x256xf32> to vector<196x256xf32>
    %38 = arith.addf %35, %37 : vector<196x256xf32>
    %cst_26 = arith.constant 0.000000e+00 : f32
    %39 = vector.broadcast %cst_26 : f32 to vector<196x256xf32>
    %40 = arith.maximumf %38, %39 : vector<196x256xf32>
    %41 = arith.truncf %29 : vector<196x64xf32> to vector<196x64xbf16>
    %c0_27 = arith.constant 0 : index
    %c0_28 = arith.constant 0 : index
    %42 = vector.load %arg8[%c0_27, %c0_28] : memref<64x256xbf16, #tpu.memory_space<vmem>>, vector<64x256xbf16>
    %cst_29 = arith.constant dense<0.000000e+00> : vector<196x256xf32>
    %43 = tpu.matmul %41, %42, %cst_29 {dimension_numbers = #tpu.dot_dimension_numbers<[1], [0], [0], [1], [0, 0, 1, 1], [], []>} : vector<196x64xbf16>, vector<64x256xbf16>, vector<196x256xf32> -> vector<196x256xf32>
    %c0_30 = arith.constant 0 : index
    %c0_31 = arith.constant 0 : index
    %44 = vector.load %arg9[%c0_30, %c0_31] : memref<1x256xf32, #tpu.memory_space<vmem>>, vector<1x256xf32>
    %45 = vector.broadcast %44 : vector<1x256xf32> to vector<196x256xf32>
    %46 = arith.addf %43, %45 : vector<196x256xf32>
    %cst_32 = arith.constant 0.000000e+00 : f32
    %47 = vector.broadcast %cst_32 : f32 to vector<196x256xf32>
    %48 = arith.maximumf %46, %47 : vector<196x256xf32>
    %49 = arith.truncf %28 : vector<196x128xf32> to vector<196x128xbf16>
    %c0_33 = arith.constant 0 : index
    %c0_34 = arith.constant 0 : index
    %50 = vector.load %arg10[%c0_33, %c0_34] : memref<128x256xbf16, #tpu.memory_space<vmem>>, vector<128x256xbf16>
    %cst_35 = arith.constant dense<0.000000e+00> : vector<196x256xf32>
    %51 = tpu.matmul %49, %50, %cst_35 {dimension_numbers = #tpu.dot_dimension_numbers<[1], [0], [0], [1], [0, 0, 1, 1], [], []>} : vector<196x128xbf16>, vector<128x256xbf16>, vector<196x256xf32> -> vector<196x256xf32>
    %c0_36 = arith.constant 0 : index
    %c0_37 = arith.constant 0 : index
    %52 = vector.load %arg11[%c0_36, %c0_37] : memref<1x256xf32, #tpu.memory_space<vmem>>, vector<1x256xf32>
    %53 = vector.broadcast %52 : vector<1x256xf32> to vector<196x256xf32>
    %54 = arith.addf %51, %53 : vector<196x256xf32>
    %cst_38 = arith.constant 0.000000e+00 : f32
    %55 = vector.broadcast %cst_38 : f32 to vector<196x256xf32>
    %56 = arith.maximumf %54, %55 : vector<196x256xf32>
    %cst_39 = arith.constant 0.527718544 : f32
    %57 = vector.broadcast %cst_39 : f32 to vector<196x256xf32>
    %58 = arith.mulf %57, %48 : vector<196x256xf32>
    %cst_40 = arith.constant 0.472281456 : f32
    %59 = vector.broadcast %cst_40 : f32 to vector<196x256xf32>
    %60 = arith.mulf %59, %56 : vector<196x256xf32>
    %61 = arith.addf %58, %60 : vector<196x256xf32>
    %cst_41 = arith.constant 0.471422821 : f32
    %62 = vector.broadcast %cst_41 : f32 to vector<196x256xf32>
    %63 = arith.mulf %62, %61 : vector<196x256xf32>
    %cst_42 = arith.constant 0.528577149 : f32
    %64 = vector.broadcast %cst_42 : f32 to vector<196x256xf32>
    %65 = arith.mulf %64, %40 : vector<196x256xf32>
    %66 = arith.addf %63, %65 : vector<196x256xf32>
    %c0_43 = arith.constant 0 : index
    %c0_44 = arith.constant 0 : index
    %67 = vector.load %arg22[%c0_43, %c0_44] : memref<98x196xbf16, #tpu.memory_space<vmem>>, vector<98x196xbf16>
    %68 = arith.truncf %66 : vector<196x256xf32> to vector<196x256xbf16>
    %cst_45 = arith.constant dense<0.000000e+00> : vector<98x256xf32>
    %69 = tpu.matmul %67, %68, %cst_45 {dimension_numbers = #tpu.dot_dimension_numbers<[1], [0], [0], [1], [0, 0, 1, 1], [], []>} : vector<98x196xbf16>, vector<196x256xbf16>, vector<98x256xf32> -> vector<98x256xf32>
    %70 = vector.extract_strided_slice %69 {offsets = [0, 0], sizes = [49, 256], strides = [1, 1]} : vector<98x256xf32> to vector<49x256xf32>
    %71 = vector.extract_strided_slice %69 {offsets = [49, 0], sizes = [49, 256], strides = [1, 1]} : vector<98x256xf32> to vector<49x256xf32>
    %72 = arith.truncf %70 : vector<49x256xf32> to vector<49x256xbf16>
    %c0_46 = arith.constant 0 : index
    %c0_47 = arith.constant 0 : index
    %73 = vector.load %arg12[%c0_46, %c0_47] : memref<256x512xbf16, #tpu.memory_space<vmem>>, vector<256x512xbf16>
    %cst_48 = arith.constant dense<0.000000e+00> : vector<49x512xf32>
    %74 = tpu.matmul %72, %73, %cst_48 {dimension_numbers = #tpu.dot_dimension_numbers<[1], [0], [0], [1], [0, 0, 1, 1], [], []>} : vector<49x256xbf16>, vector<256x512xbf16>, vector<49x512xf32> -> vector<49x512xf32>
    %c0_49 = arith.constant 0 : index
    %c0_50 = arith.constant 0 : index
    %75 = vector.load %arg13[%c0_49, %c0_50] : memref<1x512xf32, #tpu.memory_space<vmem>>, vector<1x512xf32>
    %76 = vector.broadcast %75 : vector<1x512xf32> to vector<49x512xf32>
    %77 = arith.addf %74, %76 : vector<49x512xf32>
    %cst_51 = arith.constant 0.000000e+00 : f32
    %78 = vector.broadcast %cst_51 : f32 to vector<49x512xf32>
    %79 = arith.maximumf %77, %78 : vector<49x512xf32>
    %c0_52 = arith.constant 0 : index
    %c0_53 = arith.constant 0 : index
    %80 = vector.load %arg23[%c0_52, %c0_53] : memref<49x196xbf16, #tpu.memory_space<vmem>>, vector<49x196xbf16>
    %81 = arith.truncf %29 : vector<196x64xf32> to vector<196x64xbf16>
    %cst_54 = arith.constant dense<0.000000e+00> : vector<49x64xf32>
    %82 = tpu.matmul %80, %81, %cst_54 {dimension_numbers = #tpu.dot_dimension_numbers<[1], [0], [0], [1], [0, 0, 1, 1], [], []>} : vector<49x196xbf16>, vector<196x64xbf16>, vector<49x64xf32> -> vector<49x64xf32>
    %83 = arith.truncf %82 : vector<49x64xf32> to vector<49x64xbf16>
    %c0_55 = arith.constant 0 : index
    %c0_56 = arith.constant 0 : index
    %84 = vector.load %arg14[%c0_55, %c0_56] : memref<64x512xbf16, #tpu.memory_space<vmem>>, vector<64x512xbf16>
    %cst_57 = arith.constant dense<0.000000e+00> : vector<49x512xf32>
    %85 = tpu.matmul %83, %84, %cst_57 {dimension_numbers = #tpu.dot_dimension_numbers<[1], [0], [0], [1], [0, 0, 1, 1], [], []>} : vector<49x64xbf16>, vector<64x512xbf16>, vector<49x512xf32> -> vector<49x512xf32>
    %c0_58 = arith.constant 0 : index
    %c0_59 = arith.constant 0 : index
    %86 = vector.load %arg15[%c0_58, %c0_59] : memref<1x512xf32, #tpu.memory_space<vmem>>, vector<1x512xf32>
    %87 = vector.broadcast %86 : vector<1x512xf32> to vector<49x512xf32>
    %88 = arith.addf %85, %87 : vector<49x512xf32>
    %cst_60 = arith.constant 0.000000e+00 : f32
    %89 = vector.broadcast %cst_60 : f32 to vector<49x512xf32>
    %90 = arith.maximumf %88, %89 : vector<49x512xf32>
    %91 = arith.truncf %71 : vector<49x256xf32> to vector<49x256xbf16>
    %c0_61 = arith.constant 0 : index
    %c0_62 = arith.constant 0 : index
    %92 = vector.load %arg16[%c0_61, %c0_62] : memref<256x512xbf16, #tpu.memory_space<vmem>>, vector<256x512xbf16>
    %cst_63 = arith.constant dense<0.000000e+00> : vector<49x512xf32>
    %93 = tpu.matmul %91, %92, %cst_63 {dimension_numbers = #tpu.dot_dimension_numbers<[1], [0], [0], [1], [0, 0, 1, 1], [], []>} : vector<49x256xbf16>, vector<256x512xbf16>, vector<49x512xf32> -> vector<49x512xf32>
    %c0_64 = arith.constant 0 : index
    %c0_65 = arith.constant 0 : index
    %94 = vector.load %arg17[%c0_64, %c0_65] : memref<1x512xf32, #tpu.memory_space<vmem>>, vector<1x512xf32>
    %95 = vector.broadcast %94 : vector<1x512xf32> to vector<49x512xf32>
    %96 = arith.addf %93, %95 : vector<49x512xf32>
    %cst_66 = arith.constant 0.000000e+00 : f32
    %97 = vector.broadcast %cst_66 : f32 to vector<49x512xf32>
    %98 = arith.maximumf %96, %97 : vector<49x512xf32>
    %cst_67 = arith.constant 0.435129315 : f32
    %99 = vector.broadcast %cst_67 : f32 to vector<49x512xf32>
    %100 = arith.mulf %99, %90 : vector<49x512xf32>
    %cst_68 = arith.constant 0.564870656 : f32
    %101 = vector.broadcast %cst_68 : f32 to vector<49x512xf32>
    %102 = arith.mulf %101, %98 : vector<49x512xf32>
    %103 = arith.addf %100, %102 : vector<49x512xf32>
    %cst_69 = arith.constant 0.926090776 : f32
    %104 = vector.broadcast %cst_69 : f32 to vector<49x512xf32>
    %105 = arith.mulf %104, %103 : vector<49x512xf32>
    %cst_70 = arith.constant 0.0739092454 : f32
    %106 = vector.broadcast %cst_70 : f32 to vector<49x512xf32>
    %107 = arith.mulf %106, %79 : vector<49x512xf32>
    %108 = arith.addf %105, %107 : vector<49x512xf32>
    %cst_71 = arith.constant dense<0.000000e+00> : vector<512xf32>
    %109 = vector.multi_reduction <add>, %108, %cst_71 [0] : vector<49x512xf32> to vector<512xf32>
    %110 = vector.shape_cast %109 : vector<512xf32> to vector<1x512xf32>
    %cst_72 = arith.constant 4.900000e+01 : f32
    %111 = vector.broadcast %cst_72 : f32 to vector<1x512xf32>
    %112 = arith.divf %110, %111 : vector<1x512xf32>
    %113 = arith.truncf %112 : vector<1x512xf32> to vector<1x512xbf16>
    %c0_73 = arith.constant 0 : index
    %c0_74 = arith.constant 0 : index
    %114 = vector.load %arg18[%c0_73, %c0_74] : memref<512x8xbf16, #tpu.memory_space<vmem>>, vector<512x8xbf16>
    %cst_75 = arith.constant dense<0.000000e+00> : vector<1x8xf32>
    %115 = tpu.matmul %113, %114, %cst_75 {dimension_numbers = #tpu.dot_dimension_numbers<[1], [0], [0], [1], [0, 0, 1, 1], [], []>} : vector<1x512xbf16>, vector<512x8xbf16>, vector<1x8xf32> -> vector<1x8xf32>
    %c0_76 = arith.constant 0 : index
    %c0_77 = arith.constant 0 : index
    %116 = vector.load %arg19[%c0_76, %c0_77] : memref<1x8xf32, #tpu.memory_space<vmem>>, vector<1x8xf32>
    %117 = arith.addf %115, %116 : vector<1x8xf32>
    %118 = vector.shape_cast %117 : vector<1x8xf32> to vector<1x1x8xf32>
    %c0_78 = arith.constant 0 : index
    %c0_79 = arith.constant 0 : index
    %c0_80 = arith.constant 0 : index
    %119 = vector.load %arg24[%c0_78, %c0_79, %c0_80] : memref<1x1x8xf32, #tpu.memory_space<vmem>>, vector<1x1x8xf32>
    tpu.vector_store %arg24[%c0_78, %c0_79, %c0_80], %118 {strides = array<i32>} : memref<1x1x8xf32, #tpu.memory_space<vmem>>, vector<1x1x8xf32>,
    %cst_81 = arith.constant 1.000000e+00 : f32
    %120 = vector.broadcast %cst_81 : f32 to vector<1x1x49xf32>
    %c0_82 = arith.constant 0 : index
    %c0_83 = arith.constant 0 : index
    %c0_84 = arith.constant 0 : index
    %121 = vector.load %arg25[%c0_82, %c0_83, %c0_84] : memref<1x1x49xf32, #tpu.memory_space<vmem>>, vector<1x1x49xf32>
    tpu.vector_store %arg25[%c0_82, %c0_83, %c0_84], %120 {strides = array<i32>} : memref<1x1x49xf32, #tpu.memory_space<vmem>>, vector<1x1x49xf32>,
    return
  }
  func.func @transform_0(%arg0: i32) -> (i32, i32, i32) {
    %c0_i32 = arith.constant 0 : i32
    %c0_i32_0 = arith.constant 0 : i32
    %c0_i32_1 = arith.constant 0 : i32
    return %arg0, %c0_i32, %c0_i32_0 : i32, i32, i32
  }
  func.func @transform_1(%arg0: i32) -> (i32, i32) {
    %c0_i32 = arith.constant 0 : i32
    %c0_i32_0 = arith.constant 0 : i32
    %c0_i32_1 = arith.constant 0 : i32
    return %c0_i32, %c0_i32_0 : i32, i32
  }
  func.func @transform_2(%arg0: i32) -> (i32, i32) {
    %c0_i32 = arith.constant 0 : i32
    %c0_i32_0 = arith.constant 0 : i32
    %c0_i32_1 = arith.constant 0 : i32
    return %c0_i32, %c0_i32_0 : i32, i32
  }
  func.func @transform_3(%arg0: i32) -> (i32, i32) {
    %c0_i32 = arith.constant 0 : i32
    %c0_i32_0 = arith.constant 0 : i32
    %c0_i32_1 = arith.constant 0 : i32
    return %c0_i32, %c0_i32_0 : i32, i32
  }
  func.func @transform_4(%arg0: i32) -> (i32, i32) {
    %c0_i32 = arith.constant 0 : i32
    %c0_i32_0 = arith.constant 0 : i32
    %c0_i32_1 = arith.constant 0 : i32
    return %c0_i32, %c0_i32_0 : i32, i32
  }
  func.func @transform_5(%arg0: i32) -> (i32, i32) {
    %c0_i32 = arith.constant 0 : i32
    %c0_i32_0 = arith.constant 0 : i32
    %c0_i32_1 = arith.constant 0 : i32
    return %c0_i32, %c0_i32_0 : i32, i32
  }
  func.func @transform_6(%arg0: i32) -> (i32, i32) {
    %c0_i32 = arith.constant 0 : i32
    %c0_i32_0 = arith.constant 0 : i32
    %c0_i32_1 = arith.constant 0 : i32
    return %c0_i32, %c0_i32_0 : i32, i32
  }
  func.func @transform_7(%arg0: i32) -> (i32, i32) {
    %c0_i32 = arith.constant 0 : i32
    %c0_i32_0 = arith.constant 0 : i32
    %c0_i32_1 = arith.constant 0 : i32
    return %c0_i32, %c0_i32_0 : i32, i32
  }
  func.func @transform_8(%arg0: i32) -> (i32, i32) {
    %c0_i32 = arith.constant 0 : i32
    %c0_i32_0 = arith.constant 0 : i32
    %c0_i32_1 = arith.constant 0 : i32
    return %c0_i32, %c0_i32_0 : i32, i32
  }
  func.func @transform_9(%arg0: i32) -> (i32, i32) {
    %c0_i32 = arith.constant 0 : i32
    %c0_i32_0 = arith.constant 0 : i32
    %c0_i32_1 = arith.constant 0 : i32
    return %c0_i32, %c0_i32_0 : i32, i32
  }
  func.func @transform_10(%arg0: i32) -> (i32, i32) {
    %c0_i32 = arith.constant 0 : i32
    %c0_i32_0 = arith.constant 0 : i32
    %c0_i32_1 = arith.constant 0 : i32
    return %c0_i32, %c0_i32_0 : i32, i32
  }
  func.func @transform_11(%arg0: i32) -> (i32, i32) {
    %c0_i32 = arith.constant 0 : i32
    %c0_i32_0 = arith.constant 0 : i32
    %c0_i32_1 = arith.constant 0 : i32
    return %c0_i32, %c0_i32_0 : i32, i32
  }
  func.func @transform_12(%arg0: i32) -> (i32, i32) {
    %c0_i32 = arith.constant 0 : i32
    %c0_i32_0 = arith.constant 0 : i32
    %c0_i32_1 = arith.constant 0 : i32
    return %c0_i32, %c0_i32_0 : i32, i32
  }
  func.func @transform_13(%arg0: i32) -> (i32, i32) {
    %c0_i32 = arith.constant 0 : i32
    %c0_i32_0 = arith.constant 0 : i32
    %c0_i32_1 = arith.constant 0 : i32
    return %c0_i32, %c0_i32_0 : i32, i32
  }
  func.func @transform_14(%arg0: i32) -> (i32, i32) {
    %c0_i32 = arith.constant 0 : i32
    %c0_i32_0 = arith.constant 0 : i32
    %c0_i32_1 = arith.constant 0 : i32
    return %c0_i32, %c0_i32_0 : i32, i32
  }
  func.func @transform_15(%arg0: i32) -> (i32, i32) {
    %c0_i32 = arith.constant 0 : i32
    %c0_i32_0 = arith.constant 0 : i32
    %c0_i32_1 = arith.constant 0 : i32
    return %c0_i32, %c0_i32_0 : i32, i32
  }
  func.func @transform_16(%arg0: i32) -> (i32, i32) {
    %c0_i32 = arith.constant 0 : i32
    %c0_i32_0 = arith.constant 0 : i32
    %c0_i32_1 = arith.constant 0 : i32
    return %c0_i32, %c0_i32_0 : i32, i32
  }
  func.func @transform_17(%arg0: i32) -> (i32, i32) {
    %c0_i32 = arith.constant 0 : i32
    %c0_i32_0 = arith.constant 0 : i32
    %c0_i32_1 = arith.constant 0 : i32
    return %c0_i32, %c0_i32_0 : i32, i32
  }
  func.func @transform_18(%arg0: i32) -> (i32, i32) {
    %c0_i32 = arith.constant 0 : i32
    %c0_i32_0 = arith.constant 0 : i32
    %c0_i32_1 = arith.constant 0 : i32
    return %c0_i32, %c0_i32_0 : i32, i32
  }
  func.func @transform_19(%arg0: i32) -> (i32, i32) {
    %c0_i32 = arith.constant 0 : i32
    %c0_i32_0 = arith.constant 0 : i32
    %c0_i32_1 = arith.constant 0 : i32
    return %c0_i32, %c0_i32_0 : i32, i32
  }
  func.func @transform_20(%arg0: i32) -> (i32, i32) {
    %c0_i32 = arith.constant 0 : i32
    %c0_i32_0 = arith.constant 0 : i32
    %c0_i32_1 = arith.constant 0 : i32
    return %c0_i32, %c0_i32_0 : i32, i32
  }
  func.func @transform_21(%arg0: i32) -> (i32, i32) {
    %c0_i32 = arith.constant 0 : i32
    %c0_i32_0 = arith.constant 0 : i32
    %c0_i32_1 = arith.constant 0 : i32
    return %c0_i32, %c0_i32_0 : i32, i32
  }
  func.func @transform_22(%arg0: i32) -> (i32, i32) {
    %c0_i32 = arith.constant 0 : i32
    %c0_i32_0 = arith.constant 0 : i32
    %c0_i32_1 = arith.constant 0 : i32
    return %c0_i32, %c0_i32_0 : i32, i32
  }
  func.func @transform_23(%arg0: i32) -> (i32, i32, i32) {
    %c0_i32 = arith.constant 0 : i32
    %c0_i32_0 = arith.constant 0 : i32
    %c0_i32_1 = arith.constant 0 : i32
    return %arg0, %c0_i32, %c0_i32_0 : i32, i32, i32
  }
  func.func @transform_24(%arg0: i32) -> (i32, i32, i32) {
    %c0_i32 = arith.constant 0 : i32
    %c0_i32_0 = arith.constant 0 : i32
    %c0_i32_1 = arith.constant 0 : i32
    return %arg0, %c0_i32, %c0_i32_0 : i32, i32, i32
  }
}

</mosaic_0001>

<llo_original>
// kernel: gmfanet_forward.1
$region0: #{gmfanet_forward.1}
  #allocation0 [shape = 'u32[]', space=smem, size = 0x4, offset = 0x4, fixed_abs, tag = 'smem constant byte address 0x4 - core index']
  #allocation1 [shape = 'u32[72,128]{1,0:T(1,128)}', space=vmem, size = 0x9000, scoped, tag = 'internal scratch']
  %s0 = inlined_call_operand.vmem [shape: bf16[2,784,8], index: 0, kind: input, shape index: {}]
  %s1 = inlined_call_operand.vmem [shape: bf16[8,64], index: 1, kind: input, shape index: {}]
  %s2 = inlined_call_operand.hbm [shape: f32[1,64], index: 2, kind: input, shape index: {}]
  %s3 = inlined_call_operand.hbm [shape: bf16[64,256], index: 3, kind: input, shape index: {}]
  %s4 = inlined_call_operand.vmem [shape: f32[1,256], index: 4, kind: input, shape index: {}]
  %s5 = inlined_call_operand.hbm [shape: bf16[128,256], index: 5, kind: input, shape index: {}]
  %s6 = inlined_call_operand.hbm [shape: f32[1,256], index: 6, kind: input, shape index: {}]
  %s7 = inlined_call_operand.hbm [shape: bf16[64,256], index: 7, kind: input, shape index: {}]
  %s8 = inlined_call_operand.hbm [shape: f32[1,256], index: 8, kind: input, shape index: {}]
  %s9 = inlined_call_operand.hbm [shape: bf16[128,256], index: 9, kind: input, shape index: {}]
  %s10 = inlined_call_operand.hbm [shape: f32[1,256], index: 10, kind: input, shape index: {}]
  %s11 = inlined_call_operand.vmem [shape: bf16[256,512], index: 11, kind: input, shape index: {}]
  %s12 = inlined_call_operand.hbm [shape: f32[1,512], index: 12, kind: input, shape index: {}]
  %s13 = inlined_call_operand.vmem [shape: bf16[64,512], index: 13, kind: input, shape index: {}]
  %s14 = inlined_call_operand.hbm [shape: f32[1,512], index: 14, kind: input, shape index: {}]
  %s15 = inlined_call_operand.vmem [shape: bf16[256,512], index: 15, kind: input, shape index: {}]
  %s16 = inlined_call_operand.vmem [shape: f32[1,512], index: 16, kind: input, shape index: {}]
  %s17 = inlined_call_operand.vmem [shape: bf16[512,8], index: 17, kind: input, shape index: {}]
  %s18 = inlined_call_operand.vmem [shape: f32[1,8], index: 18, kind: input, shape index: {}]
  %s19 = inlined_call_operand.vmem [shape: bf16[196,784], index: 19, kind: input, shape index: {}]
  %s20 = inlined_call_operand.vmem [shape: bf16[196,784], index: 20, kind: input, shape index: {}]
  %s21 = inlined_call_operand.vmem [shape: bf16[98,196], index: 21, kind: input, shape index: {}]
  %s22 = inlined_call_operand.hbm [shape: bf16[49,196], index: 22, kind: input, shape index: {}]
  %s23 = inlined_call_operand.hbm [shape: f32[2,1,8], index: 23, kind: output, shape index: {0}]
  %s24 = inlined_call_operand.vmem [shape: f32[2,1,49], index: 24, kind: output, shape index: {1}]
  %25 = xla_tuple %s23, %s24
  %s26 = sld [smem:[#allocation0]]
  $region177: #{gmfanet_forward.1} parent=0
    _
  %s28 = ssub.s32 1, %s26
  %s29 = scalar_select 0, %s28, %s26
  $region1: #{gmfanet_forward.1} parent=0
    #allocation2 [shape = 'u8[512]{0}', space=vmem, size = 0x400, scoped, tag = 'input window, operand 2, single buffered']
    #allocation3 [shape = 's32[2]{0}', space=sflag, size = 0x8, scoped, tag = 'scoped memory for gmfanet_forward.1']
    #allocation4 [shape = 's32[2]{0}', space=sflag, size = 0x8, scoped, tag = 'scoped memory for gmfanet_forward.1']
    #allocation5 [shape = 'u8[32768]{0}', space=vmem, size = 0x8000, scoped, tag = 'input window, operand 3, single buffered']
    #allocation6 [shape = 's32[1]{0}', space=sflag, size = 0x4, scoped, tag = 'scoped memory for gmfanet_forward.1']
    #allocation7 [shape = 'u8[65536]{0}', space=vmem, size = 0x10000, scoped, tag = 'input window, operand 5, single buffered']
    #allocation8 [shape = 'u8[1024]{0}', space=vmem, size = 0x400, scoped, tag = 'input window, operand 6, single buffered']
    #allocation9 [shape = 's32[1]{0}', space=sflag, size = 0x4, scoped, tag = 'scoped memory for gmfanet_forward.1']
    #allocation10 [shape = 'u8[32768]{0}', space=vmem, size = 0x8000, scoped, tag = 'input window, operand 7, single buffered']
    #allocation11 [shape = 'u8[1024]{0}', space=vmem, size = 0x400, scoped, tag = 'input window, operand 8, single buffered']
    #allocation12 [shape = 's32[1]{0}', space=sflag, size = 0x4, scoped, tag = 'scoped memory for gmfanet_forward.1']
    #allocation13 [shape = 'u8[65536]{0}', space=vmem, size = 0x10000, scoped, tag = 'input window, operand 9, single buffered']
    #allocation14 [shape = 'u8[1024]{0}', space=vmem, size = 0x400, scoped, tag = 'input window, operand 10, single buffered']
    #allocation15 [shape = 's32[1]{0}', space=sflag, size = 0x4, scoped, tag = 'scoped memory for gmfanet_forward.1']
    #allocation16 [shape = 'u8[2048]{0}', space=vmem, size = 0x800, scoped, tag = 'input window, operand 12, single buffered']
    #allocation17 [shape = 'u8[2048]{0}', space=vmem, size = 0x800, scoped, tag = 'input window, operand 14, single buffered']
    #allocation18 [shape = 's32[1]{0}', space=sflag, size = 0x4, scoped, tag = 'scoped memory for gmfanet_forward.1']
    #allocation19 [shape = 'u8[28672]{0}', space=vmem, size = 0x7000, scoped, tag = 'input window, operand 22, single buffered']
    #allocation20 [shape = 'u8[1024]{0}', space=vmem, size = 0x400, scoped, tag = 'output window, operand 0']
    %30 = vsyncpa [#allocation3], 0
    %31 = vsyncpa [#allocation6], 0
    %32 = vsyncpa [#allocation9], 0
    %33 = vsyncpa [#allocation12], 0
    %34 = vsyncpa [#allocation15], 0
    %35 = vsyncpa [#allocation18], 0
    %36 = vsyncpa [#allocation4], 0
    %s37 = scalar_lea.sflag [#allocation4], 1
    %38 = vsyncpa %s37, 0
    loop: start=0, step=1, limit=4
    $region2: #{gmfanet_forward.1} parent=1 // loop_pre_header
      _
    $region3: #{gmfanet_forward.1} parent=1 // loop_header
      %s40 = sphi 0, %s44
      %p41 = scmp.ge.s32.totalorder %s40, 4
      %s50 = sphi 0, %s52
      %s53 = sphi 0, %s50
      %s54 = sphi 0, %s53
      %s70 = sphi 0, %s54
      %s74 = sphi 0, %s74
      %s76 = sphi 0, %s74
      %s77 = sphi 0, %s76
      %s91 = sphi 0, %s77
      %s95 = sphi 0, %s95
      %s97 = sphi 0, %s95
      %s98 = sphi 0, %s97
      %s112 = sphi 0, %s98
      %s116 = sphi 0, %s116
      %s118 = sphi 0, %s116
      %s119 = sphi 0, %s118
      %s133 = sphi 0, %s119
      %s137 = sphi 0, %s137
      %s139 = sphi 0, %s137
      %s140 = sphi 0, %s139
      %s154 = sphi 0, %s140
      %s158 = sphi 0, %s158
      %s160 = sphi 0, %s158
      %s161 = sphi 0, %s160
      %s175 = sphi 0, %s161
      %s179 = sphi 0, %s179
      %s181 = sphi 0, %s179
      %s182 = sphi 0, %s181
      %s196 = sphi 0, %s182
      %s200 = sphi 0, %s200
      %s202 = sphi 0, %s200
      %s203 = sphi 0, %s202
      %s217 = sphi 0, %s203
      %s221 = sphi 0, %s221
      %s223 = sphi 0, %s221
      %s224 = sphi 0, %s223
      %s238 = sphi 0, %s224
      %s242 = sphi 0, %s242
      %s244 = sphi 0, %s242
      %s245 = sphi 0, %s244
      %s259 = sphi 0, %s245
      %s263 = sphi 0, %s263
      %s265 = sphi 0, %s263
      %s266 = sphi 0, %s265
      %s280 = sphi 0, %s266
      %s284 = sphi 0, %s284
      %s286 = sphi 0, %s284
      %s287 = sphi 0, %s286
      %s301 = sphi 0, %s287
      %s305 = sphi 0, %s305
      %s307 = sphi 0, %s305
      %s308 = sphi 0, %s307
      %s322 = sphi 0, %s308
      %s326 = sphi 0, %s326
      %s328 = sphi 0, %s326
      %s329 = sphi 0, %s328
      %s343 = sphi 0, %s329
      %s347 = sphi 0, %s347
      %s349 = sphi 0, %s347
      %s350 = sphi 0, %s349
      %s364 = sphi 0, %s350
      %s368 = sphi 0, %s368
      %s370 = sphi 0, %s368
      %s371 = sphi 0, %s370
      %s385 = sphi 0, %s371
      %s389 = sphi 0, %s389
      %s391 = sphi 0, %s389
      %s392 = sphi 0, %s391
      %s406 = sphi 0, %s392
      %s410 = sphi 0, %s410
      %s412 = sphi 0, %s410
      %s413 = sphi 0, %s412
      %s427 = sphi 0, %s413
      %s431 = sphi 0, %s431
      %s433 = sphi 0, %s431
      %s434 = sphi 0, %s433
      %s448 = sphi 0, %s434
      %s452 = sphi 0, %s452
      %s454 = sphi 0, %s452
      %s455 = sphi 0, %s454
      %s469 = sphi 0, %s455
      %s473 = sphi 0, %s473
      %s475 = sphi 0, %s473
      %s476 = sphi 0, %s475
      %s490 = sphi 0, %s476
      %s494 = sphi 0, %s494
      %s496 = sphi 0, %s494
      %s497 = sphi 0, %s496
      %s511 = sphi 0, %s497
      %s515 = sphi 0, %s515
      %s517 = sphi 0, %s515
      %s518 = sphi 0, %s517
      %s532 = sphi 0, %s518
      %s538 = sphi 0, %s540
      %s541 = sphi 0, %s538
      %s542 = sphi 0, %s541
      %s558 = sphi 0, %s542
      %s564 = sphi 0, %s566
      %s567 = sphi 0, %s564
      %s568 = sphi 0, %s567
      %s584 = sphi 0, %s568
    $region4: #{gmfanet_forward.1} parent=1 // loop_header_branch
      %43 = sbr.rel (%p41) target = $region8
    $region5: #{gmfanet_forward.1} parent=1 // loop_body
      %s45 = ssub.s32 %s40, 1
      %s46 = ssub.s32 %s40, 2
      %s47 = sadd.s32 %s40, 1
      %s48 = ssub.s32 %s40, %s47
      %p49 = scmp.eq.s32.totalorder %s48, 0
      %s51 = sadd.s32 %s50, 1
      %s52 = scalar_select %p49, %s50, %s51
      %p55 = pneg %p49
      %p56 = scmp.eq.s32.totalorder %s40, 1
      %p57 = por %p55, %p56
      %p58 = scmp.ne.s32.totalorder %s50, %s53
      %p59 = scmp.eq.s32.totalorder %s40, 0
      %p60 = por %p58, %p59
      %p61 = scmp.ne.s32.totalorder %s50, %s53
      %p62 = scmp.eq.s32.totalorder %s45, 1
      %p63 = por %p61, %p62
      %p64 = scmp.ne.s32.totalorder %s53, %s54
      %p65 = scmp.eq.s32.totalorder %s45, 0
      %p66 = por %p64, %p65
      %p67 = scmp.ne.s32.totalorder %s53, %s54
      %p68 = scmp.eq.s32.totalorder %s46, 1
      %p69 = por %p67, %p68
      %p71 = scmp.ne.s32.totalorder %s54, %s70
      %p72 = scmp.eq.s32.totalorder %s46, 0
      %p73 = por %p71, %p72
      %s75 = sadd.s32 %s74, 1
      %p78 = scmp.eq.s32.totalorder %s40, 1
      %p79 = scmp.ne.s32.totalorder %s74, %s76
      %p80 = scmp.eq.s32.totalorder %s40, 0
      %p81 = por %p79, %p80
      %p82 = scmp.ne.s32.totalorder %s74, %s76
      %p83 = scmp.eq.s32.totalorder %s45, 1
      %p84 = por %p82, %p83
      %p85 = scmp.ne.s32.totalorder %s76, %s77
      %p86 = scmp.eq.s32.totalorder %s45, 0
      %p87 = por %p85, %p86
      %p88 = scmp.ne.s32.totalorder %s76, %s77
      %p89 = scmp.eq.s32.totalorder %s46, 1
      %p90 = por %p88, %p89
      %p92 = scmp.ne.s32.totalorder %s77, %s91
      %p93 = scmp.eq.s32.totalorder %s46, 0
      %p94 = por %p92, %p93
      %s96 = sadd.s32 %s95, 1
      %p99 = scmp.eq.s32.totalorder %s40, 1
      %p100 = scmp.ne.s32.totalorder %s95, %s97
      %p101 = scmp.eq.s32.totalorder %s40, 0
      %p102 = por %p100, %p101
      %p103 = scmp.ne.s32.totalorder %s95, %s97
      %p104 = scmp.eq.s32.totalorder %s45, 1
      %p105 = por %p103, %p104
      %p106 = scmp.ne.s32.totalorder %s97, %s98
      %p107 = scmp.eq.s32.totalorder %s45, 0
      %p108 = por %p106, %p107
      %p109 = scmp.ne.s32.totalorder %s97, %s98
      %p110 = scmp.eq.s32.totalorder %s46, 1
      %p111 = por %p109, %p110
      %p113 = scmp.ne.s32.totalorder %s98, %s112
      %p114 = scmp.eq.s32.totalorder %s46, 0
      %p115 = por %p113, %p114
      %s117 = sadd.s32 %s116, 1
      %p120 = scmp.eq.s32.totalorder %s40, 1
      %p121 = scmp.ne.s32.totalorder %s116, %s118
      %p122 = scmp.eq.s32.totalorder %s40, 0
      %p123 = por %p121, %p122
      %p124 = scmp.ne.s32.totalorder %s116, %s118
      %p125 = scmp.eq.s32.totalorder %s45, 1
      %p126 = por %p124, %p125
      %p127 = scmp.ne.s32.totalorder %s118, %s119
      %p128 = scmp.eq.s32.totalorder %s45, 0
      %p129 = por %p127, %p128
      %p130 = scmp.ne.s32.totalorder %s118, %s119
      %p131 = scmp.eq.s32.totalorder %s46, 1
      %p132 = por %p130, %p131
      %p134 = scmp.ne.s32.totalorder %s119, %s133
      %p135 = scmp.eq.s32.totalorder %s46, 0
      %p136 = por %p134, %p135
      %s138 = sadd.s32 %s137, 1
      %p141 = scmp.eq.s32.totalorder %s40, 1
      %p142 = scmp.ne.s32.totalorder %s137, %s139
      %p143 = scmp.eq.s32.totalorder %s40, 0
      %p144 = por %p142, %p143
      %p145 = scmp.ne.s32.totalorder %s137, %s139
      %p146 = scmp.eq.s32.totalorder %s45, 1
      %p147 = por %p145, %p146
      %p148 = scmp.ne.s32.totalorder %s139, %s140
      %p149 = scmp.eq.s32.totalorder %s45, 0
      %p150 = por %p148, %p149
      %p151 = scmp.ne.s32.totalorder %s139, %s140
      %p152 = scmp.eq.s32.totalorder %s46, 1
      %p153 = por %p151, %p152
      %p155 = scmp.ne.s32.totalorder %s140, %s154
      %p156 = scmp.eq.s32.totalorder %s46, 0
      %p157 = por %p155, %p156
      %s159 = sadd.s32 %s158, 1
      %p162 = scmp.eq.s32.totalorder %s40, 1
      %p163 = scmp.ne.s32.totalorder %s158, %s160
      %p164 = scmp.eq.s32.totalorder %s40, 0
      %p165 = por %p163, %p164
      %p166 = scmp.ne.s32.totalorder %s158, %s160
      %p167 = scmp.eq.s32.totalorder %s45, 1
      %p168 = por %p166, %p167
      %p169 = scmp.ne.s32.totalorder %s160, %s161
      %p170 = scmp.eq.s32.totalorder %s45, 0
      %p171 = por %p169, %p170
      %p172 = scmp.ne.s32.totalorder %s160, %s161
      %p173 = scmp.eq.s32.totalorder %s46, 1
      %p174 = por %p172, %p173
      %p176 = scmp.ne.s32.totalorder %s161, %s175
      %p177 = scmp.eq.s32.totalorder %s46, 0
      %p178 = por %p176, %p177
      %s180 = sadd.s32 %s179, 1
      %p183 = scmp.eq.s32.totalorder %s40, 1
      %p184 = scmp.ne.s32.totalorder %s179, %s181
      %p185 = scmp.eq.s32.totalorder %s40, 0
      %p186 = por %p184, %p185
      %p187 = scmp.ne.s32.totalorder %s179, %s181
      %p188 = scmp.eq.s32.totalorder %s45, 1
      %p189 = por %p187, %p188
      %p190 = scmp.ne.s32.totalorder %s181, %s182
      %p191 = scmp.eq.s32.totalorder %s45, 0
      %p192 = por %p190, %p191
      %p193 = scmp.ne.s32.totalorder %s181, %s182
      %p194 = scmp.eq.s32.totalorder %s46, 1
      %p195 = por %p193, %p194
      %p197 = scmp.ne.s32.totalorder %s182, %s196
      %p198 = scmp.eq.s32.totalorder %s46, 0
      %p199 = por %p197, %p198
      %s201 = sadd.s32 %s200, 1
      %p204 = scmp.eq.s32.totalorder %s40, 1
      %p205 = scmp.ne.s32.totalorder %s200, %s202
      %p206 = scmp.eq.s32.totalorder %s40, 0
      %p207 = por %p205, %p206
      %p208 = scmp.ne.s32.totalorder %s200, %s202
      %p209 = scmp.eq.s32.totalorder %s45, 1
      %p210 = por %p208, %p209
      %p211 = scmp.ne.s32.totalorder %s202, %s203
      %p212 = scmp.eq.s32.totalorder %s45, 0
      %p213 = por %p211, %p212
      %p214 = scmp.ne.s32.totalorder %s202, %s203
      %p215 = scmp.eq.s32.totalorder %s46, 1
      %p216 = por %p214, %p215
      %p218 = scmp.ne.s32.totalorder %s203, %s217
      %p219 = scmp.eq.s32.totalorder %s46, 0
      %p220 = por %p218, %p219
      %s222 = sadd.s32 %s221, 1
      %p225 = scmp.eq.s32.totalorder %s40, 1
      %p226 = scmp.ne.s32.totalorder %s221, %s223
      %p227 = scmp.eq.s32.totalorder %s40, 0
      %p228 = por %p226, %p227
      %p229 = scmp.ne.s32.totalorder %s221, %s223
      %p230 = scmp.eq.s32.totalorder %s45, 1
      %p231 = por %p229, %p230
      %p232 = scmp.ne.s32.totalorder %s223, %s224
      %p233 = scmp.eq.s32.totalorder %s45, 0
      %p234 = por %p232, %p233
      %p235 = scmp.ne.s32.totalorder %s223, %s224
      %p236 = scmp.eq.s32.totalorder %s46, 1
      %p237 = por %p235, %p236
      %p239 = scmp.ne.s32.totalorder %s224, %s238
      %p240 = scmp.eq.s32.totalorder %s46, 0
      %p241 = por %p239, %p240
      %s243 = sadd.s32 %s242, 1
      %p246 = scmp.eq.s32.totalorder %s40, 1
      %p247 = scmp.ne.s32.totalorder %s242, %s244
      %p248 = scmp.eq.s32.totalorder %s40, 0
      %p249 = por %p247, %p248
      %p250 = scmp.ne.s32.totalorder %s242, %s244
      %p251 = scmp.eq.s32.totalorder %s45, 1
      %p252 = por %p250, %p251
      %p253 = scmp.ne.s32.totalorder %s244, %s245
      %p254 = scmp.eq.s32.totalorder %s45, 0
      %p255 = por %p253, %p254
      %p256 = scmp.ne.s32.totalorder %s244, %s245
      %p257 = scmp.eq.s32.totalorder %s46, 1
      %p258 = por %p256, %p257
      %p260 = scmp.ne.s32.totalorder %s245, %s259
      %p261 = scmp.eq.s32.totalorder %s46, 0
      %p262 = por %p260, %p261
      %s264 = sadd.s32 %s263, 1
      %p267 = scmp.eq.s32.totalorder %s40, 1
      %p268 = scmp.ne.s32.totalorder %s263, %s265
      %p269 = scmp.eq.s32.totalorder %s40, 0
      %p270 = por %p268, %p269
      %p271 = scmp.ne.s32.totalorder %s263, %s265
      %p272 = scmp.eq.s32.totalorder %s45, 1
      %p273 = por %p271, %p272
      %p274 = scmp.ne.s32.totalorder %s265, %s266
      %p275 = scmp.eq.s32.totalorder %s45, 0
      %p276 = por %p274, %p275
      %p277 = scmp.ne.s32.totalorder %s265, %s266
      %p278 = scmp.eq.s32.totalorder %s46, 1
      %p279 = por %p277, %p278
      %p281 = scmp.ne.s32.totalorder %s266, %s280
      %p282 = scmp.eq.s32.totalorder %s46, 0
      %p283 = por %p281, %p282
      %s285 = sadd.s32 %s284, 1
      %p288 = scmp.eq.s32.totalorder %s40, 1
      %p289 = scmp.ne.s32.totalorder %s284, %s286
      %p290 = scmp.eq.s32.totalorder %s40, 0
      %p291 = por %p289, %p290
      %p292 = scmp.ne.s32.totalorder %s284, %s286
      %p293 = scmp.eq.s32.totalorder %s45, 1
      %p294 = por %p292, %p293
      %p295 = scmp.ne.s32.totalorder %s286, %s287
      %p296 = scmp.eq.s32.totalorder %s45, 0
      %p297 = por %p295, %p296
      %p298 = scmp.ne.s32.totalorder %s286, %s287
      %p299 = scmp.eq.s32.totalorder %s46, 1
      %p300 = por %p298, %p299
      %p302 = scmp.ne.s32.totalorder %s287, %s301
      %p303 = scmp.eq.s32.totalorder %s46, 0
      %p304 = por %p302, %p303
      %s306 = sadd.s32 %s305, 1
      %p309 = scmp.eq.s32.totalorder %s40, 1
      %p310 = scmp.ne.s32.totalorder %s305, %s307
      %p311 = scmp.eq.s32.totalorder %s40, 0
      %p312 = por %p310, %p311
      %p313 = scmp.ne.s32.totalorder %s305, %s307
      %p314 = scmp.eq.s32.totalorder %s45, 1
      %p315 = por %p313, %p314
      %p316 = scmp.ne.s32.totalorder %s307, %s308
      %p317 = scmp.eq.s32.totalorder %s45, 0
      %p318 = por %p316, %p317
      %p319 = scmp.ne.s32.totalorder %s307, %s308
      %p320 = scmp.eq.s32.totalorder %s46, 1
      %p321 = por %p319, %p320
      %p323 = scmp.ne.s32.totalorder %s308, %s322
      %p324 = scmp.eq.s32.totalorder %s46, 0
      %p325 = por %p323, %p324
      %s327 = sadd.s32 %s326, 1
      %p330 = scmp.eq.s32.totalorder %s40, 1
      %p331 = scmp.ne.s32.totalorder %s326, %s328
      %p332 = scmp.eq.s32.totalorder %s40, 0
      %p333 = por %p331, %p332
      %p334 = scmp.ne.s32.totalorder %s326, %s328
      %p335 = scmp.eq.s32.totalorder %s45, 1
      %p336 = por %p334, %p335
      %p337 = scmp.ne.s32.totalorder %s328, %s329
      %p338 = scmp.eq.s32.totalorder %s45, 0
      %p339 = por %p337, %p338
      %p340 = scmp.ne.s32.totalorder %s328, %s329
      %p341 = scmp.eq.s32.totalorder %s46, 1
      %p342 = por %p340, %p341
      %p344 = scmp.ne.s32.totalorder %s329, %s343
      %p345 = scmp.eq.s32.totalorder %s46, 0
      %p346 = por %p344, %p345
      %s348 = sadd.s32 %s347, 1
      %p351 = scmp.eq.s32.totalorder %s40, 1
      %p352 = scmp.ne.s32.totalorder %s347, %s349
      %p353 = scmp.eq.s32.totalorder %s40, 0
      %p354 = por %p352, %p353
      %p355 = scmp.ne.s32.totalorder %s347, %s349
      %p356 = scmp.eq.s32.totalorder %s45, 1
      %p357 = por %p355, %p356
      %p358 = scmp.ne.s32.totalorder %s349, %s350
      %p359 = scmp.eq.s32.totalorder %s45, 0
      %p360 = por %p358, %p359
      %p361 = scmp.ne.s32.totalorder %s349, %s350
      %p362 = scmp.eq.s32.totalorder %s46, 1
      %p363 = por %p361, %p362
      %p365 = scmp.ne.s32.totalorder %s350, %s364
      %p366 = scmp.eq.s32.totalorder %s46, 0
      %p367 = por %p365, %p366
      %s369 = sadd.s32 %s368, 1
      %p372 = scmp.eq.s32.totalorder %s40, 1
      %p373 = scmp.ne.s32.totalorder %s368, %s370
      %p374 = scmp.eq.s32.totalorder %s40, 0
      %p375 = por %p373, %p374
      %p376 = scmp.ne.s32.totalorder %s368, %s370
      %p377 = scmp.eq.s32.totalorder %s45, 1
      %p378 = por %p376, %p377
      %p379 = scmp.ne.s32.totalorder %s370, %s371
      %p380 = scmp.eq.s32.totalorder %s45, 0
      %p381 = por %p379, %p380
      %p382 = scmp.ne.s32.totalorder %s370, %s371
      %p383 = scmp.eq.s32.totalorder %s46, 1
      %p384 = por %p382, %p383
      %p386 = scmp.ne.s32.totalorder %s371, %s385
      %p387 = scmp.eq.s32.totalorder %s46, 0
      %p388 = por %p386, %p387
      %s390 = sadd.s32 %s389, 1
      %p393 = scmp.eq.s32.totalorder %s40, 1
      %p394 = scmp.ne.s32.totalorder %s389, %s391
      %p395 = scmp.eq.s32.totalorder %s40, 0
      %p396 = por %p394, %p395
      %p397 = scmp.ne.s32.totalorder %s389, %s391
      %p398 = scmp.eq.s32.totalorder %s45, 1
      %p399 = por %p397, %p398
      %p400 = scmp.ne.s32.totalorder %s391, %s392
      %p401 = scmp.eq.s32.totalorder %s45, 0
      %p402 = por %p400, %p401
      %p403 = scmp.ne.s32.totalorder %s391, %s392
      %p404 = scmp.eq.s32.totalorder %s46, 1
      %p405 = por %p403, %p404
      %p407 = scmp.ne.s32.totalorder %s392, %s406
      %p408 = scmp.eq.s32.totalorder %s46, 0
      %p409 = por %p407, %p408
      %s411 = sadd.s32 %s410, 1
      %p414 = scmp.eq.s32.totalorder %s40, 1
      %p415 = scmp.ne.s32.totalorder %s410, %s412
      %p416 = scmp.eq.s32.totalorder %s40, 0
      %p417 = por %p415, %p416
      %p418 = scmp.ne.s32.totalorder %s410, %s412
      %p419 = scmp.eq.s32.totalorder %s45, 1
      %p420 = por %p418, %p419
      %p421 = scmp.ne.s32.totalorder %s412, %s413
      %p422 = scmp.eq.s32.totalorder %s45, 0
      %p423 = por %p421, %p422
      %p424 = scmp.ne.s32.totalorder %s412, %s413
      %p425 = scmp.eq.s32.totalorder %s46, 1
      %p426 = por %p424, %p425
      %p428 = scmp.ne.s32.totalorder %s413, %s427
      %p429 = scmp.eq.s32.totalorder %s46, 0
      %p430 = por %p428, %p429
      %s432 = sadd.s32 %s431, 1
      %p435 = scmp.eq.s32.totalorder %s40, 1
      %p436 = scmp.ne.s32.totalorder %s431, %s433
      %p437 = scmp.eq.s32.totalorder %s40, 0
      %p438 = por %p436, %p437
      %p439 = scmp.ne.s32.totalorder %s431, %s433
      %p440 = scmp.eq.s32.totalorder %s45, 1
      %p441 = por %p439, %p440
      %p442 = scmp.ne.s32.totalorder %s433, %s434
      %p443 = scmp.eq.s32.totalorder %s45, 0
      %p444 = por %p442, %p443
      %p445 = scmp.ne.s32.totalorder %s433, %s434
      %p446 = scmp.eq.s32.totalorder %s46, 1
      %p447 = por %p445, %p446
      %p449 = scmp.ne.s32.totalorder %s434, %s448
      %p450 = scmp.eq.s32.totalorder %s46, 0
      %p451 = por %p449, %p450
      %s453 = sadd.s32 %s452, 1
      %p456 = scmp.eq.s32.totalorder %s40, 1
      %p457 = scmp.ne.s32.totalorder %s452, %s454
      %p458 = scmp.eq.s32.totalorder %s40, 0
      %p459 = por %p457, %p458
      %p460 = scmp.ne.s32.totalorder %s452, %s454
      %p461 = scmp.eq.s32.totalorder %s45, 1
      %p462 = por %p460, %p461
      %p463 = scmp.ne.s32.totalorder %s454, %s455
      %p464 = scmp.eq.s32.totalorder %s45, 0
      %p465 = por %p463, %p464
      %p466 = scmp.ne.s32.totalorder %s454, %s455
      %p467 = scmp.eq.s32.totalorder %s46, 1
      %p468 = por %p466, %p467
      %p470 = scmp.ne.s32.totalorder %s455, %s469
      %p471 = scmp.eq.s32.totalorder %s46, 0
      %p472 = por %p470, %p471
      %s474 = sadd.s32 %s473, 1
      %p477 = scmp.eq.s32.totalorder %s40, 1
      %p478 = scmp.ne.s32.totalorder %s473, %s475
      %p479 = scmp.eq.s32.totalorder %s40, 0
      %p480 = por %p478, %p479
      %p481 = scmp.ne.s32.totalorder %s473, %s475
      %p482 = scmp.eq.s32.totalorder %s45, 1
      %p483 = por %p481, %p482
      %p484 = scmp.ne.s32.totalorder %s475, %s476
      %p485 = scmp.eq.s32.totalorder %s45, 0
      %p486 = por %p484, %p485
      %p487 = scmp.ne.s32.totalorder %s475, %s476
      %p488 = scmp.eq.s32.totalorder %s46, 1
      %p489 = por %p487, %p488
      %p491 = scmp.ne.s32.totalorder %s476, %s490
      %p492 = scmp.eq.s32.totalorder %s46, 0
      %p493 = por %p491, %p492
      %s495 = sadd.s32 %s494, 1
      %p498 = scmp.eq.s32.totalorder %s40, 1
      %p499 = scmp.ne.s32.totalorder %s494, %s496
      %p500 = scmp.eq.s32.totalorder %s40, 0
      %p501 = por %p499, %p500
      %p502 = scmp.ne.s32.totalorder %s494, %s496
      %p503 = scmp.eq.s32.totalorder %s45, 1
      %p504 = por %p502, %p503
      %p505 = scmp.ne.s32.totalorder %s496, %s497
      %p506 = scmp.eq.s32.totalorder %s45, 0
      %p507 = por %p505, %p506
      %p508 = scmp.ne.s32.totalorder %s496, %s497
      %p509 = scmp.eq.s32.totalorder %s46, 1
      %p510 = por %p508, %p509
      %p512 = scmp.ne.s32.totalorder %s497, %s511
      %p513 = scmp.eq.s32.totalorder %s46, 0
      %p514 = por %p512, %p513
      %s516 = sadd.s32 %s515, 1
      %p519 = scmp.eq.s32.totalorder %s40, 1
      %p520 = scmp.ne.s32.totalorder %s515, %s517
      %p521 = scmp.eq.s32.totalorder %s40, 0
      %p522 = por %p520, %p521
      %p523 = scmp.ne.s32.totalorder %s515, %s517
      %p524 = scmp.eq.s32.totalorder %s45, 1
      %p525 = por %p523, %p524
      %p526 = scmp.ne.s32.totalorder %s517, %s518
      %p527 = scmp.eq.s32.totalorder %s45, 0
      %p528 = por %p526, %p527
      %p529 = scmp.ne.s32.totalorder %s517, %s518
      %p530 = scmp.eq.s32.totalorder %s46, 1
      %p531 = por %p529, %p530
      %p533 = scmp.ne.s32.totalorder %s518, %s532
      %p534 = scmp.eq.s32.totalorder %s46, 0
      %p535 = por %p533, %p534
      %s536 = ssub.s32 %s40, %s47
      %p537 = scmp.eq.s32.totalorder %s536, 0
      %s539 = sadd.s32 %s538, 1
      %s540 = scalar_select %p537, %s538, %s539
      %p543 = pneg %p537
      %p544 = scmp.eq.s32.totalorder %s40, 1
      %p545 = por %p543, %p544
      %p546 = scmp.ne.s32.totalorder %s538, %s541
      %p547 = scmp.eq.s32.totalorder %s40, 0
      %p548 = por %p546, %p547
      %p549 = scmp.ne.s32.totalorder %s538, %s541
      %p550 = scmp.eq.s32.totalorder %s45, 1
      %p551 = por %p549, %p550
      %p552 = scmp.ne.s32.totalorder %s541, %s542
      %p553 = scmp.eq.s32.totalorder %s45, 0
      %p554 = por %p552, %p553
      %p555 = scmp.ne.s32.totalorder %s541, %s542
      %p556 = scmp.eq.s32.totalorder %s46, 1
      %p557 = por %p555, %p556
      %p559 = scmp.ne.s32.totalorder %s542, %s558
      %p560 = scmp.eq.s32.totalorder %s46, 0
      %p561 = por %p559, %p560
      %s562 = ssub.s32 %s40, %s47
      %p563 = scmp.eq.s32.totalorder %s562, 0
      %s565 = sadd.s32 %s564, 1
      %s566 = scalar_select %p563, %s564, %s565
      %p569 = pneg %p563
      %p570 = scmp.eq.s32.totalorder %s40, 1
      %p571 = por %p569, %p570
      %p572 = scmp.ne.s32.totalorder %s564, %s567
      %p573 = scmp.eq.s32.totalorder %s40, 0
      %p574 = por %p572, %p573
      %p575 = scmp.ne.s32.totalorder %s564, %s567
      %p576 = scmp.eq.s32.totalorder %s45, 1
      %p577 = por %p575, %p576
      %p578 = scmp.ne.s32.totalorder %s567, %s568
      %p579 = scmp.eq.s32.totalorder %s45, 0
      %p580 = por %p578, %p579
      %p581 = scmp.ne.s32.totalorder %s567, %s568
      %p582 = scmp.eq.s32.totalorder %s46, 1
      %p583 = por %p581, %p582
      %p585 = scmp.ne.s32.totalorder %s568, %s584
      %p586 = scmp.eq.s32.totalorder %s46, 0
      %p587 = por %p585, %p586
      %p588 = scmp.le.s32.totalorder 1, %s40
      %p589 = scmp.lt.s32.totalorder %s40, 3
      %p590 = pnand %p588, %p589
      %p591 = pneg %p590
      // Predicated region
      $region9: #{gmfanet_forward.1} parent=5 // pred_check
        _
      $region10: #{gmfanet_forward.1} parent=5 // pred_check_branch
        %593 = sbr.rel (%p590) target = $region12
      $region11: #{gmfanet_forward.1} parent=5 // pred_region
        %s594 = ssub.s32 %s40, 1
        // Predicated region
        $region13: #{gmfanet_forward.1} parent=11 // pred_check
          %p595 = pneg %p87
        $region14: #{gmfanet_forward.1} parent=11 // pred_check_branch
          %597 = sbr.rel (%p595) target = $region16
        $region15: #{gmfanet_forward.1} parent=11 // pred_region
          _
        $region16: #{gmfanet_forward.1} parent=11 // pred_fallthru
          _
        // Predicated region
        $region17: #{gmfanet_forward.1} parent=11 // pred_check
          %p598 = pneg %p108
        $region18: #{gmfanet_forward.1} parent=11 // pred_check_branch
          %600 = sbr.rel (%p598) target = $region20
        $region19: #{gmfanet_forward.1} parent=11 // pred_region
          %602 = vsyncadd [#allocation3], 0
          %s604 = sshll.u32 %s2, 4
          %s605 = int_to_ptr.hbm [resolvable:$true] %s604
          %s606 = sshll.u32 [#allocation2], 4
          %s607 = int_to_ptr.vmem [resolvable:$true] %s606
          %609 = dma.hbm_to_vmem [thread:$0]  %s605, 16, %s607, [#allocation3]
        $region20: #{gmfanet_forward.1} parent=11 // pred_fallthru
          _
        // Predicated region
        $region21: #{gmfanet_forward.1} parent=11 // pred_check
          %p610 = pneg %p129
        $region22: #{gmfanet_forward.1} parent=11 // pred_check_branch
          %612 = sbr.rel (%p610) target = $region24
        $region23: #{gmfanet_forward.1} parent=11 // pred_region
          %614 = vsyncadd [#allocation6], 0
          %s615 = sshll.u32 %s3, 4
          %s616 = int_to_ptr.hbm [resolvable:$true] %s615
          %s617 = sshll.u32 [#allocation5], 4
          %s618 = int_to_ptr.vmem [resolvable:$true] %s617
          %623 = dma.hbm_to_vmem [thread:$0]  %s616, 1024, %s618, [#allocation6], 128, 128, 8
        $region24: #{gmfanet_forward.1} parent=11 // pred_fallthru
          _
        // Predicated region
        $region25: #{gmfanet_forward.1} parent=11 // pred_check
          %p624 = pneg %p150
        $region26: #{gmfanet_forward.1} parent=11 // pred_check_branch
          %626 = sbr.rel (%p624) target = $region28
        $region27: #{gmfanet_forward.1} parent=11 // pred_region
          _
        $region28: #{gmfanet_forward.1} parent=11 // pred_fallthru
          _
        // Predicated region
        $region29: #{gmfanet_forward.1} parent=11 // pred_check
          %p627 = pneg %p171
        $region30: #{gmfanet_forward.1} parent=11 // pred_check_branch
          %629 = sbr.rel (%p627) target = $region32
        $region31: #{gmfanet_forward.1} parent=11 // pred_region
          %631 = vsyncadd [#allocation6], 0
          %s632 = sshll.u32 %s5, 4
          %s633 = int_to_ptr.hbm [resolvable:$true] %s632
          %s634 = sshll.u32 [#allocation7], 4
          %s635 = int_to_ptr.vmem [resolvable:$true] %s634
          %640 = dma.hbm_to_vmem [thread:$0]  %s633, 2048, %s635, [#allocation6], 128, 128, 8
        $region32: #{gmfanet_forward.1} parent=11 // pred_fallthru
          _
        // Predicated region
        $region33: #{gmfanet_forward.1} parent=11 // pred_check
          %p641 = pneg %p192
        $region34: #{gmfanet_forward.1} parent=11 // pred_check_branch
          %643 = sbr.rel (%p641) target = $region36
        $region35: #{gmfanet_forward.1} parent=11 // pred_region
          %645 = vsyncadd [#allocation9], 0
          %s647 = sshll.u32 %s6, 4
          %s648 = int_to_ptr.hbm [resolvable:$true] %s647
          %s649 = sshll.u32 [#allocation8], 4
          %s650 = int_to_ptr.vmem [resolvable:$true] %s649
          %652 = dma.hbm_to_vmem [thread:$0]  %s648, 32, %s650, [#allocation9]
        $region36: #{gmfanet_forward.1} parent=11 // pred_fallthru
          _
        // Predicated region
        $region37: #{gmfanet_forward.1} parent=11 // pred_check
          %p653 = pneg %p213
        $region38: #{gmfanet_forward.1} parent=11 // pred_check_branch
          %655 = sbr.rel (%p653) target = $region40
        $region39: #{gmfanet_forward.1} parent=11 // pred_region
          %657 = vsyncadd [#allocation9], 0
          %s658 = sshll.u32 %s7, 4
          %s659 = int_to_ptr.hbm [resolvable:$true] %s658
          %s660 = sshll.u32 [#allocation10], 4
          %s661 = int_to_ptr.vmem [resolvable:$true] %s660
          %666 = dma.hbm_to_vmem [thread:$0]  %s659, 1024, %s661, [#allocation9], 128, 128, 8
        $region40: #{gmfanet_forward.1} parent=11 // pred_fallthru
          _
        // Predicated region
        $region41: #{gmfanet_forward.1} parent=11 // pred_check
          %p667 = pneg %p234
        $region42: #{gmfanet_forward.1} parent=11 // pred_check_branch
          %669 = sbr.rel (%p667) target = $region44
        $region43: #{gmfanet_forward.1} parent=11 // pred_region
          %671 = vsyncadd [#allocation12], 0
          %s673 = sshll.u32 %s8, 4
          %s674 = int_to_ptr.hbm [resolvable:$true] %s673
          %s675 = sshll.u32 [#allocation11], 4
          %s676 = int_to_ptr.vmem [resolvable:$true] %s675
          %678 = dma.hbm_to_vmem [thread:$0]  %s674, 32, %s676, [#allocation12]
        $region44: #{gmfanet_forward.1} parent=11 // pred_fallthru
          _
        // Predicated region
        $region45: #{gmfanet_forward.1} parent=11 // pred_check
          %p679 = pneg %p255
        $region46: #{gmfanet_forward.1} parent=11 // pred_check_branch
          %681 = sbr.rel (%p679) target = $region48
        $region47: #{gmfanet_forward.1} parent=11 // pred_region
          %683 = vsyncadd [#allocation12], 0
          %s684 = sshll.u32 %s9, 4
          %s685 = int_to_ptr.hbm [resolvable:$true] %s684
          %s686 = sshll.u32 [#allocation13], 4
          %s687 = int_to_ptr.vmem [resolvable:$true] %s686
          %692 = dma.hbm_to_vmem [thread:$0]  %s685, 2048, %s687, [#allocation12], 128, 128, 8
        $region48: #{gmfanet_forward.1} parent=11 // pred_fallthru
          _
        // Predicated region
        $region49: #{gmfanet_forward.1} parent=11 // pred_check
          %p693 = pneg %p276
        $region50: #{gmfanet_forward.1} parent=11 // pred_check_branch
          %695 = sbr.rel (%p693) target = $region52
        $region51: #{gmfanet_forward.1} parent=11 // pred_region
          %697 = vsyncadd [#allocation15], 0
          %s699 = sshll.u32 %s10, 4
          %s700 = int_to_ptr.hbm [resolvable:$true] %s699
          %s701 = sshll.u32 [#allocation14], 4
          %s702 = int_to_ptr.vmem [resolvable:$true] %s701
          %704 = dma.hbm_to_vmem [thread:$0]  %s700, 32, %s702, [#allocation15]
        $region52: #{gmfanet_forward.1} parent=11 // pred_fallthru
          _
        // Predicated region
        $region53: #{gmfanet_forward.1} parent=11 // pred_check
          %p705 = pneg %p297
        $region54: #{gmfanet_forward.1} parent=11 // pred_check_branch
          %707 = sbr.rel (%p705) target = $region56
        $region55: #{gmfanet_forward.1} parent=11 // pred_region
          _
        $region56: #{gmfanet_forward.1} parent=11 // pred_fallthru
          _
        // Predicated region
        $region57: #{gmfanet_forward.1} parent=11 // pred_check
          %p708 = pneg %p318
        $region58: #{gmfanet_forward.1} parent=11 // pred_check_branch
          %710 = sbr.rel (%p708) target = $region60
        $region59: #{gmfanet_forward.1} parent=11 // pred_region
          %712 = vsyncadd [#allocation15], 0
          %s714 = sshll.u32 %s12, 4
          %s715 = int_to_ptr.hbm [resolvable:$true] %s714
          %s716 = sshll.u32 [#allocation16], 4
          %s717 = int_to_ptr.vmem [resolvable:$true] %s716
          %719 = dma.hbm_to_vmem [thread:$0]  %s715, 64, %s717, [#allocation15]
        $region60: #{gmfanet_forward.1} parent=11 // pred_fallthru
          _
        // Predicated region
        $region61: #{gmfanet_forward.1} parent=11 // pred_check
          %p720 = pneg %p339
        $region62: #{gmfanet_forward.1} parent=11 // pred_check_branch
          %722 = sbr.rel (%p720) target = $region64
        $region63: #{gmfanet_forward.1} parent=11 // pred_region
          _
        $region64: #{gmfanet_forward.1} parent=11 // pred_fallthru
          _
        // Predicated region
        $region65: #{gmfanet_forward.1} parent=11 // pred_check
          %p723 = pneg %p360
        $region66: #{gmfanet_forward.1} parent=11 // pred_check_branch
          %725 = sbr.rel (%p723) target = $region68
        $region67: #{gmfanet_forward.1} parent=11 // pred_region
          %727 = vsyncadd [#allocation18], 0
          %s729 = sshll.u32 %s14, 4
          %s730 = int_to_ptr.hbm [resolvable:$true] %s729
          %s731 = sshll.u32 [#allocation17], 4
          %s732 = int_to_ptr.vmem [resolvable:$true] %s731
          %734 = dma.hbm_to_vmem [thread:$0]  %s730, 64, %s732, [#allocation18]
        $region68: #{gmfanet_forward.1} parent=11 // pred_fallthru
          _
        // Predicated region
        $region69: #{gmfanet_forward.1} parent=11 // pred_check
          %p735 = pneg %p381
        $region70: #{gmfanet_forward.1} parent=11 // pred_check_branch
          %737 = sbr.rel (%p735) target = $region72
        $region71: #{gmfanet_forward.1} parent=11 // pred_region
          _
        $region72: #{gmfanet_forward.1} parent=11 // pred_fallthru
          _
        // Predicated region
        $region73: #{gmfanet_forward.1} parent=11 // pred_check
          %p738 = pneg %p402
        $region74: #{gmfanet_forward.1} parent=11 // pred_check_branch
          %740 = sbr.rel (%p738) target = $region76
        $region75: #{gmfanet_forward.1} parent=11 // pred_region
          _
        $region76: #{gmfanet_forward.1} parent=11 // pred_fallthru
          _
        // Predicated region
        $region77: #{gmfanet_forward.1} parent=11 // pred_check
          %p741 = pneg %p423
        $region78: #{gmfanet_forward.1} parent=11 // pred_check_branch
          %743 = sbr.rel (%p741) target = $region80
        $region79: #{gmfanet_forward.1} parent=11 // pred_region
          _
        $region80: #{gmfanet_forward.1} parent=11 // pred_fallthru
          _
        // Predicated region
        $region81: #{gmfanet_forward.1} parent=11 // pred_check
          %p744 = pneg %p444
        $region82: #{gmfanet_forward.1} parent=11 // pred_check_branch
          %746 = sbr.rel (%p744) target = $region84
        $region83: #{gmfanet_forward.1} parent=11 // pred_region
          _
        $region84: #{gmfanet_forward.1} parent=11 // pred_fallthru
          _
        // Predicated region
        $region85: #{gmfanet_forward.1} parent=11 // pred_check
          %p747 = pneg %p465
        $region86: #{gmfanet_forward.1} parent=11 // pred_check_branch
          %749 = sbr.rel (%p747) target = $region88
        $region87: #{gmfanet_forward.1} parent=11 // pred_region
          _
        $region88: #{gmfanet_forward.1} parent=11 // pred_fallthru
          _
        // Predicated region
        $region89: #{gmfanet_forward.1} parent=11 // pred_check
          %p750 = pneg %p486
        $region90: #{gmfanet_forward.1} parent=11 // pred_check_branch
          %752 = sbr.rel (%p750) target = $region92
        $region91: #{gmfanet_forward.1} parent=11 // pred_region
          _
        $region92: #{gmfanet_forward.1} parent=11 // pred_fallthru
          _
        // Predicated region
        $region93: #{gmfanet_forward.1} parent=11 // pred_check
          %p753 = pneg %p507
        $region94: #{gmfanet_forward.1} parent=11 // pred_check_branch
          %755 = sbr.rel (%p753) target = $region96
        $region95: #{gmfanet_forward.1} parent=11 // pred_region
          _
        $region96: #{gmfanet_forward.1} parent=11 // pred_fallthru
          _
        // Predicated region
        $region97: #{gmfanet_forward.1} parent=11 // pred_check
          %p756 = pneg %p528
        $region98: #{gmfanet_forward.1} parent=11 // pred_check_branch
          %758 = sbr.rel (%p756) target = $region100
        $region99: #{gmfanet_forward.1} parent=11 // pred_region
          %760 = vsyncadd [#allocation18], 0
          %s761 = sshll.u32 %s22, 4
          %s762 = int_to_ptr.hbm [resolvable:$true] %s761
          %s763 = sshll.u32 [#allocation19], 4
          %s764 = int_to_ptr.vmem [resolvable:$true] %s763
          %769 = dma.hbm_to_vmem [thread:$0]  %s762, 896, %s764, [#allocation18], 128, 128, 8
        $region100: #{gmfanet_forward.1} parent=11 // pred_fallthru
          _
      $region12: #{gmfanet_forward.1} parent=5 // pred_fallthru
        _
      %p770 = scmp.lt.s32.totalorder %s40, 2
      // Predicated region
      $region101: #{gmfanet_forward.1} parent=5 // pred_check
        %p771 = pneg %p770
      $region102: #{gmfanet_forward.1} parent=5 // pred_check_branch
        %773 = sbr.rel (%p771) target = $region104
      $region103: #{gmfanet_forward.1} parent=5 // pred_region
        // Predicated region
        $region105: #{gmfanet_forward.1} parent=103 // pred_check
          %p774 = pneg %p60
        $region106: #{gmfanet_forward.1} parent=103 // pred_check_branch
          %776 = sbr.rel (%p774) target = $region108
        $region107: #{gmfanet_forward.1} parent=103 // pred_region
          %p777 = scmp.lt.s32.totalorder %s40, 1
          %s778 = scalar_select %p777, %s40, 1
          %s779 = smul.addr %s778, 98
          %s780 = smul.addr %s779, 4
          %s781 = scalar_lea.vmem %s0, %s780
        $region108: #{gmfanet_forward.1} parent=103 // pred_fallthru
          _
      $region104: #{gmfanet_forward.1} parent=5 // pred_fallthru
        _
      %p782 = scmp.le.s32.totalorder 1, %s40
      %p783 = scmp.lt.s32.totalorder %s40, 3
      %p784 = pnand %p782, %p783
      %p785 = pneg %p784
      // Predicated region
      $region109: #{gmfanet_forward.1} parent=5 // pred_check
        _
      $region110: #{gmfanet_forward.1} parent=5 // pred_check_branch
        %787 = sbr.rel (%p784) target = $region112
      $region111: #{gmfanet_forward.1} parent=5 // pred_region
        %s788 = ssub.s32 %s40, 1
        // Predicated region
        $region113: #{gmfanet_forward.1} parent=111 // pred_check
          %p789 = pneg %p108
        $region114: #{gmfanet_forward.1} parent=111 // pred_check_branch
          %791 = sbr.rel (%p789) target = $region116
        $region115: #{gmfanet_forward.1} parent=111 // pred_region
          %793 = dma.done [#allocation3], 16
        $region116: #{gmfanet_forward.1} parent=111 // pred_fallthru
          _
        // Predicated region
        $region117: #{gmfanet_forward.1} parent=111 // pred_check
          %p794 = pneg %p129
        $region118: #{gmfanet_forward.1} parent=111 // pred_check_branch
          %796 = sbr.rel (%p794) target = $region120
        $region119: #{gmfanet_forward.1} parent=111 // pred_region
          %798 = dma.done [#allocation6], 1024
        $region120: #{gmfanet_forward.1} parent=111 // pred_fallthru
          _
        // Predicated region
        $region121: #{gmfanet_forward.1} parent=111 // pred_check
          %p799 = pneg %p171
        $region122: #{gmfanet_forward.1} parent=111 // pred_check_branch
          %801 = sbr.rel (%p799) target = $region124
        $region123: #{gmfanet_forward.1} parent=111 // pred_region
          %803 = dma.done [#allocation6], 2048
        $region124: #{gmfanet_forward.1} parent=111 // pred_fallthru
          _
        // Predicated region
        $region125: #{gmfanet_forward.1} parent=111 // pred_check
          %p804 = pneg %p192
        $region126: #{gmfanet_forward.1} parent=111 // pred_check_branch
          %806 = sbr.rel (%p804) target = $region128
        $region127: #{gmfanet_forward.1} parent=111 // pred_region
          %808 = dma.done [#allocation9], 32
        $region128: #{gmfanet_forward.1} parent=111 // pred_fallthru
          _
        // Predicated region
        $region129: #{gmfanet_forward.1} parent=111 // pred_check
          %p809 = pneg %p213
        $region130: #{gmfanet_forward.1} parent=111 // pred_check_branch
          %811 = sbr.rel (%p809) target = $region132
        $region131: #{gmfanet_forward.1} parent=111 // pred_region
          %813 = dma.done [#allocation9], 1024
        $region132: #{gmfanet_forward.1} parent=111 // pred_fallthru
          _
        // Predicated region
        $region133: #{gmfanet_forward.1} parent=111 // pred_check
          %p814 = pneg %p234
        $region134: #{gmfanet_forward.1} parent=111 // pred_check_branch
          %816 = sbr.rel (%p814) target = $region136
        $region135: #{gmfanet_forward.1} parent=111 // pred_region
          %818 = dma.done [#allocation12], 32
        $region136: #{gmfanet_forward.1} parent=111 // pred_fallthru
          _
        // Predicated region
        $region137: #{gmfanet_forward.1} parent=111 // pred_check
          %p819 = pneg %p255
        $region138: #{gmfanet_forward.1} parent=111 // pred_check_branch
          %821 = sbr.rel (%p819) target = $region140
        $region139: #{gmfanet_forward.1} parent=111 // pred_region
          %823 = dma.done [#allocation12], 2048
        $region140: #{gmfanet_forward.1} parent=111 // pred_fallthru
          _
        // Predicated region
        $region141: #{gmfanet_forward.1} parent=111 // pred_check
          %p824 = pneg %p276
        $region142: #{gmfanet_forward.1} parent=111 // pred_check_branch
          %826 = sbr.rel (%p824) target = $region144
        $region143: #{gmfanet_forward.1} parent=111 // pred_region
          %828 = dma.done [#allocation15], 32
        $region144: #{gmfanet_forward.1} parent=111 // pred_fallthru
          _
        // Predicated region
        $region145: #{gmfanet_forward.1} parent=111 // pred_check
          %p829 = pneg %p318
        $region146: #{gmfanet_forward.1} parent=111 // pred_check_branch
          %831 = sbr.rel (%p829) target = $region148
        $region147: #{gmfanet_forward.1} parent=111 // pred_region
          %833 = dma.done [#allocation15], 64
        $region148: #{gmfanet_forward.1} parent=111 // pred_fallthru
          _
        // Predicated region
        $region149: #{gmfanet_forward.1} parent=111 // pred_check
          %p834 = pneg %p360
        $region150: #{gmfanet_forward.1} parent=111 // pred_check_branch
          %836 = sbr.rel (%p834) target = $region152
        $region151: #{gmfanet_forward.1} parent=111 // pred_region
          %838 = dma.done [#allocation18], 64
        $region152: #{gmfanet_forward.1} parent=111 // pred_fallthru
          _
        // Predicated region
        $region153: #{gmfanet_forward.1} parent=111 // pred_check
          %p839 = pneg %p528
        $region154: #{gmfanet_forward.1} parent=111 // pred_check_branch
          %841 = sbr.rel (%p839) target = $region156
        $region155: #{gmfanet_forward.1} parent=111 // pred_region
          %843 = dma.done [#allocation18], 896
        $region156: #{gmfanet_forward.1} parent=111 // pred_fallthru
          _
        %p844 = scmp.lt.s32.totalorder %s45, 1
        %s845 = scalar_select %p844, %s45, 1
        %s846 = smul.addr %s845, 98
        %s847 = smul.addr %s846, 4
        %s848 = scalar_lea.vmem %s0, %s847
        %p849 = pneg %p66
        %p850 = pneg %p63
        %p851 = pneg %p87
        %p852 = pneg %p84
        %p853 = pneg %p108
        %p854 = pneg %p105
        %p855 = pneg %p129
        %p856 = pneg %p126
        %p857 = pneg %p150
        %p858 = pneg %p147
        %p859 = pneg %p171
        %p860 = pneg %p168
        %p861 = pneg %p192
        %p862 = pneg %p189
        %p863 = pneg %p213
        %p864 = pneg %p210
        %p865 = pneg %p234
        %p866 = pneg %p231
        %p867 = pneg %p255
        %p868 = pneg %p252
        %p869 = pneg %p276
        %p870 = pneg %p273
        %p871 = pneg %p297
        %p872 = pneg %p294
        %p873 = pneg %p318
        %p874 = pneg %p315
        %p875 = pneg %p339
        %p876 = pneg %p336
        %p877 = pneg %p360
        %p878 = pneg %p357
        %p879 = pneg %p381
        %p880 = pneg %p378
        %p881 = pneg %p402
        %p882 = pneg %p399
        %p883 = pneg %p423
        %p884 = pneg %p420
        %p885 = pneg %p444
        %p886 = pneg %p441
        %p887 = pneg %p465
        %p888 = pneg %p462
        %p889 = pneg %p486
        %p890 = pneg %p483
        %p891 = pneg %p507
        %p892 = pneg %p504
        %p893 = pneg %p528
        %p894 = pneg %p525
        %p895 = pneg %p554
        %p896 = pneg %p551
        %s897 = sand.u32 %s541, 1
        %s898 = scalar_lea.sflag [#allocation4], %s897
        %s899 = sand.u32 %s541, 1
        %s900 = scalar_lea.vmem [#allocation20], %s899
        %p901 = pneg %p580
        %p902 = pneg %p577
        %p903 = scmp.lt.s32.totalorder %s45, 1
        %s904 = scalar_select %p903, %s45, 1
        %s905 = scalar_lea.vmem %s24, %s904
        %p906 = scmp.lt.s32.totalorder %s45, 1
        %s907 = scalar_select %p906, %s45, 1
        %s908 = smul.addr %s907, 98
        %s909 = smul.addr %s908, 4
        %s910 = scalar_lea.vmem %s0, %s909
        %p911 = scmp.lt.s32.totalorder %s45, 1
        %s912 = scalar_select %p911, %s45, 1
        %s913 = scalar_lea.vmem %s24, %s912
        %v915 = vld [vmem:[%s910] sm:$0xf]
        %v916 = vld [vmem:[%s910 + $0x4] sm:$0xf]
        %v917 = vld [vmem:[%s910 + $0x8] sm:$0xf]
        %v918 = vld [vmem:[%s910 + $0xc] sm:$0xf]
        %v919 = vld [vmem:[%s910 + $0x10] sm:$0xf]
        %v920 = vld [vmem:[%s910 + $0x14] sm:$0xf]
        %v921 = vld [vmem:[%s910 + $0x18] sm:$0xf]
        %v922 = vld [vmem:[%s910 + $0x1c] sm:$0xf]
        %v923 = vld [vmem:[%s910 + $0x20] sm:$0xf]
        %v924 = vld [vmem:[%s910 + $0x24] sm:$0xf]
        %v925 = vld [vmem:[%s910 + $0x28] sm:$0xf]
        %v926 = vld [vmem:[%s910 + $0x2c] sm:$0xf]
        %v927 = vld [vmem:[%s910 + $0x30] sm:$0xf]
        %v928 = vld [vmem:[%s910 + $0x34] sm:$0xf]
        %v929 = vld [vmem:[%s910 + $0x38] sm:$0xf]
        %v930 = vld [vmem:[%s910 + $0x3c] sm:$0xf]
        %v931 = vld [vmem:[%s910 + $0x40] sm:$0xf]
        %v932 = vld [vmem:[%s910 + $0x44] sm:$0xf]
        %v933 = vld [vmem:[%s910 + $0x48] sm:$0xf]
        %v934 = vld [vmem:[%s910 + $0x4c] sm:$0xf]
        %v935 = vld [vmem:[%s910 + $0x50] sm:$0xf]
        %v936 = vld [vmem:[%s910 + $0x54] sm:$0xf]
        %v937 = vld [vmem:[%s910 + $0x58] sm:$0xf]
        %v938 = vld [vmem:[%s910 + $0x5c] sm:$0xf]
        %v939 = vld [vmem:[%s910 + $0x60] sm:$0xf]
        %v940 = vld [vmem:[%s910 + $0x64] sm:$0xf]
        %v941 = vld [vmem:[%s910 + $0x68] sm:$0xf]
        %v942 = vld [vmem:[%s910 + $0x6c] sm:$0xf]
        %v943 = vld [vmem:[%s910 + $0x70] sm:$0xf]
        %v944 = vld [vmem:[%s910 + $0x74] sm:$0xf]
        %v945 = vld [vmem:[%s910 + $0x78] sm:$0xf]
        %v946 = vld [vmem:[%s910 + $0x7c] sm:$0xf]
        %v947 = vld [vmem:[%s910 + $0x80] sm:$0xf]
        %v948 = vld [vmem:[%s910 + $0x84] sm:$0xf]
        %v949 = vld [vmem:[%s910 + $0x88] sm:$0xf]
        %v950 = vld [vmem:[%s910 + $0x8c] sm:$0xf]
        %v951 = vld [vmem:[%s910 + $0x90] sm:$0xf]
        %v952 = vld [vmem:[%s910 + $0x94] sm:$0xf]
        %v953 = vld [vmem:[%s910 + $0x98] sm:$0xf]
        %v954 = vld [vmem:[%s910 + $0x9c] sm:$0xf]
        %v955 = vld [vmem:[%s910 + $0xa0] sm:$0xf]
        %v956 = vld [vmem:[%s910 + $0xa4] sm:$0xf]
        %v957 = vld [vmem:[%s910 + $0xa8] sm:$0xf]
        %v958 = vld [vmem:[%s910 + $0xac] sm:$0xf]
        %v959 = vld [vmem:[%s910 + $0xb0] sm:$0xf]
        %v960 = vld [vmem:[%s910 + $0xb4] sm:$0xf]
        %v961 = vld [vmem:[%s910 + $0xb8] sm:$0xf]
        %v962 = vld [vmem:[%s910 + $0xbc] sm:$0xf]
        %v963 = vld [vmem:[%s910 + $0xc0] sm:$0xf]
        %v964 = vld [vmem:[%s910 + $0xc4] sm:$0xf]
        %v965 = vld [vmem:[%s910 + $0xc8] sm:$0xf]
        %v966 = vld [vmem:[%s910 + $0xcc] sm:$0xf]
        %v967 = vld [vmem:[%s910 + $0xd0] sm:$0xf]
        %v968 = vld [vmem:[%s910 + $0xd4] sm:$0xf]
        %v969 = vld [vmem:[%s910 + $0xd8] sm:$0xf]
        %v970 = vld [vmem:[%s910 + $0xdc] sm:$0xf]
        %v971 = vld [vmem:[%s910 + $0xe0] sm:$0xf]
        %v972 = vld [vmem:[%s910 + $0xe4] sm:$0xf]
        %v973 = vld [vmem:[%s910 + $0xe8] sm:$0xf]
        %v974 = vld [vmem:[%s910 + $0xec] sm:$0xf]
        %v975 = vld [vmem:[%s910 + $0xf0] sm:$0xf]
        %v976 = vld [vmem:[%s910 + $0xf4] sm:$0xf]
        %v977 = vld [vmem:[%s910 + $0xf8] sm:$0xf]
        %v978 = vld [vmem:[%s910 + $0xfc] sm:$0xf]
        %v979 = vld [vmem:[%s910 + $0x100] sm:$0xf]
        %v980 = vld [vmem:[%s910 + $0x104] sm:$0xf]
        %v981 = vld [vmem:[%s910 + $0x108] sm:$0xf]
        %v982 = vld [vmem:[%s910 + $0x10c] sm:$0xf]
        %v983 = vld [vmem:[%s910 + $0x110] sm:$0xf]
        %v984 = vld [vmem:[%s910 + $0x114] sm:$0xf]
        %v985 = vld [vmem:[%s910 + $0x118] sm:$0xf]
        %v986 = vld [vmem:[%s910 + $0x11c] sm:$0xf]
        %v987 = vld [vmem:[%s910 + $0x120] sm:$0xf]
        %v988 = vld [vmem:[%s910 + $0x124] sm:$0xf]
        %v989 = vld [vmem:[%s910 + $0x128] sm:$0xf]
        %v990 = vld [vmem:[%s910 + $0x12c] sm:$0xf]
        %v991 = vld [vmem:[%s910 + $0x130] sm:$0xf]
        %v992 = vld [vmem:[%s910 + $0x134] sm:$0xf]
        %v993 = vld [vmem:[%s910 + $0x138] sm:$0xf]
        %v994 = vld [vmem:[%s910 + $0x13c] sm:$0xf]
        %v995 = vld [vmem:[%s910 + $0x140] sm:$0xf]
        %v996 = vld [vmem:[%s910 + $0x144] sm:$0xf]
        %v997 = vld [vmem:[%s910 + $0x148] sm:$0xf]
        %v998 = vld [vmem:[%s910 + $0x14c] sm:$0xf]
        %v999 = vld [vmem:[%s910 + $0x150] sm:$0xf]
        %v1000 = vld [vmem:[%s910 + $0x154] sm:$0xf]
        %v1001 = vld [vmem:[%s910 + $0x158] sm:$0xf]
        %v1002 = vld [vmem:[%s910 + $0x15c] sm:$0xf]
        %v1003 = vld [vmem:[%s910 + $0x160] sm:$0xf]
        %v1004 = vld [vmem:[%s910 + $0x164] sm:$0xf]
        %v1005 = vld [vmem:[%s910 + $0x168] sm:$0xf]
        %v1006 = vld [vmem:[%s910 + $0x16c] sm:$0xf]
        %v1007 = vld [vmem:[%s910 + $0x170] sm:$0xf]
        %v1008 = vld [vmem:[%s910 + $0x174] sm:$0xf]
        %v1009 = vld [vmem:[%s910 + $0x178] sm:$0xf]
        %v1010 = vld [vmem:[%s910 + $0x17c] sm:$0xf]
        %v1011 = vld [vmem:[%s910 + $0x180] sm:$0xf]
        %v1012 = vld [vmem:[%s910 + $0x184] sm:$0xf]
        %v1013 = vld [vmem:[%s1] sm:$0xf]
        %v1014 = vld [vmem:[#allocation2] sm:$0x1]
        %v1016 = vperm.slane %v1014, 0
        %v1116 = vunpack.c.l.b16 %v915
        %v1117 = vunpack.c.l.b16 %v916
        %v1118 = vunpack.c.l.b16 %v917
        %v1119 = vunpack.c.l.b16 %v918
        %v1120 = vunpack.c.l.b16 %v919
        %v1121 = vunpack.c.l.b16 %v920
        %v1122 = vunpack.c.l.b16 %v921
        %v1123 = vunpack.c.l.b16 %v922
        %v1124 = vunpack.c.l.b16 %v923
        %v1125 = vunpack.c.l.b16 %v924
        %v1126 = vunpack.c.l.b16 %v925
        %v1127 = vunpack.c.l.b16 %v926
        %v1128 = vunpack.c.l.b16 %v927
        %v1129 = vunpack.c.l.b16 %v928
        %v1130 = vunpack.c.l.b16 %v929
        %v1131 = vunpack.c.l.b16 %v930
        %v1132 = vunpack.c.l.b16 %v931
        %v1133 = vunpack.c.l.b16 %v932
        %v1134 = vunpack.c.l.b16 %v933
        %v1135 = vunpack.c.l.b16 %v934
        %v1136 = vunpack.c.l.b16 %v935
        %v1137 = vunpack.c.l.b16 %v936
        %v1138 = vunpack.c.l.b16 %v937
        %v1139 = vunpack.c.l.b16 %v938
        %v1140 = vunpack.c.l.b16 %v939
        %v1141 = vunpack.c.l.b16 %v940
        %v1142 = vunpack.c.l.b16 %v941
        %v1143 = vunpack.c.l.b16 %v942
        %v1144 = vunpack.c.l.b16 %v943
        %v1145 = vunpack.c.l.b16 %v944
        %v1146 = vunpack.c.l.b16 %v945
        %v1147 = vunpack.c.l.b16 %v946
        %v1148 = vunpack.c.l.b16 %v947
        %v1149 = vunpack.c.l.b16 %v948
        %v1150 = vunpack.c.l.b16 %v949
        %v1151 = vunpack.c.l.b16 %v950
        %v1152 = vunpack.c.l.b16 %v951
        %v1153 = vunpack.c.l.b16 %v952
        %v1154 = vunpack.c.l.b16 %v953
        %v1155 = vunpack.c.l.b16 %v954
        %v1156 = vunpack.c.l.b16 %v955
        %v1157 = vunpack.c.l.b16 %v956
        %v1158 = vunpack.c.l.b16 %v957
        %v1159 = vunpack.c.l.b16 %v958
        %v1160 = vunpack.c.l.b16 %v959
        %v1161 = vunpack.c.l.b16 %v960
        %v1162 = vunpack.c.l.b16 %v961
        %v1163 = vunpack.c.l.b16 %v962
        %v1164 = vunpack.c.l.b16 %v963
        %v1165 = vunpack.c.l.b16 %v964
        %v1166 = vunpack.c.l.b16 %v965
        %v1167 = vunpack.c.l.b16 %v966
        %v1168 = vunpack.c.l.b16 %v967
        %v1169 = vunpack.c.l.b16 %v968
        %v1170 = vunpack.c.l.b16 %v969
        %v1171 = vunpack.c.l.b16 %v970
        %v1172 = vunpack.c.l.b16 %v971
        %v1173 = vunpack.c.l.b16 %v972
        %v1174 = vunpack.c.l.b16 %v973
        %v1175 = vunpack.c.l.b16 %v974
        %v1176 = vunpack.c.l.b16 %v975
        %v1177 = vunpack.c.l.b16 %v976
        %v1178 = vunpack.c.l.b16 %v977
        %v1179 = vunpack.c.l.b16 %v978
        %v1180 = vunpack.c.l.b16 %v979
        %v1181 = vunpack.c.l.b16 %v980
        %v1182 = vunpack.c.l.b16 %v981
        %v1183 = vunpack.c.l.b16 %v982
        %v1184 = vunpack.c.l.b16 %v983
        %v1185 = vunpack.c.l.b16 %v984
        %v1186 = vunpack.c.l.b16 %v985
        %v1187 = vunpack.c.l.b16 %v986
        %v1188 = vunpack.c.l.b16 %v987
        %v1189 = vunpack.c.l.b16 %v988
        %v1190 = vunpack.c.l.b16 %v989
        %v1191 = vunpack.c.l.b16 %v990
        %v1192 = vunpack.c.l.b16 %v991
        %v1193 = vunpack.c.l.b16 %v992
        %v1194 = vunpack.c.l.b16 %v993
        %v1195 = vunpack.c.l.b16 %v994
        %v1196 = vunpack.c.l.b16 %v995
        %v1197 = vunpack.c.l.b16 %v996
        %v1198 = vunpack.c.l.b16 %v997
        %v1199 = vunpack.c.l.b16 %v998
        %v1200 = vunpack.c.l.b16 %v999
        %v1201 = vunpack.c.l.b16 %v1000
        %v1202 = vunpack.c.l.b16 %v1001
        %v1203 = vunpack.c.l.b16 %v1002
        %v1204 = vunpack.c.l.b16 %v1003
        %v1205 = vunpack.c.l.b16 %v1004
        %v1206 = vunpack.c.l.b16 %v1005
        %v1207 = vunpack.c.l.b16 %v1006
        %v1208 = vunpack.c.l.b16 %v1007
        %v1209 = vunpack.c.l.b16 %v1008
        %v1210 = vunpack.c.l.b16 %v1009
        %v1211 = vunpack.c.l.b16 %v1010
        %v1212 = vunpack.c.l.b16 %v1011
        %v1213 = vunpack.c.l.b16 %v1012
        %v1214 = vpack.c.b16 %v1117, %v1116
        %v1215 = vpack.c.b16 %v1119, %v1118
        %v1216 = vpack.c.b16 %v1121, %v1120
        %v1217 = vpack.c.b16 %v1123, %v1122
        %v1218 = vpack.c.b16 %v1125, %v1124
        %v1219 = vpack.c.b16 %v1127, %v1126
        %v1220 = vpack.c.b16 %v1129, %v1128
        %v1221 = vpack.c.b16 %v1131, %v1130
        %v1222 = vpack.c.b16 %v1133, %v1132
        %v1223 = vpack.c.b16 %v1135, %v1134
        %v1224 = vpack.c.b16 %v1137, %v1136
        %v1225 = vpack.c.b16 %v1139, %v1138
        %v1226 = vpack.c.b16 %v1141, %v1140
        %v1227 = vpack.c.b16 %v1143, %v1142
        %v1228 = vpack.c.b16 %v1145, %v1144
        %v1229 = vpack.c.b16 %v1147, %v1146
        %v1230 = vpack.c.b16 %v1149, %v1148
        %v1231 = vpack.c.b16 %v1151, %v1150
        %v1232 = vpack.c.b16 %v1153, %v1152
        %v1233 = vpack.c.b16 %v1155, %v1154
        %v1234 = vpack.c.b16 %v1157, %v1156
        %v1235 = vpack.c.b16 %v1159, %v1158
        %v1236 = vpack.c.b16 %v1161, %v1160
        %v1237 = vpack.c.b16 %v1163, %v1162
        %v1238 = vpack.c.b16 %v1165, %v1164
        %v1239 = vpack.c.b16 %v1167, %v1166
        %v1240 = vpack.c.b16 %v1169, %v1168
        %v1241 = vpack.c.b16 %v1171, %v1170
        %v1242 = vpack.c.b16 %v1173, %v1172
        %v1243 = vpack.c.b16 %v1175, %v1174
        %v1244 = vpack.c.b16 %v1177, %v1176
        %v1245 = vpack.c.b16 %v1179, %v1178
        %v1246 = vpack.c.b16 %v1181, %v1180
        %v1247 = vpack.c.b16 %v1183, %v1182
        %v1248 = vpack.c.b16 %v1185, %v1184
        %v1249 = vpack.c.b16 %v1187, %v1186
        %v1250 = vpack.c.b16 %v1189, %v1188
        %v1251 = vpack.c.b16 %v1191, %v1190
        %v1252 = vpack.c.b16 %v1193, %v1192
        %v1253 = vpack.c.b16 %v1195, %v1194
        %v1254 = vpack.c.b16 %v1197, %v1196
        %v1255 = vpack.c.b16 %v1199, %v1198
        %v1256 = vpack.c.b16 %v1201, %v1200
        %v1257 = vpack.c.b16 %v1203, %v1202
        %v1258 = vpack.c.b16 %v1205, %v1204
        %v1259 = vpack.c.b16 %v1207, %v1206
        %v1260 = vpack.c.b16 %v1209, %v1208
        %v1261 = vpack.c.b16 %v1211, %v1210
        %v1262 = vpack.c.b16 %v1213, %v1212
        %vm1263 = vcmask 64512
        %v1265 = vsel %vm1263, %v1214, 0
        %v1268 = vsel %vm1263, %v1215, 0
        %v1271 = vsel %vm1263, %v1216, 0
        %v1274 = vsel %vm1263, %v1217, 0
        %v1277 = vsel %vm1263, %v1218, 0
        %v1280 = vsel %vm1263, %v1219, 0
        %v1283 = vsel %vm1263, %v1220, 0
        %v1286 = vsel %vm1263, %v1221, 0
        %v1289 = vsel %vm1263, %v1222, 0
        %v1292 = vsel %vm1263, %v1223, 0
        %v1295 = vsel %vm1263, %v1224, 0
        %v1298 = vsel %vm1263, %v1225, 0
        %v1301 = vsel %vm1263, %v1226, 0
        %v1304 = vsel %vm1263, %v1227, 0
        %v1307 = vsel %vm1263, %v1228, 0
        %v1310 = vsel %vm1263, %v1229, 0
        %v1313 = vsel %vm1263, %v1230, 0
        %v1316 = vsel %vm1263, %v1231, 0
        %v1319 = vsel %vm1263, %v1232, 0
        %v1322 = vsel %vm1263, %v1233, 0
        %v1325 = vsel %vm1263, %v1234, 0
        %v1328 = vsel %vm1263, %v1235, 0
        %v1331 = vsel %vm1263, %v1236, 0
        %v1334 = vsel %vm1263, %v1237, 0
        %v1337 = vsel %vm1263, %v1238, 0
        %v1340 = vsel %vm1263, %v1239, 0
        %v1343 = vsel %vm1263, %v1240, 0
        %v1346 = vsel %vm1263, %v1241, 0
        %v1349 = vsel %vm1263, %v1242, 0
        %v1352 = vsel %vm1263, %v1243, 0
        %v1355 = vsel %vm1263, %v1244, 0
        %v1358 = vsel %vm1263, %v1245, 0
        %v1361 = vsel %vm1263, %v1246, 0
        %v1364 = vsel %vm1263, %v1247, 0
        %v1367 = vsel %vm1263, %v1248, 0
        %v1370 = vsel %vm1263, %v1249, 0
        %v1373 = vsel %vm1263, %v1250, 0
        %v1376 = vsel %vm1263, %v1251, 0
        %v1379 = vsel %vm1263, %v1252, 0
        %v1382 = vsel %vm1263, %v1253, 0
        %v1385 = vsel %vm1263, %v1254, 0
        %v1388 = vsel %vm1263, %v1255, 0
        %v1391 = vsel %vm1263, %v1256, 0
        %v1394 = vsel %vm1263, %v1257, 0
        %v1397 = vsel %vm1263, %v1258, 0
        %v1400 = vsel %vm1263, %v1259, 0
        %v1403 = vsel %vm1263, %v1260, 0
        %v1406 = vsel %vm1263, %v1261, 0
        %v1409 = vsel %vm1263, %v1262, 0
        %vm1411 = vcmask 1043456
        %v1413 = vsel %vm1411, %v1013, 0
        %1415 = vmatpush.bf16.msra.mxu0 0
        %1416 = vmatpush.bf16.msra.mxu0 0
        %1417 = vmatpush.bf16.msra.mxu0 0
        %1418 = vmatpush.bf16.msra.mxu0 0
        %1419 = vmatpush.bf16.msra.mxu0 0
        %1420 = vmatpush.bf16.msra.mxu0 0
        %1421 = vmatpush.bf16.msra.mxu0 0
        %1422 = vmatpush.bf16.msra.mxu0 %v1413
        %1423 = vmatmul.bf16.gmra.mxu0 %v1265
        %v1424 = vpop.f32.mrf.mxu0
        %v1425 = vadd.f32 %v1016, %v1424
        %v1426 = vpop.f32.mrf.mxu0
        %v1427 = vadd.f32 %v1016, %v1426
        %1428 = vmatmul.bf16.gmra.mxu0 %v1268
        %v1429 = vpop.f32.mrf.mxu0
        %v1430 = vadd.f32 %v1016, %v1429
        %v1431 = vpop.f32.mrf.mxu0
        %v1432 = vadd.f32 %v1016, %v1431
        %1433 = vmatmul.bf16.gmra.mxu0 %v1271
        %v1434 = vpop.f32.mrf.mxu0
        %v1435 = vadd.f32 %v1016, %v1434
        %v1436 = vpop.f32.mrf.mxu0
        %v1437 = vadd.f32 %v1016, %v1436
        %1438 = vmatmul.bf16.gmra.mxu0 %v1274
        %v1439 = vpop.f32.mrf.mxu0
        %v1440 = vadd.f32 %v1016, %v1439
        %v1441 = vpop.f32.mrf.mxu0
        %v1442 = vadd.f32 %v1016, %v1441
        %1443 = vmatmul.bf16.gmra.mxu0 %v1277
        %v1444 = vpop.f32.mrf.mxu0
        %v1445 = vadd.f32 %v1016, %v1444
        %v1446 = vpop.f32.mrf.mxu0
        %v1447 = vadd.f32 %v1016, %v1446
        %1448 = vmatmul.bf16.gmra.mxu0 %v1280
        %v1449 = vpop.f32.mrf.mxu0
        %v1450 = vadd.f32 %v1016, %v1449
        %v1451 = vpop.f32.mrf.mxu0
        %v1452 = vadd.f32 %v1016, %v1451
        %1453 = vmatmul.bf16.gmra.mxu0 %v1283
        %v1454 = vpop.f32.mrf.mxu0
        %v1455 = vadd.f32 %v1016, %v1454
        %v1456 = vpop.f32.mrf.mxu0
        %v1457 = vadd.f32 %v1016, %v1456
        %1458 = vmatmul.bf16.gmra.mxu0 %v1286
        %v1459 = vpop.f32.mrf.mxu0
        %v1460 = vadd.f32 %v1016, %v1459
        %v1461 = vpop.f32.mrf.mxu0
        %v1462 = vadd.f32 %v1016, %v1461
        %1463 = vmatmul.bf16.gmra.mxu0 %v1289
        %v1464 = vpop.f32.mrf.mxu0
        %v1465 = vadd.f32 %v1016, %v1464
        %v1466 = vpop.f32.mrf.mxu0
        %v1467 = vadd.f32 %v1016, %v1466
        %1468 = vmatmul.bf16.gmra.mxu0 %v1292
        %v1469 = vpop.f32.mrf.mxu0
        %v1470 = vadd.f32 %v1016, %v1469
        %v1471 = vpop.f32.mrf.mxu0
        %v1472 = vadd.f32 %v1016, %v1471
        %1473 = vmatmul.bf16.gmra.mxu0 %v1295
        %v1474 = vpop.f32.mrf.mxu0
        %v1475 = vadd.f32 %v1016, %v1474
        %v1476 = vpop.f32.mrf.mxu0
        %v1477 = vadd.f32 %v1016, %v1476
        %1478 = vmatmul.bf16.gmra.mxu0 %v1298
        %v1479 = vpop.f32.mrf.mxu0
        %v1480 = vadd.f32 %v1016, %v1479
        %v1481 = vpop.f32.mrf.mxu0
        %v1482 = vadd.f32 %v1016, %v1481
        %1483 = vmatmul.bf16.gmra.mxu0 %v1301
        %v1484 = vpop.f32.mrf.mxu0
        %v1485 = vadd.f32 %v1016, %v1484
        %v1486 = vpop.f32.mrf.mxu0
        %v1487 = vadd.f32 %v1016, %v1486
        %1488 = vmatmul.bf16.gmra.mxu0 %v1304
        %v1489 = vpop.f32.mrf.mxu0
        %v1490 = vadd.f32 %v1016, %v1489
        %v1491 = vpop.f32.mrf.mxu0
        %v1492 = vadd.f32 %v1016, %v1491
        %1493 = vmatmul.bf16.gmra.mxu0 %v1307
        %v1494 = vpop.f32.mrf.mxu0
        %v1495 = vadd.f32 %v1016, %v1494
        %v1496 = vpop.f32.mrf.mxu0
        %v1497 = vadd.f32 %v1016, %v1496
        %1498 = vmatmul.bf16.gmra.mxu0 %v1310
        %v1499 = vpop.f32.mrf.mxu0
        %v1500 = vadd.f32 %v1016, %v1499
        %v1501 = vpop.f32.mrf.mxu0
        %v1502 = vadd.f32 %v1016, %v1501
        %1503 = vmatmul.bf16.gmra.mxu0 %v1313
        %v1504 = vpop.f32.mrf.mxu0
        %v1505 = vadd.f32 %v1016, %v1504
        %v1506 = vpop.f32.mrf.mxu0
        %v1507 = vadd.f32 %v1016, %v1506
        %1508 = vmatmul.bf16.gmra.mxu0 %v1316
        %v1509 = vpop.f32.mrf.mxu0
        %v1510 = vadd.f32 %v1016, %v1509
        %v1511 = vpop.f32.mrf.mxu0
        %v1512 = vadd.f32 %v1016, %v1511
        %1513 = vmatmul.bf16.gmra.mxu0 %v1319
        %v1514 = vpop.f32.mrf.mxu0
        %v1515 = vadd.f32 %v1016, %v1514
        %v1516 = vpop.f32.mrf.mxu0
        %v1517 = vadd.f32 %v1016, %v1516
        %1518 = vmatmul.bf16.gmra.mxu0 %v1322
        %v1519 = vpop.f32.mrf.mxu0
        %v1520 = vadd.f32 %v1016, %v1519
        %v1521 = vpop.f32.mrf.mxu0
        %v1522 = vadd.f32 %v1016, %v1521
        %1523 = vmatmul.bf16.gmra.mxu0 %v1325
        %v1524 = vpop.f32.mrf.mxu0
        %v1525 = vadd.f32 %v1016, %v1524
        %v1526 = vpop.f32.mrf.mxu0
        %v1527 = vadd.f32 %v1016, %v1526
        %1528 = vmatmul.bf16.gmra.mxu0 %v1328
        %v1529 = vpop.f32.mrf.mxu0
        %v1530 = vadd.f32 %v1016, %v1529
        %v1531 = vpop.f32.mrf.mxu0
        %v1532 = vadd.f32 %v1016, %v1531
        %1533 = vmatmul.bf16.gmra.mxu0 %v1331
        %v1534 = vpop.f32.mrf.mxu0
        %v1535 = vadd.f32 %v1016, %v1534
        %v1536 = vpop.f32.mrf.mxu0
        %v1537 = vadd.f32 %v1016, %v1536
        %1538 = vmatmul.bf16.gmra.mxu0 %v1334
        %v1539 = vpop.f32.mrf.mxu0
        %v1540 = vadd.f32 %v1016, %v1539
        %v1541 = vpop.f32.mrf.mxu0
        %v1542 = vadd.f32 %v1016, %v1541
        %1543 = vmatmul.bf16.gmra.mxu0 %v1337
        %v1544 = vpop.f32.mrf.mxu0
        %v1545 = vadd.f32 %v1016, %v1544
        %v1546 = vpop.f32.mrf.mxu0
        %v1547 = vadd.f32 %v1016, %v1546
        %1548 = vmatmul.bf16.gmra.mxu0 %v1340
        %v1549 = vpop.f32.mrf.mxu0
        %v1550 = vadd.f32 %v1016, %v1549
        %v1551 = vpop.f32.mrf.mxu0
        %v1552 = vadd.f32 %v1016, %v1551
        %1553 = vmatmul.bf16.gmra.mxu0 %v1343
        %v1554 = vpop.f32.mrf.mxu0
        %v1555 = vadd.f32 %v1016, %v1554
        %v1556 = vpop.f32.mrf.mxu0
        %v1557 = vadd.f32 %v1016, %v1556
        %1558 = vmatmul.bf16.gmra.mxu0 %v1346
        %v1559 = vpop.f32.mrf.mxu0
        %v1560 = vadd.f32 %v1016, %v1559
        %v1561 = vpop.f32.mrf.mxu0
        %v1562 = vadd.f32 %v1016, %v1561
        %1563 = vmatmul.bf16.gmra.mxu0 %v1349
        %v1564 = vpop.f32.mrf.mxu0
        %v1565 = vadd.f32 %v1016, %v1564
        %v1566 = vpop.f32.mrf.mxu0
        %v1567 = vadd.f32 %v1016, %v1566
        %1568 = vmatmul.bf16.gmra.mxu0 %v1352
        %v1569 = vpop.f32.mrf.mxu0
        %v1570 = vadd.f32 %v1016, %v1569
        %v1571 = vpop.f32.mrf.mxu0
        %v1572 = vadd.f32 %v1016, %v1571
        %1573 = vmatmul.bf16.gmra.mxu0 %v1355
        %v1574 = vpop.f32.mrf.mxu0
        %v1575 = vadd.f32 %v1016, %v1574
        %v1576 = vpop.f32.mrf.mxu0
        %v1577 = vadd.f32 %v1016, %v1576
        %1578 = vmatmul.bf16.gmra.mxu0 %v1358
        %v1579 = vpop.f32.mrf.mxu0
        %v1580 = vadd.f32 %v1016, %v1579
        %v1581 = vpop.f32.mrf.mxu0
        %v1582 = vadd.f32 %v1016, %v1581
        %1583 = vmatmul.bf16.gmra.mxu0 %v1361
        %v1584 = vpop.f32.mrf.mxu0
        %v1585 = vadd.f32 %v1016, %v1584
        %v1586 = vpop.f32.mrf.mxu0
        %v1587 = vadd.f32 %v1016, %v1586
        %1588 = vmatmul.bf16.gmra.mxu0 %v1364
        %v1589 = vpop.f32.mrf.mxu0
        %v1590 = vadd.f32 %v1016, %v1589
        %v1591 = vpop.f32.mrf.mxu0
        %v1592 = vadd.f32 %v1016, %v1591
        %1593 = vmatmul.bf16.gmra.mxu0 %v1367
        %v1594 = vpop.f32.mrf.mxu0
        %v1595 = vadd.f32 %v1016, %v1594
        %v1596 = vpop.f32.mrf.mxu0
        %v1597 = vadd.f32 %v1016, %v1596
        %1598 = vmatmul.bf16.gmra.mxu0 %v1370
        %v1599 = vpop.f32.mrf.mxu0
        %v1600 = vadd.f32 %v1016, %v1599
        %v1601 = vpop.f32.mrf.mxu0
        %v1602 = vadd.f32 %v1016, %v1601
        %1603 = vmatmul.bf16.gmra.mxu0 %v1373
        %v1604 = vpop.f32.mrf.mxu0
        %v1605 = vadd.f32 %v1016, %v1604
        %v1606 = vpop.f32.mrf.mxu0
        %v1607 = vadd.f32 %v1016, %v1606
        %1608 = vmatmul.bf16.gmra.mxu0 %v1376
        %v1609 = vpop.f32.mrf.mxu0
        %v1610 = vadd.f32 %v1016, %v1609
        %v1611 = vpop.f32.mrf.mxu0
        %v1612 = vadd.f32 %v1016, %v1611
        %1613 = vmatmul.bf16.gmra.mxu0 %v1379
        %v1614 = vpop.f32.mrf.mxu0
        %v1615 = vadd.f32 %v1016, %v1614
        %v1616 = vpop.f32.mrf.mxu0
        %v1617 = vadd.f32 %v1016, %v1616
        %1618 = vmatmul.bf16.gmra.mxu0 %v1382
        %v1619 = vpop.f32.mrf.mxu0
        %v1620 = vadd.f32 %v1016, %v1619
        %v1621 = vpop.f32.mrf.mxu0
        %v1622 = vadd.f32 %v1016, %v1621
        %1623 = vmatmul.bf16.gmra.mxu0 %v1385
        %v1624 = vpop.f32.mrf.mxu0
        %v1625 = vadd.f32 %v1016, %v1624
        %v1626 = vpop.f32.mrf.mxu0
        %v1627 = vadd.f32 %v1016, %v1626
        %1628 = vmatmul.bf16.gmra.mxu0 %v1388
        %v1629 = vpop.f32.mrf.mxu0
        %v1630 = vadd.f32 %v1016, %v1629
        %v1631 = vpop.f32.mrf.mxu0
        %v1632 = vadd.f32 %v1016, %v1631
        %1633 = vmatmul.bf16.gmra.mxu0 %v1391
        %v1634 = vpop.f32.mrf.mxu0
        %v1635 = vadd.f32 %v1016, %v1634
        %v1636 = vpop.f32.mrf.mxu0
        %v1637 = vadd.f32 %v1016, %v1636
        %1638 = vmatmul.bf16.gmra.mxu0 %v1394
        %v1639 = vpop.f32.mrf.mxu0
        %v1640 = vadd.f32 %v1016, %v1639
        %v1641 = vpop.f32.mrf.mxu0
        %v1642 = vadd.f32 %v1016, %v1641
        %1643 = vmatmul.bf16.gmra.mxu0 %v1397
        %v1644 = vpop.f32.mrf.mxu0
        %v1645 = vadd.f32 %v1016, %v1644
        %v1646 = vpop.f32.mrf.mxu0
        %v1647 = vadd.f32 %v1016, %v1646
        %1648 = vmatmul.bf16.gmra.mxu0 %v1400
        %v1649 = vpop.f32.mrf.mxu0
        %v1650 = vadd.f32 %v1016, %v1649
        %v1651 = vpop.f32.mrf.mxu0
        %v1652 = vadd.f32 %v1016, %v1651
        %1653 = vmatmul.bf16.gmra.mxu0 %v1403
        %v1654 = vpop.f32.mrf.mxu0
        %v1655 = vadd.f32 %v1016, %v1654
        %v1656 = vpop.f32.mrf.mxu0
        %v1657 = vadd.f32 %v1016, %v1656
        %1658 = vmatmul.bf16.gmra.mxu0 %v1406
        %v1659 = vpop.f32.mrf.mxu0
        %v1660 = vadd.f32 %v1016, %v1659
        %v1661 = vpop.f32.mrf.mxu0
        %v1662 = vadd.f32 %v1016, %v1661
        %1663 = vmatmul.bf16.gmra.mxu0 %v1409
        %v1664 = vpop.f32.mrf.mxu0
        %v1665 = vadd.f32 %v1016, %v1664
        %v1666 = vpop.f32.mrf.mxu0
        %v1667 = vadd.f32 %v1016, %v1666
        %1668 = vdwg.mxu0
        %v1669 = vmax.f32 %v1425, 0.0
        %v1670 = vmax.f32 %v1427, 0.0
        %v1671 = vmax.f32 %v1430, 0.0
        %v1672 = vmax.f32 %v1432, 0.0
        %v1673 = vmax.f32 %v1435, 0.0
        %v1674 = vmax.f32 %v1437, 0.0
        %v1675 = vmax.f32 %v1440, 0.0
        %v1676 = vmax.f32 %v1442, 0.0
        %v1677 = vmax.f32 %v1445, 0.0
        %v1678 = vmax.f32 %v1447, 0.0
        %v1679 = vmax.f32 %v1450, 0.0
        %v1680 = vmax.f32 %v1452, 0.0
        %v1681 = vmax.f32 %v1455, 0.0
        %v1682 = vmax.f32 %v1457, 0.0
        %v1683 = vmax.f32 %v1460, 0.0
        %v1684 = vmax.f32 %v1462, 0.0
        %v1685 = vmax.f32 %v1465, 0.0
        %v1686 = vmax.f32 %v1467, 0.0
        %v1687 = vmax.f32 %v1470, 0.0
        %v1688 = vmax.f32 %v1472, 0.0
        %v1689 = vmax.f32 %v1475, 0.0
        %v1690 = vmax.f32 %v1477, 0.0
        %v1691 = vmax.f32 %v1480, 0.0
        %v1692 = vmax.f32 %v1482, 0.0
        %v1693 = vmax.f32 %v1485, 0.0
        %v1694 = vmax.f32 %v1487, 0.0
        %v1695 = vmax.f32 %v1490, 0.0
        %v1696 = vmax.f32 %v1492, 0.0
        %v1697 = vmax.f32 %v1495, 0.0
        %v1698 = vmax.f32 %v1497, 0.0
        %v1699 = vmax.f32 %v1500, 0.0
        %v1700 = vmax.f32 %v1502, 0.0
        %v1701 = vmax.f32 %v1505, 0.0
        %v1702 = vmax.f32 %v1507, 0.0
        %v1703 = vmax.f32 %v1510, 0.0
        %v1704 = vmax.f32 %v1512, 0.0
        %v1705 = vmax.f32 %v1515, 0.0
        %v1706 = vmax.f32 %v1517, 0.0
        %v1707 = vmax.f32 %v1520, 0.0
        %v1708 = vmax.f32 %v1522, 0.0
        %v1709 = vmax.f32 %v1525, 0.0
        %v1710 = vmax.f32 %v1527, 0.0
        %v1711 = vmax.f32 %v1530, 0.0
        %v1712 = vmax.f32 %v1532, 0.0
        %v1713 = vmax.f32 %v1535, 0.0
        %v1714 = vmax.f32 %v1537, 0.0
        %v1715 = vmax.f32 %v1540, 0.0
        %v1716 = vmax.f32 %v1542, 0.0
        %v1717 = vmax.f32 %v1545, 0.0
        %v1718 = vmax.f32 %v1547, 0.0
        %v1719 = vmax.f32 %v1550, 0.0
        %v1720 = vmax.f32 %v1552, 0.0
        %v1721 = vmax.f32 %v1555, 0.0
        %v1722 = vmax.f32 %v1557, 0.0
        %v1723 = vmax.f32 %v1560, 0.0
        %v1724 = vmax.f32 %v1562, 0.0
        %v1725 = vmax.f32 %v1565, 0.0
        %v1726 = vmax.f32 %v1567, 0.0
        %v1727 = vmax.f32 %v1570, 0.0
        %v1728 = vmax.f32 %v1572, 0.0
        %v1729 = vmax.f32 %v1575, 0.0
        %v1730 = vmax.f32 %v1577, 0.0
        %v1731 = vmax.f32 %v1580, 0.0
        %v1732 = vmax.f32 %v1582, 0.0
        %v1733 = vmax.f32 %v1585, 0.0
        %v1734 = vmax.f32 %v1587, 0.0
        %v1735 = vmax.f32 %v1590, 0.0
        %v1736 = vmax.f32 %v1592, 0.0
        %v1737 = vmax.f32 %v1595, 0.0
        %v1738 = vmax.f32 %v1597, 0.0
        %v1739 = vmax.f32 %v1600, 0.0
        %v1740 = vmax.f32 %v1602, 0.0
        %v1741 = vmax.f32 %v1605, 0.0
        %v1742 = vmax.f32 %v1607, 0.0
        %v1743 = vmax.f32 %v1610, 0.0
        %v1744 = vmax.f32 %v1612, 0.0
        %v1745 = vmax.f32 %v1615, 0.0
        %v1746 = vmax.f32 %v1617, 0.0
        %v1747 = vmax.f32 %v1620, 0.0
        %v1748 = vmax.f32 %v1622, 0.0
        %v1749 = vmax.f32 %v1625, 0.0
        %v1750 = vmax.f32 %v1627, 0.0
        %v1751 = vmax.f32 %v1630, 0.0
        %v1752 = vmax.f32 %v1632, 0.0
        %v1753 = vmax.f32 %v1635, 0.0
        %v1754 = vmax.f32 %v1637, 0.0
        %v1755 = vmax.f32 %v1640, 0.0
        %v1756 = vmax.f32 %v1642, 0.0
        %v1757 = vmax.f32 %v1645, 0.0
        %v1758 = vmax.f32 %v1647, 0.0
        %v1759 = vmax.f32 %v1650, 0.0
        %v1760 = vmax.f32 %v1652, 0.0
        %v1761 = vmax.f32 %v1655, 0.0
        %v1762 = vmax.f32 %v1657, 0.0
        %v1763 = vmax.f32 %v1660, 0.0
        %v1764 = vmax.f32 %v1662, 0.0
        %v1765 = vmax.f32 %v1665, 0.0
        %v1766 = vmax.f32 %v1667, 0.0
        %v1767 = vpack.c.bf16 %v1670, %v1669
        %v1768 = vpack.c.bf16 %v1672, %v1671
        %v1769 = vpack.c.bf16 %v1674, %v1673
        %v1770 = vpack.c.bf16 %v1676, %v1675
        %v1771 = vpack.c.bf16 %v1678, %v1677
        %v1772 = vpack.c.bf16 %v1680, %v1679
        %v1773 = vpack.c.bf16 %v1682, %v1681
        %v1774 = vpack.c.bf16 %v1684, %v1683
        %v1775 = vpack.c.bf16 %v1686, %v1685
        %v1776 = vpack.c.bf16 %v1688, %v1687
        %v1777 = vpack.c.bf16 %v1690, %v1689
        %v1778 = vpack.c.bf16 %v1692, %v1691
        %v1779 = vpack.c.bf16 %v1694, %v1693
        %v1780 = vpack.c.bf16 %v1696, %v1695
        %v1781 = vpack.c.bf16 %v1698, %v1697
        %v1782 = vpack.c.bf16 %v1700, %v1699
        %v1783 = vpack.c.bf16 %v1702, %v1701
        %v1784 = vpack.c.bf16 %v1704, %v1703
        %v1785 = vpack.c.bf16 %v1706, %v1705
        %v1786 = vpack.c.bf16 %v1708, %v1707
        %v1787 = vpack.c.bf16 %v1710, %v1709
        %v1788 = vpack.c.bf16 %v1712, %v1711
        %v1789 = vpack.c.bf16 %v1714, %v1713
        %v1790 = vpack.c.bf16 %v1716, %v1715
        %v1791 = vpack.c.bf16 %v1718, %v1717
        %v1792 = vpack.c.bf16 %v1720, %v1719
        %v1793 = vpack.c.bf16 %v1722, %v1721
        %v1794 = vpack.c.bf16 %v1724, %v1723
        %v1795 = vpack.c.bf16 %v1726, %v1725
        %v1796 = vpack.c.bf16 %v1728, %v1727
        %v1797 = vpack.c.bf16 %v1730, %v1729
        %v1798 = vpack.c.bf16 %v1732, %v1731
        %v1799 = vpack.c.bf16 %v1734, %v1733
        %v1800 = vpack.c.bf16 %v1736, %v1735
        %v1801 = vpack.c.bf16 %v1738, %v1737
        %v1802 = vpack.c.bf16 %v1740, %v1739
        %v1803 = vpack.c.bf16 %v1742, %v1741
        %v1804 = vpack.c.bf16 %v1744, %v1743
        %v1805 = vpack.c.bf16 %v1746, %v1745
        %v1806 = vpack.c.bf16 %v1748, %v1747
        %v1807 = vpack.c.bf16 %v1750, %v1749
        %v1808 = vpack.c.bf16 %v1752, %v1751
        %v1809 = vpack.c.bf16 %v1754, %v1753
        %v1810 = vpack.c.bf16 %v1756, %v1755
        %v1811 = vpack.c.bf16 %v1758, %v1757
        %v1812 = vpack.c.bf16 %v1760, %v1759
        %v1813 = vpack.c.bf16 %v1762, %v1761
        %v1814 = vpack.c.bf16 %v1764, %v1763
        %v1815 = vpack.c.bf16 %v1766, %v1765
        %v1816 = vld [vmem:[#allocation5] sm:$0xff]
        %v1817 = vld [vmem:[#allocation5 + $0x8] sm:$0xff]
        %v1818 = vld [vmem:[#allocation5 + $0x10] sm:$0xff]
        %v1819 = vld [vmem:[#allocation5 + $0x18] sm:$0xff]
        %v1820 = vld [vmem:[#allocation5 + $0x20] sm:$0xff]
        %v1821 = vld [vmem:[#allocation5 + $0x28] sm:$0xff]
        %v1822 = vld [vmem:[#allocation5 + $0x30] sm:$0xff]
        %v1823 = vld [vmem:[#allocation5 + $0x38] sm:$0xff]
        %v1824 = vld [vmem:[%s4] sm:$0x3]
        %v1826 = vperm.slane %v1824, 0
        %v1827 = vperm.slane %v1824, 1
        %v1838 = vunpack.c.l.b16 %v1816
        %v1839 = vunpack.c.h.b16 %v1816
        %v1840 = vunpack.c.l.b16 %v1817
        %v1841 = vunpack.c.h.b16 %v1817
        %v1842 = vunpack.c.l.b16 %v1818
        %v1843 = vunpack.c.h.b16 %v1818
        %v1844 = vunpack.c.l.b16 %v1819
        %v1845 = vunpack.c.h.b16 %v1819
        %v1846 = vunpack.c.l.b16 %v1820
        %v1847 = vunpack.c.h.b16 %v1820
        %v1848 = vunpack.c.l.b16 %v1821
        %v1849 = vunpack.c.h.b16 %v1821
        %v1850 = vunpack.c.l.b16 %v1822
        %v1851 = vunpack.c.h.b16 %v1822
        %v1852 = vunpack.c.l.b16 %v1823
        %v1853 = vunpack.c.h.b16 %v1823
        %v1854 = vpack.c.b16 %v1840, %v1838
        %v1855 = vpack.c.b16 %v1841, %v1839
        %v1856 = vpack.c.b16 %v1844, %v1842
        %v1857 = vpack.c.b16 %v1845, %v1843
        %v1858 = vpack.c.b16 %v1848, %v1846
        %v1859 = vpack.c.b16 %v1849, %v1847
        %v1860 = vpack.c.b16 %v1852, %v1850
        %v1861 = vpack.c.b16 %v1853, %v1851
        %vm1870 = vcmask 523264
        %v1872 = vsel %vm1870, %v1767, 0
        %v1875 = vsel %vm1870, %v1768, 0
        %v1878 = vsel %vm1870, %v1769, 0
        %v1881 = vsel %vm1870, %v1770, 0
        %v1884 = vsel %vm1870, %v1771, 0
        %v1887 = vsel %vm1870, %v1772, 0
        %v1890 = vsel %vm1870, %v1773, 0
        %v1893 = vsel %vm1870, %v1774, 0
        %v1896 = vsel %vm1870, %v1775, 0
        %v1899 = vsel %vm1870, %v1776, 0
        %v1902 = vsel %vm1870, %v1777, 0
        %v1905 = vsel %vm1870, %v1778, 0
        %v1908 = vsel %vm1870, %v1779, 0
        %v1911 = vsel %vm1870, %v1780, 0
        %v1914 = vsel %vm1870, %v1781, 0
        %v1917 = vsel %vm1870, %v1782, 0
        %v1920 = vsel %vm1870, %v1783, 0
        %v1923 = vsel %vm1870, %v1784, 0
        %v1926 = vsel %vm1870, %v1785, 0
        %v1929 = vsel %vm1870, %v1786, 0
        %v1932 = vsel %vm1870, %v1787, 0
        %v1935 = vsel %vm1870, %v1788, 0
        %v1938 = vsel %vm1870, %v1789, 0
        %v1941 = vsel %vm1870, %v1790, 0
        %v1944 = vsel %vm1870, %v1791, 0
        %v1947 = vsel %vm1870, %v1792, 0
        %v1950 = vsel %vm1870, %v1793, 0
        %v1953 = vsel %vm1870, %v1794, 0
        %v1956 = vsel %vm1870, %v1795, 0
        %v1959 = vsel %vm1870, %v1796, 0
        %v1962 = vsel %vm1870, %v1797, 0
        %v1965 = vsel %vm1870, %v1798, 0
        %v1968 = vsel %vm1870, %v1799, 0
        %v1971 = vsel %vm1870, %v1800, 0
        %v1974 = vsel %vm1870, %v1801, 0
        %v1977 = vsel %vm1870, %v1802, 0
        %v1980 = vsel %vm1870, %v1803, 0
        %v1983 = vsel %vm1870, %v1804, 0
        %v1986 = vsel %vm1870, %v1805, 0
        %v1989 = vsel %vm1870, %v1806, 0
        %v1992 = vsel %vm1870, %v1807, 0
        %v1995 = vsel %vm1870, %v1808, 0
        %v1998 = vsel %vm1870, %v1809, 0
        %v2001 = vsel %vm1870, %v1810, 0
        %v2004 = vsel %vm1870, %v1811, 0
        %v2007 = vsel %vm1870, %v1812, 0
        %v2010 = vsel %vm1870, %v1813, 0
        %v2013 = vsel %vm1870, %v1814, 0
        %v2016 = vsel %vm1870, %v1815, 0
        %2018 = vmatpush.bf16.msra.mxu0 0
        %2019 = vmatpush.bf16.msra.mxu0 0
        %2020 = vmatpush.bf16.msra.mxu0 0
        %2021 = vmatpush.bf16.msra.mxu0 0
        %2022 = vmatpush.bf16.msra.mxu0 %v1860
        %2023 = vmatpush.bf16.msra.mxu0 %v1858
        %2024 = vmatpush.bf16.msra.mxu0 %v1856
        %2025 = vmatpush.bf16.msra.mxu0 %v1854
        %2026 = vmatmul.bf16.gmra.mxu0 %v1872
        %v2027 = vpop.f32.mrf.mxu0
        %v2028 = vadd.f32 %v1826, %v2027
        %v2029 = vpop.f32.mrf.mxu0
        %v2030 = vadd.f32 %v1826, %v2029
        %2031 = vmatmul.bf16.gmra.mxu0 %v1875
        %v2032 = vpop.f32.mrf.mxu0
        %v2033 = vadd.f32 %v1826, %v2032
        %v2034 = vpop.f32.mrf.mxu0
        %v2035 = vadd.f32 %v1826, %v2034
        %2036 = vmatmul.bf16.gmra.mxu0 %v1878
        %v2037 = vpop.f32.mrf.mxu0
        %v2038 = vadd.f32 %v1826, %v2037
        %v2039 = vpop.f32.mrf.mxu0
        %v2040 = vadd.f32 %v1826, %v2039
        %2041 = vmatmul.bf16.gmra.mxu0 %v1881
        %v2042 = vpop.f32.mrf.mxu0
        %v2043 = vadd.f32 %v1826, %v2042
        %v2044 = vpop.f32.mrf.mxu0
        %v2045 = vadd.f32 %v1826, %v2044
        %2046 = vmatmul.bf16.gmra.mxu0 %v1884
        %v2047 = vpop.f32.mrf.mxu0
        %v2048 = vadd.f32 %v1826, %v2047
        %v2049 = vpop.f32.mrf.mxu0
        %v2050 = vadd.f32 %v1826, %v2049
        %2051 = vmatmul.bf16.gmra.mxu0 %v1887
        %v2052 = vpop.f32.mrf.mxu0
        %v2053 = vadd.f32 %v1826, %v2052
        %v2054 = vpop.f32.mrf.mxu0
        %v2055 = vadd.f32 %v1826, %v2054
        %2056 = vmatmul.bf16.gmra.mxu0 %v1890
        %v2057 = vpop.f32.mrf.mxu0
        %v2058 = vadd.f32 %v1826, %v2057
        %v2059 = vpop.f32.mrf.mxu0
        %v2060 = vadd.f32 %v1826, %v2059
        %2061 = vmatmul.bf16.gmra.mxu0 %v1893
        %v2062 = vpop.f32.mrf.mxu0
        %v2063 = vadd.f32 %v1826, %v2062
        %v2064 = vpop.f32.mrf.mxu0
        %v2065 = vadd.f32 %v1826, %v2064
        %2066 = vmatmul.bf16.gmra.mxu0 %v1896
        %v2067 = vpop.f32.mrf.mxu0
        %v2068 = vadd.f32 %v1826, %v2067
        %v2069 = vpop.f32.mrf.mxu0
        %v2070 = vadd.f32 %v1826, %v2069
        %2071 = vmatmul.bf16.gmra.mxu0 %v1899
        %v2072 = vpop.f32.mrf.mxu0
        %v2073 = vadd.f32 %v1826, %v2072
        %v2074 = vpop.f32.mrf.mxu0
        %v2075 = vadd.f32 %v1826, %v2074
        %2076 = vmatmul.bf16.gmra.mxu0 %v1902
        %v2077 = vpop.f32.mrf.mxu0
        %v2078 = vadd.f32 %v1826, %v2077
        %v2079 = vpop.f32.mrf.mxu0
        %v2080 = vadd.f32 %v1826, %v2079
        %2081 = vmatmul.bf16.gmra.mxu0 %v1905
        %v2082 = vpop.f32.mrf.mxu0
        %v2083 = vadd.f32 %v1826, %v2082
        %v2084 = vpop.f32.mrf.mxu0
        %v2085 = vadd.f32 %v1826, %v2084
        %2086 = vmatmul.bf16.gmra.mxu0 %v1908
        %v2087 = vpop.f32.mrf.mxu0
        %v2088 = vadd.f32 %v1826, %v2087
        %v2089 = vpop.f32.mrf.mxu0
        %v2090 = vadd.f32 %v1826, %v2089
        %2091 = vmatmul.bf16.gmra.mxu0 %v1911
        %v2092 = vpop.f32.mrf.mxu0
        %v2093 = vadd.f32 %v1826, %v2092
        %v2094 = vpop.f32.mrf.mxu0
        %v2095 = vadd.f32 %v1826, %v2094
        %2096 = vmatmul.bf16.gmra.mxu0 %v1914
        %v2097 = vpop.f32.mrf.mxu0
        %v2098 = vadd.f32 %v1826, %v2097
        %v2099 = vpop.f32.mrf.mxu0
        %v2100 = vadd.f32 %v1826, %v2099
        %2101 = vmatmul.bf16.gmra.mxu0 %v1917
        %v2102 = vpop.f32.mrf.mxu0
        %v2103 = vadd.f32 %v1826, %v2102
        %v2104 = vpop.f32.mrf.mxu0
        %v2105 = vadd.f32 %v1826, %v2104
        %2106 = vmatmul.bf16.gmra.mxu0 %v1920
        %v2107 = vpop.f32.mrf.mxu0
        %v2108 = vadd.f32 %v1826, %v2107
        %v2109 = vpop.f32.mrf.mxu0
        %v2110 = vadd.f32 %v1826, %v2109
        %2111 = vmatmul.bf16.gmra.mxu0 %v1923
        %v2112 = vpop.f32.mrf.mxu0
        %v2113 = vadd.f32 %v1826, %v2112
        %v2114 = vpop.f32.mrf.mxu0
        %v2115 = vadd.f32 %v1826, %v2114
        %2116 = vmatmul.bf16.gmra.mxu0 %v1926
        %v2117 = vpop.f32.mrf.mxu0
        %v2118 = vadd.f32 %v1826, %v2117
        %v2119 = vpop.f32.mrf.mxu0
        %v2120 = vadd.f32 %v1826, %v2119
        %2121 = vmatmul.bf16.gmra.mxu0 %v1929
        %v2122 = vpop.f32.mrf.mxu0
        %v2123 = vadd.f32 %v1826, %v2122
        %v2124 = vpop.f32.mrf.mxu0
        %v2125 = vadd.f32 %v1826, %v2124
        %2126 = vmatmul.bf16.gmra.mxu0 %v1932
        %v2127 = vpop.f32.mrf.mxu0
        %v2128 = vadd.f32 %v1826, %v2127
        %v2129 = vpop.f32.mrf.mxu0
        %v2130 = vadd.f32 %v1826, %v2129
        %2131 = vmatmul.bf16.gmra.mxu0 %v1935
        %v2132 = vpop.f32.mrf.mxu0
        %v2133 = vadd.f32 %v1826, %v2132
        %v2134 = vpop.f32.mrf.mxu0
        %v2135 = vadd.f32 %v1826, %v2134
        %2136 = vmatmul.bf16.gmra.mxu0 %v1938
        %v2137 = vpop.f32.mrf.mxu0
        %v2138 = vadd.f32 %v1826, %v2137
        %v2139 = vpop.f32.mrf.mxu0
        %v2140 = vadd.f32 %v1826, %v2139
        %2141 = vmatmul.bf16.gmra.mxu0 %v1941
        %v2142 = vpop.f32.mrf.mxu0
        %v2143 = vadd.f32 %v1826, %v2142
        %v2144 = vpop.f32.mrf.mxu0
        %v2145 = vadd.f32 %v1826, %v2144
        %2146 = vmatmul.bf16.gmra.mxu0 %v1944
        %v2147 = vpop.f32.mrf.mxu0
        %v2148 = vadd.f32 %v1826, %v2147
        %v2149 = vpop.f32.mrf.mxu0
        %v2150 = vadd.f32 %v1826, %v2149
        %2151 = vmatmul.bf16.gmra.mxu0 %v1947
        %v2152 = vpop.f32.mrf.mxu0
        %v2153 = vadd.f32 %v1826, %v2152
        %v2154 = vpop.f32.mrf.mxu0
        %v2155 = vadd.f32 %v1826, %v2154
        %2156 = vmatmul.bf16.gmra.mxu0 %v1950
        %v2157 = vpop.f32.mrf.mxu0
        %v2158 = vadd.f32 %v1826, %v2157
        %v2159 = vpop.f32.mrf.mxu0
        %v2160 = vadd.f32 %v1826, %v2159
        %2161 = vmatmul.bf16.gmra.mxu0 %v1953
        %v2162 = vpop.f32.mrf.mxu0
        %v2163 = vadd.f32 %v1826, %v2162
        %v2164 = vpop.f32.mrf.mxu0
        %v2165 = vadd.f32 %v1826, %v2164
        %2166 = vmatmul.bf16.gmra.mxu0 %v1956
        %v2167 = vpop.f32.mrf.mxu0
        %v2168 = vadd.f32 %v1826, %v2167
        %v2169 = vpop.f32.mrf.mxu0
        %v2170 = vadd.f32 %v1826, %v2169
        %2171 = vmatmul.bf16.gmra.mxu0 %v1959
        %v2172 = vpop.f32.mrf.mxu0
        %v2173 = vadd.f32 %v1826, %v2172
        %v2174 = vpop.f32.mrf.mxu0
        %v2175 = vadd.f32 %v1826, %v2174
        %2176 = vmatmul.bf16.gmra.mxu0 %v1962
        %v2177 = vpop.f32.mrf.mxu0
        %v2178 = vadd.f32 %v1826, %v2177
        %v2179 = vpop.f32.mrf.mxu0
        %v2180 = vadd.f32 %v1826, %v2179
        %2181 = vmatmul.bf16.gmra.mxu0 %v1965
        %v2182 = vpop.f32.mrf.mxu0
        %v2183 = vadd.f32 %v1826, %v2182
        %v2184 = vpop.f32.mrf.mxu0
        %v2185 = vadd.f32 %v1826, %v2184
        %2186 = vmatmul.bf16.gmra.mxu0 %v1968
        %v2187 = vpop.f32.mrf.mxu0
        %v2188 = vadd.f32 %v1826, %v2187
        %v2189 = vpop.f32.mrf.mxu0
        %v2190 = vadd.f32 %v1826, %v2189
        %2191 = vmatmul.bf16.gmra.mxu0 %v1971
        %v2192 = vpop.f32.mrf.mxu0
        %v2193 = vadd.f32 %v1826, %v2192
        %v2194 = vpop.f32.mrf.mxu0
        %v2195 = vadd.f32 %v1826, %v2194
        %2196 = vmatmul.bf16.gmra.mxu0 %v1974
        %v2197 = vpop.f32.mrf.mxu0
        %v2198 = vadd.f32 %v1826, %v2197
        %v2199 = vpop.f32.mrf.mxu0
        %v2200 = vadd.f32 %v1826, %v2199
        %2201 = vmatmul.bf16.gmra.mxu0 %v1977
        %v2202 = vpop.f32.mrf.mxu0
        %v2203 = vadd.f32 %v1826, %v2202
        %v2204 = vpop.f32.mrf.mxu0
        %v2205 = vadd.f32 %v1826, %v2204
        %2206 = vmatmul.bf16.gmra.mxu0 %v1980
        %v2207 = vpop.f32.mrf.mxu0
        %v2208 = vadd.f32 %v1826, %v2207
        %v2209 = vpop.f32.mrf.mxu0
        %v2210 = vadd.f32 %v1826, %v2209
        %2211 = vmatmul.bf16.gmra.mxu0 %v1983
        %v2212 = vpop.f32.mrf.mxu0
        %v2213 = vadd.f32 %v1826, %v2212
        %v2214 = vpop.f32.mrf.mxu0
        %v2215 = vadd.f32 %v1826, %v2214
        %2216 = vmatmul.bf16.gmra.mxu0 %v1986
        %v2217 = vpop.f32.mrf.mxu0
        %v2218 = vadd.f32 %v1826, %v2217
        %v2219 = vpop.f32.mrf.mxu0
        %v2220 = vadd.f32 %v1826, %v2219
        %2221 = vmatmul.bf16.gmra.mxu0 %v1989
        %v2222 = vpop.f32.mrf.mxu0
        %v2223 = vadd.f32 %v1826, %v2222
        %v2224 = vpop.f32.mrf.mxu0
        %v2225 = vadd.f32 %v1826, %v2224
        %2226 = vmatmul.bf16.gmra.mxu0 %v1992
        %v2227 = vpop.f32.mrf.mxu0
        %v2228 = vadd.f32 %v1826, %v2227
        %v2229 = vpop.f32.mrf.mxu0
        %v2230 = vadd.f32 %v1826, %v2229
        %2231 = vmatmul.bf16.gmra.mxu0 %v1995
        %v2232 = vpop.f32.mrf.mxu0
        %v2233 = vadd.f32 %v1826, %v2232
        %v2234 = vpop.f32.mrf.mxu0
        %v2235 = vadd.f32 %v1826, %v2234
        %2236 = vmatmul.bf16.gmra.mxu0 %v1998
        %v2237 = vpop.f32.mrf.mxu0
        %v2238 = vadd.f32 %v1826, %v2237
        %v2239 = vpop.f32.mrf.mxu0
        %v2240 = vadd.f32 %v1826, %v2239
        %2241 = vmatmul.bf16.gmra.mxu0 %v2001
        %v2242 = vpop.f32.mrf.mxu0
        %v2243 = vadd.f32 %v1826, %v2242
        %v2244 = vpop.f32.mrf.mxu0
        %v2245 = vadd.f32 %v1826, %v2244
        %2246 = vmatmul.bf16.gmra.mxu0 %v2004
        %v2247 = vpop.f32.mrf.mxu0
        %v2248 = vadd.f32 %v1826, %v2247
        %v2249 = vpop.f32.mrf.mxu0
        %v2250 = vadd.f32 %v1826, %v2249
        %2251 = vmatmul.bf16.gmra.mxu0 %v2007
        %v2252 = vpop.f32.mrf.mxu0
        %v2253 = vadd.f32 %v1826, %v2252
        %v2254 = vpop.f32.mrf.mxu0
        %v2255 = vadd.f32 %v1826, %v2254
        %2256 = vmatmul.bf16.gmra.mxu0 %v2010
        %v2257 = vpop.f32.mrf.mxu0
        %v2258 = vadd.f32 %v1826, %v2257
        %v2259 = vpop.f32.mrf.mxu0
        %v2260 = vadd.f32 %v1826, %v2259
        %2261 = vmatmul.bf16.gmra.mxu0 %v2013
        %v2262 = vpop.f32.mrf.mxu0
        %v2263 = vadd.f32 %v1826, %v2262
        %v2264 = vpop.f32.mrf.mxu0
        %v2265 = vadd.f32 %v1826, %v2264
        %2266 = vmatmul.bf16.gmra.mxu0 %v2016
        %v2267 = vpop.f32.mrf.mxu0
        %v2268 = vadd.f32 %v1826, %v2267
        %v2269 = vpop.f32.mrf.mxu0
        %v2270 = vadd.f32 %v1826, %v2269
        %2271 = vdwg.mxu0
        %2272 = vmatpush.bf16.msra.mxu0 0
        %2273 = vmatpush.bf16.msra.mxu0 0
        %2274 = vmatpush.bf16.msra.mxu0 0
        %2275 = vmatpush.bf16.msra.mxu0 0
        %2276 = vmatpush.bf16.msra.mxu0 %v1861
        %2277 = vmatpush.bf16.msra.mxu0 %v1859
        %2278 = vmatpush.bf16.msra.mxu0 %v1857
        %2279 = vmatpush.bf16.msra.mxu0 %v1855
        %2280 = vmatmul.bf16.gmra.mxu0 %v1872
        %v2281 = vpop.f32.mrf.mxu0
        %v2282 = vadd.f32 %v1827, %v2281
        %v2283 = vpop.f32.mrf.mxu0
        %v2284 = vadd.f32 %v1827, %v2283
        %2285 = vmatmul.bf16.gmra.mxu0 %v1875
        %v2286 = vpop.f32.mrf.mxu0
        %v2287 = vadd.f32 %v1827, %v2286
        %v2288 = vpop.f32.mrf.mxu0
        %v2289 = vadd.f32 %v1827, %v2288
        %2290 = vmatmul.bf16.gmra.mxu0 %v1878
        %v2291 = vpop.f32.mrf.mxu0
        %v2292 = vadd.f32 %v1827, %v2291
        %v2293 = vpop.f32.mrf.mxu0
        %v2294 = vadd.f32 %v1827, %v2293
        %2295 = vmatmul.bf16.gmra.mxu0 %v1881
        %v2296 = vpop.f32.mrf.mxu0
        %v2297 = vadd.f32 %v1827, %v2296
        %v2298 = vpop.f32.mrf.mxu0
        %v2299 = vadd.f32 %v1827, %v2298
        %2300 = vmatmul.bf16.gmra.mxu0 %v1884
        %v2301 = vpop.f32.mrf.mxu0
        %v2302 = vadd.f32 %v1827, %v2301
        %v2303 = vpop.f32.mrf.mxu0
        %v2304 = vadd.f32 %v1827, %v2303
        %2305 = vmatmul.bf16.gmra.mxu0 %v1887
        %v2306 = vpop.f32.mrf.mxu0
        %v2307 = vadd.f32 %v1827, %v2306
        %v2308 = vpop.f32.mrf.mxu0
        %v2309 = vadd.f32 %v1827, %v2308
        %2310 = vmatmul.bf16.gmra.mxu0 %v1890
        %v2311 = vpop.f32.mrf.mxu0
        %v2312 = vadd.f32 %v1827, %v2311
        %v2313 = vpop.f32.mrf.mxu0
        %v2314 = vadd.f32 %v1827, %v2313
        %2315 = vmatmul.bf16.gmra.mxu0 %v1893
        %v2316 = vpop.f32.mrf.mxu0
        %v2317 = vadd.f32 %v1827, %v2316
        %v2318 = vpop.f32.mrf.mxu0
        %v2319 = vadd.f32 %v1827, %v2318
        %2320 = vmatmul.bf16.gmra.mxu0 %v1896
        %v2321 = vpop.f32.mrf.mxu0
        %v2322 = vadd.f32 %v1827, %v2321
        %v2323 = vpop.f32.mrf.mxu0
        %v2324 = vadd.f32 %v1827, %v2323
        %2325 = vmatmul.bf16.gmra.mxu0 %v1899
        %v2326 = vpop.f32.mrf.mxu0
        %v2327 = vadd.f32 %v1827, %v2326
        %v2328 = vpop.f32.mrf.mxu0
        %v2329 = vadd.f32 %v1827, %v2328
        %2330 = vmatmul.bf16.gmra.mxu0 %v1902
        %v2331 = vpop.f32.mrf.mxu0
        %v2332 = vadd.f32 %v1827, %v2331
        %v2333 = vpop.f32.mrf.mxu0
        %v2334 = vadd.f32 %v1827, %v2333
        %2335 = vmatmul.bf16.gmra.mxu0 %v1905
        %v2336 = vpop.f32.mrf.mxu0
        %v2337 = vadd.f32 %v1827, %v2336
        %v2338 = vpop.f32.mrf.mxu0
        %v2339 = vadd.f32 %v1827, %v2338
        %2340 = vmatmul.bf16.gmra.mxu0 %v1908
        %v2341 = vpop.f32.mrf.mxu0
        %v2342 = vadd.f32 %v1827, %v2341
        %v2343 = vpop.f32.mrf.mxu0
        %v2344 = vadd.f32 %v1827, %v2343
        %2345 = vmatmul.bf16.gmra.mxu0 %v1911
        %v2346 = vpop.f32.mrf.mxu0
        %v2347 = vadd.f32 %v1827, %v2346
        %v2348 = vpop.f32.mrf.mxu0
        %v2349 = vadd.f32 %v1827, %v2348
        %2350 = vmatmul.bf16.gmra.mxu0 %v1914
        %v2351 = vpop.f32.mrf.mxu0
        %v2352 = vadd.f32 %v1827, %v2351
        %v2353 = vpop.f32.mrf.mxu0
        %v2354 = vadd.f32 %v1827, %v2353
        %2355 = vmatmul.bf16.gmra.mxu0 %v1917
        %v2356 = vpop.f32.mrf.mxu0
        %v2357 = vadd.f32 %v1827, %v2356
        %v2358 = vpop.f32.mrf.mxu0
        %v2359 = vadd.f32 %v1827, %v2358
        %2360 = vmatmul.bf16.gmra.mxu0 %v1920
        %v2361 = vpop.f32.mrf.mxu0
        %v2362 = vadd.f32 %v1827, %v2361
        %v2363 = vpop.f32.mrf.mxu0
        %v2364 = vadd.f32 %v1827, %v2363
        %2365 = vmatmul.bf16.gmra.mxu0 %v1923
        %v2366 = vpop.f32.mrf.mxu0
        %v2367 = vadd.f32 %v1827, %v2366
        %v2368 = vpop.f32.mrf.mxu0
        %v2369 = vadd.f32 %v1827, %v2368
        %2370 = vmatmul.bf16.gmra.mxu0 %v1926
        %v2371 = vpop.f32.mrf.mxu0
        %v2372 = vadd.f32 %v1827, %v2371
        %v2373 = vpop.f32.mrf.mxu0
        %v2374 = vadd.f32 %v1827, %v2373
        %2375 = vmatmul.bf16.gmra.mxu0 %v1929
        %v2376 = vpop.f32.mrf.mxu0
        %v2377 = vadd.f32 %v1827, %v2376
        %v2378 = vpop.f32.mrf.mxu0
        %v2379 = vadd.f32 %v1827, %v2378
        %2380 = vmatmul.bf16.gmra.mxu0 %v1932
        %v2381 = vpop.f32.mrf.mxu0
        %v2382 = vadd.f32 %v1827, %v2381
        %v2383 = vpop.f32.mrf.mxu0
        %v2384 = vadd.f32 %v1827, %v2383
        %2385 = vmatmul.bf16.gmra.mxu0 %v1935
        %v2386 = vpop.f32.mrf.mxu0
        %v2387 = vadd.f32 %v1827, %v2386
        %v2388 = vpop.f32.mrf.mxu0
        %v2389 = vadd.f32 %v1827, %v2388
        %2390 = vmatmul.bf16.gmra.mxu0 %v1938
        %v2391 = vpop.f32.mrf.mxu0
        %v2392 = vadd.f32 %v1827, %v2391
        %v2393 = vpop.f32.mrf.mxu0
        %v2394 = vadd.f32 %v1827, %v2393
        %2395 = vmatmul.bf16.gmra.mxu0 %v1941
        %v2396 = vpop.f32.mrf.mxu0
        %v2397 = vadd.f32 %v1827, %v2396
        %v2398 = vpop.f32.mrf.mxu0
        %v2399 = vadd.f32 %v1827, %v2398
        %2400 = vmatmul.bf16.gmra.mxu0 %v1944
        %v2401 = vpop.f32.mrf.mxu0
        %v2402 = vadd.f32 %v1827, %v2401
        %v2403 = vpop.f32.mrf.mxu0
        %v2404 = vadd.f32 %v1827, %v2403
        %2405 = vmatmul.bf16.gmra.mxu0 %v1947
        %v2406 = vpop.f32.mrf.mxu0
        %v2407 = vadd.f32 %v1827, %v2406
        %v2408 = vpop.f32.mrf.mxu0
        %v2409 = vadd.f32 %v1827, %v2408
        %2410 = vmatmul.bf16.gmra.mxu0 %v1950
        %v2411 = vpop.f32.mrf.mxu0
        %v2412 = vadd.f32 %v1827, %v2411
        %v2413 = vpop.f32.mrf.mxu0
        %v2414 = vadd.f32 %v1827, %v2413
        %2415 = vmatmul.bf16.gmra.mxu0 %v1953
        %v2416 = vpop.f32.mrf.mxu0
        %v2417 = vadd.f32 %v1827, %v2416
        %v2418 = vpop.f32.mrf.mxu0
        %v2419 = vadd.f32 %v1827, %v2418
        %2420 = vmatmul.bf16.gmra.mxu0 %v1956
        %v2421 = vpop.f32.mrf.mxu0
        %v2422 = vadd.f32 %v1827, %v2421
        %v2423 = vpop.f32.mrf.mxu0
        %v2424 = vadd.f32 %v1827, %v2423
        %2425 = vmatmul.bf16.gmra.mxu0 %v1959
        %v2426 = vpop.f32.mrf.mxu0
        %v2427 = vadd.f32 %v1827, %v2426
        %v2428 = vpop.f32.mrf.mxu0
        %v2429 = vadd.f32 %v1827, %v2428
        %2430 = vmatmul.bf16.gmra.mxu0 %v1962
        %v2431 = vpop.f32.mrf.mxu0
        %v2432 = vadd.f32 %v1827, %v2431
        %v2433 = vpop.f32.mrf.mxu0
        %v2434 = vadd.f32 %v1827, %v2433
        %2435 = vmatmul.bf16.gmra.mxu0 %v1965
        %v2436 = vpop.f32.mrf.mxu0
        %v2437 = vadd.f32 %v1827, %v2436
        %v2438 = vpop.f32.mrf.mxu0
        %v2439 = vadd.f32 %v1827, %v2438
        %2440 = vmatmul.bf16.gmra.mxu0 %v1968
        %v2441 = vpop.f32.mrf.mxu0
        %v2442 = vadd.f32 %v1827, %v2441
        %v2443 = vpop.f32.mrf.mxu0
        %v2444 = vadd.f32 %v1827, %v2443
        %2445 = vmatmul.bf16.gmra.mxu0 %v1971
        %v2446 = vpop.f32.mrf.mxu0
        %v2447 = vadd.f32 %v1827, %v2446
        %v2448 = vpop.f32.mrf.mxu0
        %v2449 = vadd.f32 %v1827, %v2448
        %2450 = vmatmul.bf16.gmra.mxu0 %v1974
        %v2451 = vpop.f32.mrf.mxu0
        %v2452 = vadd.f32 %v1827, %v2451
        %v2453 = vpop.f32.mrf.mxu0
        %v2454 = vadd.f32 %v1827, %v2453
        %2455 = vmatmul.bf16.gmra.mxu0 %v1977
        %v2456 = vpop.f32.mrf.mxu0
        %v2457 = vadd.f32 %v1827, %v2456
        %v2458 = vpop.f32.mrf.mxu0
        %v2459 = vadd.f32 %v1827, %v2458
        %2460 = vmatmul.bf16.gmra.mxu0 %v1980
        %v2461 = vpop.f32.mrf.mxu0
        %v2462 = vadd.f32 %v1827, %v2461
        %v2463 = vpop.f32.mrf.mxu0
        %v2464 = vadd.f32 %v1827, %v2463
        %2465 = vmatmul.bf16.gmra.mxu0 %v1983
        %v2466 = vpop.f32.mrf.mxu0
        %v2467 = vadd.f32 %v1827, %v2466
        %v2468 = vpop.f32.mrf.mxu0
        %v2469 = vadd.f32 %v1827, %v2468
        %2470 = vmatmul.bf16.gmra.mxu0 %v1986
        %v2471 = vpop.f32.mrf.mxu0
        %v2472 = vadd.f32 %v1827, %v2471
        %v2473 = vpop.f32.mrf.mxu0
        %v2474 = vadd.f32 %v1827, %v2473
        %2475 = vmatmul.bf16.gmra.mxu0 %v1989
        %v2476 = vpop.f32.mrf.mxu0
        %v2477 = vadd.f32 %v1827, %v2476
        %v2478 = vpop.f32.mrf.mxu0
        %v2479 = vadd.f32 %v1827, %v2478
        %2480 = vmatmul.bf16.gmra.mxu0 %v1992
        %v2481 = vpop.f32.mrf.mxu0
        %v2482 = vadd.f32 %v1827, %v2481
        %v2483 = vpop.f32.mrf.mxu0
        %v2484 = vadd.f32 %v1827, %v2483
        %2485 = vmatmul.bf16.gmra.mxu0 %v1995
        %v2486 = vpop.f32.mrf.mxu0
        %v2487 = vadd.f32 %v1827, %v2486
        %v2488 = vpop.f32.mrf.mxu0
        %v2489 = vadd.f32 %v1827, %v2488
        %2490 = vmatmul.bf16.gmra.mxu0 %v1998
        %v2491 = vpop.f32.mrf.mxu0
        %v2492 = vadd.f32 %v1827, %v2491
        %v2493 = vpop.f32.mrf.mxu0
        %v2494 = vadd.f32 %v1827, %v2493
        %2495 = vmatmul.bf16.gmra.mxu0 %v2001
        %v2496 = vpop.f32.mrf.mxu0
        %v2497 = vadd.f32 %v1827, %v2496
        %v2498 = vpop.f32.mrf.mxu0
        %v2499 = vadd.f32 %v1827, %v2498
        %2500 = vmatmul.bf16.gmra.mxu0 %v2004
        %v2501 = vpop.f32.mrf.mxu0
        %v2502 = vadd.f32 %v1827, %v2501
        %v2503 = vpop.f32.mrf.mxu0
        %v2504 = vadd.f32 %v1827, %v2503
        %2505 = vmatmul.bf16.gmra.mxu0 %v2007
        %v2506 = vpop.f32.mrf.mxu0
        %v2507 = vadd.f32 %v1827, %v2506
        %v2508 = vpop.f32.mrf.mxu0
        %v2509 = vadd.f32 %v1827, %v2508
        %2510 = vmatmul.bf16.gmra.mxu0 %v2010
        %v2511 = vpop.f32.mrf.mxu0
        %v2512 = vadd.f32 %v1827, %v2511
        %v2513 = vpop.f32.mrf.mxu0
        %v2514 = vadd.f32 %v1827, %v2513
        %2515 = vmatmul.bf16.gmra.mxu0 %v2013
        %v2516 = vpop.f32.mrf.mxu0
        %v2517 = vadd.f32 %v1827, %v2516
        %v2518 = vpop.f32.mrf.mxu0
        %v2519 = vadd.f32 %v1827, %v2518
        %2520 = vmatmul.bf16.gmra.mxu0 %v2016
        %v2521 = vpop.f32.mrf.mxu0
        %v2522 = vadd.f32 %v1827, %v2521
        %v2523 = vpop.f32.mrf.mxu0
        %v2524 = vadd.f32 %v1827, %v2523
        %2525 = vdwg.mxu0
        %v2526 = vmax.f32 %v2028, 0.0
        %v2527 = vmax.f32 %v2282, 0.0
        %v2528 = vmax.f32 %v2030, 0.0
        %v2529 = vmax.f32 %v2284, 0.0
        %v2530 = vmax.f32 %v2033, 0.0
        %v2531 = vmax.f32 %v2287, 0.0
        %v2532 = vmax.f32 %v2035, 0.0
        %v2533 = vmax.f32 %v2289, 0.0
        %v2534 = vmax.f32 %v2038, 0.0
        %v2535 = vmax.f32 %v2292, 0.0
        %v2536 = vmax.f32 %v2040, 0.0
        %v2537 = vmax.f32 %v2294, 0.0
        %v2538 = vmax.f32 %v2043, 0.0
        %v2539 = vmax.f32 %v2297, 0.0
        %v2540 = vmax.f32 %v2045, 0.0
        %v2541 = vmax.f32 %v2299, 0.0
        %v2542 = vmax.f32 %v2048, 0.0
        %v2543 = vmax.f32 %v2302, 0.0
        %v2544 = vmax.f32 %v2050, 0.0
        %v2545 = vmax.f32 %v2304, 0.0
        %v2546 = vmax.f32 %v2053, 0.0
        %v2547 = vmax.f32 %v2307, 0.0
        %v2548 = vmax.f32 %v2055, 0.0
        %v2549 = vmax.f32 %v2309, 0.0
        %v2550 = vmax.f32 %v2058, 0.0
        %v2551 = vmax.f32 %v2312, 0.0
        %v2552 = vmax.f32 %v2060, 0.0
        %v2553 = vmax.f32 %v2314, 0.0
        %v2554 = vmax.f32 %v2063, 0.0
        %v2555 = vmax.f32 %v2317, 0.0
        %v2556 = vmax.f32 %v2065, 0.0
        %v2557 = vmax.f32 %v2319, 0.0
        %v2558 = vmax.f32 %v2068, 0.0
        %v2559 = vmax.f32 %v2322, 0.0
        %v2560 = vmax.f32 %v2070, 0.0
        %v2561 = vmax.f32 %v2324, 0.0
        %v2562 = vmax.f32 %v2073, 0.0
        %v2563 = vmax.f32 %v2327, 0.0
        %v2564 = vmax.f32 %v2075, 0.0
        %v2565 = vmax.f32 %v2329, 0.0
        %v2566 = vmax.f32 %v2078, 0.0
        %v2567 = vmax.f32 %v2332, 0.0
        %v2568 = vmax.f32 %v2080, 0.0
        %v2569 = vmax.f32 %v2334, 0.0
        %v2570 = vmax.f32 %v2083, 0.0
        %v2571 = vmax.f32 %v2337, 0.0
        %v2572 = vmax.f32 %v2085, 0.0
        %v2573 = vmax.f32 %v2339, 0.0
        %v2574 = vmax.f32 %v2088, 0.0
        %v2575 = vmax.f32 %v2342, 0.0
        %v2576 = vmax.f32 %v2090, 0.0
        %v2577 = vmax.f32 %v2344, 0.0
        %v2578 = vmax.f32 %v2093, 0.0
        %v2579 = vmax.f32 %v2347, 0.0
        %v2580 = vmax.f32 %v2095, 0.0
        %v2581 = vmax.f32 %v2349, 0.0
        %v2582 = vmax.f32 %v2098, 0.0
        %v2583 = vmax.f32 %v2352, 0.0
        %v2584 = vmax.f32 %v2100, 0.0
        %v2585 = vmax.f32 %v2354, 0.0
        %v2586 = vmax.f32 %v2103, 0.0
        %v2587 = vmax.f32 %v2357, 0.0
        %v2588 = vmax.f32 %v2105, 0.0
        %v2589 = vmax.f32 %v2359, 0.0
        %v2590 = vmax.f32 %v2108, 0.0
        %v2591 = vmax.f32 %v2362, 0.0
        %v2592 = vmax.f32 %v2110, 0.0
        %v2593 = vmax.f32 %v2364, 0.0
        %v2594 = vmax.f32 %v2113, 0.0
        %v2595 = vmax.f32 %v2367, 0.0
        %v2596 = vmax.f32 %v2115, 0.0
        %v2597 = vmax.f32 %v2369, 0.0
        %v2598 = vmax.f32 %v2118, 0.0
        %v2599 = vmax.f32 %v2372, 0.0
        %v2600 = vmax.f32 %v2120, 0.0
        %v2601 = vmax.f32 %v2374, 0.0
        %v2602 = vmax.f32 %v2123, 0.0
        %v2603 = vmax.f32 %v2377, 0.0
        %v2604 = vmax.f32 %v2125, 0.0
        %v2605 = vmax.f32 %v2379, 0.0
        %v2606 = vmax.f32 %v2128, 0.0
        %v2607 = vmax.f32 %v2382, 0.0
        %v2608 = vmax.f32 %v2130, 0.0
        %v2609 = vmax.f32 %v2384, 0.0
        %v2610 = vmax.f32 %v2133, 0.0
        %v2611 = vmax.f32 %v2387, 0.0
        %v2612 = vmax.f32 %v2135, 0.0
        %v2613 = vmax.f32 %v2389, 0.0
        %v2614 = vmax.f32 %v2138, 0.0
        %v2615 = vmax.f32 %v2392, 0.0
        %v2616 = vmax.f32 %v2140, 0.0
        %v2617 = vmax.f32 %v2394, 0.0
        %v2618 = vmax.f32 %v2143, 0.0
        %v2619 = vmax.f32 %v2397, 0.0
        %v2620 = vmax.f32 %v2145, 0.0
        %v2621 = vmax.f32 %v2399, 0.0
        %v2622 = vmax.f32 %v2148, 0.0
        %v2623 = vmax.f32 %v2402, 0.0
        %v2624 = vmax.f32 %v2150, 0.0
        %v2625 = vmax.f32 %v2404, 0.0
        %v2626 = vmax.f32 %v2153, 0.0
        %v2627 = vmax.f32 %v2407, 0.0
        %v2628 = vmax.f32 %v2155, 0.0
        %v2629 = vmax.f32 %v2409, 0.0
        %v2630 = vmax.f32 %v2158, 0.0
        %v2631 = vmax.f32 %v2412, 0.0
        %v2632 = vmax.f32 %v2160, 0.0
        %v2633 = vmax.f32 %v2414, 0.0
        %v2634 = vmax.f32 %v2163, 0.0
        %v2635 = vmax.f32 %v2417, 0.0
        %v2636 = vmax.f32 %v2165, 0.0
        %v2637 = vmax.f32 %v2419, 0.0
        %v2638 = vmax.f32 %v2168, 0.0
        %v2639 = vmax.f32 %v2422, 0.0
        %v2640 = vmax.f32 %v2170, 0.0
        %v2641 = vmax.f32 %v2424, 0.0
        %v2642 = vmax.f32 %v2173, 0.0
        %v2643 = vmax.f32 %v2427, 0.0
        %v2644 = vmax.f32 %v2175, 0.0
        %v2645 = vmax.f32 %v2429, 0.0
        %v2646 = vmax.f32 %v2178, 0.0
        %v2647 = vmax.f32 %v2432, 0.0
        %v2648 = vmax.f32 %v2180, 0.0
        %v2649 = vmax.f32 %v2434, 0.0
        %v2650 = vmax.f32 %v2183, 0.0
        %v2651 = vmax.f32 %v2437, 0.0
        %v2652 = vmax.f32 %v2185, 0.0
        %v2653 = vmax.f32 %v2439, 0.0
        %v2654 = vmax.f32 %v2188, 0.0
        %v2655 = vmax.f32 %v2442, 0.0
        %v2656 = vmax.f32 %v2190, 0.0
        %v2657 = vmax.f32 %v2444, 0.0
        %v2658 = vmax.f32 %v2193, 0.0
        %v2659 = vmax.f32 %v2447, 0.0
        %v2660 = vmax.f32 %v2195, 0.0
        %v2661 = vmax.f32 %v2449, 0.0
        %v2662 = vmax.f32 %v2198, 0.0
        %v2663 = vmax.f32 %v2452, 0.0
        %v2664 = vmax.f32 %v2200, 0.0
        %v2665 = vmax.f32 %v2454, 0.0
        %v2666 = vmax.f32 %v2203, 0.0
        %v2667 = vmax.f32 %v2457, 0.0
        %v2668 = vmax.f32 %v2205, 0.0
        %v2669 = vmax.f32 %v2459, 0.0
        %v2670 = vmax.f32 %v2208, 0.0
        %v2671 = vmax.f32 %v2462, 0.0
        %v2672 = vmax.f32 %v2210, 0.0
        %v2673 = vmax.f32 %v2464, 0.0
        %v2674 = vmax.f32 %v2213, 0.0
        %v2675 = vmax.f32 %v2467, 0.0
        %v2676 = vmax.f32 %v2215, 0.0
        %v2677 = vmax.f32 %v2469, 0.0
        %v2678 = vmax.f32 %v2218, 0.0
        %v2679 = vmax.f32 %v2472, 0.0
        %v2680 = vmax.f32 %v2220, 0.0
        %v2681 = vmax.f32 %v2474, 0.0
        %v2682 = vmax.f32 %v2223, 0.0
        %v2683 = vmax.f32 %v2477, 0.0
        %v2684 = vmax.f32 %v2225, 0.0
        %v2685 = vmax.f32 %v2479, 0.0
        %v2686 = vmax.f32 %v2228, 0.0
        %v2687 = vmax.f32 %v2482, 0.0
        %v2688 = vmax.f32 %v2230, 0.0
        %v2689 = vmax.f32 %v2484, 0.0
        %v2690 = vmax.f32 %v2233, 0.0
        %v2691 = vmax.f32 %v2487, 0.0
        %v2692 = vmax.f32 %v2235, 0.0
        %v2693 = vmax.f32 %v2489, 0.0
        %v2694 = vmax.f32 %v2238, 0.0
        %v2695 = vmax.f32 %v2492, 0.0
        %v2696 = vmax.f32 %v2240, 0.0
        %v2697 = vmax.f32 %v2494, 0.0
        %v2698 = vmax.f32 %v2243, 0.0
        %v2699 = vmax.f32 %v2497, 0.0
        %v2700 = vmax.f32 %v2245, 0.0
        %v2701 = vmax.f32 %v2499, 0.0
        %v2702 = vmax.f32 %v2248, 0.0
        %v2703 = vmax.f32 %v2502, 0.0
        %v2704 = vmax.f32 %v2250, 0.0
        %v2705 = vmax.f32 %v2504, 0.0
        %v2706 = vmax.f32 %v2253, 0.0
        %v2707 = vmax.f32 %v2507, 0.0
        %v2708 = vmax.f32 %v2255, 0.0
        %v2709 = vmax.f32 %v2509, 0.0
        %v2710 = vmax.f32 %v2258, 0.0
        %v2711 = vmax.f32 %v2512, 0.0
        %v2712 = vmax.f32 %v2260, 0.0
        %v2713 = vmax.f32 %v2514, 0.0
        %v2714 = vmax.f32 %v2263, 0.0
        %v2715 = vmax.f32 %v2517, 0.0
        %v2716 = vmax.f32 %v2265, 0.0
        %v2717 = vmax.f32 %v2519, 0.0
        %v2718 = vmax.f32 %v2268, 0.0
        %v2719 = vmax.f32 %v2522, 0.0
        %v2720 = vmax.f32 %v2270, 0.0
        %v2721 = vmax.f32 %v2524, 0.0
        %v2722 = vmul.f32 %v2527, 0.20851527
        %v2723 = vmul.f32 %v2529, 0.20851527
        %v2724 = vmul.f32 %v2531, 0.20851527
        %v2725 = vmul.f32 %v2533, 0.20851527
        %v2726 = vmul.f32 %v2535, 0.20851527
        %v2727 = vmul.f32 %v2537, 0.20851527
        %v2728 = vmul.f32 %v2539, 0.20851527
        %v2729 = vmul.f32 %v2541, 0.20851527
        %v2730 = vmul.f32 %v2543, 0.20851527
        %v2731 = vmul.f32 %v2545, 0.20851527
        %v2732 = vmul.f32 %v2547, 0.20851527
        %v2733 = vmul.f32 %v2549, 0.20851527
        %v2734 = vmul.f32 %v2551, 0.20851527
        %v2735 = vmul.f32 %v2553, 0.20851527
        %v2736 = vmul.f32 %v2555, 0.20851527
        %v2737 = vmul.f32 %v2557, 0.20851527
        %v2738 = vmul.f32 %v2559, 0.20851527
        %v2739 = vmul.f32 %v2561, 0.20851527
        %v2740 = vmul.f32 %v2563, 0.20851527
        %v2741 = vmul.f32 %v2565, 0.20851527
        %v2742 = vmul.f32 %v2567, 0.20851527
        %v2743 = vmul.f32 %v2569, 0.20851527
        %v2744 = vmul.f32 %v2571, 0.20851527
        %v2745 = vmul.f32 %v2573, 0.20851527
        %v2746 = vmul.f32 %v2575, 0.20851527
        %v2747 = vmul.f32 %v2577, 0.20851527
        %v2748 = vmul.f32 %v2579, 0.20851527
        %v2749 = vmul.f32 %v2581, 0.20851527
        %v2750 = vmul.f32 %v2583, 0.20851527
        %v2751 = vmul.f32 %v2585, 0.20851527
        %v2752 = vmul.f32 %v2587, 0.20851527
        %v2753 = vmul.f32 %v2589, 0.20851527
        %v2754 = vmul.f32 %v2591, 0.20851527
        %v2755 = vmul.f32 %v2593, 0.20851527
        %v2756 = vmul.f32 %v2595, 0.20851527
        %v2757 = vmul.f32 %v2597, 0.20851527
        %v2758 = vmul.f32 %v2599, 0.20851527
        %v2759 = vmul.f32 %v2601, 0.20851527
        %v2760 = vmul.f32 %v2603, 0.20851527
        %v2761 = vmul.f32 %v2605, 0.20851527
        %v2762 = vmul.f32 %v2607, 0.20851527
        %v2763 = vmul.f32 %v2609, 0.20851527
        %v2764 = vmul.f32 %v2611, 0.20851527
        %v2765 = vmul.f32 %v2613, 0.20851527
        %v2766 = vmul.f32 %v2615, 0.20851527
        %v2767 = vmul.f32 %v2617, 0.20851527
        %v2768 = vmul.f32 %v2619, 0.20851527
        %v2769 = vmul.f32 %v2621, 0.20851527
        %v2770 = vmul.f32 %v2623, 0.20851527
        %v2771 = vmul.f32 %v2625, 0.20851527
        %v2772 = vmul.f32 %v2627, 0.20851527
        %v2773 = vmul.f32 %v2629, 0.20851527
        %v2774 = vmul.f32 %v2631, 0.20851527
        %v2775 = vmul.f32 %v2633, 0.20851527
        %v2776 = vmul.f32 %v2635, 0.20851527
        %v2777 = vmul.f32 %v2637, 0.20851527
        %v2778 = vmul.f32 %v2639, 0.20851527
        %v2779 = vmul.f32 %v2641, 0.20851527
        %v2780 = vmul.f32 %v2643, 0.20851527
        %v2781 = vmul.f32 %v2645, 0.20851527
        %v2782 = vmul.f32 %v2647, 0.20851527
        %v2783 = vmul.f32 %v2649, 0.20851527
        %v2784 = vmul.f32 %v2651, 0.20851527
        %v2785 = vmul.f32 %v2653, 0.20851527
        %v2786 = vmul.f32 %v2655, 0.20851527
        %v2787 = vmul.f32 %v2657, 0.20851527
        %v2788 = vmul.f32 %v2659, 0.20851527
        %v2789 = vmul.f32 %v2661, 0.20851527
        %v2790 = vmul.f32 %v2663, 0.20851527
        %v2791 = vmul.f32 %v2665, 0.20851527
        %v2792 = vmul.f32 %v2667, 0.20851527
        %v2793 = vmul.f32 %v2669, 0.20851527
        %v2794 = vmul.f32 %v2671, 0.20851527
        %v2795 = vmul.f32 %v2673, 0.20851527
        %v2796 = vmul.f32 %v2675, 0.20851527
        %v2797 = vmul.f32 %v2677, 0.20851527
        %v2798 = vmul.f32 %v2679, 0.20851527
        %v2799 = vmul.f32 %v2681, 0.20851527
        %v2800 = vmul.f32 %v2683, 0.20851527
        %v2801 = vmul.f32 %v2685, 0.20851527
        %v2802 = vmul.f32 %v2687, 0.20851527
        %v2803 = vmul.f32 %v2689, 0.20851527
        %v2804 = vmul.f32 %v2691, 0.20851527
        %v2805 = vmul.f32 %v2693, 0.20851527
        %v2806 = vmul.f32 %v2695, 0.20851527
        %v2807 = vmul.f32 %v2697, 0.20851527
        %v2808 = vmul.f32 %v2699, 0.20851527
        %v2809 = vmul.f32 %v2701, 0.20851527
        %v2810 = vmul.f32 %v2703, 0.20851527
        %v2811 = vmul.f32 %v2705, 0.20851527
        %v2812 = vmul.f32 %v2707, 0.20851527
        %v2813 = vmul.f32 %v2709, 0.20851527
        %v2814 = vmul.f32 %v2711, 0.20851527
        %v2815 = vmul.f32 %v2713, 0.20851527
        %v2816 = vmul.f32 %v2715, 0.20851527
        %v2817 = vmul.f32 %v2717, 0.20851527
        %v2818 = vmul.f32 %v2719, 0.20851527
        %v2819 = vmul.f32 %v2721, 0.20851527
        %v2820 = vmul.f32 %v2526, 0.7914847
        %v2821 = vmul.f32 %v2528, 0.7914847
        %v2822 = vmul.f32 %v2530, 0.7914847
        %v2823 = vmul.f32 %v2532, 0.7914847
        %v2824 = vmul.f32 %v2534, 0.7914847
        %v2825 = vmul.f32 %v2536, 0.7914847
        %v2826 = vmul.f32 %v2538, 0.7914847
        %v2827 = vmul.f32 %v2540, 0.7914847
        %v2828 = vmul.f32 %v2542, 0.7914847
        %v2829 = vmul.f32 %v2544, 0.7914847
        %v2830 = vmul.f32 %v2546, 0.7914847
        %v2831 = vmul.f32 %v2548, 0.7914847
        %v2832 = vmul.f32 %v2550, 0.7914847
        %v2833 = vmul.f32 %v2552, 0.7914847
        %v2834 = vmul.f32 %v2554, 0.7914847
        %v2835 = vmul.f32 %v2556, 0.7914847
        %v2836 = vmul.f32 %v2558, 0.7914847
        %v2837 = vmul.f32 %v2560, 0.7914847
        %v2838 = vmul.f32 %v2562, 0.7914847
        %v2839 = vmul.f32 %v2564, 0.7914847
        %v2840 = vmul.f32 %v2566, 0.7914847
        %v2841 = vmul.f32 %v2568, 0.7914847
        %v2842 = vmul.f32 %v2570, 0.7914847
        %v2843 = vmul.f32 %v2572, 0.7914847
        %v2844 = vmul.f32 %v2574, 0.7914847
        %v2845 = vmul.f32 %v2576, 0.7914847
        %v2846 = vmul.f32 %v2578, 0.7914847
        %v2847 = vmul.f32 %v2580, 0.7914847
        %v2848 = vmul.f32 %v2582, 0.7914847
        %v2849 = vmul.f32 %v2584, 0.7914847
        %v2850 = vmul.f32 %v2586, 0.7914847
        %v2851 = vmul.f32 %v2588, 0.7914847
        %v2852 = vmul.f32 %v2590, 0.7914847
        %v2853 = vmul.f32 %v2592, 0.7914847
        %v2854 = vmul.f32 %v2594, 0.7914847
        %v2855 = vmul.f32 %v2596, 0.7914847
        %v2856 = vmul.f32 %v2598, 0.7914847
        %v2857 = vmul.f32 %v2600, 0.7914847
        %v2858 = vmul.f32 %v2602, 0.7914847
        %v2859 = vmul.f32 %v2604, 0.7914847
        %v2860 = vmul.f32 %v2606, 0.7914847
        %v2861 = vmul.f32 %v2608, 0.7914847
        %v2862 = vmul.f32 %v2610, 0.7914847
        %v2863 = vmul.f32 %v2612, 0.7914847
        %v2864 = vmul.f32 %v2614, 0.7914847
        %v2865 = vmul.f32 %v2616, 0.7914847
        %v2866 = vmul.f32 %v2618, 0.7914847
        %v2867 = vmul.f32 %v2620, 0.7914847
        %v2868 = vmul.f32 %v2622, 0.7914847
        %v2869 = vmul.f32 %v2624, 0.7914847
        %v2870 = vmul.f32 %v2626, 0.7914847
        %v2871 = vmul.f32 %v2628, 0.7914847
        %v2872 = vmul.f32 %v2630, 0.7914847
        %v2873 = vmul.f32 %v2632, 0.7914847
        %v2874 = vmul.f32 %v2634, 0.7914847
        %v2875 = vmul.f32 %v2636, 0.7914847
        %v2876 = vmul.f32 %v2638, 0.7914847
        %v2877 = vmul.f32 %v2640, 0.7914847
        %v2878 = vmul.f32 %v2642, 0.7914847
        %v2879 = vmul.f32 %v2644, 0.7914847
        %v2880 = vmul.f32 %v2646, 0.7914847
        %v2881 = vmul.f32 %v2648, 0.7914847
        %v2882 = vmul.f32 %v2650, 0.7914847
        %v2883 = vmul.f32 %v2652, 0.7914847
        %v2884 = vmul.f32 %v2654, 0.7914847
        %v2885 = vmul.f32 %v2656, 0.7914847
        %v2886 = vmul.f32 %v2658, 0.7914847
        %v2887 = vmul.f32 %v2660, 0.7914847
        %v2888 = vmul.f32 %v2662, 0.7914847
        %v2889 = vmul.f32 %v2664, 0.7914847
        %v2890 = vmul.f32 %v2666, 0.7914847
        %v2891 = vmul.f32 %v2668, 0.7914847
        %v2892 = vmul.f32 %v2670, 0.7914847
        %v2893 = vmul.f32 %v2672, 0.7914847
        %v2894 = vmul.f32 %v2674, 0.7914847
        %v2895 = vmul.f32 %v2676, 0.7914847
        %v2896 = vmul.f32 %v2678, 0.7914847
        %v2897 = vmul.f32 %v2680, 0.7914847
        %v2898 = vmul.f32 %v2682, 0.7914847
        %v2899 = vmul.f32 %v2684, 0.7914847
        %v2900 = vmul.f32 %v2686, 0.7914847
        %v2901 = vmul.f32 %v2688, 0.7914847
        %v2902 = vmul.f32 %v2690, 0.7914847
        %v2903 = vmul.f32 %v2692, 0.7914847
        %v2904 = vmul.f32 %v2694, 0.7914847
        %v2905 = vmul.f32 %v2696, 0.7914847
        %v2906 = vmul.f32 %v2698, 0.7914847
        %v2907 = vmul.f32 %v2700, 0.7914847
        %v2908 = vmul.f32 %v2702, 0.7914847
        %v2909 = vmul.f32 %v2704, 0.7914847
        %v2910 = vmul.f32 %v2706, 0.7914847
        %v2911 = vmul.f32 %v2708, 0.7914847
        %v2912 = vmul.f32 %v2710, 0.7914847
        %v2913 = vmul.f32 %v2712, 0.7914847
        %v2914 = vmul.f32 %v2714, 0.7914847
        %v2915 = vmul.f32 %v2716, 0.7914847
        %v2916 = vmul.f32 %v2718, 0.7914847
        %v2917 = vmul.f32 %v2720, 0.7914847
        %v2918 = vadd.f32 %v2722, %v2820
        %v2919 = vadd.f32 %v2723, %v2821
        %v2920 = vadd.f32 %v2724, %v2822
        %v2921 = vadd.f32 %v2725, %v2823
        %v2922 = vadd.f32 %v2726, %v2824
        %v2923 = vadd.f32 %v2727, %v2825
        %v2924 = vadd.f32 %v2728, %v2826
        %v2925 = vadd.f32 %v2729, %v2827
        %v2926 = vadd.f32 %v2730, %v2828
        %v2927 = vadd.f32 %v2731, %v2829
        %v2928 = vadd.f32 %v2732, %v2830
        %v2929 = vadd.f32 %v2733, %v2831
        %v2930 = vadd.f32 %v2734, %v2832
        %v2931 = vadd.f32 %v2735, %v2833
        %v2932 = vadd.f32 %v2736, %v2834
        %v2933 = vadd.f32 %v2737, %v2835
        %v2934 = vadd.f32 %v2738, %v2836
        %v2935 = vadd.f32 %v2739, %v2837
        %v2936 = vadd.f32 %v2740, %v2838
        %v2937 = vadd.f32 %v2741, %v2839
        %v2938 = vadd.f32 %v2742, %v2840
        %v2939 = vadd.f32 %v2743, %v2841
        %v2940 = vadd.f32 %v2744, %v2842
        %v2941 = vadd.f32 %v2745, %v2843
        %v2942 = vadd.f32 %v2746, %v2844
        %v2943 = vadd.f32 %v2747, %v2845
        %v2944 = vadd.f32 %v2748, %v2846
        %v2945 = vadd.f32 %v2749, %v2847
        %v2946 = vadd.f32 %v2750, %v2848
        %v2947 = vadd.f32 %v2751, %v2849
        %v2948 = vadd.f32 %v2752, %v2850
        %v2949 = vadd.f32 %v2753, %v2851
        %v2950 = vadd.f32 %v2754, %v2852
        %v2951 = vadd.f32 %v2755, %v2853
        %v2952 = vadd.f32 %v2756, %v2854
        %v2953 = vadd.f32 %v2757, %v2855
        %v2954 = vadd.f32 %v2758, %v2856
        %v2955 = vadd.f32 %v2759, %v2857
        %v2956 = vadd.f32 %v2760, %v2858
        %v2957 = vadd.f32 %v2761, %v2859
        %v2958 = vadd.f32 %v2762, %v2860
        %v2959 = vadd.f32 %v2763, %v2861
        %v2960 = vadd.f32 %v2764, %v2862
        %v2961 = vadd.f32 %v2765, %v2863
        %v2962 = vadd.f32 %v2766, %v2864
        %v2963 = vadd.f32 %v2767, %v2865
        %v2964 = vadd.f32 %v2768, %v2866
        %v2965 = vadd.f32 %v2769, %v2867
        %v2966 = vadd.f32 %v2770, %v2868
        %v2967 = vadd.f32 %v2771, %v2869
        %v2968 = vadd.f32 %v2772, %v2870
        %v2969 = vadd.f32 %v2773, %v2871
        %v2970 = vadd.f32 %v2774, %v2872
        %v2971 = vadd.f32 %v2775, %v2873
        %v2972 = vadd.f32 %v2776, %v2874
        %v2973 = vadd.f32 %v2777, %v2875
        %v2974 = vadd.f32 %v2778, %v2876
        %v2975 = vadd.f32 %v2779, %v2877
        %v2976 = vadd.f32 %v2780, %v2878
        %v2977 = vadd.f32 %v2781, %v2879
        %v2978 = vadd.f32 %v2782, %v2880
        %v2979 = vadd.f32 %v2783, %v2881
        %v2980 = vadd.f32 %v2784, %v2882
        %v2981 = vadd.f32 %v2785, %v2883
        %v2982 = vadd.f32 %v2786, %v2884
        %v2983 = vadd.f32 %v2787, %v2885
        %v2984 = vadd.f32 %v2788, %v2886
        %v2985 = vadd.f32 %v2789, %v2887
        %v2986 = vadd.f32 %v2790, %v2888
        %v2987 = vadd.f32 %v2791, %v2889
        %v2988 = vadd.f32 %v2792, %v2890
        %v2989 = vadd.f32 %v2793, %v2891
        %v2990 = vadd.f32 %v2794, %v2892
        %v2991 = vadd.f32 %v2795, %v2893
        %v2992 = vadd.f32 %v2796, %v2894
        %v2993 = vadd.f32 %v2797, %v2895
        %v2994 = vadd.f32 %v2798, %v2896
        %v2995 = vadd.f32 %v2799, %v2897
        %v2996 = vadd.f32 %v2800, %v2898
        %v2997 = vadd.f32 %v2801, %v2899
        %v2998 = vadd.f32 %v2802, %v2900
        %v2999 = vadd.f32 %v2803, %v2901
        %v3000 = vadd.f32 %v2804, %v2902
        %v3001 = vadd.f32 %v2805, %v2903
        %v3002 = vadd.f32 %v2806, %v2904
        %v3003 = vadd.f32 %v2807, %v2905
        %v3004 = vadd.f32 %v2808, %v2906
        %v3005 = vadd.f32 %v2809, %v2907
        %v3006 = vadd.f32 %v2810, %v2908
        %v3007 = vadd.f32 %v2811, %v2909
        %v3008 = vadd.f32 %v2812, %v2910
        %v3009 = vadd.f32 %v2813, %v2911
        %v3010 = vadd.f32 %v2814, %v2912
        %v3011 = vadd.f32 %v2815, %v2913
        %v3012 = vadd.f32 %v2816, %v2914
        %v3013 = vadd.f32 %v2817, %v2915
        %v3014 = vadd.f32 %v2818, %v2916
        %v3015 = vadd.f32 %v2819, %v2917
        %v3016 = vld [vmem:[%s19] sm:$0xff]
        %v3017 = vld [vmem:[%s19 + $0x8] sm:$0xff]
        %v3018 = vld [vmem:[%s19 + $0x10] sm:$0xff]
        %v3019 = vld [vmem:[%s19 + $0x18] sm:$0xf]
        %v3020 = vld [vmem:[%s19 + $0x1c] sm:$0xff]
        %v3021 = vld [vmem:[%s19 + $0x24] sm:$0xff]
        %v3022 = vld [vmem:[%s19 + $0x2c] sm:$0xff]
        %v3023 = vld [vmem:[%s19 + $0x34] sm:$0xf]
        %v3024 = vld [vmem:[%s19 + $0x38] sm:$0xff]
        %v3025 = vld [vmem:[%s19 + $0x40] sm:$0xff]
        %v3026 = vld [vmem:[%s19 + $0x48] sm:$0xff]
        %v3027 = vld [vmem:[%s19 + $0x50] sm:$0xf]
        %v3028 = vld [vmem:[%s19 + $0x54] sm:$0xff]
        %v3029 = vld [vmem:[%s19 + $0x5c] sm:$0xff]
        %v3030 = vld [vmem:[%s19 + $0x64] sm:$0xff]
        %v3031 = vld [vmem:[%s19 + $0x6c] sm:$0xf]
        %v3032 = vld [vmem:[%s19 + $0x70] sm:$0xff]
        %v3033 = vld [vmem:[%s19 + $0x78] sm:$0xff]
        %v3034 = vld [vmem:[%s19 + $0x80] sm:$0xff]
        %v3035 = vld [vmem:[%s19 + $0x88] sm:$0xf]
        %v3036 = vld [vmem:[%s19 + $0x8c] sm:$0xff]
        %v3037 = vld [vmem:[%s19 + $0x94] sm:$0xff]
        %v3038 = vld [vmem:[%s19 + $0x9c] sm:$0xff]
        %v3039 = vld [vmem:[%s19 + $0xa4] sm:$0xf]
        %v3040 = vld [vmem:[%s19 + $0xa8] sm:$0xff]
        %v3041 = vld [vmem:[%s19 + $0xb0] sm:$0xff]
        %v3042 = vld [vmem:[%s19 + $0xb8] sm:$0xff]
        %v3043 = vld [vmem:[%s19 + $0xc0] sm:$0xf]
        %v3044 = vld [vmem:[%s19 + $0xc4] sm:$0xff]
        %v3045 = vld [vmem:[%s19 + $0xcc] sm:$0xff]
        %v3046 = vld [vmem:[%s19 + $0xd4] sm:$0xff]
        %v3047 = vld [vmem:[%s19 + $0xdc] sm:$0xf]
        %v3048 = vld [vmem:[%s19 + $0xe0] sm:$0xff]
        %v3049 = vld [vmem:[%s19 + $0xe8] sm:$0xff]
        %v3050 = vld [vmem:[%s19 + $0xf0] sm:$0xff]
        %v3051 = vld [vmem:[%s19 + $0xf8] sm:$0xf]
        %v3052 = vld [vmem:[%s19 + $0xfc] sm:$0xff]
        %v3053 = vld [vmem:[%s19 + $0x104] sm:$0xff]
        %v3054 = vld [vmem:[%s19 + $0x10c] sm:$0xff]
        %v3055 = vld [vmem:[%s19 + $0x114] sm:$0xf]
        %v3056 = vld [vmem:[%s19 + $0x118] sm:$0xff]
        %v3057 = vld [vmem:[%s19 + $0x120] sm:$0xff]
        %v3058 = vld [vmem:[%s19 + $0x128] sm:$0xff]
        %v3059 = vld [vmem:[%s19 + $0x130] sm:$0xf]
        %v3060 = vld [vmem:[%s19 + $0x134] sm:$0xff]
        %v3061 = vld [vmem:[%s19 + $0x13c] sm:$0xff]
        %v3062 = vld [vmem:[%s19 + $0x144] sm:$0xff]
        %v3063 = vld [vmem:[%s19 + $0x14c] sm:$0xf]
        %v3064 = vld [vmem:[%s19 + $0x150] sm:$0xff]
        %v3065 = vld [vmem:[%s19 + $0x158] sm:$0xff]
        %v3066 = vld [vmem:[%s19 + $0x160] sm:$0xff]
        %v3067 = vld [vmem:[%s19 + $0x168] sm:$0xf]
        %v3068 = vld [vmem:[%s19 + $0x16c] sm:$0xff]
        %v3069 = vld [vmem:[%s19 + $0x174] sm:$0xff]
        %v3070 = vld [vmem:[%s19 + $0x17c] sm:$0xff]
        %v3071 = vld [vmem:[%s19 + $0x184] sm:$0xf]
        %v3072 = vld [vmem:[%s19 + $0x188] sm:$0xff]
        %v3073 = vld [vmem:[%s19 + $0x190] sm:$0xff]
        %v3074 = vld [vmem:[%s19 + $0x198] sm:$0xff]
        %v3075 = vld [vmem:[%s19 + $0x1a0] sm:$0xf]
        %v3076 = vld [vmem:[%s19 + $0x1a4] sm:$0xff]
        %v3077 = vld [vmem:[%s19 + $0x1ac] sm:$0xff]
        %v3078 = vld [vmem:[%s19 + $0x1b4] sm:$0xff]
        %v3079 = vld [vmem:[%s19 + $0x1bc] sm:$0xf]
        %v3080 = vld [vmem:[%s19 + $0x1c0] sm:$0xff]
        %v3081 = vld [vmem:[%s19 + $0x1c8] sm:$0xff]
        %v3082 = vld [vmem:[%s19 + $0x1d0] sm:$0xff]
        %v3083 = vld [vmem:[%s19 + $0x1d8] sm:$0xf]
        %v3084 = vld [vmem:[%s19 + $0x1dc] sm:$0xff]
        %v3085 = vld [vmem:[%s19 + $0x1e4] sm:$0xff]
        %v3086 = vld [vmem:[%s19 + $0x1ec] sm:$0xff]
        %v3087 = vld [vmem:[%s19 + $0x1f4] sm:$0xf]
        %v3088 = vld [vmem:[%s19 + $0x1f8] sm:$0xff]
        %v3089 = vld [vmem:[%s19 + $0x200] sm:$0xff]
        %v3090 = vld [vmem:[%s19 + $0x208] sm:$0xff]
        %v3091 = vld [vmem:[%s19 + $0x210] sm:$0xf]
        %v3092 = vld [vmem:[%s19 + $0x214] sm:$0xff]
        %v3093 = vld [vmem:[%s19 + $0x21c] sm:$0xff]
        %v3094 = vld [vmem:[%s19 + $0x224] sm:$0xff]
        %v3095 = vld [vmem:[%s19 + $0x22c] sm:$0xf]
        %v3096 = vld [vmem:[%s19 + $0x230] sm:$0xff]
        %v3097 = vld [vmem:[%s19 + $0x238] sm:$0xff]
        %v3098 = vld [vmem:[%s19 + $0x240] sm:$0xff]
        %v3099 = vld [vmem:[%s19 + $0x248] sm:$0xf]
        %v3100 = vld [vmem:[%s19 + $0x24c] sm:$0xff]
        %v3101 = vld [vmem:[%s19 + $0x254] sm:$0xff]
        %v3102 = vld [vmem:[%s19 + $0x25c] sm:$0xff]
        %v3103 = vld [vmem:[%s19 + $0x264] sm:$0xf]
        %v3104 = vld [vmem:[%s19 + $0x268] sm:$0xff]
        %v3105 = vld [vmem:[%s19 + $0x270] sm:$0xff]
        %v3106 = vld [vmem:[%s19 + $0x278] sm:$0xff]
        %v3107 = vld [vmem:[%s19 + $0x280] sm:$0xf]
        %v3108 = vld [vmem:[%s19 + $0x284] sm:$0xff]
        %v3109 = vld [vmem:[%s19 + $0x28c] sm:$0xff]
        %v3110 = vld [vmem:[%s19 + $0x294] sm:$0xff]
        %v3111 = vld [vmem:[%s19 + $0x29c] sm:$0xf]
        %v3112 = vld [vmem:[%s19 + $0x2a0] sm:$0x33]
        %v3113 = vld [vmem:[%s19 + $0x2a8] sm:$0x33]
        %v3114 = vld [vmem:[%s19 + $0x2b0] sm:$0x33]
        %v3115 = vld [vmem:[%s19 + $0x2b8] sm:$0x3]
        %v3116 = vpack.c.bf16 %v2919, %v2918
        %v3117 = vpack.c.bf16 %v2921, %v2920
        %v3118 = vpack.c.bf16 %v2923, %v2922
        %v3119 = vpack.c.bf16 %v2925, %v2924
        %v3120 = vpack.c.bf16 %v2927, %v2926
        %v3121 = vpack.c.bf16 %v2929, %v2928
        %v3122 = vpack.c.bf16 %v2931, %v2930
        %v3123 = vpack.c.bf16 %v2933, %v2932
        %v3124 = vpack.c.bf16 %v2935, %v2934
        %v3125 = vpack.c.bf16 %v2937, %v2936
        %v3126 = vpack.c.bf16 %v2939, %v2938
        %v3127 = vpack.c.bf16 %v2941, %v2940
        %v3128 = vpack.c.bf16 %v2943, %v2942
        %v3129 = vpack.c.bf16 %v2945, %v2944
        %v3130 = vpack.c.bf16 %v2947, %v2946
        %v3131 = vpack.c.bf16 %v2949, %v2948
        %v3132 = vpack.c.bf16 %v2951, %v2950
        %v3133 = vpack.c.bf16 %v2953, %v2952
        %v3134 = vpack.c.bf16 %v2955, %v2954
        %v3135 = vpack.c.bf16 %v2957, %v2956
        %v3136 = vpack.c.bf16 %v2959, %v2958
        %v3137 = vpack.c.bf16 %v2961, %v2960
        %v3138 = vpack.c.bf16 %v2963, %v2962
        %v3139 = vpack.c.bf16 %v2965, %v2964
        %v3140 = vpack.c.bf16 %v2967, %v2966
        %v3141 = vpack.c.bf16 %v2969, %v2968
        %v3142 = vpack.c.bf16 %v2971, %v2970
        %v3143 = vpack.c.bf16 %v2973, %v2972
        %v3144 = vpack.c.bf16 %v2975, %v2974
        %v3145 = vpack.c.bf16 %v2977, %v2976
        %v3146 = vpack.c.bf16 %v2979, %v2978
        %v3147 = vpack.c.bf16 %v2981, %v2980
        %v3148 = vpack.c.bf16 %v2983, %v2982
        %v3149 = vpack.c.bf16 %v2985, %v2984
        %v3150 = vpack.c.bf16 %v2987, %v2986
        %v3151 = vpack.c.bf16 %v2989, %v2988
        %v3152 = vpack.c.bf16 %v2991, %v2990
        %v3153 = vpack.c.bf16 %v2993, %v2992
        %v3154 = vpack.c.bf16 %v2995, %v2994
        %v3155 = vpack.c.bf16 %v2997, %v2996
        %v3156 = vpack.c.bf16 %v2999, %v2998
        %v3157 = vpack.c.bf16 %v3001, %v3000
        %v3158 = vpack.c.bf16 %v3003, %v3002
        %v3159 = vpack.c.bf16 %v3005, %v3004
        %v3160 = vpack.c.bf16 %v3007, %v3006
        %v3161 = vpack.c.bf16 %v3009, %v3008
        %v3162 = vpack.c.bf16 %v3011, %v3010
        %v3163 = vpack.c.bf16 %v3013, %v3012
        %v3164 = vpack.c.bf16 %v3015, %v3014
        %v3265 = vunpack.c.l.b16 %v3016
        %v3266 = vunpack.c.h.b16 %v3016
        %v3267 = vunpack.c.l.b16 %v3017
        %v3268 = vunpack.c.h.b16 %v3017
        %v3269 = vunpack.c.l.b16 %v3018
        %v3270 = vunpack.c.h.b16 %v3018
        %v3271 = vunpack.c.l.b16 %v3019
        %v3272 = vunpack.c.l.b16 %v3020
        %v3273 = vunpack.c.h.b16 %v3020
        %v3274 = vunpack.c.l.b16 %v3021
        %v3275 = vunpack.c.h.b16 %v3021
        %v3276 = vunpack.c.l.b16 %v3022
        %v3277 = vunpack.c.h.b16 %v3022
        %v3278 = vunpack.c.l.b16 %v3023
        %v3279 = vunpack.c.l.b16 %v3024
        %v3280 = vunpack.c.h.b16 %v3024
        %v3281 = vunpack.c.l.b16 %v3025
        %v3282 = vunpack.c.h.b16 %v3025
        %v3283 = vunpack.c.l.b16 %v3026
        %v3284 = vunpack.c.h.b16 %v3026
        %v3285 = vunpack.c.l.b16 %v3027
        %v3286 = vunpack.c.l.b16 %v3028
        %v3287 = vunpack.c.h.b16 %v3028
        %v3288 = vunpack.c.l.b16 %v3029
        %v3289 = vunpack.c.h.b16 %v3029
        %v3290 = vunpack.c.l.b16 %v3030
        %v3291 = vunpack.c.h.b16 %v3030
        %v3292 = vunpack.c.l.b16 %v3031
        %v3293 = vunpack.c.l.b16 %v3032
        %v3294 = vunpack.c.h.b16 %v3032
        %v3295 = vunpack.c.l.b16 %v3033
        %v3296 = vunpack.c.h.b16 %v3033
        %v3297 = vunpack.c.l.b16 %v3034
        %v3298 = vunpack.c.h.b16 %v3034
        %v3299 = vunpack.c.l.b16 %v3035
        %v3300 = vunpack.c.l.b16 %v3036
        %v3301 = vunpack.c.h.b16 %v3036
        %v3302 = vunpack.c.l.b16 %v3037
        %v3303 = vunpack.c.h.b16 %v3037
        %v3304 = vunpack.c.l.b16 %v3038
        %v3305 = vunpack.c.h.b16 %v3038
        %v3306 = vunpack.c.l.b16 %v3039
        %v3307 = vunpack.c.l.b16 %v3040
        %v3308 = vunpack.c.h.b16 %v3040
        %v3309 = vunpack.c.l.b16 %v3041
        %v3310 = vunpack.c.h.b16 %v3041
        %v3311 = vunpack.c.l.b16 %v3042
        %v3312 = vunpack.c.h.b16 %v3042
        %v3313 = vunpack.c.l.b16 %v3043
        %v3314 = vunpack.c.l.b16 %v3044
        %v3315 = vunpack.c.h.b16 %v3044
        %v3316 = vunpack.c.l.b16 %v3045
        %v3317 = vunpack.c.h.b16 %v3045
        %v3318 = vunpack.c.l.b16 %v3046
        %v3319 = vunpack.c.h.b16 %v3046
        %v3320 = vunpack.c.l.b16 %v3047
        %v3321 = vunpack.c.l.b16 %v3048
        %v3322 = vunpack.c.h.b16 %v3048
        %v3323 = vunpack.c.l.b16 %v3049
        %v3324 = vunpack.c.h.b16 %v3049
        %v3325 = vunpack.c.l.b16 %v3050
        %v3326 = vunpack.c.h.b16 %v3050
        %v3327 = vunpack.c.l.b16 %v3051
        %v3328 = vunpack.c.l.b16 %v3052
        %v3329 = vunpack.c.h.b16 %v3052
        %v3330 = vunpack.c.l.b16 %v3053
        %v3331 = vunpack.c.h.b16 %v3053
        %v3332 = vunpack.c.l.b16 %v3054
        %v3333 = vunpack.c.h.b16 %v3054
        %v3334 = vunpack.c.l.b16 %v3055
        %v3335 = vunpack.c.l.b16 %v3056
        %v3336 = vunpack.c.h.b16 %v3056
        %v3337 = vunpack.c.l.b16 %v3057
        %v3338 = vunpack.c.h.b16 %v3057
        %v3339 = vunpack.c.l.b16 %v3058
        %v3340 = vunpack.c.h.b16 %v3058
        %v3341 = vunpack.c.l.b16 %v3059
        %v3342 = vunpack.c.l.b16 %v3060
        %v3343 = vunpack.c.h.b16 %v3060
        %v3344 = vunpack.c.l.b16 %v3061
        %v3345 = vunpack.c.h.b16 %v3061
        %v3346 = vunpack.c.l.b16 %v3062
        %v3347 = vunpack.c.h.b16 %v3062
        %v3348 = vunpack.c.l.b16 %v3063
        %v3349 = vunpack.c.l.b16 %v3064
        %v3350 = vunpack.c.h.b16 %v3064
        %v3351 = vunpack.c.l.b16 %v3065
        %v3352 = vunpack.c.h.b16 %v3065
        %v3353 = vunpack.c.l.b16 %v3066
        %v3354 = vunpack.c.h.b16 %v3066
        %v3355 = vunpack.c.l.b16 %v3067
        %v3356 = vunpack.c.l.b16 %v3068
        %v3357 = vunpack.c.h.b16 %v3068
        %v3358 = vunpack.c.l.b16 %v3069
        %v3359 = vunpack.c.h.b16 %v3069
        %v3360 = vunpack.c.l.b16 %v3070
        %v3361 = vunpack.c.h.b16 %v3070
        %v3362 = vunpack.c.l.b16 %v3071
        %v3363 = vunpack.c.l.b16 %v3072
        %v3364 = vunpack.c.h.b16 %v3072
        %v3365 = vunpack.c.l.b16 %v3073
        %v3366 = vunpack.c.h.b16 %v3073
        %v3367 = vunpack.c.l.b16 %v3074
        %v3368 = vunpack.c.h.b16 %v3074
        %v3369 = vunpack.c.l.b16 %v3075
        %v3370 = vunpack.c.l.b16 %v3076
        %v3371 = vunpack.c.h.b16 %v3076
        %v3372 = vunpack.c.l.b16 %v3077
        %v3373 = vunpack.c.h.b16 %v3077
        %v3374 = vunpack.c.l.b16 %v3078
        %v3375 = vunpack.c.h.b16 %v3078
        %v3376 = vunpack.c.l.b16 %v3079
        %v3377 = vunpack.c.l.b16 %v3080
        %v3378 = vunpack.c.h.b16 %v3080
        %v3379 = vunpack.c.l.b16 %v3081
        %v3380 = vunpack.c.h.b16 %v3081
        %v3381 = vunpack.c.l.b16 %v3082
        %v3382 = vunpack.c.h.b16 %v3082
        %v3383 = vunpack.c.l.b16 %v3083
        %v3384 = vunpack.c.l.b16 %v3084
        %v3385 = vunpack.c.h.b16 %v3084
        %v3386 = vunpack.c.l.b16 %v3085
        %v3387 = vunpack.c.h.b16 %v3085
        %v3388 = vunpack.c.l.b16 %v3086
        %v3389 = vunpack.c.h.b16 %v3086
        %v3390 = vunpack.c.l.b16 %v3087
        %v3391 = vunpack.c.l.b16 %v3088
        %v3392 = vunpack.c.h.b16 %v3088
        %v3393 = vunpack.c.l.b16 %v3089
        %v3394 = vunpack.c.h.b16 %v3089
        %v3395 = vunpack.c.l.b16 %v3090
        %v3396 = vunpack.c.h.b16 %v3090
        %v3397 = vunpack.c.l.b16 %v3091
        %v3398 = vunpack.c.l.b16 %v3092
        %v3399 = vunpack.c.h.b16 %v3092
        %v3400 = vunpack.c.l.b16 %v3093
        %v3401 = vunpack.c.h.b16 %v3093
        %v3402 = vunpack.c.l.b16 %v3094
        %v3403 = vunpack.c.h.b16 %v3094
        %v3404 = vunpack.c.l.b16 %v3095
        %v3405 = vunpack.c.l.b16 %v3096
        %v3406 = vunpack.c.h.b16 %v3096
        %v3407 = vunpack.c.l.b16 %v3097
        %v3408 = vunpack.c.h.b16 %v3097
        %v3409 = vunpack.c.l.b16 %v3098
        %v3410 = vunpack.c.h.b16 %v3098
        %v3411 = vunpack.c.l.b16 %v3099
        %v3412 = vunpack.c.l.b16 %v3100
        %v3413 = vunpack.c.h.b16 %v3100
        %v3414 = vunpack.c.l.b16 %v3101
        %v3415 = vunpack.c.h.b16 %v3101
        %v3416 = vunpack.c.l.b16 %v3102
        %v3417 = vunpack.c.h.b16 %v3102
        %v3418 = vunpack.c.l.b16 %v3103
        %v3419 = vunpack.c.l.b16 %v3104
        %v3420 = vunpack.c.h.b16 %v3104
        %v3421 = vunpack.c.l.b16 %v3105
        %v3422 = vunpack.c.h.b16 %v3105
        %v3423 = vunpack.c.l.b16 %v3106
        %v3424 = vunpack.c.h.b16 %v3106
        %v3425 = vunpack.c.l.b16 %v3107
        %v3426 = vunpack.c.l.b16 %v3108
        %v3427 = vunpack.c.h.b16 %v3108
        %v3428 = vunpack.c.l.b16 %v3109
        %v3429 = vunpack.c.h.b16 %v3109
        %v3430 = vunpack.c.l.b16 %v3110
        %v3431 = vunpack.c.h.b16 %v3110
        %v3432 = vunpack.c.l.b16 %v3111
        %v3433 = vunpack.c.l.b16 %v3112
        %v3434 = vunpack.c.h.b16 %v3112
        %v3435 = vunpack.c.l.b16 %v3113
        %v3436 = vunpack.c.h.b16 %v3113
        %v3437 = vunpack.c.l.b16 %v3114
        %v3438 = vunpack.c.h.b16 %v3114
        %v3439 = vunpack.c.l.b16 %v3115
        %v3440 = vpack.c.b16 %v3272, %v3265
        %v3441 = vpack.c.b16 %v3273, %v3266
        %v3442 = vpack.c.b16 %v3274, %v3267
        %v3443 = vpack.c.b16 %v3275, %v3268
        %v3444 = vpack.c.b16 %v3276, %v3269
        %v3445 = vpack.c.b16 %v3277, %v3270
        %v3446 = vpack.c.b16 %v3278, %v3271
        %v3447 = vpack.c.b16 %v3286, %v3279
        %v3448 = vpack.c.b16 %v3287, %v3280
        %v3449 = vpack.c.b16 %v3288, %v3281
        %v3450 = vpack.c.b16 %v3289, %v3282
        %v3451 = vpack.c.b16 %v3290, %v3283
        %v3452 = vpack.c.b16 %v3291, %v3284
        %v3453 = vpack.c.b16 %v3292, %v3285
        %v3454 = vpack.c.b16 %v3300, %v3293
        %v3455 = vpack.c.b16 %v3301, %v3294
        %v3456 = vpack.c.b16 %v3302, %v3295
        %v3457 = vpack.c.b16 %v3303, %v3296
        %v3458 = vpack.c.b16 %v3304, %v3297
        %v3459 = vpack.c.b16 %v3305, %v3298
        %v3460 = vpack.c.b16 %v3306, %v3299
        %v3461 = vpack.c.b16 %v3314, %v3307
        %v3462 = vpack.c.b16 %v3315, %v3308
        %v3463 = vpack.c.b16 %v3316, %v3309
        %v3464 = vpack.c.b16 %v3317, %v3310
        %v3465 = vpack.c.b16 %v3318, %v3311
        %v3466 = vpack.c.b16 %v3319, %v3312
        %v3467 = vpack.c.b16 %v3320, %v3313
        %v3468 = vpack.c.b16 %v3328, %v3321
        %v3469 = vpack.c.b16 %v3329, %v3322
        %v3470 = vpack.c.b16 %v3330, %v3323
        %v3471 = vpack.c.b16 %v3331, %v3324
        %v3472 = vpack.c.b16 %v3332, %v3325
        %v3473 = vpack.c.b16 %v3333, %v3326
        %v3474 = vpack.c.b16 %v3334, %v3327
        %v3475 = vpack.c.b16 %v3342, %v3335
        %v3476 = vpack.c.b16 %v3343, %v3336
        %v3477 = vpack.c.b16 %v3344, %v3337
        %v3478 = vpack.c.b16 %v3345, %v3338
        %v3479 = vpack.c.b16 %v3346, %v3339
        %v3480 = vpack.c.b16 %v3347, %v3340
        %v3481 = vpack.c.b16 %v3348, %v3341
        %v3482 = vpack.c.b16 %v3356, %v3349
        %v3483 = vpack.c.b16 %v3357, %v3350
        %v3484 = vpack.c.b16 %v3358, %v3351
        %v3485 = vpack.c.b16 %v3359, %v3352
        %v3486 = vpack.c.b16 %v3360, %v3353
        %v3487 = vpack.c.b16 %v3361, %v3354
        %v3488 = vpack.c.b16 %v3362, %v3355
        %v3489 = vpack.c.b16 %v3370, %v3363
        %v3490 = vpack.c.b16 %v3371, %v3364
        %v3491 = vpack.c.b16 %v3372, %v3365
        %v3492 = vpack.c.b16 %v3373, %v3366
        %v3493 = vpack.c.b16 %v3374, %v3367
        %v3494 = vpack.c.b16 %v3375, %v3368
        %v3495 = vpack.c.b16 %v3376, %v3369
        %v3496 = vpack.c.b16 %v3384, %v3377
        %v3497 = vpack.c.b16 %v3385, %v3378
        %v3498 = vpack.c.b16 %v3386, %v3379
        %v3499 = vpack.c.b16 %v3387, %v3380
        %v3500 = vpack.c.b16 %v3388, %v3381
        %v3501 = vpack.c.b16 %v3389, %v3382
        %v3502 = vpack.c.b16 %v3390, %v3383
        %v3503 = vpack.c.b16 %v3398, %v3391
        %v3504 = vpack.c.b16 %v3399, %v3392
        %v3505 = vpack.c.b16 %v3400, %v3393
        %v3506 = vpack.c.b16 %v3401, %v3394
        %v3507 = vpack.c.b16 %v3402, %v3395
        %v3508 = vpack.c.b16 %v3403, %v3396
        %v3509 = vpack.c.b16 %v3404, %v3397
        %v3510 = vpack.c.b16 %v3412, %v3405
        %v3511 = vpack.c.b16 %v3413, %v3406
        %v3512 = vpack.c.b16 %v3414, %v3407
        %v3513 = vpack.c.b16 %v3415, %v3408
        %v3514 = vpack.c.b16 %v3416, %v3409
        %v3515 = vpack.c.b16 %v3417, %v3410
        %v3516 = vpack.c.b16 %v3418, %v3411
        %v3517 = vpack.c.b16 %v3426, %v3419
        %v3518 = vpack.c.b16 %v3427, %v3420
        %v3519 = vpack.c.b16 %v3428, %v3421
        %v3520 = vpack.c.b16 %v3429, %v3422
        %v3521 = vpack.c.b16 %v3430, %v3423
        %v3522 = vpack.c.b16 %v3431, %v3424
        %v3523 = vpack.c.b16 %v3432, %v3425
        %v3524 = vpack.c.b16 %v3433, %v3433
        %v3525 = vpack.c.b16 %v3434, %v3434
        %v3526 = vpack.c.b16 %v3435, %v3435
        %v3527 = vpack.c.b16 %v3436, %v3436
        %v3528 = vpack.c.b16 %v3437, %v3437
        %v3529 = vpack.c.b16 %v3438, %v3438
        %v3530 = vpack.c.b16 %v3439, %v3439
        %vm3609 = vcmask 130048
        %v3611 = vsel %vm3609, %v3446, 0
        %v3614 = vsel %vm3609, %v3453, 0
        %v3617 = vsel %vm3609, %v3460, 0
        %v3620 = vsel %vm3609, %v3467, 0
        %v3623 = vsel %vm3609, %v3474, 0
        %v3626 = vsel %vm3609, %v3481, 0
        %v3629 = vsel %vm3609, %v3488, 0
        %v3632 = vsel %vm3609, %v3495, 0
        %v3635 = vsel %vm3609, %v3502, 0
        %v3638 = vsel %vm3609, %v3509, 0
        %v3641 = vsel %vm3609, %v3516, 0
        %v3644 = vsel %vm3609, %v3523, 0
        %v3647 = vsel %vm3609, %v3530, 0
        %3649 = vmatpush.bf16.msra.mxu0 %v3123
        %3650 = vmatpush.bf16.msra.mxu0 %v3122
        %3651 = vmatpush.bf16.msra.mxu0 %v3121
        %3652 = vmatpush.bf16.msra.mxu0 %v3120
        %3653 = vmatpush.bf16.msra.mxu0 %v3119
        %3654 = vmatpush.bf16.msra.mxu0 %v3118
        %3655 = vmatpush.bf16.msra.mxu0 %v3117
        %3656 = vmatpush.bf16.msra.mxu0 %v3116
        %3657 = vmatmul.bf16.gmra.mxu0 %v3440
        %v3658 = vpop.f32.mrf.mxu0
        %v3659 = vadd.f32 0.0, %v3658
        %v3660 = vpop.f32.mrf.mxu0
        %v3661 = vadd.f32 0.0, %v3660
        %3662 = vmatmul.bf16.gmra.mxu0 %v3447
        %v3663 = vpop.f32.mrf.mxu0
        %v3664 = vadd.f32 0.0, %v3663
        %v3665 = vpop.f32.mrf.mxu0
        %v3666 = vadd.f32 0.0, %v3665
        %3667 = vmatmul.bf16.gmra.mxu0 %v3454
        %v3668 = vpop.f32.mrf.mxu0
        %v3669 = vadd.f32 0.0, %v3668
        %v3670 = vpop.f32.mrf.mxu0
        %v3671 = vadd.f32 0.0, %v3670
        %3672 = vmatmul.bf16.gmra.mxu0 %v3461
        %v3673 = vpop.f32.mrf.mxu0
        %v3674 = vadd.f32 0.0, %v3673
        %v3675 = vpop.f32.mrf.mxu0
        %v3676 = vadd.f32 0.0, %v3675
        %3677 = vmatmul.bf16.gmra.mxu0 %v3468
        %v3678 = vpop.f32.mrf.mxu0
        %v3679 = vadd.f32 0.0, %v3678
        %v3680 = vpop.f32.mrf.mxu0
        %v3681 = vadd.f32 0.0, %v3680
        %3682 = vmatmul.bf16.gmra.mxu0 %v3475
        %v3683 = vpop.f32.mrf.mxu0
        %v3684 = vadd.f32 0.0, %v3683
        %v3685 = vpop.f32.mrf.mxu0
        %v3686 = vadd.f32 0.0, %v3685
        %3687 = vmatmul.bf16.gmra.mxu0 %v3482
        %v3688 = vpop.f32.mrf.mxu0
        %v3689 = vadd.f32 0.0, %v3688
        %v3690 = vpop.f32.mrf.mxu0
        %v3691 = vadd.f32 0.0, %v3690
        %3692 = vmatmul.bf16.gmra.mxu0 %v3489
        %v3693 = vpop.f32.mrf.mxu0
        %v3694 = vadd.f32 0.0, %v3693
        %v3695 = vpop.f32.mrf.mxu0
        %v3696 = vadd.f32 0.0, %v3695
        %3697 = vmatmul.bf16.gmra.mxu0 %v3496
        %v3698 = vpop.f32.mrf.mxu0
        %v3699 = vadd.f32 0.0, %v3698
        %v3700 = vpop.f32.mrf.mxu0
        %v3701 = vadd.f32 0.0, %v3700
        %3702 = vmatmul.bf16.gmra.mxu0 %v3503
        %v3703 = vpop.f32.mrf.mxu0
        %v3704 = vadd.f32 0.0, %v3703
        %v3705 = vpop.f32.mrf.mxu0
        %v3706 = vadd.f32 0.0, %v3705
        %3707 = vmatmul.bf16.gmra.mxu0 %v3510
        %v3708 = vpop.f32.mrf.mxu0
        %v3709 = vadd.f32 0.0, %v3708
        %v3710 = vpop.f32.mrf.mxu0
        %v3711 = vadd.f32 0.0, %v3710
        %3712 = vmatmul.bf16.gmra.mxu0 %v3517
        %v3713 = vpop.f32.mrf.mxu0
        %v3714 = vadd.f32 0.0, %v3713
        %v3715 = vpop.f32.mrf.mxu0
        %v3716 = vadd.f32 0.0, %v3715
        %3717 = vmatmul.bf16.gmra.mxu0 %v3524
        %v3718 = vpop.f32.mrf.mxu0
        %v3719 = vadd.f32 0.0, %v3718
        %v3720 = vpop.f32.mrf.mxu0
        %3721 = vdwg.mxu0
        %3722 = vmatpush.bf16.msra.mxu0 %v3131
        %3723 = vmatpush.bf16.msra.mxu0 %v3130
        %3724 = vmatpush.bf16.msra.mxu0 %v3129
        %3725 = vmatpush.bf16.msra.mxu0 %v3128
        %3726 = vmatpush.bf16.msra.mxu0 %v3127
        %3727 = vmatpush.bf16.msra.mxu0 %v3126
        %3728 = vmatpush.bf16.msra.mxu0 %v3125
        %3729 = vmatpush.bf16.msra.mxu0 %v3124
        %3730 = vmatmul.bf16.gmra.mxu0 %v3441
        %v3731 = vpop.f32.mrf.mxu0
        %v3732 = vadd.f32 %v3659, %v3731
        %v3733 = vpop.f32.mrf.mxu0
        %v3734 = vadd.f32 %v3661, %v3733
        %3735 = vmatmul.bf16.gmra.mxu0 %v3448
        %v3736 = vpop.f32.mrf.mxu0
        %v3737 = vadd.f32 %v3664, %v3736
        %v3738 = vpop.f32.mrf.mxu0
        %v3739 = vadd.f32 %v3666, %v3738
        %3740 = vmatmul.bf16.gmra.mxu0 %v3455
        %v3741 = vpop.f32.mrf.mxu0
        %v3742 = vadd.f32 %v3669, %v3741
        %v3743 = vpop.f32.mrf.mxu0
        %v3744 = vadd.f32 %v3671, %v3743
        %3745 = vmatmul.bf16.gmra.mxu0 %v3462
        %v3746 = vpop.f32.mrf.mxu0
        %v3747 = vadd.f32 %v3674, %v3746
        %v3748 = vpop.f32.mrf.mxu0
        %v3749 = vadd.f32 %v3676, %v3748
        %3750 = vmatmul.bf16.gmra.mxu0 %v3469
        %v3751 = vpop.f32.mrf.mxu0
        %v3752 = vadd.f32 %v3679, %v3751
        %v3753 = vpop.f32.mrf.mxu0
        %v3754 = vadd.f32 %v3681, %v3753
        %3755 = vmatmul.bf16.gmra.mxu0 %v3476
        %v3756 = vpop.f32.mrf.mxu0
        %v3757 = vadd.f32 %v3684, %v3756
        %v3758 = vpop.f32.mrf.mxu0
        %v3759 = vadd.f32 %v3686, %v3758
        %3760 = vmatmul.bf16.gmra.mxu0 %v3483
        %v3761 = vpop.f32.mrf.mxu0
        %v3762 = vadd.f32 %v3689, %v3761
        %v3763 = vpop.f32.mrf.mxu0
        %v3764 = vadd.f32 %v3691, %v3763
        %3765 = vmatmul.bf16.gmra.mxu0 %v3490
        %v3766 = vpop.f32.mrf.mxu0
        %v3767 = vadd.f32 %v3694, %v3766
        %v3768 = vpop.f32.mrf.mxu0
        %v3769 = vadd.f32 %v3696, %v3768
        %3770 = vmatmul.bf16.gmra.mxu0 %v3497
        %v3771 = vpop.f32.mrf.mxu0
        %v3772 = vadd.f32 %v3699, %v3771
        %v3773 = vpop.f32.mrf.mxu0
        %v3774 = vadd.f32 %v3701, %v3773
        %3775 = vmatmul.bf16.gmra.mxu0 %v3504
        %v3776 = vpop.f32.mrf.mxu0
        %v3777 = vadd.f32 %v3704, %v3776
        %v3778 = vpop.f32.mrf.mxu0
        %v3779 = vadd.f32 %v3706, %v3778
        %3780 = vmatmul.bf16.gmra.mxu0 %v3511
        %v3781 = vpop.f32.mrf.mxu0
        %v3782 = vadd.f32 %v3709, %v3781
        %v3783 = vpop.f32.mrf.mxu0
        %v3784 = vadd.f32 %v3711, %v3783
        %3785 = vmatmul.bf16.gmra.mxu0 %v3518
        %v3786 = vpop.f32.mrf.mxu0
        %v3787 = vadd.f32 %v3714, %v3786
        %v3788 = vpop.f32.mrf.mxu0
        %v3789 = vadd.f32 %v3716, %v3788
        %3790 = vmatmul.bf16.gmra.mxu0 %v3525
        %v3791 = vpop.f32.mrf.mxu0
        %v3792 = vadd.f32 %v3719, %v3791
        %v3793 = vpop.f32.mrf.mxu0
        %3794 = vdwg.mxu0
        %3795 = vmatpush.bf16.msra.mxu0 %v3139
        %3796 = vmatpush.bf16.msra.mxu0 %v3138
        %3797 = vmatpush.bf16.msra.mxu0 %v3137
        %3798 = vmatpush.bf16.msra.mxu0 %v3136
        %3799 = vmatpush.bf16.msra.mxu0 %v3135
        %3800 = vmatpush.bf16.msra.mxu0 %v3134
        %3801 = vmatpush.bf16.msra.mxu0 %v3133
        %3802 = vmatpush.bf16.msra.mxu0 %v3132
        %3803 = vmatmul.bf16.gmra.mxu0 %v3442
        %v3804 = vpop.f32.mrf.mxu0
        %v3805 = vadd.f32 %v3732, %v3804
        %v3806 = vpop.f32.mrf.mxu0
        %v3807 = vadd.f32 %v3734, %v3806
        %3808 = vmatmul.bf16.gmra.mxu0 %v3449
        %v3809 = vpop.f32.mrf.mxu0
        %v3810 = vadd.f32 %v3737, %v3809
        %v3811 = vpop.f32.mrf.mxu0
        %v3812 = vadd.f32 %v3739, %v3811
        %3813 = vmatmul.bf16.gmra.mxu0 %v3456
        %v3814 = vpop.f32.mrf.mxu0
        %v3815 = vadd.f32 %v3742, %v3814
        %v3816 = vpop.f32.mrf.mxu0
        %v3817 = vadd.f32 %v3744, %v3816
        %3818 = vmatmul.bf16.gmra.mxu0 %v3463
        %v3819 = vpop.f32.mrf.mxu0
        %v3820 = vadd.f32 %v3747, %v3819
        %v3821 = vpop.f32.mrf.mxu0
        %v3822 = vadd.f32 %v3749, %v3821
        %3823 = vmatmul.bf16.gmra.mxu0 %v3470
        %v3824 = vpop.f32.mrf.mxu0
        %v3825 = vadd.f32 %v3752, %v3824
        %v3826 = vpop.f32.mrf.mxu0
        %v3827 = vadd.f32 %v3754, %v3826
        %3828 = vmatmul.bf16.gmra.mxu0 %v3477
        %v3829 = vpop.f32.mrf.mxu0
        %v3830 = vadd.f32 %v3757, %v3829
        %v3831 = vpop.f32.mrf.mxu0
        %v3832 = vadd.f32 %v3759, %v3831
        %3833 = vmatmul.bf16.gmra.mxu0 %v3484
        %v3834 = vpop.f32.mrf.mxu0
        %v3835 = vadd.f32 %v3762, %v3834
        %v3836 = vpop.f32.mrf.mxu0
        %v3837 = vadd.f32 %v3764, %v3836
        %3838 = vmatmul.bf16.gmra.mxu0 %v3491
        %v3839 = vpop.f32.mrf.mxu0
        %v3840 = vadd.f32 %v3767, %v3839
        %v3841 = vpop.f32.mrf.mxu0
        %v3842 = vadd.f32 %v3769, %v3841
        %3843 = vmatmul.bf16.gmra.mxu0 %v3498
        %v3844 = vpop.f32.mrf.mxu0
        %v3845 = vadd.f32 %v3772, %v3844
        %v3846 = vpop.f32.mrf.mxu0
        %v3847 = vadd.f32 %v3774, %v3846
        %3848 = vmatmul.bf16.gmra.mxu0 %v3505
        %v3849 = vpop.f32.mrf.mxu0
        %v3850 = vadd.f32 %v3777, %v3849
        %v3851 = vpop.f32.mrf.mxu0
        %v3852 = vadd.f32 %v3779, %v3851
        %3853 = vmatmul.bf16.gmra.mxu0 %v3512
        %v3854 = vpop.f32.mrf.mxu0
        %v3855 = vadd.f32 %v3782, %v3854
        %v3856 = vpop.f32.mrf.mxu0
        %v3857 = vadd.f32 %v3784, %v3856
        %3858 = vmatmul.bf16.gmra.mxu0 %v3519
        %v3859 = vpop.f32.mrf.mxu0
        %v3860 = vadd.f32 %v3787, %v3859
        %v3861 = vpop.f32.mrf.mxu0
        %v3862 = vadd.f32 %v3789, %v3861
        %3863 = vmatmul.bf16.gmra.mxu0 %v3526
        %v3864 = vpop.f32.mrf.mxu0
        %v3865 = vadd.f32 %v3792, %v3864
        %v3866 = vpop.f32.mrf.mxu0
        %3867 = vdwg.mxu0
        %3868 = vmatpush.bf16.msra.mxu0 %v3147
        %3869 = vmatpush.bf16.msra.mxu0 %v3146
        %3870 = vmatpush.bf16.msra.mxu0 %v3145
        %3871 = vmatpush.bf16.msra.mxu0 %v3144
        %3872 = vmatpush.bf16.msra.mxu0 %v3143
        %3873 = vmatpush.bf16.msra.mxu0 %v3142
        %3874 = vmatpush.bf16.msra.mxu0 %v3141
        %3875 = vmatpush.bf16.msra.mxu0 %v3140
        %3876 = vmatmul.bf16.gmra.mxu0 %v3443
        %v3877 = vpop.f32.mrf.mxu0
        %v3878 = vadd.f32 %v3805, %v3877
        %v3879 = vpop.f32.mrf.mxu0
        %v3880 = vadd.f32 %v3807, %v3879
        %3881 = vmatmul.bf16.gmra.mxu0 %v3450
        %v3882 = vpop.f32.mrf.mxu0
        %v3883 = vadd.f32 %v3810, %v3882
        %v3884 = vpop.f32.mrf.mxu0
        %v3885 = vadd.f32 %v3812, %v3884
        %3886 = vmatmul.bf16.gmra.mxu0 %v3457
        %v3887 = vpop.f32.mrf.mxu0
        %v3888 = vadd.f32 %v3815, %v3887
        %v3889 = vpop.f32.mrf.mxu0
        %v3890 = vadd.f32 %v3817, %v3889
        %3891 = vmatmul.bf16.gmra.mxu0 %v3464
        %v3892 = vpop.f32.mrf.mxu0
        %v3893 = vadd.f32 %v3820, %v3892
        %v3894 = vpop.f32.mrf.mxu0
        %v3895 = vadd.f32 %v3822, %v3894
        %3896 = vmatmul.bf16.gmra.mxu0 %v3471
        %v3897 = vpop.f32.mrf.mxu0
        %v3898 = vadd.f32 %v3825, %v3897
        %v3899 = vpop.f32.mrf.mxu0
        %v3900 = vadd.f32 %v3827, %v3899
        %3901 = vmatmul.bf16.gmra.mxu0 %v3478
        %v3902 = vpop.f32.mrf.mxu0
        %v3903 = vadd.f32 %v3830, %v3902
        %v3904 = vpop.f32.mrf.mxu0
        %v3905 = vadd.f32 %v3832, %v3904
        %3906 = vmatmul.bf16.gmra.mxu0 %v3485
        %v3907 = vpop.f32.mrf.mxu0
        %v3908 = vadd.f32 %v3835, %v3907
        %v3909 = vpop.f32.mrf.mxu0
        %v3910 = vadd.f32 %v3837, %v3909
        %3911 = vmatmul.bf16.gmra.mxu0 %v3492
        %v3912 = vpop.f32.mrf.mxu0
        %v3913 = vadd.f32 %v3840, %v3912
        %v3914 = vpop.f32.mrf.mxu0
        %v3915 = vadd.f32 %v3842, %v3914
        %3916 = vmatmul.bf16.gmra.mxu0 %v3499
        %v3917 = vpop.f32.mrf.mxu0
        %v3918 = vadd.f32 %v3845, %v3917
        %v3919 = vpop.f32.mrf.mxu0
        %v3920 = vadd.f32 %v3847, %v3919
        %3921 = vmatmul.bf16.gmra.mxu0 %v3506
        %v3922 = vpop.f32.mrf.mxu0
        %v3923 = vadd.f32 %v3850, %v3922
        %v3924 = vpop.f32.mrf.mxu0
        %v3925 = vadd.f32 %v3852, %v3924
        %3926 = vmatmul.bf16.gmra.mxu0 %v3513
        %v3927 = vpop.f32.mrf.mxu0
        %v3928 = vadd.f32 %v3855, %v3927
        %v3929 = vpop.f32.mrf.mxu0
        %v3930 = vadd.f32 %v3857, %v3929
        %3931 = vmatmul.bf16.gmra.mxu0 %v3520
        %v3932 = vpop.f32.mrf.mxu0
        %v3933 = vadd.f32 %v3860, %v3932
        %v3934 = vpop.f32.mrf.mxu0
        %v3935 = vadd.f32 %v3862, %v3934
        %3936 = vmatmul.bf16.gmra.mxu0 %v3527
        %v3937 = vpop.f32.mrf.mxu0
        %v3938 = vadd.f32 %v3865, %v3937
        %v3939 = vpop.f32.mrf.mxu0
        %3940 = vdwg.mxu0
        %3941 = vmatpush.bf16.msra.mxu0 %v3155
        %3942 = vmatpush.bf16.msra.mxu0 %v3154
        %3943 = vmatpush.bf16.msra.mxu0 %v3153
        %3944 = vmatpush.bf16.msra.mxu0 %v3152
        %3945 = vmatpush.bf16.msra.mxu0 %v3151
        %3946 = vmatpush.bf16.msra.mxu0 %v3150
        %3947 = vmatpush.bf16.msra.mxu0 %v3149
        %3948 = vmatpush.bf16.msra.mxu0 %v3148
        %3949 = vmatmul.bf16.gmra.mxu0 %v3444
        %v3950 = vpop.f32.mrf.mxu0
        %v3951 = vadd.f32 %v3878, %v3950
        %v3952 = vpop.f32.mrf.mxu0
        %v3953 = vadd.f32 %v3880, %v3952
        %3954 = vmatmul.bf16.gmra.mxu0 %v3451
        %v3955 = vpop.f32.mrf.mxu0
        %v3956 = vadd.f32 %v3883, %v3955
        %v3957 = vpop.f32.mrf.mxu0
        %v3958 = vadd.f32 %v3885, %v3957
        %3959 = vmatmul.bf16.gmra.mxu0 %v3458
        %v3960 = vpop.f32.mrf.mxu0
        %v3961 = vadd.f32 %v3888, %v3960
        %v3962 = vpop.f32.mrf.mxu0
        %v3963 = vadd.f32 %v3890, %v3962
        %3964 = vmatmul.bf16.gmra.mxu0 %v3465
        %v3965 = vpop.f32.mrf.mxu0
        %v3966 = vadd.f32 %v3893, %v3965
        %v3967 = vpop.f32.mrf.mxu0
        %v3968 = vadd.f32 %v3895, %v3967
        %3969 = vmatmul.bf16.gmra.mxu0 %v3472
        %v3970 = vpop.f32.mrf.mxu0
        %v3971 = vadd.f32 %v3898, %v3970
        %v3972 = vpop.f32.mrf.mxu0
        %v3973 = vadd.f32 %v3900, %v3972
        %3974 = vmatmul.bf16.gmra.mxu0 %v3479
        %v3975 = vpop.f32.mrf.mxu0
        %v3976 = vadd.f32 %v3903, %v3975
        %v3977 = vpop.f32.mrf.mxu0
        %v3978 = vadd.f32 %v3905, %v3977
        %3979 = vmatmul.bf16.gmra.mxu0 %v3486
        %v3980 = vpop.f32.mrf.mxu0
        %v3981 = vadd.f32 %v3908, %v3980
        %v3982 = vpop.f32.mrf.mxu0
        %v3983 = vadd.f32 %v3910, %v3982
        %3984 = vmatmul.bf16.gmra.mxu0 %v3493
        %v3985 = vpop.f32.mrf.mxu0
        %v3986 = vadd.f32 %v3913, %v3985
        %v3987 = vpop.f32.mrf.mxu0
        %v3988 = vadd.f32 %v3915, %v3987
        %3989 = vmatmul.bf16.gmra.mxu0 %v3500
        %v3990 = vpop.f32.mrf.mxu0
        %v3991 = vadd.f32 %v3918, %v3990
        %v3992 = vpop.f32.mrf.mxu0
        %v3993 = vadd.f32 %v3920, %v3992
        %3994 = vmatmul.bf16.gmra.mxu0 %v3507
        %v3995 = vpop.f32.mrf.mxu0
        %v3996 = vadd.f32 %v3923, %v3995
        %v3997 = vpop.f32.mrf.mxu0
        %v3998 = vadd.f32 %v3925, %v3997
        %3999 = vmatmul.bf16.gmra.mxu0 %v3514
        %v4000 = vpop.f32.mrf.mxu0
        %v4001 = vadd.f32 %v3928, %v4000
        %v4002 = vpop.f32.mrf.mxu0
        %v4003 = vadd.f32 %v3930, %v4002
        %4004 = vmatmul.bf16.gmra.mxu0 %v3521
        %v4005 = vpop.f32.mrf.mxu0
        %v4006 = vadd.f32 %v3933, %v4005
        %v4007 = vpop.f32.mrf.mxu0
        %v4008 = vadd.f32 %v3935, %v4007
        %4009 = vmatmul.bf16.gmra.mxu0 %v3528
        %v4010 = vpop.f32.mrf.mxu0
        %v4011 = vadd.f32 %v3938, %v4010
        %v4012 = vpop.f32.mrf.mxu0
        %4013 = vdwg.mxu0
        %4014 = vmatpush.bf16.msra.mxu0 %v3163
        %4015 = vmatpush.bf16.msra.mxu0 %v3162
        %4016 = vmatpush.bf16.msra.mxu0 %v3161
        %4017 = vmatpush.bf16.msra.mxu0 %v3160
        %4018 = vmatpush.bf16.msra.mxu0 %v3159
        %4019 = vmatpush.bf16.msra.mxu0 %v3158
        %4020 = vmatpush.bf16.msra.mxu0 %v3157
        %4021 = vmatpush.bf16.msra.mxu0 %v3156
        %4022 = vmatmul.bf16.gmra.mxu0 %v3445
        %v4023 = vpop.f32.mrf.mxu0
        %v4024 = vadd.f32 %v3951, %v4023
        %v4025 = vpop.f32.mrf.mxu0
        %v4026 = vadd.f32 %v3953, %v4025
        %4027 = vmatmul.bf16.gmra.mxu0 %v3452
        %v4028 = vpop.f32.mrf.mxu0
        %v4029 = vadd.f32 %v3956, %v4028
        %v4030 = vpop.f32.mrf.mxu0
        %v4031 = vadd.f32 %v3958, %v4030
        %4032 = vmatmul.bf16.gmra.mxu0 %v3459
        %v4033 = vpop.f32.mrf.mxu0
        %v4034 = vadd.f32 %v3961, %v4033
        %v4035 = vpop.f32.mrf.mxu0
        %v4036 = vadd.f32 %v3963, %v4035
        %4037 = vmatmul.bf16.gmra.mxu0 %v3466
        %v4038 = vpop.f32.mrf.mxu0
        %v4039 = vadd.f32 %v3966, %v4038
        %v4040 = vpop.f32.mrf.mxu0
        %v4041 = vadd.f32 %v3968, %v4040
        %4042 = vmatmul.bf16.gmra.mxu0 %v3473
        %v4043 = vpop.f32.mrf.mxu0
        %v4044 = vadd.f32 %v3971, %v4043
        %v4045 = vpop.f32.mrf.mxu0
        %v4046 = vadd.f32 %v3973, %v4045
        %4047 = vmatmul.bf16.gmra.mxu0 %v3480
        %v4048 = vpop.f32.mrf.mxu0
        %v4049 = vadd.f32 %v3976, %v4048
        %v4050 = vpop.f32.mrf.mxu0
        %v4051 = vadd.f32 %v3978, %v4050
        %4052 = vmatmul.bf16.gmra.mxu0 %v3487
        %v4053 = vpop.f32.mrf.mxu0
        %v4054 = vadd.f32 %v3981, %v4053
        %v4055 = vpop.f32.mrf.mxu0
        %v4056 = vadd.f32 %v3983, %v4055
        %4057 = vmatmul.bf16.gmra.mxu0 %v3494
        %v4058 = vpop.f32.mrf.mxu0
        %v4059 = vadd.f32 %v3986, %v4058
        %v4060 = vpop.f32.mrf.mxu0
        %v4061 = vadd.f32 %v3988, %v4060
        %4062 = vmatmul.bf16.gmra.mxu0 %v3501
        %v4063 = vpop.f32.mrf.mxu0
        %v4064 = vadd.f32 %v3991, %v4063
        %v4065 = vpop.f32.mrf.mxu0
        %v4066 = vadd.f32 %v3993, %v4065
        %4067 = vmatmul.bf16.gmra.mxu0 %v3508
        %v4068 = vpop.f32.mrf.mxu0
        %v4069 = vadd.f32 %v3996, %v4068
        %v4070 = vpop.f32.mrf.mxu0
        %v4071 = vadd.f32 %v3998, %v4070
        %4072 = vmatmul.bf16.gmra.mxu0 %v3515
        %v4073 = vpop.f32.mrf.mxu0
        %v4074 = vadd.f32 %v4001, %v4073
        %v4075 = vpop.f32.mrf.mxu0
        %v4076 = vadd.f32 %v4003, %v4075
        %4077 = vmatmul.bf16.gmra.mxu0 %v3522
        %v4078 = vpop.f32.mrf.mxu0
        %v4079 = vadd.f32 %v4006, %v4078
        %v4080 = vpop.f32.mrf.mxu0
        %v4081 = vadd.f32 %v4008, %v4080
        %4082 = vmatmul.bf16.gmra.mxu0 %v3529
        %v4083 = vpop.f32.mrf.mxu0
        %v4084 = vadd.f32 %v4011, %v4083
        %v4085 = vpop.f32.mrf.mxu0
        %4086 = vdwg.mxu0
        %4087 = vmatpush.bf16.msra.mxu0 0
        %4088 = vmatpush.bf16.msra.mxu0 0
        %4089 = vmatpush.bf16.msra.mxu0 0
        %4090 = vmatpush.bf16.msra.mxu0 0
        %4091 = vmatpush.bf16.msra.mxu0 0
        %4092 = vmatpush.bf16.msra.mxu0 0
        %4093 = vmatpush.bf16.msra.mxu0 0
        %4094 = vmatpush.bf16.msra.mxu0 %v3164
        %4095 = vmatmul.bf16.gmra.mxu0 %v3611
        %v4096 = vpop.f32.mrf.mxu0
        %v4097 = vadd.f32 %v4024, %v4096
        %v4098 = vpop.f32.mrf.mxu0
        %v4099 = vadd.f32 %v4026, %v4098
        %4100 = vmatmul.bf16.gmra.mxu0 %v3614
        %v4101 = vpop.f32.mrf.mxu0
        %v4102 = vadd.f32 %v4029, %v4101
        %v4103 = vpop.f32.mrf.mxu0
        %v4104 = vadd.f32 %v4031, %v4103
        %4105 = vmatmul.bf16.gmra.mxu0 %v3617
        %v4106 = vpop.f32.mrf.mxu0
        %v4107 = vadd.f32 %v4034, %v4106
        %v4108 = vpop.f32.mrf.mxu0
        %v4109 = vadd.f32 %v4036, %v4108
        %4110 = vmatmul.bf16.gmra.mxu0 %v3620
        %v4111 = vpop.f32.mrf.mxu0
        %v4112 = vadd.f32 %v4039, %v4111
        %v4113 = vpop.f32.mrf.mxu0
        %v4114 = vadd.f32 %v4041, %v4113
        %4115 = vmatmul.bf16.gmra.mxu0 %v3623
        %v4116 = vpop.f32.mrf.mxu0
        %v4117 = vadd.f32 %v4044, %v4116
        %v4118 = vpop.f32.mrf.mxu0
        %v4119 = vadd.f32 %v4046, %v4118
        %4120 = vmatmul.bf16.gmra.mxu0 %v3626
        %v4121 = vpop.f32.mrf.mxu0
        %v4122 = vadd.f32 %v4049, %v4121
        %v4123 = vpop.f32.mrf.mxu0
        %v4124 = vadd.f32 %v4051, %v4123
        %4125 = vmatmul.bf16.gmra.mxu0 %v3629
        %v4126 = vpop.f32.mrf.mxu0
        %v4127 = vadd.f32 %v4054, %v4126
        %v4128 = vpop.f32.mrf.mxu0
        %v4129 = vadd.f32 %v4056, %v4128
        %4130 = vmatmul.bf16.gmra.mxu0 %v3632
        %v4131 = vpop.f32.mrf.mxu0
        %v4132 = vadd.f32 %v4059, %v4131
        %v4133 = vpop.f32.mrf.mxu0
        %v4134 = vadd.f32 %v4061, %v4133
        %4135 = vmatmul.bf16.gmra.mxu0 %v3635
        %v4136 = vpop.f32.mrf.mxu0
        %v4137 = vadd.f32 %v4064, %v4136
        %v4138 = vpop.f32.mrf.mxu0
        %v4139 = vadd.f32 %v4066, %v4138
        %4140 = vmatmul.bf16.gmra.mxu0 %v3638
        %v4141 = vpop.f32.mrf.mxu0
        %v4142 = vadd.f32 %v4069, %v4141
        %v4143 = vpop.f32.mrf.mxu0
        %v4144 = vadd.f32 %v4071, %v4143
        %4145 = vmatmul.bf16.gmra.mxu0 %v3641
        %v4146 = vpop.f32.mrf.mxu0
        %v4147 = vadd.f32 %v4074, %v4146
        %v4148 = vpop.f32.mrf.mxu0
        %v4149 = vadd.f32 %v4076, %v4148
        %4150 = vmatmul.bf16.gmra.mxu0 %v3644
        %v4151 = vpop.f32.mrf.mxu0
        %v4152 = vadd.f32 %v4079, %v4151
        %v4153 = vpop.f32.mrf.mxu0
        %v4154 = vadd.f32 %v4081, %v4153
        %4155 = vmatmul.bf16.gmra.mxu0 %v3647
        %v4156 = vpop.f32.mrf.mxu0
        %v4157 = vadd.f32 %v4084, %v4156
        %v4158 = vpop.f32.mrf.mxu0
        %4159 = vdwg.mxu0
        %4160 = vmatpush.bf16.msra.mxu0 %v1774
        %4161 = vmatpush.bf16.msra.mxu0 %v1773
        %4162 = vmatpush.bf16.msra.mxu0 %v1772
        %4163 = vmatpush.bf16.msra.mxu0 %v1771
        %4164 = vmatpush.bf16.msra.mxu0 %v1770
        %4165 = vmatpush.bf16.msra.mxu0 %v1769
        %4166 = vmatpush.bf16.msra.mxu0 %v1768
        %4167 = vmatpush.bf16.msra.mxu0 %v1767
        %4168 = vmatmul.bf16.gmra.mxu0 %v3440
        %v4169 = vpop.f32.mrf.mxu0
        %v4170 = vadd.f32 0.0, %v4169
        %v4171 = vpop.f32.mrf.mxu0
        %v4172 = vadd.f32 0.0, %v4171
        %4173 = vmatmul.bf16.gmra.mxu0 %v3447
        %v4174 = vpop.f32.mrf.mxu0
        %v4175 = vadd.f32 0.0, %v4174
        %v4176 = vpop.f32.mrf.mxu0
        %v4177 = vadd.f32 0.0, %v4176
        %4178 = vmatmul.bf16.gmra.mxu0 %v3454
        %v4179 = vpop.f32.mrf.mxu0
        %v4180 = vadd.f32 0.0, %v4179
        %v4181 = vpop.f32.mrf.mxu0
        %v4182 = vadd.f32 0.0, %v4181
        %4183 = vmatmul.bf16.gmra.mxu0 %v3461
        %v4184 = vpop.f32.mrf.mxu0
        %v4185 = vadd.f32 0.0, %v4184
        %v4186 = vpop.f32.mrf.mxu0
        %v4187 = vadd.f32 0.0, %v4186
        %4188 = vmatmul.bf16.gmra.mxu0 %v3468
        %v4189 = vpop.f32.mrf.mxu0
        %v4190 = vadd.f32 0.0, %v4189
        %v4191 = vpop.f32.mrf.mxu0
        %v4192 = vadd.f32 0.0, %v4191
        %4193 = vmatmul.bf16.gmra.mxu0 %v3475
        %v4194 = vpop.f32.mrf.mxu0
        %v4195 = vadd.f32 0.0, %v4194
        %v4196 = vpop.f32.mrf.mxu0
        %v4197 = vadd.f32 0.0, %v4196
        %4198 = vmatmul.bf16.gmra.mxu0 %v3482
        %v4199 = vpop.f32.mrf.mxu0
        %v4200 = vadd.f32 0.0, %v4199
        %v4201 = vpop.f32.mrf.mxu0
        %v4202 = vadd.f32 0.0, %v4201
        %4203 = vmatmul.bf16.gmra.mxu0 %v3489
        %v4204 = vpop.f32.mrf.mxu0
        %v4205 = vadd.f32 0.0, %v4204
        %v4206 = vpop.f32.mrf.mxu0
        %v4207 = vadd.f32 0.0, %v4206
        %4208 = vmatmul.bf16.gmra.mxu0 %v3496
        %v4209 = vpop.f32.mrf.mxu0
        %v4210 = vadd.f32 0.0, %v4209
        %v4211 = vpop.f32.mrf.mxu0
        %v4212 = vadd.f32 0.0, %v4211
        %4213 = vmatmul.bf16.gmra.mxu0 %v3503
        %v4214 = vpop.f32.mrf.mxu0
        %v4215 = vadd.f32 0.0, %v4214
        %v4216 = vpop.f32.mrf.mxu0
        %v4217 = vadd.f32 0.0, %v4216
        %4218 = vmatmul.bf16.gmra.mxu0 %v3510
        %v4219 = vpop.f32.mrf.mxu0
        %v4220 = vadd.f32 0.0, %v4219
        %v4221 = vpop.f32.mrf.mxu0
        %v4222 = vadd.f32 0.0, %v4221
        %4223 = vmatmul.bf16.gmra.mxu0 %v3517
        %v4224 = vpop.f32.mrf.mxu0
        %v4225 = vadd.f32 0.0, %v4224
        %v4226 = vpop.f32.mrf.mxu0
        %v4227 = vadd.f32 0.0, %v4226
        %4228 = vmatmul.bf16.gmra.mxu0 %v3524
        %v4229 = vpop.f32.mrf.mxu0
        %v4230 = vadd.f32 0.0, %v4229
        %v4231 = vpop.f32.mrf.mxu0
        %4232 = vdwg.mxu0
        %4233 = vmatpush.bf16.msra.mxu0 %v1782
        %4234 = vmatpush.bf16.msra.mxu0 %v1781
        %4235 = vmatpush.bf16.msra.mxu0 %v1780
        %4236 = vmatpush.bf16.msra.mxu0 %v1779
        %4237 = vmatpush.bf16.msra.mxu0 %v1778
        %4238 = vmatpush.bf16.msra.mxu0 %v1777
        %4239 = vmatpush.bf16.msra.mxu0 %v1776
        %4240 = vmatpush.bf16.msra.mxu0 %v1775
        %4241 = vmatmul.bf16.gmra.mxu0 %v3441
        %v4242 = vpop.f32.mrf.mxu0
        %v4243 = vadd.f32 %v4170, %v4242
        %v4244 = vpop.f32.mrf.mxu0
        %v4245 = vadd.f32 %v4172, %v4244
        %4246 = vmatmul.bf16.gmra.mxu0 %v3448
        %v4247 = vpop.f32.mrf.mxu0
        %v4248 = vadd.f32 %v4175, %v4247
        %v4249 = vpop.f32.mrf.mxu0
        %v4250 = vadd.f32 %v4177, %v4249
        %4251 = vmatmul.bf16.gmra.mxu0 %v3455
        %v4252 = vpop.f32.mrf.mxu0
        %v4253 = vadd.f32 %v4180, %v4252
        %v4254 = vpop.f32.mrf.mxu0
        %v4255 = vadd.f32 %v4182, %v4254
        %4256 = vmatmul.bf16.gmra.mxu0 %v3462
        %v4257 = vpop.f32.mrf.mxu0
        %v4258 = vadd.f32 %v4185, %v4257
        %v4259 = vpop.f32.mrf.mxu0
        %v4260 = vadd.f32 %v4187, %v4259
        %4261 = vmatmul.bf16.gmra.mxu0 %v3469
        %v4262 = vpop.f32.mrf.mxu0
        %v4263 = vadd.f32 %v4190, %v4262
        %v4264 = vpop.f32.mrf.mxu0
        %v4265 = vadd.f32 %v4192, %v4264
        %4266 = vmatmul.bf16.gmra.mxu0 %v3476
        %v4267 = vpop.f32.mrf.mxu0
        %v4268 = vadd.f32 %v4195, %v4267
        %v4269 = vpop.f32.mrf.mxu0
        %v4270 = vadd.f32 %v4197, %v4269
        %4271 = vmatmul.bf16.gmra.mxu0 %v3483
        %v4272 = vpop.f32.mrf.mxu0
        %v4273 = vadd.f32 %v4200, %v4272
        %v4274 = vpop.f32.mrf.mxu0
        %v4275 = vadd.f32 %v4202, %v4274
        %4276 = vmatmul.bf16.gmra.mxu0 %v3490
        %v4277 = vpop.f32.mrf.mxu0
        %v4278 = vadd.f32 %v4205, %v4277
        %v4279 = vpop.f32.mrf.mxu0
        %v4280 = vadd.f32 %v4207, %v4279
        %4281 = vmatmul.bf16.gmra.mxu0 %v3497
        %v4282 = vpop.f32.mrf.mxu0
        %v4283 = vadd.f32 %v4210, %v4282
        %v4284 = vpop.f32.mrf.mxu0
        %v4285 = vadd.f32 %v4212, %v4284
        %4286 = vmatmul.bf16.gmra.mxu0 %v3504
        %v4287 = vpop.f32.mrf.mxu0
        %v4288 = vadd.f32 %v4215, %v4287
        %v4289 = vpop.f32.mrf.mxu0
        %v4290 = vadd.f32 %v4217, %v4289
        %4291 = vmatmul.bf16.gmra.mxu0 %v3511
        %v4292 = vpop.f32.mrf.mxu0
        %v4293 = vadd.f32 %v4220, %v4292
        %v4294 = vpop.f32.mrf.mxu0
        %v4295 = vadd.f32 %v4222, %v4294
        %4296 = vmatmul.bf16.gmra.mxu0 %v3518
        %v4297 = vpop.f32.mrf.mxu0
        %v4298 = vadd.f32 %v4225, %v4297
        %v4299 = vpop.f32.mrf.mxu0
        %v4300 = vadd.f32 %v4227, %v4299
        %4301 = vmatmul.bf16.gmra.mxu0 %v3525
        %v4302 = vpop.f32.mrf.mxu0
        %v4303 = vadd.f32 %v4230, %v4302
        %v4304 = vpop.f32.mrf.mxu0
        %4305 = vdwg.mxu0
        %4306 = vmatpush.bf16.msra.mxu0 %v1790
        %4307 = vmatpush.bf16.msra.mxu0 %v1789
        %4308 = vmatpush.bf16.msra.mxu0 %v1788
        %4309 = vmatpush.bf16.msra.mxu0 %v1787
        %4310 = vmatpush.bf16.msra.mxu0 %v1786
        %4311 = vmatpush.bf16.msra.mxu0 %v1785
        %4312 = vmatpush.bf16.msra.mxu0 %v1784
        %4313 = vmatpush.bf16.msra.mxu0 %v1783
        %4314 = vmatmul.bf16.gmra.mxu0 %v3442
        %v4315 = vpop.f32.mrf.mxu0
        %v4316 = vadd.f32 %v4243, %v4315
        %v4317 = vpop.f32.mrf.mxu0
        %v4318 = vadd.f32 %v4245, %v4317
        %4319 = vmatmul.bf16.gmra.mxu0 %v3449
        %v4320 = vpop.f32.mrf.mxu0
        %v4321 = vadd.f32 %v4248, %v4320
        %v4322 = vpop.f32.mrf.mxu0
        %v4323 = vadd.f32 %v4250, %v4322
        %4324 = vmatmul.bf16.gmra.mxu0 %v3456
        %v4325 = vpop.f32.mrf.mxu0
        %v4326 = vadd.f32 %v4253, %v4325
        %v4327 = vpop.f32.mrf.mxu0
        %v4328 = vadd.f32 %v4255, %v4327
        %4329 = vmatmul.bf16.gmra.mxu0 %v3463
        %v4330 = vpop.f32.mrf.mxu0
        %v4331 = vadd.f32 %v4258, %v4330
        %v4332 = vpop.f32.mrf.mxu0
        %v4333 = vadd.f32 %v4260, %v4332
        %4334 = vmatmul.bf16.gmra.mxu0 %v3470
        %v4335 = vpop.f32.mrf.mxu0
        %v4336 = vadd.f32 %v4263, %v4335
        %v4337 = vpop.f32.mrf.mxu0
        %v4338 = vadd.f32 %v4265, %v4337
        %4339 = vmatmul.bf16.gmra.mxu0 %v3477
        %v4340 = vpop.f32.mrf.mxu0
        %v4341 = vadd.f32 %v4268, %v4340
        %v4342 = vpop.f32.mrf.mxu0
        %v4343 = vadd.f32 %v4270, %v4342
        %4344 = vmatmul.bf16.gmra.mxu0 %v3484
        %v4345 = vpop.f32.mrf.mxu0
        %v4346 = vadd.f32 %v4273, %v4345
        %v4347 = vpop.f32.mrf.mxu0
        %v4348 = vadd.f32 %v4275, %v4347
        %4349 = vmatmul.bf16.gmra.mxu0 %v3491
        %v4350 = vpop.f32.mrf.mxu0
        %v4351 = vadd.f32 %v4278, %v4350
        %v4352 = vpop.f32.mrf.mxu0
        %v4353 = vadd.f32 %v4280, %v4352
        %4354 = vmatmul.bf16.gmra.mxu0 %v3498
        %v4355 = vpop.f32.mrf.mxu0
        %v4356 = vadd.f32 %v4283, %v4355
        %v4357 = vpop.f32.mrf.mxu0
        %v4358 = vadd.f32 %v4285, %v4357
        %4359 = vmatmul.bf16.gmra.mxu0 %v3505
        %v4360 = vpop.f32.mrf.mxu0
        %v4361 = vadd.f32 %v4288, %v4360
        %v4362 = vpop.f32.mrf.mxu0
        %v4363 = vadd.f32 %v4290, %v4362
        %4364 = vmatmul.bf16.gmra.mxu0 %v3512
        %v4365 = vpop.f32.mrf.mxu0
        %v4366 = vadd.f32 %v4293, %v4365
        %v4367 = vpop.f32.mrf.mxu0
        %v4368 = vadd.f32 %v4295, %v4367
        %4369 = vmatmul.bf16.gmra.mxu0 %v3519
        %v4370 = vpop.f32.mrf.mxu0
        %v4371 = vadd.f32 %v4298, %v4370
        %v4372 = vpop.f32.mrf.mxu0
        %v4373 = vadd.f32 %v4300, %v4372
        %4374 = vmatmul.bf16.gmra.mxu0 %v3526
        %v4375 = vpop.f32.mrf.mxu0
        %v4376 = vadd.f32 %v4303, %v4375
        %v4377 = vpop.f32.mrf.mxu0
        %4378 = vdwg.mxu0
        %4379 = vmatpush.bf16.msra.mxu0 %v1798
        %4380 = vmatpush.bf16.msra.mxu0 %v1797
        %4381 = vmatpush.bf16.msra.mxu0 %v1796
        %4382 = vmatpush.bf16.msra.mxu0 %v1795
        %4383 = vmatpush.bf16.msra.mxu0 %v1794
        %4384 = vmatpush.bf16.msra.mxu0 %v1793
        %4385 = vmatpush.bf16.msra.mxu0 %v1792
        %4386 = vmatpush.bf16.msra.mxu0 %v1791
        %4387 = vmatmul.bf16.gmra.mxu0 %v3443
        %v4388 = vpop.f32.mrf.mxu0
        %v4389 = vadd.f32 %v4316, %v4388
        %v4390 = vpop.f32.mrf.mxu0
        %v4391 = vadd.f32 %v4318, %v4390
        %4392 = vmatmul.bf16.gmra.mxu0 %v3450
        %v4393 = vpop.f32.mrf.mxu0
        %v4394 = vadd.f32 %v4321, %v4393
        %v4395 = vpop.f32.mrf.mxu0
        %v4396 = vadd.f32 %v4323, %v4395
        %4397 = vmatmul.bf16.gmra.mxu0 %v3457
        %v4398 = vpop.f32.mrf.mxu0
        %v4399 = vadd.f32 %v4326, %v4398
        %v4400 = vpop.f32.mrf.mxu0
        %v4401 = vadd.f32 %v4328, %v4400
        %4402 = vmatmul.bf16.gmra.mxu0 %v3464
        %v4403 = vpop.f32.mrf.mxu0
        %v4404 = vadd.f32 %v4331, %v4403
        %v4405 = vpop.f32.mrf.mxu0
        %v4406 = vadd.f32 %v4333, %v4405
        %4407 = vmatmul.bf16.gmra.mxu0 %v3471
        %v4408 = vpop.f32.mrf.mxu0
        %v4409 = vadd.f32 %v4336, %v4408
        %v4410 = vpop.f32.mrf.mxu0
        %v4411 = vadd.f32 %v4338, %v4410
        %4412 = vmatmul.bf16.gmra.mxu0 %v3478
        %v4413 = vpop.f32.mrf.mxu0
        %v4414 = vadd.f32 %v4341, %v4413
        %v4415 = vpop.f32.mrf.mxu0
        %v4416 = vadd.f32 %v4343, %v4415
        %4417 = vmatmul.bf16.gmra.mxu0 %v3485
        %v4418 = vpop.f32.mrf.mxu0
        %v4419 = vadd.f32 %v4346, %v4418
        %v4420 = vpop.f32.mrf.mxu0
        %v4421 = vadd.f32 %v4348, %v4420
        %4422 = vmatmul.bf16.gmra.mxu0 %v3492
        %v4423 = vpop.f32.mrf.mxu0
        %v4424 = vadd.f32 %v4351, %v4423
        %v4425 = vpop.f32.mrf.mxu0
        %v4426 = vadd.f32 %v4353, %v4425
        %4427 = vmatmul.bf16.gmra.mxu0 %v3499
        %v4428 = vpop.f32.mrf.mxu0
        %v4429 = vadd.f32 %v4356, %v4428
        %v4430 = vpop.f32.mrf.mxu0
        %v4431 = vadd.f32 %v4358, %v4430
        %4432 = vmatmul.bf16.gmra.mxu0 %v3506
        %v4433 = vpop.f32.mrf.mxu0
        %v4434 = vadd.f32 %v4361, %v4433
        %v4435 = vpop.f32.mrf.mxu0
        %v4436 = vadd.f32 %v4363, %v4435
        %4437 = vmatmul.bf16.gmra.mxu0 %v3513
        %v4438 = vpop.f32.mrf.mxu0
        %v4439 = vadd.f32 %v4366, %v4438
        %v4440 = vpop.f32.mrf.mxu0
        %v4441 = vadd.f32 %v4368, %v4440
        %4442 = vmatmul.bf16.gmra.mxu0 %v3520
        %v4443 = vpop.f32.mrf.mxu0
        %v4444 = vadd.f32 %v4371, %v4443
        %v4445 = vpop.f32.mrf.mxu0
        %v4446 = vadd.f32 %v4373, %v4445
        %4447 = vmatmul.bf16.gmra.mxu0 %v3527
        %v4448 = vpop.f32.mrf.mxu0
        %v4449 = vadd.f32 %v4376, %v4448
        %v4450 = vpop.f32.mrf.mxu0
        %4451 = vdwg.mxu0
        %4452 = vmatpush.bf16.msra.mxu0 %v1806
        %4453 = vmatpush.bf16.msra.mxu0 %v1805
        %4454 = vmatpush.bf16.msra.mxu0 %v1804
        %4455 = vmatpush.bf16.msra.mxu0 %v1803
        %4456 = vmatpush.bf16.msra.mxu0 %v1802
        %4457 = vmatpush.bf16.msra.mxu0 %v1801
        %4458 = vmatpush.bf16.msra.mxu0 %v1800
        %4459 = vmatpush.bf16.msra.mxu0 %v1799
        %4460 = vmatmul.bf16.gmra.mxu0 %v3444
        %v4461 = vpop.f32.mrf.mxu0
        %v4462 = vadd.f32 %v4389, %v4461
        %v4463 = vpop.f32.mrf.mxu0
        %v4464 = vadd.f32 %v4391, %v4463
        %4465 = vmatmul.bf16.gmra.mxu0 %v3451
        %v4466 = vpop.f32.mrf.mxu0
        %v4467 = vadd.f32 %v4394, %v4466
        %v4468 = vpop.f32.mrf.mxu0
        %v4469 = vadd.f32 %v4396, %v4468
        %4470 = vmatmul.bf16.gmra.mxu0 %v3458
        %v4471 = vpop.f32.mrf.mxu0
        %v4472 = vadd.f32 %v4399, %v4471
        %v4473 = vpop.f32.mrf.mxu0
        %v4474 = vadd.f32 %v4401, %v4473
        %4475 = vmatmul.bf16.gmra.mxu0 %v3465
        %v4476 = vpop.f32.mrf.mxu0
        %v4477 = vadd.f32 %v4404, %v4476
        %v4478 = vpop.f32.mrf.mxu0
        %v4479 = vadd.f32 %v4406, %v4478
        %4480 = vmatmul.bf16.gmra.mxu0 %v3472
        %v4481 = vpop.f32.mrf.mxu0
        %v4482 = vadd.f32 %v4409, %v4481
        %v4483 = vpop.f32.mrf.mxu0
        %v4484 = vadd.f32 %v4411, %v4483
        %4485 = vmatmul.bf16.gmra.mxu0 %v3479
        %v4486 = vpop.f32.mrf.mxu0
        %v4487 = vadd.f32 %v4414, %v4486
        %v4488 = vpop.f32.mrf.mxu0
        %v4489 = vadd.f32 %v4416, %v4488
        %4490 = vmatmul.bf16.gmra.mxu0 %v3486
        %v4491 = vpop.f32.mrf.mxu0
        %v4492 = vadd.f32 %v4419, %v4491
        %v4493 = vpop.f32.mrf.mxu0
        %v4494 = vadd.f32 %v4421, %v4493
        %4495 = vmatmul.bf16.gmra.mxu0 %v3493
        %v4496 = vpop.f32.mrf.mxu0
        %v4497 = vadd.f32 %v4424, %v4496
        %v4498 = vpop.f32.mrf.mxu0
        %v4499 = vadd.f32 %v4426, %v4498
        %4500 = vmatmul.bf16.gmra.mxu0 %v3500
        %v4501 = vpop.f32.mrf.mxu0
        %v4502 = vadd.f32 %v4429, %v4501
        %v4503 = vpop.f32.mrf.mxu0
        %v4504 = vadd.f32 %v4431, %v4503
        %4505 = vmatmul.bf16.gmra.mxu0 %v3507
        %v4506 = vpop.f32.mrf.mxu0
        %v4507 = vadd.f32 %v4434, %v4506
        %v4508 = vpop.f32.mrf.mxu0
        %v4509 = vadd.f32 %v4436, %v4508
        %4510 = vmatmul.bf16.gmra.mxu0 %v3514
        %v4511 = vpop.f32.mrf.mxu0
        %v4512 = vadd.f32 %v4439, %v4511
        %v4513 = vpop.f32.mrf.mxu0
        %v4514 = vadd.f32 %v4441, %v4513
        %4515 = vmatmul.bf16.gmra.mxu0 %v3521
        %v4516 = vpop.f32.mrf.mxu0
        %v4517 = vadd.f32 %v4444, %v4516
        %v4518 = vpop.f32.mrf.mxu0
        %v4519 = vadd.f32 %v4446, %v4518
        %4520 = vmatmul.bf16.gmra.mxu0 %v3528
        %v4521 = vpop.f32.mrf.mxu0
        %v4522 = vadd.f32 %v4449, %v4521
        %v4523 = vpop.f32.mrf.mxu0
        %4524 = vdwg.mxu0
        %4525 = vmatpush.bf16.msra.mxu0 %v1814
        %4526 = vmatpush.bf16.msra.mxu0 %v1813
        %4527 = vmatpush.bf16.msra.mxu0 %v1812
        %4528 = vmatpush.bf16.msra.mxu0 %v1811
        %4529 = vmatpush.bf16.msra.mxu0 %v1810
        %4530 = vmatpush.bf16.msra.mxu0 %v1809
        %4531 = vmatpush.bf16.msra.mxu0 %v1808
        %4532 = vmatpush.bf16.msra.mxu0 %v1807
        %4533 = vmatmul.bf16.gmra.mxu0 %v3445
        %v4534 = vpop.f32.mrf.mxu0
        %v4535 = vadd.f32 %v4462, %v4534
        %v4536 = vpop.f32.mrf.mxu0
        %v4537 = vadd.f32 %v4464, %v4536
        %4538 = vmatmul.bf16.gmra.mxu0 %v3452
        %v4539 = vpop.f32.mrf.mxu0
        %v4540 = vadd.f32 %v4467, %v4539
        %v4541 = vpop.f32.mrf.mxu0
        %v4542 = vadd.f32 %v4469, %v4541
        %4543 = vmatmul.bf16.gmra.mxu0 %v3459
        %v4544 = vpop.f32.mrf.mxu0
        %v4545 = vadd.f32 %v4472, %v4544
        %v4546 = vpop.f32.mrf.mxu0
        %v4547 = vadd.f32 %v4474, %v4546
        %4548 = vmatmul.bf16.gmra.mxu0 %v3466
        %v4549 = vpop.f32.mrf.mxu0
        %v4550 = vadd.f32 %v4477, %v4549
        %v4551 = vpop.f32.mrf.mxu0
        %v4552 = vadd.f32 %v4479, %v4551
        %4553 = vmatmul.bf16.gmra.mxu0 %v3473
        %v4554 = vpop.f32.mrf.mxu0
        %v4555 = vadd.f32 %v4482, %v4554
        %v4556 = vpop.f32.mrf.mxu0
        %v4557 = vadd.f32 %v4484, %v4556
        %4558 = vmatmul.bf16.gmra.mxu0 %v3480
        %v4559 = vpop.f32.mrf.mxu0
        %v4560 = vadd.f32 %v4487, %v4559
        %v4561 = vpop.f32.mrf.mxu0
        %v4562 = vadd.f32 %v4489, %v4561
        %4563 = vmatmul.bf16.gmra.mxu0 %v3487
        %v4564 = vpop.f32.mrf.mxu0
        %v4565 = vadd.f32 %v4492, %v4564
        %v4566 = vpop.f32.mrf.mxu0
        %v4567 = vadd.f32 %v4494, %v4566
        %4568 = vmatmul.bf16.gmra.mxu0 %v3494
        %v4569 = vpop.f32.mrf.mxu0
        %v4570 = vadd.f32 %v4497, %v4569
        %v4571 = vpop.f32.mrf.mxu0
        %v4572 = vadd.f32 %v4499, %v4571
        %4573 = vmatmul.bf16.gmra.mxu0 %v3501
        %v4574 = vpop.f32.mrf.mxu0
        %v4575 = vadd.f32 %v4502, %v4574
        %v4576 = vpop.f32.mrf.mxu0
        %v4577 = vadd.f32 %v4504, %v4576
        %4578 = vmatmul.bf16.gmra.mxu0 %v3508
        %v4579 = vpop.f32.mrf.mxu0
        %v4580 = vadd.f32 %v4507, %v4579
        %v4581 = vpop.f32.mrf.mxu0
        %v4582 = vadd.f32 %v4509, %v4581
        %4583 = vmatmul.bf16.gmra.mxu0 %v3515
        %v4584 = vpop.f32.mrf.mxu0
        %v4585 = vadd.f32 %v4512, %v4584
        %v4586 = vpop.f32.mrf.mxu0
        %v4587 = vadd.f32 %v4514, %v4586
        %4588 = vmatmul.bf16.gmra.mxu0 %v3522
        %v4589 = vpop.f32.mrf.mxu0
        %v4590 = vadd.f32 %v4517, %v4589
        %v4591 = vpop.f32.mrf.mxu0
        %v4592 = vadd.f32 %v4519, %v4591
        %4593 = vmatmul.bf16.gmra.mxu0 %v3529
        %v4594 = vpop.f32.mrf.mxu0
        %v4595 = vadd.f32 %v4522, %v4594
        %v4596 = vpop.f32.mrf.mxu0
        %4597 = vdwg.mxu0
        %4598 = vmatpush.bf16.msra.mxu0 0
        %4599 = vmatpush.bf16.msra.mxu0 0
        %4600 = vmatpush.bf16.msra.mxu0 0
        %4601 = vmatpush.bf16.msra.mxu0 0
        %4602 = vmatpush.bf16.msra.mxu0 0
        %4603 = vmatpush.bf16.msra.mxu0 0
        %4604 = vmatpush.bf16.msra.mxu0 0
        %4605 = vmatpush.bf16.msra.mxu0 %v1815
        %4606 = vmatmul.bf16.gmra.mxu0 %v3611
        %v4607 = vpop.f32.mrf.mxu0
        %v4608 = vadd.f32 %v4535, %v4607
        %v4609 = vpop.f32.mrf.mxu0
        %v4610 = vadd.f32 %v4537, %v4609
        %4611 = vmatmul.bf16.gmra.mxu0 %v3614
        %v4612 = vpop.f32.mrf.mxu0
        %v4613 = vadd.f32 %v4540, %v4612
        %v4614 = vpop.f32.mrf.mxu0
        %v4615 = vadd.f32 %v4542, %v4614
        %4616 = vmatmul.bf16.gmra.mxu0 %v3617
        %v4617 = vpop.f32.mrf.mxu0
        %v4618 = vadd.f32 %v4545, %v4617
        %v4619 = vpop.f32.mrf.mxu0
        %v4620 = vadd.f32 %v4547, %v4619
        %4621 = vmatmul.bf16.gmra.mxu0 %v3620
        %v4622 = vpop.f32.mrf.mxu0
        %v4623 = vadd.f32 %v4550, %v4622
        %v4624 = vpop.f32.mrf.mxu0
        %v4625 = vadd.f32 %v4552, %v4624
        %4626 = vmatmul.bf16.gmra.mxu0 %v3623
        %v4627 = vpop.f32.mrf.mxu0
        %v4628 = vadd.f32 %v4555, %v4627
        %v4629 = vpop.f32.mrf.mxu0
        %v4630 = vadd.f32 %v4557, %v4629
        %4631 = vmatmul.bf16.gmra.mxu0 %v3626
        %v4632 = vpop.f32.mrf.mxu0
        %v4633 = vadd.f32 %v4560, %v4632
        %v4634 = vpop.f32.mrf.mxu0
        %v4635 = vadd.f32 %v4562, %v4634
        %4636 = vmatmul.bf16.gmra.mxu0 %v3629
        %v4637 = vpop.f32.mrf.mxu0
        %v4638 = vadd.f32 %v4565, %v4637
        %v4639 = vpop.f32.mrf.mxu0
        %v4640 = vadd.f32 %v4567, %v4639
        %4641 = vmatmul.bf16.gmra.mxu0 %v3632
        %v4642 = vpop.f32.mrf.mxu0
        %v4643 = vadd.f32 %v4570, %v4642
        %v4644 = vpop.f32.mrf.mxu0
        %v4645 = vadd.f32 %v4572, %v4644
        %4646 = vmatmul.bf16.gmra.mxu0 %v3635
        %v4647 = vpop.f32.mrf.mxu0
        %v4648 = vadd.f32 %v4575, %v4647
        %v4649 = vpop.f32.mrf.mxu0
        %v4650 = vadd.f32 %v4577, %v4649
        %4651 = vmatmul.bf16.gmra.mxu0 %v3638
        %v4652 = vpop.f32.mrf.mxu0
        %v4653 = vadd.f32 %v4580, %v4652
        %v4654 = vpop.f32.mrf.mxu0
        %v4655 = vadd.f32 %v4582, %v4654
        %4656 = vmatmul.bf16.gmra.mxu0 %v3641
        %v4657 = vpop.f32.mrf.mxu0
        %v4658 = vadd.f32 %v4585, %v4657
        %v4659 = vpop.f32.mrf.mxu0
        %v4660 = vadd.f32 %v4587, %v4659
        %4661 = vmatmul.bf16.gmra.mxu0 %v3644
        %v4662 = vpop.f32.mrf.mxu0
        %v4663 = vadd.f32 %v4590, %v4662
        %v4664 = vpop.f32.mrf.mxu0
        %v4665 = vadd.f32 %v4592, %v4664
        %4666 = vmatmul.bf16.gmra.mxu0 %v3647
        %v4667 = vpop.f32.mrf.mxu0
        %v4668 = vadd.f32 %v4595, %v4667
        %v4669 = vpop.f32.mrf.mxu0
        %4670 = vdwg.mxu0
        %v4671 = vld [vmem:[%s20] sm:$0xff]
        %v4672 = vld [vmem:[%s20 + $0x8] sm:$0xff]
        %v4673 = vld [vmem:[%s20 + $0x10] sm:$0xff]
        %v4674 = vld [vmem:[%s20 + $0x18] sm:$0xf]
        %v4675 = vld [vmem:[%s20 + $0x1c] sm:$0xff]
        %v4676 = vld [vmem:[%s20 + $0x24] sm:$0xff]
        %v4677 = vld [vmem:[%s20 + $0x2c] sm:$0xff]
        %v4678 = vld [vmem:[%s20 + $0x34] sm:$0xf]
        %v4679 = vld [vmem:[%s20 + $0x38] sm:$0xff]
        %v4680 = vld [vmem:[%s20 + $0x40] sm:$0xff]
        %v4681 = vld [vmem:[%s20 + $0x48] sm:$0xff]
        %v4682 = vld [vmem:[%s20 + $0x50] sm:$0xf]
        %v4683 = vld [vmem:[%s20 + $0x54] sm:$0xff]
        %v4684 = vld [vmem:[%s20 + $0x5c] sm:$0xff]
        %v4685 = vld [vmem:[%s20 + $0x64] sm:$0xff]
        %v4686 = vld [vmem:[%s20 + $0x6c] sm:$0xf]
        %v4687 = vld [vmem:[%s20 + $0x70] sm:$0xff]
        %v4688 = vld [vmem:[%s20 + $0x78] sm:$0xff]
        %v4689 = vld [vmem:[%s20 + $0x80] sm:$0xff]
        %v4690 = vld [vmem:[%s20 + $0x88] sm:$0xf]
        %v4691 = vld [vmem:[%s20 + $0x8c] sm:$0xff]
        %v4692 = vld [vmem:[%s20 + $0x94] sm:$0xff]
        %v4693 = vld [vmem:[%s20 + $0x9c] sm:$0xff]
        %v4694 = vld [vmem:[%s20 + $0xa4] sm:$0xf]
        %v4695 = vld [vmem:[%s20 + $0xa8] sm:$0xff]
        %v4696 = vld [vmem:[%s20 + $0xb0] sm:$0xff]
        %v4697 = vld [vmem:[%s20 + $0xb8] sm:$0xff]
        %v4698 = vld [vmem:[%s20 + $0xc0] sm:$0xf]
        %v4699 = vld [vmem:[%s20 + $0xc4] sm:$0xff]
        %v4700 = vld [vmem:[%s20 + $0xcc] sm:$0xff]
        %v4701 = vld [vmem:[%s20 + $0xd4] sm:$0xff]
        %v4702 = vld [vmem:[%s20 + $0xdc] sm:$0xf]
        %v4703 = vld [vmem:[%s20 + $0xe0] sm:$0xff]
        %v4704 = vld [vmem:[%s20 + $0xe8] sm:$0xff]
        %v4705 = vld [vmem:[%s20 + $0xf0] sm:$0xff]
        %v4706 = vld [vmem:[%s20 + $0xf8] sm:$0xf]
        %v4707 = vld [vmem:[%s20 + $0xfc] sm:$0xff]
        %v4708 = vld [vmem:[%s20 + $0x104] sm:$0xff]
        %v4709 = vld [vmem:[%s20 + $0x10c] sm:$0xff]
        %v4710 = vld [vmem:[%s20 + $0x114] sm:$0xf]
        %v4711 = vld [vmem:[%s20 + $0x118] sm:$0xff]
        %v4712 = vld [vmem:[%s20 + $0x120] sm:$0xff]
        %v4713 = vld [vmem:[%s20 + $0x128] sm:$0xff]
        %v4714 = vld [vmem:[%s20 + $0x130] sm:$0xf]
        %v4715 = vld [vmem:[%s20 + $0x134] sm:$0xff]
        %v4716 = vld [vmem:[%s20 + $0x13c] sm:$0xff]
        %v4717 = vld [vmem:[%s20 + $0x144] sm:$0xff]
        %v4718 = vld [vmem:[%s20 + $0x14c] sm:$0xf]
        %v4719 = vld [vmem:[%s20 + $0x150] sm:$0xff]
        %v4720 = vld [vmem:[%s20 + $0x158] sm:$0xff]
        %v4721 = vld [vmem:[%s20 + $0x160] sm:$0xff]
        %v4722 = vld [vmem:[%s20 + $0x168] sm:$0xf]
        %v4723 = vld [vmem:[%s20 + $0x16c] sm:$0xff]
        %v4724 = vld [vmem:[%s20 + $0x174] sm:$0xff]
        %v4725 = vld [vmem:[%s20 + $0x17c] sm:$0xff]
        %v4726 = vld [vmem:[%s20 + $0x184] sm:$0xf]
        %v4727 = vld [vmem:[%s20 + $0x188] sm:$0xff]
        %v4728 = vld [vmem:[%s20 + $0x190] sm:$0xff]
        %v4729 = vld [vmem:[%s20 + $0x198] sm:$0xff]
        %v4730 = vld [vmem:[%s20 + $0x1a0] sm:$0xf]
        %v4731 = vld [vmem:[%s20 + $0x1a4] sm:$0xff]
        %v4732 = vld [vmem:[%s20 + $0x1ac] sm:$0xff]
        %v4733 = vld [vmem:[%s20 + $0x1b4] sm:$0xff]
        %v4734 = vld [vmem:[%s20 + $0x1bc] sm:$0xf]
        %v4735 = vld [vmem:[%s20 + $0x1c0] sm:$0xff]
        %v4736 = vld [vmem:[%s20 + $0x1c8] sm:$0xff]
        %v4737 = vld [vmem:[%s20 + $0x1d0] sm:$0xff]
        %v4738 = vld [vmem:[%s20 + $0x1d8] sm:$0xf]
        %v4739 = vld [vmem:[%s20 + $0x1dc] sm:$0xff]
        %v4740 = vld [vmem:[%s20 + $0x1e4] sm:$0xff]
        %v4741 = vld [vmem:[%s20 + $0x1ec] sm:$0xff]
        %v4742 = vld [vmem:[%s20 + $0x1f4] sm:$0xf]
        %v4743 = vld [vmem:[%s20 + $0x1f8] sm:$0xff]
        %v4744 = vld [vmem:[%s20 + $0x200] sm:$0xff]
        %v4745 = vld [vmem:[%s20 + $0x208] sm:$0xff]
        %v4746 = vld [vmem:[%s20 + $0x210] sm:$0xf]
        %v4747 = vld [vmem:[%s20 + $0x214] sm:$0xff]
        %v4748 = vld [vmem:[%s20 + $0x21c] sm:$0xff]
        %v4749 = vld [vmem:[%s20 + $0x224] sm:$0xff]
        %v4750 = vld [vmem:[%s20 + $0x22c] sm:$0xf]
        %v4751 = vld [vmem:[%s20 + $0x230] sm:$0xff]
        %v4752 = vld [vmem:[%s20 + $0x238] sm:$0xff]
        %v4753 = vld [vmem:[%s20 + $0x240] sm:$0xff]
        %v4754 = vld [vmem:[%s20 + $0x248] sm:$0xf]
        %v4755 = vld [vmem:[%s20 + $0x24c] sm:$0xff]
        %v4756 = vld [vmem:[%s20 + $0x254] sm:$0xff]
        %v4757 = vld [vmem:[%s20 + $0x25c] sm:$0xff]
        %v4758 = vld [vmem:[%s20 + $0x264] sm:$0xf]
        %v4759 = vld [vmem:[%s20 + $0x268] sm:$0xff]
        %v4760 = vld [vmem:[%s20 + $0x270] sm:$0xff]
        %v4761 = vld [vmem:[%s20 + $0x278] sm:$0xff]
        %v4762 = vld [vmem:[%s20 + $0x280] sm:$0xf]
        %v4763 = vld [vmem:[%s20 + $0x284] sm:$0xff]
        %v4764 = vld [vmem:[%s20 + $0x28c] sm:$0xff]
        %v4765 = vld [vmem:[%s20 + $0x294] sm:$0xff]
        %v4766 = vld [vmem:[%s20 + $0x29c] sm:$0xf]
        %v4767 = vld [vmem:[%s20 + $0x2a0] sm:$0x33]
        %v4768 = vld [vmem:[%s20 + $0x2a8] sm:$0x33]
        %v4769 = vld [vmem:[%s20 + $0x2b0] sm:$0x33]
        %v4770 = vld [vmem:[%s20 + $0x2b8] sm:$0x3]
        %v4871 = vunpack.c.l.b16 %v4671
        %v4872 = vunpack.c.h.b16 %v4671
        %v4873 = vunpack.c.l.b16 %v4672
        %v4874 = vunpack.c.h.b16 %v4672
        %v4875 = vunpack.c.l.b16 %v4673
        %v4876 = vunpack.c.h.b16 %v4673
        %v4877 = vunpack.c.l.b16 %v4674
        %v4878 = vunpack.c.l.b16 %v4675
        %v4879 = vunpack.c.h.b16 %v4675
        %v4880 = vunpack.c.l.b16 %v4676
        %v4881 = vunpack.c.h.b16 %v4676
        %v4882 = vunpack.c.l.b16 %v4677
        %v4883 = vunpack.c.h.b16 %v4677
        %v4884 = vunpack.c.l.b16 %v4678
        %v4885 = vunpack.c.l.b16 %v4679
        %v4886 = vunpack.c.h.b16 %v4679
        %v4887 = vunpack.c.l.b16 %v4680
        %v4888 = vunpack.c.h.b16 %v4680
        %v4889 = vunpack.c.l.b16 %v4681
        %v4890 = vunpack.c.h.b16 %v4681
        %v4891 = vunpack.c.l.b16 %v4682
        %v4892 = vunpack.c.l.b16 %v4683
        %v4893 = vunpack.c.h.b16 %v4683
        %v4894 = vunpack.c.l.b16 %v4684
        %v4895 = vunpack.c.h.b16 %v4684
        %v4896 = vunpack.c.l.b16 %v4685
        %v4897 = vunpack.c.h.b16 %v4685
        %v4898 = vunpack.c.l.b16 %v4686
        %v4899 = vunpack.c.l.b16 %v4687
        %v4900 = vunpack.c.h.b16 %v4687
        %v4901 = vunpack.c.l.b16 %v4688
        %v4902 = vunpack.c.h.b16 %v4688
        %v4903 = vunpack.c.l.b16 %v4689
        %v4904 = vunpack.c.h.b16 %v4689
        %v4905 = vunpack.c.l.b16 %v4690
        %v4906 = vunpack.c.l.b16 %v4691
        %v4907 = vunpack.c.h.b16 %v4691
        %v4908 = vunpack.c.l.b16 %v4692
        %v4909 = vunpack.c.h.b16 %v4692
        %v4910 = vunpack.c.l.b16 %v4693
        %v4911 = vunpack.c.h.b16 %v4693
        %v4912 = vunpack.c.l.b16 %v4694
        %v4913 = vunpack.c.l.b16 %v4695
        %v4914 = vunpack.c.h.b16 %v4695
        %v4915 = vunpack.c.l.b16 %v4696
        %v4916 = vunpack.c.h.b16 %v4696
        %v4917 = vunpack.c.l.b16 %v4697
        %v4918 = vunpack.c.h.b16 %v4697
        %v4919 = vunpack.c.l.b16 %v4698
        %v4920 = vunpack.c.l.b16 %v4699
        %v4921 = vunpack.c.h.b16 %v4699
        %v4922 = vunpack.c.l.b16 %v4700
        %v4923 = vunpack.c.h.b16 %v4700
        %v4924 = vunpack.c.l.b16 %v4701
        %v4925 = vunpack.c.h.b16 %v4701
        %v4926 = vunpack.c.l.b16 %v4702
        %v4927 = vunpack.c.l.b16 %v4703
        %v4928 = vunpack.c.h.b16 %v4703
        %v4929 = vunpack.c.l.b16 %v4704
        %v4930 = vunpack.c.h.b16 %v4704
        %v4931 = vunpack.c.l.b16 %v4705
        %v4932 = vunpack.c.h.b16 %v4705
        %v4933 = vunpack.c.l.b16 %v4706
        %v4934 = vunpack.c.l.b16 %v4707
        %v4935 = vunpack.c.h.b16 %v4707
        %v4936 = vunpack.c.l.b16 %v4708
        %v4937 = vunpack.c.h.b16 %v4708
        %v4938 = vunpack.c.l.b16 %v4709
        %v4939 = vunpack.c.h.b16 %v4709
        %v4940 = vunpack.c.l.b16 %v4710
        %v4941 = vunpack.c.l.b16 %v4711
        %v4942 = vunpack.c.h.b16 %v4711
        %v4943 = vunpack.c.l.b16 %v4712
        %v4944 = vunpack.c.h.b16 %v4712
        %v4945 = vunpack.c.l.b16 %v4713
        %v4946 = vunpack.c.h.b16 %v4713
        %v4947 = vunpack.c.l.b16 %v4714
        %v4948 = vunpack.c.l.b16 %v4715
        %v4949 = vunpack.c.h.b16 %v4715
        %v4950 = vunpack.c.l.b16 %v4716
        %v4951 = vunpack.c.h.b16 %v4716
        %v4952 = vunpack.c.l.b16 %v4717
        %v4953 = vunpack.c.h.b16 %v4717
        %v4954 = vunpack.c.l.b16 %v4718
        %v4955 = vunpack.c.l.b16 %v4719
        %v4956 = vunpack.c.h.b16 %v4719
        %v4957 = vunpack.c.l.b16 %v4720
        %v4958 = vunpack.c.h.b16 %v4720
        %v4959 = vunpack.c.l.b16 %v4721
        %v4960 = vunpack.c.h.b16 %v4721
        %v4961 = vunpack.c.l.b16 %v4722
        %v4962 = vunpack.c.l.b16 %v4723
        %v4963 = vunpack.c.h.b16 %v4723
        %v4964 = vunpack.c.l.b16 %v4724
        %v4965 = vunpack.c.h.b16 %v4724
        %v4966 = vunpack.c.l.b16 %v4725
        %v4967 = vunpack.c.h.b16 %v4725
        %v4968 = vunpack.c.l.b16 %v4726
        %v4969 = vunpack.c.l.b16 %v4727
        %v4970 = vunpack.c.h.b16 %v4727
        %v4971 = vunpack.c.l.b16 %v4728
        %v4972 = vunpack.c.h.b16 %v4728
        %v4973 = vunpack.c.l.b16 %v4729
        %v4974 = vunpack.c.h.b16 %v4729
        %v4975 = vunpack.c.l.b16 %v4730
        %v4976 = vunpack.c.l.b16 %v4731
        %v4977 = vunpack.c.h.b16 %v4731
        %v4978 = vunpack.c.l.b16 %v4732
        %v4979 = vunpack.c.h.b16 %v4732
        %v4980 = vunpack.c.l.b16 %v4733
        %v4981 = vunpack.c.h.b16 %v4733
        %v4982 = vunpack.c.l.b16 %v4734
        %v4983 = vunpack.c.l.b16 %v4735
        %v4984 = vunpack.c.h.b16 %v4735
        %v4985 = vunpack.c.l.b16 %v4736
        %v4986 = vunpack.c.h.b16 %v4736
        %v4987 = vunpack.c.l.b16 %v4737
        %v4988 = vunpack.c.h.b16 %v4737
        %v4989 = vunpack.c.l.b16 %v4738
        %v4990 = vunpack.c.l.b16 %v4739
        %v4991 = vunpack.c.h.b16 %v4739
        %v4992 = vunpack.c.l.b16 %v4740
        %v4993 = vunpack.c.h.b16 %v4740
        %v4994 = vunpack.c.l.b16 %v4741
        %v4995 = vunpack.c.h.b16 %v4741
        %v4996 = vunpack.c.l.b16 %v4742
        %v4997 = vunpack.c.l.b16 %v4743
        %v4998 = vunpack.c.h.b16 %v4743
        %v4999 = vunpack.c.l.b16 %v4744
        %v5000 = vunpack.c.h.b16 %v4744
        %v5001 = vunpack.c.l.b16 %v4745
        %v5002 = vunpack.c.h.b16 %v4745
        %v5003 = vunpack.c.l.b16 %v4746
        %v5004 = vunpack.c.l.b16 %v4747
        %v5005 = vunpack.c.h.b16 %v4747
        %v5006 = vunpack.c.l.b16 %v4748
        %v5007 = vunpack.c.h.b16 %v4748
        %v5008 = vunpack.c.l.b16 %v4749
        %v5009 = vunpack.c.h.b16 %v4749
        %v5010 = vunpack.c.l.b16 %v4750
        %v5011 = vunpack.c.l.b16 %v4751
        %v5012 = vunpack.c.h.b16 %v4751
        %v5013 = vunpack.c.l.b16 %v4752
        %v5014 = vunpack.c.h.b16 %v4752
        %v5015 = vunpack.c.l.b16 %v4753
        %v5016 = vunpack.c.h.b16 %v4753
        %v5017 = vunpack.c.l.b16 %v4754
        %v5018 = vunpack.c.l.b16 %v4755
        %v5019 = vunpack.c.h.b16 %v4755
        %v5020 = vunpack.c.l.b16 %v4756
        %v5021 = vunpack.c.h.b16 %v4756
        %v5022 = vunpack.c.l.b16 %v4757
        %v5023 = vunpack.c.h.b16 %v4757
        %v5024 = vunpack.c.l.b16 %v4758
        %v5025 = vunpack.c.l.b16 %v4759
        %v5026 = vunpack.c.h.b16 %v4759
        %v5027 = vunpack.c.l.b16 %v4760
        %v5028 = vunpack.c.h.b16 %v4760
        %v5029 = vunpack.c.l.b16 %v4761
        %v5030 = vunpack.c.h.b16 %v4761
        %v5031 = vunpack.c.l.b16 %v4762
        %v5032 = vunpack.c.l.b16 %v4763
        %v5033 = vunpack.c.h.b16 %v4763
        %v5034 = vunpack.c.l.b16 %v4764
        %v5035 = vunpack.c.h.b16 %v4764
        %v5036 = vunpack.c.l.b16 %v4765
        %v5037 = vunpack.c.h.b16 %v4765
        %v5038 = vunpack.c.l.b16 %v4766
        %v5039 = vunpack.c.l.b16 %v4767
        %v5040 = vunpack.c.h.b16 %v4767
        %v5041 = vunpack.c.l.b16 %v4768
        %v5042 = vunpack.c.h.b16 %v4768
        %v5043 = vunpack.c.l.b16 %v4769
        %v5044 = vunpack.c.h.b16 %v4769
        %v5045 = vunpack.c.l.b16 %v4770
        %v5046 = vpack.c.b16 %v4878, %v4871
        %v5047 = vpack.c.b16 %v4879, %v4872
        %v5048 = vpack.c.b16 %v4880, %v4873
        %v5049 = vpack.c.b16 %v4881, %v4874
        %v5050 = vpack.c.b16 %v4882, %v4875
        %v5051 = vpack.c.b16 %v4883, %v4876
        %v5052 = vpack.c.b16 %v4884, %v4877
        %v5053 = vpack.c.b16 %v4892, %v4885
        %v5054 = vpack.c.b16 %v4893, %v4886
        %v5055 = vpack.c.b16 %v4894, %v4887
        %v5056 = vpack.c.b16 %v4895, %v4888
        %v5057 = vpack.c.b16 %v4896, %v4889
        %v5058 = vpack.c.b16 %v4897, %v4890
        %v5059 = vpack.c.b16 %v4898, %v4891
        %v5060 = vpack.c.b16 %v4906, %v4899
        %v5061 = vpack.c.b16 %v4907, %v4900
        %v5062 = vpack.c.b16 %v4908, %v4901
        %v5063 = vpack.c.b16 %v4909, %v4902
        %v5064 = vpack.c.b16 %v4910, %v4903
        %v5065 = vpack.c.b16 %v4911, %v4904
        %v5066 = vpack.c.b16 %v4912, %v4905
        %v5067 = vpack.c.b16 %v4920, %v4913
        %v5068 = vpack.c.b16 %v4921, %v4914
        %v5069 = vpack.c.b16 %v4922, %v4915
        %v5070 = vpack.c.b16 %v4923, %v4916
        %v5071 = vpack.c.b16 %v4924, %v4917
        %v5072 = vpack.c.b16 %v4925, %v4918
        %v5073 = vpack.c.b16 %v4926, %v4919
        %v5074 = vpack.c.b16 %v4934, %v4927
        %v5075 = vpack.c.b16 %v4935, %v4928
        %v5076 = vpack.c.b16 %v4936, %v4929
        %v5077 = vpack.c.b16 %v4937, %v4930
        %v5078 = vpack.c.b16 %v4938, %v4931
        %v5079 = vpack.c.b16 %v4939, %v4932
        %v5080 = vpack.c.b16 %v4940, %v4933
        %v5081 = vpack.c.b16 %v4948, %v4941
        %v5082 = vpack.c.b16 %v4949, %v4942
        %v5083 = vpack.c.b16 %v4950, %v4943
        %v5084 = vpack.c.b16 %v4951, %v4944
        %v5085 = vpack.c.b16 %v4952, %v4945
        %v5086 = vpack.c.b16 %v4953, %v4946
        %v5087 = vpack.c.b16 %v4954, %v4947
        %v5088 = vpack.c.b16 %v4962, %v4955
        %v5089 = vpack.c.b16 %v4963, %v4956
        %v5090 = vpack.c.b16 %v4964, %v4957
        %v5091 = vpack.c.b16 %v4965, %v4958
        %v5092 = vpack.c.b16 %v4966, %v4959
        %v5093 = vpack.c.b16 %v4967, %v4960
        %v5094 = vpack.c.b16 %v4968, %v4961
        %v5095 = vpack.c.b16 %v4976, %v4969
        %v5096 = vpack.c.b16 %v4977, %v4970
        %v5097 = vpack.c.b16 %v4978, %v4971
        %v5098 = vpack.c.b16 %v4979, %v4972
        %v5099 = vpack.c.b16 %v4980, %v4973
        %v5100 = vpack.c.b16 %v4981, %v4974
        %v5101 = vpack.c.b16 %v4982, %v4975
        %v5102 = vpack.c.b16 %v4990, %v4983
        %v5103 = vpack.c.b16 %v4991, %v4984
        %v5104 = vpack.c.b16 %v4992, %v4985
        %v5105 = vpack.c.b16 %v4993, %v4986
        %v5106 = vpack.c.b16 %v4994, %v4987
        %v5107 = vpack.c.b16 %v4995, %v4988
        %v5108 = vpack.c.b16 %v4996, %v4989
        %v5109 = vpack.c.b16 %v5004, %v4997
        %v5110 = vpack.c.b16 %v5005, %v4998
        %v5111 = vpack.c.b16 %v5006, %v4999
        %v5112 = vpack.c.b16 %v5007, %v5000
        %v5113 = vpack.c.b16 %v5008, %v5001
        %v5114 = vpack.c.b16 %v5009, %v5002
        %v5115 = vpack.c.b16 %v5010, %v5003
        %v5116 = vpack.c.b16 %v5018, %v5011
        %v5117 = vpack.c.b16 %v5019, %v5012
        %v5118 = vpack.c.b16 %v5020, %v5013
        %v5119 = vpack.c.b16 %v5021, %v5014
        %v5120 = vpack.c.b16 %v5022, %v5015
        %v5121 = vpack.c.b16 %v5023, %v5016
        %v5122 = vpack.c.b16 %v5024, %v5017
        %v5123 = vpack.c.b16 %v5032, %v5025
        %v5124 = vpack.c.b16 %v5033, %v5026
        %v5125 = vpack.c.b16 %v5034, %v5027
        %v5126 = vpack.c.b16 %v5035, %v5028
        %v5127 = vpack.c.b16 %v5036, %v5029
        %v5128 = vpack.c.b16 %v5037, %v5030
        %v5129 = vpack.c.b16 %v5038, %v5031
        %v5130 = vpack.c.b16 %v5039, %v5039
        %v5131 = vpack.c.b16 %v5040, %v5040
        %v5132 = vpack.c.b16 %v5041, %v5041
        %v5133 = vpack.c.b16 %v5042, %v5042
        %v5134 = vpack.c.b16 %v5043, %v5043
        %v5135 = vpack.c.b16 %v5044, %v5044
        %v5136 = vpack.c.b16 %v5045, %v5045
        %v5216 = vsel %vm3609, %v5052, 0
        %v5219 = vsel %vm3609, %v5059, 0
        %v5222 = vsel %vm3609, %v5066, 0
        %v5225 = vsel %vm3609, %v5073, 0
        %v5228 = vsel %vm3609, %v5080, 0
        %v5231 = vsel %vm3609, %v5087, 0
        %v5234 = vsel %vm3609, %v5094, 0
        %v5237 = vsel %vm3609, %v5101, 0
        %v5240 = vsel %vm3609, %v5108, 0
        %v5243 = vsel %vm3609, %v5115, 0
        %v5246 = vsel %vm3609, %v5122, 0
        %v5249 = vsel %vm3609, %v5129, 0
        %v5252 = vsel %vm3609, %v5136, 0
        %5254 = vmatpush.bf16.msra.mxu0 %v3123
        %5255 = vmatpush.bf16.msra.mxu0 %v3122
        %5256 = vmatpush.bf16.msra.mxu0 %v3121
        %5257 = vmatpush.bf16.msra.mxu0 %v3120
        %5258 = vmatpush.bf16.msra.mxu0 %v3119
        %5259 = vmatpush.bf16.msra.mxu0 %v3118
        %5260 = vmatpush.bf16.msra.mxu0 %v3117
        %5261 = vmatpush.bf16.msra.mxu0 %v3116
        %5262 = vmatmul.bf16.gmra.mxu0 %v5046
        %v5263 = vpop.f32.mrf.mxu0
        %v5264 = vadd.f32 0.0, %v5263
        %v5265 = vpop.f32.mrf.mxu0
        %v5266 = vadd.f32 0.0, %v5265
        %5267 = vmatmul.bf16.gmra.mxu0 %v5053
        %v5268 = vpop.f32.mrf.mxu0
        %v5269 = vadd.f32 0.0, %v5268
        %v5270 = vpop.f32.mrf.mxu0
        %v5271 = vadd.f32 0.0, %v5270
        %5272 = vmatmul.bf16.gmra.mxu0 %v5060
        %v5273 = vpop.f32.mrf.mxu0
        %v5274 = vadd.f32 0.0, %v5273
        %v5275 = vpop.f32.mrf.mxu0
        %v5276 = vadd.f32 0.0, %v5275
        %5277 = vmatmul.bf16.gmra.mxu0 %v5067
        %v5278 = vpop.f32.mrf.mxu0
        %v5279 = vadd.f32 0.0, %v5278
        %v5280 = vpop.f32.mrf.mxu0
        %v5281 = vadd.f32 0.0, %v5280
        %5282 = vmatmul.bf16.gmra.mxu0 %v5074
        %v5283 = vpop.f32.mrf.mxu0
        %v5284 = vadd.f32 0.0, %v5283
        %v5285 = vpop.f32.mrf.mxu0
        %v5286 = vadd.f32 0.0, %v5285
        %5287 = vmatmul.bf16.gmra.mxu0 %v5081
        %v5288 = vpop.f32.mrf.mxu0
        %v5289 = vadd.f32 0.0, %v5288
        %v5290 = vpop.f32.mrf.mxu0
        %v5291 = vadd.f32 0.0, %v5290
        %5292 = vmatmul.bf16.gmra.mxu0 %v5088
        %v5293 = vpop.f32.mrf.mxu0
        %v5294 = vadd.f32 0.0, %v5293
        %v5295 = vpop.f32.mrf.mxu0
        %v5296 = vadd.f32 0.0, %v5295
        %5297 = vmatmul.bf16.gmra.mxu0 %v5095
        %v5298 = vpop.f32.mrf.mxu0
        %v5299 = vadd.f32 0.0, %v5298
        %v5300 = vpop.f32.mrf.mxu0
        %v5301 = vadd.f32 0.0, %v5300
        %5302 = vmatmul.bf16.gmra.mxu0 %v5102
        %v5303 = vpop.f32.mrf.mxu0
        %v5304 = vadd.f32 0.0, %v5303
        %v5305 = vpop.f32.mrf.mxu0
        %v5306 = vadd.f32 0.0, %v5305
        %5307 = vmatmul.bf16.gmra.mxu0 %v5109
        %v5308 = vpop.f32.mrf.mxu0
        %v5309 = vadd.f32 0.0, %v5308
        %v5310 = vpop.f32.mrf.mxu0
        %v5311 = vadd.f32 0.0, %v5310
        %5312 = vmatmul.bf16.gmra.mxu0 %v5116
        %v5313 = vpop.f32.mrf.mxu0
        %v5314 = vadd.f32 0.0, %v5313
        %v5315 = vpop.f32.mrf.mxu0
        %v5316 = vadd.f32 0.0, %v5315
        %5317 = vmatmul.bf16.gmra.mxu0 %v5123
        %v5318 = vpop.f32.mrf.mxu0
        %v5319 = vadd.f32 0.0, %v5318
        %v5320 = vpop.f32.mrf.mxu0
        %v5321 = vadd.f32 0.0, %v5320
        %5322 = vmatmul.bf16.gmra.mxu0 %v5130
        %v5323 = vpop.f32.mrf.mxu0
        %v5324 = vadd.f32 0.0, %v5323
        %v5325 = vpop.f32.mrf.mxu0
        %5326 = vdwg.mxu0
        %5327 = vmatpush.bf16.msra.mxu0 %v3131
        %5328 = vmatpush.bf16.msra.mxu0 %v3130
        %5329 = vmatpush.bf16.msra.mxu0 %v3129
        %5330 = vmatpush.bf16.msra.mxu0 %v3128
        %5331 = vmatpush.bf16.msra.mxu0 %v3127
        %5332 = vmatpush.bf16.msra.mxu0 %v3126
        %5333 = vmatpush.bf16.msra.mxu0 %v3125
        %5334 = vmatpush.bf16.msra.mxu0 %v3124
        %5335 = vmatmul.bf16.gmra.mxu0 %v5047
        %v5336 = vpop.f32.mrf.mxu0
        %v5337 = vadd.f32 %v5264, %v5336
        %v5338 = vpop.f32.mrf.mxu0
        %v5339 = vadd.f32 %v5266, %v5338
        %5340 = vmatmul.bf16.gmra.mxu0 %v5054
        %v5341 = vpop.f32.mrf.mxu0
        %v5342 = vadd.f32 %v5269, %v5341
        %v5343 = vpop.f32.mrf.mxu0
        %v5344 = vadd.f32 %v5271, %v5343
        %5345 = vmatmul.bf16.gmra.mxu0 %v5061
        %v5346 = vpop.f32.mrf.mxu0
        %v5347 = vadd.f32 %v5274, %v5346
        %v5348 = vpop.f32.mrf.mxu0
        %v5349 = vadd.f32 %v5276, %v5348
        %5350 = vmatmul.bf16.gmra.mxu0 %v5068
        %v5351 = vpop.f32.mrf.mxu0
        %v5352 = vadd.f32 %v5279, %v5351
        %v5353 = vpop.f32.mrf.mxu0
        %v5354 = vadd.f32 %v5281, %v5353
        %5355 = vmatmul.bf16.gmra.mxu0 %v5075
        %v5356 = vpop.f32.mrf.mxu0
        %v5357 = vadd.f32 %v5284, %v5356
        %v5358 = vpop.f32.mrf.mxu0
        %v5359 = vadd.f32 %v5286, %v5358
        %5360 = vmatmul.bf16.gmra.mxu0 %v5082
        %v5361 = vpop.f32.mrf.mxu0
        %v5362 = vadd.f32 %v5289, %v5361
        %v5363 = vpop.f32.mrf.mxu0
        %v5364 = vadd.f32 %v5291, %v5363
        %5365 = vmatmul.bf16.gmra.mxu0 %v5089
        %v5366 = vpop.f32.mrf.mxu0
        %v5367 = vadd.f32 %v5294, %v5366
        %v5368 = vpop.f32.mrf.mxu0
        %v5369 = vadd.f32 %v5296, %v5368
        %5370 = vmatmul.bf16.gmra.mxu0 %v5096
        %v5371 = vpop.f32.mrf.mxu0
        %v5372 = vadd.f32 %v5299, %v5371
        %v5373 = vpop.f32.mrf.mxu0
        %v5374 = vadd.f32 %v5301, %v5373
        %5375 = vmatmul.bf16.gmra.mxu0 %v5103
        %v5376 = vpop.f32.mrf.mxu0
        %v5377 = vadd.f32 %v5304, %v5376
        %v5378 = vpop.f32.mrf.mxu0
        %v5379 = vadd.f32 %v5306, %v5378
        %5380 = vmatmul.bf16.gmra.mxu0 %v5110
        %v5381 = vpop.f32.mrf.mxu0
        %v5382 = vadd.f32 %v5309, %v5381
        %v5383 = vpop.f32.mrf.mxu0
        %v5384 = vadd.f32 %v5311, %v5383
        %5385 = vmatmul.bf16.gmra.mxu0 %v5117
        %v5386 = vpop.f32.mrf.mxu0
        %v5387 = vadd.f32 %v5314, %v5386
        %v5388 = vpop.f32.mrf.mxu0
        %v5389 = vadd.f32 %v5316, %v5388
        %5390 = vmatmul.bf16.gmra.mxu0 %v5124
        %v5391 = vpop.f32.mrf.mxu0
        %v5392 = vadd.f32 %v5319, %v5391
        %v5393 = vpop.f32.mrf.mxu0
        %v5394 = vadd.f32 %v5321, %v5393
        %5395 = vmatmul.bf16.gmra.mxu0 %v5131
        %v5396 = vpop.f32.mrf.mxu0
        %v5397 = vadd.f32 %v5324, %v5396
        %v5398 = vpop.f32.mrf.mxu0
        %5399 = vdwg.mxu0
        %5400 = vmatpush.bf16.msra.mxu0 %v3139
        %5401 = vmatpush.bf16.msra.mxu0 %v3138
        %5402 = vmatpush.bf16.msra.mxu0 %v3137
        %5403 = vmatpush.bf16.msra.mxu0 %v3136
        %5404 = vmatpush.bf16.msra.mxu0 %v3135
        %5405 = vmatpush.bf16.msra.mxu0 %v3134
        %5406 = vmatpush.bf16.msra.mxu0 %v3133
        %5407 = vmatpush.bf16.msra.mxu0 %v3132
        %5408 = vmatmul.bf16.gmra.mxu0 %v5048
        %v5409 = vpop.f32.mrf.mxu0
        %v5410 = vadd.f32 %v5337, %v5409
        %v5411 = vpop.f32.mrf.mxu0
        %v5412 = vadd.f32 %v5339, %v5411
        %5413 = vmatmul.bf16.gmra.mxu0 %v5055
        %v5414 = vpop.f32.mrf.mxu0
        %v5415 = vadd.f32 %v5342, %v5414
        %v5416 = vpop.f32.mrf.mxu0
        %v5417 = vadd.f32 %v5344, %v5416
        %5418 = vmatmul.bf16.gmra.mxu0 %v5062
        %v5419 = vpop.f32.mrf.mxu0
        %v5420 = vadd.f32 %v5347, %v5419
        %v5421 = vpop.f32.mrf.mxu0
        %v5422 = vadd.f32 %v5349, %v5421
        %5423 = vmatmul.bf16.gmra.mxu0 %v5069
        %v5424 = vpop.f32.mrf.mxu0
        %v5425 = vadd.f32 %v5352, %v5424
        %v5426 = vpop.f32.mrf.mxu0
        %v5427 = vadd.f32 %v5354, %v5426
        %5428 = vmatmul.bf16.gmra.mxu0 %v5076
        %v5429 = vpop.f32.mrf.mxu0
        %v5430 = vadd.f32 %v5357, %v5429
        %v5431 = vpop.f32.mrf.mxu0
        %v5432 = vadd.f32 %v5359, %v5431
        %5433 = vmatmul.bf16.gmra.mxu0 %v5083
        %v5434 = vpop.f32.mrf.mxu0
        %v5435 = vadd.f32 %v5362, %v5434
        %v5436 = vpop.f32.mrf.mxu0
        %v5437 = vadd.f32 %v5364, %v5436
        %5438 = vmatmul.bf16.gmra.mxu0 %v5090
        %v5439 = vpop.f32.mrf.mxu0
        %v5440 = vadd.f32 %v5367, %v5439
        %v5441 = vpop.f32.mrf.mxu0
        %v5442 = vadd.f32 %v5369, %v5441
        %5443 = vmatmul.bf16.gmra.mxu0 %v5097
        %v5444 = vpop.f32.mrf.mxu0
        %v5445 = vadd.f32 %v5372, %v5444
        %v5446 = vpop.f32.mrf.mxu0
        %v5447 = vadd.f32 %v5374, %v5446
        %5448 = vmatmul.bf16.gmra.mxu0 %v5104
        %v5449 = vpop.f32.mrf.mxu0
        %v5450 = vadd.f32 %v5377, %v5449
        %v5451 = vpop.f32.mrf.mxu0
        %v5452 = vadd.f32 %v5379, %v5451
        %5453 = vmatmul.bf16.gmra.mxu0 %v5111
        %v5454 = vpop.f32.mrf.mxu0
        %v5455 = vadd.f32 %v5382, %v5454
        %v5456 = vpop.f32.mrf.mxu0
        %v5457 = vadd.f32 %v5384, %v5456
        %5458 = vmatmul.bf16.gmra.mxu0 %v5118
        %v5459 = vpop.f32.mrf.mxu0
        %v5460 = vadd.f32 %v5387, %v5459
        %v5461 = vpop.f32.mrf.mxu0
        %v5462 = vadd.f32 %v5389, %v5461
        %5463 = vmatmul.bf16.gmra.mxu0 %v5125
        %v5464 = vpop.f32.mrf.mxu0
        %v5465 = vadd.f32 %v5392, %v5464
        %v5466 = vpop.f32.mrf.mxu0
        %v5467 = vadd.f32 %v5394, %v5466
        %5468 = vmatmul.bf16.gmra.mxu0 %v5132
        %v5469 = vpop.f32.mrf.mxu0
        %v5470 = vadd.f32 %v5397, %v5469
        %v5471 = vpop.f32.mrf.mxu0
        %5472 = vdwg.mxu0
        %5473 = vmatpush.bf16.msra.mxu0 %v3147
        %5474 = vmatpush.bf16.msra.mxu0 %v3146
        %5475 = vmatpush.bf16.msra.mxu0 %v3145
        %5476 = vmatpush.bf16.msra.mxu0 %v3144
        %5477 = vmatpush.bf16.msra.mxu0 %v3143
        %5478 = vmatpush.bf16.msra.mxu0 %v3142
        %5479 = vmatpush.bf16.msra.mxu0 %v3141
        %5480 = vmatpush.bf16.msra.mxu0 %v3140
        %5481 = vmatmul.bf16.gmra.mxu0 %v5049
        %v5482 = vpop.f32.mrf.mxu0
        %v5483 = vadd.f32 %v5410, %v5482
        %v5484 = vpop.f32.mrf.mxu0
        %v5485 = vadd.f32 %v5412, %v5484
        %5486 = vmatmul.bf16.gmra.mxu0 %v5056
        %v5487 = vpop.f32.mrf.mxu0
        %v5488 = vadd.f32 %v5415, %v5487
        %v5489 = vpop.f32.mrf.mxu0
        %v5490 = vadd.f32 %v5417, %v5489
        %5491 = vmatmul.bf16.gmra.mxu0 %v5063
        %v5492 = vpop.f32.mrf.mxu0
        %v5493 = vadd.f32 %v5420, %v5492
        %v5494 = vpop.f32.mrf.mxu0
        %v5495 = vadd.f32 %v5422, %v5494
        %5496 = vmatmul.bf16.gmra.mxu0 %v5070
        %v5497 = vpop.f32.mrf.mxu0
        %v5498 = vadd.f32 %v5425, %v5497
        %v5499 = vpop.f32.mrf.mxu0
        %v5500 = vadd.f32 %v5427, %v5499
        %5501 = vmatmul.bf16.gmra.mxu0 %v5077
        %v5502 = vpop.f32.mrf.mxu0
        %v5503 = vadd.f32 %v5430, %v5502
        %v5504 = vpop.f32.mrf.mxu0
        %v5505 = vadd.f32 %v5432, %v5504
        %5506 = vmatmul.bf16.gmra.mxu0 %v5084
        %v5507 = vpop.f32.mrf.mxu0
        %v5508 = vadd.f32 %v5435, %v5507
        %v5509 = vpop.f32.mrf.mxu0
        %v5510 = vadd.f32 %v5437, %v5509
        %5511 = vmatmul.bf16.gmra.mxu0 %v5091
        %v5512 = vpop.f32.mrf.mxu0
        %v5513 = vadd.f32 %v5440, %v5512
        %v5514 = vpop.f32.mrf.mxu0
        %v5515 = vadd.f32 %v5442, %v5514
        %5516 = vmatmul.bf16.gmra.mxu0 %v5098
        %v5517 = vpop.f32.mrf.mxu0
        %v5518 = vadd.f32 %v5445, %v5517
        %v5519 = vpop.f32.mrf.mxu0
        %v5520 = vadd.f32 %v5447, %v5519
        %5521 = vmatmul.bf16.gmra.mxu0 %v5105
        %v5522 = vpop.f32.mrf.mxu0
        %v5523 = vadd.f32 %v5450, %v5522
        %v5524 = vpop.f32.mrf.mxu0
        %v5525 = vadd.f32 %v5452, %v5524
        %5526 = vmatmul.bf16.gmra.mxu0 %v5112
        %v5527 = vpop.f32.mrf.mxu0
        %v5528 = vadd.f32 %v5455, %v5527
        %v5529 = vpop.f32.mrf.mxu0
        %v5530 = vadd.f32 %v5457, %v5529
        %5531 = vmatmul.bf16.gmra.mxu0 %v5119
        %v5532 = vpop.f32.mrf.mxu0
        %v5533 = vadd.f32 %v5460, %v5532
        %v5534 = vpop.f32.mrf.mxu0
        %v5535 = vadd.f32 %v5462, %v5534
        %5536 = vmatmul.bf16.gmra.mxu0 %v5126
        %v5537 = vpop.f32.mrf.mxu0
        %v5538 = vadd.f32 %v5465, %v5537
        %v5539 = vpop.f32.mrf.mxu0
        %v5540 = vadd.f32 %v5467, %v5539
        %5541 = vmatmul.bf16.gmra.mxu0 %v5133
        %v5542 = vpop.f32.mrf.mxu0
        %v5543 = vadd.f32 %v5470, %v5542
        %v5544 = vpop.f32.mrf.mxu0
        %5545 = vdwg.mxu0
        %5546 = vmatpush.bf16.msra.mxu0 %v3155
        %5547 = vmatpush.bf16.msra.mxu0 %v3154
        %5548 = vmatpush.bf16.msra.mxu0 %v3153
        %5549 = vmatpush.bf16.msra.mxu0 %v3152
        %5550 = vmatpush.bf16.msra.mxu0 %v3151
        %5551 = vmatpush.bf16.msra.mxu0 %v3150
        %5552 = vmatpush.bf16.msra.mxu0 %v3149
        %5553 = vmatpush.bf16.msra.mxu0 %v3148
        %5554 = vmatmul.bf16.gmra.mxu0 %v5050
        %v5555 = vpop.f32.mrf.mxu0
        %v5556 = vadd.f32 %v5483, %v5555
        %v5557 = vpop.f32.mrf.mxu0
        %v5558 = vadd.f32 %v5485, %v5557
        %5559 = vmatmul.bf16.gmra.mxu0 %v5057
        %v5560 = vpop.f32.mrf.mxu0
        %v5561 = vadd.f32 %v5488, %v5560
        %v5562 = vpop.f32.mrf.mxu0
        %v5563 = vadd.f32 %v5490, %v5562
        %5564 = vmatmul.bf16.gmra.mxu0 %v5064
        %v5565 = vpop.f32.mrf.mxu0
        %v5566 = vadd.f32 %v5493, %v5565
        %v5567 = vpop.f32.mrf.mxu0
        %v5568 = vadd.f32 %v5495, %v5567
        %5569 = vmatmul.bf16.gmra.mxu0 %v5071
        %v5570 = vpop.f32.mrf.mxu0
        %v5571 = vadd.f32 %v5498, %v5570
        %v5572 = vpop.f32.mrf.mxu0
        %v5573 = vadd.f32 %v5500, %v5572
        %5574 = vmatmul.bf16.gmra.mxu0 %v5078
        %v5575 = vpop.f32.mrf.mxu0
        %v5576 = vadd.f32 %v5503, %v5575
        %v5577 = vpop.f32.mrf.mxu0
        %v5578 = vadd.f32 %v5505, %v5577
        %5579 = vmatmul.bf16.gmra.mxu0 %v5085
        %v5580 = vpop.f32.mrf.mxu0
        %v5581 = vadd.f32 %v5508, %v5580
        %v5582 = vpop.f32.mrf.mxu0
        %v5583 = vadd.f32 %v5510, %v5582
        %5584 = vmatmul.bf16.gmra.mxu0 %v5092
        %v5585 = vpop.f32.mrf.mxu0
        %v5586 = vadd.f32 %v5513, %v5585
        %v5587 = vpop.f32.mrf.mxu0
        %v5588 = vadd.f32 %v5515, %v5587
        %5589 = vmatmul.bf16.gmra.mxu0 %v5099
        %v5590 = vpop.f32.mrf.mxu0
        %v5591 = vadd.f32 %v5518, %v5590
        %v5592 = vpop.f32.mrf.mxu0
        %v5593 = vadd.f32 %v5520, %v5592
        %5594 = vmatmul.bf16.gmra.mxu0 %v5106
        %v5595 = vpop.f32.mrf.mxu0
        %v5596 = vadd.f32 %v5523, %v5595
        %v5597 = vpop.f32.mrf.mxu0
        %v5598 = vadd.f32 %v5525, %v5597
        %5599 = vmatmul.bf16.gmra.mxu0 %v5113
        %v5600 = vpop.f32.mrf.mxu0
        %v5601 = vadd.f32 %v5528, %v5600
        %v5602 = vpop.f32.mrf.mxu0
        %v5603 = vadd.f32 %v5530, %v5602
        %5604 = vmatmul.bf16.gmra.mxu0 %v5120
        %v5605 = vpop.f32.mrf.mxu0
        %v5606 = vadd.f32 %v5533, %v5605
        %v5607 = vpop.f32.mrf.mxu0
        %v5608 = vadd.f32 %v5535, %v5607
        %5609 = vmatmul.bf16.gmra.mxu0 %v5127
        %v5610 = vpop.f32.mrf.mxu0
        %v5611 = vadd.f32 %v5538, %v5610
        %v5612 = vpop.f32.mrf.mxu0
        %v5613 = vadd.f32 %v5540, %v5612
        %5614 = vmatmul.bf16.gmra.mxu0 %v5134
        %v5615 = vpop.f32.mrf.mxu0
        %v5616 = vadd.f32 %v5543, %v5615
        %v5617 = vpop.f32.mrf.mxu0
        %5618 = vdwg.mxu0
        %5619 = vmatpush.bf16.msra.mxu0 %v3163
        %5620 = vmatpush.bf16.msra.mxu0 %v3162
        %5621 = vmatpush.bf16.msra.mxu0 %v3161
        %5622 = vmatpush.bf16.msra.mxu0 %v3160
        %5623 = vmatpush.bf16.msra.mxu0 %v3159
        %5624 = vmatpush.bf16.msra.mxu0 %v3158
        %5625 = vmatpush.bf16.msra.mxu0 %v3157
        %5626 = vmatpush.bf16.msra.mxu0 %v3156
        %5627 = vmatmul.bf16.gmra.mxu0 %v5051
        %v5628 = vpop.f32.mrf.mxu0
        %v5629 = vadd.f32 %v5556, %v5628
        %v5630 = vpop.f32.mrf.mxu0
        %v5631 = vadd.f32 %v5558, %v5630
        %5632 = vmatmul.bf16.gmra.mxu0 %v5058
        %v5633 = vpop.f32.mrf.mxu0
        %v5634 = vadd.f32 %v5561, %v5633
        %v5635 = vpop.f32.mrf.mxu0
        %v5636 = vadd.f32 %v5563, %v5635
        %5637 = vmatmul.bf16.gmra.mxu0 %v5065
        %v5638 = vpop.f32.mrf.mxu0
        %v5639 = vadd.f32 %v5566, %v5638
        %v5640 = vpop.f32.mrf.mxu0
        %v5641 = vadd.f32 %v5568, %v5640
        %5642 = vmatmul.bf16.gmra.mxu0 %v5072
        %v5643 = vpop.f32.mrf.mxu0
        %v5644 = vadd.f32 %v5571, %v5643
        %v5645 = vpop.f32.mrf.mxu0
        %v5646 = vadd.f32 %v5573, %v5645
        %5647 = vmatmul.bf16.gmra.mxu0 %v5079
        %v5648 = vpop.f32.mrf.mxu0
        %v5649 = vadd.f32 %v5576, %v5648
        %v5650 = vpop.f32.mrf.mxu0
        %v5651 = vadd.f32 %v5578, %v5650
        %5652 = vmatmul.bf16.gmra.mxu0 %v5086
        %v5653 = vpop.f32.mrf.mxu0
        %v5654 = vadd.f32 %v5581, %v5653
        %v5655 = vpop.f32.mrf.mxu0
        %v5656 = vadd.f32 %v5583, %v5655
        %5657 = vmatmul.bf16.gmra.mxu0 %v5093
        %v5658 = vpop.f32.mrf.mxu0
        %v5659 = vadd.f32 %v5586, %v5658
        %v5660 = vpop.f32.mrf.mxu0
        %v5661 = vadd.f32 %v5588, %v5660
        %5662 = vmatmul.bf16.gmra.mxu0 %v5100
        %v5663 = vpop.f32.mrf.mxu0
        %v5664 = vadd.f32 %v5591, %v5663
        %v5665 = vpop.f32.mrf.mxu0
        %v5666 = vadd.f32 %v5593, %v5665
        %5667 = vmatmul.bf16.gmra.mxu0 %v5107
        %v5668 = vpop.f32.mrf.mxu0
        %v5669 = vadd.f32 %v5596, %v5668
        %v5670 = vpop.f32.mrf.mxu0
        %v5671 = vadd.f32 %v5598, %v5670
        %5672 = vmatmul.bf16.gmra.mxu0 %v5114
        %v5673 = vpop.f32.mrf.mxu0
        %v5674 = vadd.f32 %v5601, %v5673
        %v5675 = vpop.f32.mrf.mxu0
        %v5676 = vadd.f32 %v5603, %v5675
        %5677 = vmatmul.bf16.gmra.mxu0 %v5121
        %v5678 = vpop.f32.mrf.mxu0
        %v5679 = vadd.f32 %v5606, %v5678
        %v5680 = vpop.f32.mrf.mxu0
        %v5681 = vadd.f32 %v5608, %v5680
        %5682 = vmatmul.bf16.gmra.mxu0 %v5128
        %v5683 = vpop.f32.mrf.mxu0
        %v5684 = vadd.f32 %v5611, %v5683
        %v5685 = vpop.f32.mrf.mxu0
        %v5686 = vadd.f32 %v5613, %v5685
        %5687 = vmatmul.bf16.gmra.mxu0 %v5135
        %v5688 = vpop.f32.mrf.mxu0
        %v5689 = vadd.f32 %v5616, %v5688
        %v5690 = vpop.f32.mrf.mxu0
        %5691 = vdwg.mxu0
        %5692 = vmatpush.bf16.msra.mxu0 0
        %5693 = vmatpush.bf16.msra.mxu0 0
        %5694 = vmatpush.bf16.msra.mxu0 0
        %5695 = vmatpush.bf16.msra.mxu0 0
        %5696 = vmatpush.bf16.msra.mxu0 0
        %5697 = vmatpush.bf16.msra.mxu0 0
        %5698 = vmatpush.bf16.msra.mxu0 0
        %5699 = vmatpush.bf16.msra.mxu0 %v3164
        %5700 = vmatmul.bf16.gmra.mxu0 %v5216
        %v5701 = vpop.f32.mrf.mxu0
        %v5702 = vadd.f32 %v5629, %v5701
        %v5703 = vpop.f32.mrf.mxu0
        %v5704 = vadd.f32 %v5631, %v5703
        %5705 = vmatmul.bf16.gmra.mxu0 %v5219
        %v5706 = vpop.f32.mrf.mxu0
        %v5707 = vadd.f32 %v5634, %v5706
        %v5708 = vpop.f32.mrf.mxu0
        %v5709 = vadd.f32 %v5636, %v5708
        %5710 = vmatmul.bf16.gmra.mxu0 %v5222
        %v5711 = vpop.f32.mrf.mxu0
        %v5712 = vadd.f32 %v5639, %v5711
        %v5713 = vpop.f32.mrf.mxu0
        %v5714 = vadd.f32 %v5641, %v5713
        %5715 = vmatmul.bf16.gmra.mxu0 %v5225
        %v5716 = vpop.f32.mrf.mxu0
        %v5717 = vadd.f32 %v5644, %v5716
        %v5718 = vpop.f32.mrf.mxu0
        %v5719 = vadd.f32 %v5646, %v5718
        %5720 = vmatmul.bf16.gmra.mxu0 %v5228
        %v5721 = vpop.f32.mrf.mxu0
        %v5722 = vadd.f32 %v5649, %v5721
        %v5723 = vpop.f32.mrf.mxu0
        %v5724 = vadd.f32 %v5651, %v5723
        %5725 = vmatmul.bf16.gmra.mxu0 %v5231
        %v5726 = vpop.f32.mrf.mxu0
        %v5727 = vadd.f32 %v5654, %v5726
        %v5728 = vpop.f32.mrf.mxu0
        %v5729 = vadd.f32 %v5656, %v5728
        %5730 = vmatmul.bf16.gmra.mxu0 %v5234
        %v5731 = vpop.f32.mrf.mxu0
        %v5732 = vadd.f32 %v5659, %v5731
        %v5733 = vpop.f32.mrf.mxu0
        %v5734 = vadd.f32 %v5661, %v5733
        %5735 = vmatmul.bf16.gmra.mxu0 %v5237
        %v5736 = vpop.f32.mrf.mxu0
        %v5737 = vadd.f32 %v5664, %v5736
        %v5738 = vpop.f32.mrf.mxu0
        %v5739 = vadd.f32 %v5666, %v5738
        %5740 = vmatmul.bf16.gmra.mxu0 %v5240
        %v5741 = vpop.f32.mrf.mxu0
        %v5742 = vadd.f32 %v5669, %v5741
        %v5743 = vpop.f32.mrf.mxu0
        %v5744 = vadd.f32 %v5671, %v5743
        %5745 = vmatmul.bf16.gmra.mxu0 %v5243
        %v5746 = vpop.f32.mrf.mxu0
        %v5747 = vadd.f32 %v5674, %v5746
        %v5748 = vpop.f32.mrf.mxu0
        %v5749 = vadd.f32 %v5676, %v5748
        %5750 = vmatmul.bf16.gmra.mxu0 %v5246
        %v5751 = vpop.f32.mrf.mxu0
        %v5752 = vadd.f32 %v5679, %v5751
        %v5753 = vpop.f32.mrf.mxu0
        %v5754 = vadd.f32 %v5681, %v5753
        %5755 = vmatmul.bf16.gmra.mxu0 %v5249
        %v5756 = vpop.f32.mrf.mxu0
        %v5757 = vadd.f32 %v5684, %v5756
        %v5758 = vpop.f32.mrf.mxu0
        %v5759 = vadd.f32 %v5686, %v5758
        %5760 = vmatmul.bf16.gmra.mxu0 %v5252
        %v5761 = vpop.f32.mrf.mxu0
        %v5762 = vadd.f32 %v5689, %v5761
        %v5763 = vpop.f32.mrf.mxu0
        %5764 = vdwg.mxu0
        %v5765 = vpack.c.bf16 %v5704, %v5702
        %v5766 = vpack.c.bf16 %v5709, %v5707
        %v5767 = vpack.c.bf16 %v5714, %v5712
        %v5768 = vpack.c.bf16 %v5719, %v5717
        %v5769 = vpack.c.bf16 %v5724, %v5722
        %v5770 = vpack.c.bf16 %v5729, %v5727
        %v5771 = vpack.c.bf16 %v5734, %v5732
        %v5772 = vpack.c.bf16 %v5739, %v5737
        %v5773 = vpack.c.bf16 %v5744, %v5742
        %v5774 = vpack.c.bf16 %v5749, %v5747
        %v5775 = vpack.c.bf16 %v5754, %v5752
        %v5776 = vpack.c.bf16 %v5759, %v5757
        %v5777 = vpack.c.bf16 %v5762, %v5762
        %v5778 = vld [vmem:[#allocation7] sm:$0xff]
        %v5779 = vld [vmem:[#allocation7 + $0x8] sm:$0xff]
        %v5780 = vld [vmem:[#allocation7 + $0x10] sm:$0xff]
        %v5781 = vld [vmem:[#allocation7 + $0x18] sm:$0xff]
        %v5782 = vld [vmem:[#allocation7 + $0x20] sm:$0xff]
        %v5783 = vld [vmem:[#allocation7 + $0x28] sm:$0xff]
        %v5784 = vld [vmem:[#allocation7 + $0x30] sm:$0xff]
        %v5785 = vld [vmem:[#allocation7 + $0x38] sm:$0xff]
        %v5786 = vld [vmem:[#allocation7 + $0x40] sm:$0xff]
        %v5787 = vld [vmem:[#allocation7 + $0x48] sm:$0xff]
        %v5788 = vld [vmem:[#allocation7 + $0x50] sm:$0xff]
        %v5789 = vld [vmem:[#allocation7 + $0x58] sm:$0xff]
        %v5790 = vld [vmem:[#allocation7 + $0x60] sm:$0xff]
        %v5791 = vld [vmem:[#allocation7 + $0x68] sm:$0xff]
        %v5792 = vld [vmem:[#allocation7 + $0x70] sm:$0xff]
        %v5793 = vld [vmem:[#allocation7 + $0x78] sm:$0xff]
        %v5794 = vld [vmem:[#allocation8] sm:$0x3]
        %v5796 = vperm.slane %v5794, 0
        %v5797 = vperm.slane %v5794, 1
        %v5816 = vunpack.c.l.b16 %v5778
        %v5817 = vunpack.c.h.b16 %v5778
        %v5818 = vunpack.c.l.b16 %v5779
        %v5819 = vunpack.c.h.b16 %v5779
        %v5820 = vunpack.c.l.b16 %v5780
        %v5821 = vunpack.c.h.b16 %v5780
        %v5822 = vunpack.c.l.b16 %v5781
        %v5823 = vunpack.c.h.b16 %v5781
        %v5824 = vunpack.c.l.b16 %v5782
        %v5825 = vunpack.c.h.b16 %v5782
        %v5826 = vunpack.c.l.b16 %v5783
        %v5827 = vunpack.c.h.b16 %v5783
        %v5828 = vunpack.c.l.b16 %v5784
        %v5829 = vunpack.c.h.b16 %v5784
        %v5830 = vunpack.c.l.b16 %v5785
        %v5831 = vunpack.c.h.b16 %v5785
        %v5832 = vunpack.c.l.b16 %v5786
        %v5833 = vunpack.c.h.b16 %v5786
        %v5834 = vunpack.c.l.b16 %v5787
        %v5835 = vunpack.c.h.b16 %v5787
        %v5836 = vunpack.c.l.b16 %v5788
        %v5837 = vunpack.c.h.b16 %v5788
        %v5838 = vunpack.c.l.b16 %v5789
        %v5839 = vunpack.c.h.b16 %v5789
        %v5840 = vunpack.c.l.b16 %v5790
        %v5841 = vunpack.c.h.b16 %v5790
        %v5842 = vunpack.c.l.b16 %v5791
        %v5843 = vunpack.c.h.b16 %v5791
        %v5844 = vunpack.c.l.b16 %v5792
        %v5845 = vunpack.c.h.b16 %v5792
        %v5846 = vunpack.c.l.b16 %v5793
        %v5847 = vunpack.c.h.b16 %v5793
        %v5848 = vpack.c.b16 %v5818, %v5816
        %v5849 = vpack.c.b16 %v5819, %v5817
        %v5850 = vpack.c.b16 %v5822, %v5820
        %v5851 = vpack.c.b16 %v5823, %v5821
        %v5852 = vpack.c.b16 %v5826, %v5824
        %v5853 = vpack.c.b16 %v5827, %v5825
        %v5854 = vpack.c.b16 %v5830, %v5828
        %v5855 = vpack.c.b16 %v5831, %v5829
        %v5856 = vpack.c.b16 %v5834, %v5832
        %v5857 = vpack.c.b16 %v5835, %v5833
        %v5858 = vpack.c.b16 %v5838, %v5836
        %v5859 = vpack.c.b16 %v5839, %v5837
        %v5860 = vpack.c.b16 %v5842, %v5840
        %v5861 = vpack.c.b16 %v5843, %v5841
        %v5862 = vpack.c.b16 %v5846, %v5844
        %v5863 = vpack.c.b16 %v5847, %v5845
        %5880 = vmatpush.bf16.msra.mxu0 %v5862
        %5881 = vmatpush.bf16.msra.mxu0 %v5860
        %5882 = vmatpush.bf16.msra.mxu0 %v5858
        %5883 = vmatpush.bf16.msra.mxu0 %v5856
        %5884 = vmatpush.bf16.msra.mxu0 %v5854
        %5885 = vmatpush.bf16.msra.mxu0 %v5852
        %5886 = vmatpush.bf16.msra.mxu0 %v5850
        %5887 = vmatpush.bf16.msra.mxu0 %v5848
        %5888 = vmatmul.bf16.gmra.mxu0 %v5765
        %v5889 = vpop.f32.mrf.mxu0
        %v5890 = vadd.f32 %v5796, %v5889
        %v5891 = vpop.f32.mrf.mxu0
        %v5892 = vadd.f32 %v5796, %v5891
        %5893 = vmatmul.bf16.gmra.mxu0 %v5766
        %v5894 = vpop.f32.mrf.mxu0
        %v5895 = vadd.f32 %v5796, %v5894
        %v5896 = vpop.f32.mrf.mxu0
        %v5897 = vadd.f32 %v5796, %v5896
        %5898 = vmatmul.bf16.gmra.mxu0 %v5767
        %v5899 = vpop.f32.mrf.mxu0
        %v5900 = vadd.f32 %v5796, %v5899
        %v5901 = vpop.f32.mrf.mxu0
        %v5902 = vadd.f32 %v5796, %v5901
        %5903 = vmatmul.bf16.gmra.mxu0 %v5768
        %v5904 = vpop.f32.mrf.mxu0
        %v5905 = vadd.f32 %v5796, %v5904
        %v5906 = vpop.f32.mrf.mxu0
        %v5907 = vadd.f32 %v5796, %v5906
        %5908 = vmatmul.bf16.gmra.mxu0 %v5769
        %v5909 = vpop.f32.mrf.mxu0
        %v5910 = vadd.f32 %v5796, %v5909
        %v5911 = vpop.f32.mrf.mxu0
        %v5912 = vadd.f32 %v5796, %v5911
        %5913 = vmatmul.bf16.gmra.mxu0 %v5770
        %v5914 = vpop.f32.mrf.mxu0
        %v5915 = vadd.f32 %v5796, %v5914
        %v5916 = vpop.f32.mrf.mxu0
        %v5917 = vadd.f32 %v5796, %v5916
        %5918 = vmatmul.bf16.gmra.mxu0 %v5771
        %v5919 = vpop.f32.mrf.mxu0
        %v5920 = vadd.f32 %v5796, %v5919
        %v5921 = vpop.f32.mrf.mxu0
        %v5922 = vadd.f32 %v5796, %v5921
        %5923 = vmatmul.bf16.gmra.mxu0 %v5772
        %v5924 = vpop.f32.mrf.mxu0
        %v5925 = vadd.f32 %v5796, %v5924
        %v5926 = vpop.f32.mrf.mxu0
        %v5927 = vadd.f32 %v5796, %v5926
        %5928 = vmatmul.bf16.gmra.mxu0 %v5773
        %v5929 = vpop.f32.mrf.mxu0
        %v5930 = vadd.f32 %v5796, %v5929
        %v5931 = vpop.f32.mrf.mxu0
        %v5932 = vadd.f32 %v5796, %v5931
        %5933 = vmatmul.bf16.gmra.mxu0 %v5774
        %v5934 = vpop.f32.mrf.mxu0
        %v5935 = vadd.f32 %v5796, %v5934
        %v5936 = vpop.f32.mrf.mxu0
        %v5937 = vadd.f32 %v5796, %v5936
        %5938 = vmatmul.bf16.gmra.mxu0 %v5775
        %v5939 = vpop.f32.mrf.mxu0
        %v5940 = vadd.f32 %v5796, %v5939
        %v5941 = vpop.f32.mrf.mxu0
        %v5942 = vadd.f32 %v5796, %v5941
        %5943 = vmatmul.bf16.gmra.mxu0 %v5776
        %v5944 = vpop.f32.mrf.mxu0
        %v5945 = vadd.f32 %v5796, %v5944
        %v5946 = vpop.f32.mrf.mxu0
        %v5947 = vadd.f32 %v5796, %v5946
        %5948 = vmatmul.bf16.gmra.mxu0 %v5777
        %v5949 = vpop.f32.mrf.mxu0
        %v5950 = vadd.f32 %v5796, %v5949
        %v5951 = vpop.f32.mrf.mxu0
        %5952 = vdwg.mxu0
        %5953 = vmatpush.bf16.msra.mxu0 %v5863
        %5954 = vmatpush.bf16.msra.mxu0 %v5861
        %5955 = vmatpush.bf16.msra.mxu0 %v5859
        %5956 = vmatpush.bf16.msra.mxu0 %v5857
        %5957 = vmatpush.bf16.msra.mxu0 %v5855
        %5958 = vmatpush.bf16.msra.mxu0 %v5853
        %5959 = vmatpush.bf16.msra.mxu0 %v5851
        %5960 = vmatpush.bf16.msra.mxu0 %v5849
        %5961 = vmatmul.bf16.gmra.mxu0 %v5765
        %v5962 = vpop.f32.mrf.mxu0
        %v5963 = vadd.f32 %v5797, %v5962
        %v5964 = vpop.f32.mrf.mxu0
        %v5965 = vadd.f32 %v5797, %v5964
        %5966 = vmatmul.bf16.gmra.mxu0 %v5766
        %v5967 = vpop.f32.mrf.mxu0
        %v5968 = vadd.f32 %v5797, %v5967
        %v5969 = vpop.f32.mrf.mxu0
        %v5970 = vadd.f32 %v5797, %v5969
        %5971 = vmatmul.bf16.gmra.mxu0 %v5767
        %v5972 = vpop.f32.mrf.mxu0
        %v5973 = vadd.f32 %v5797, %v5972
        %v5974 = vpop.f32.mrf.mxu0
        %v5975 = vadd.f32 %v5797, %v5974
        %5976 = vmatmul.bf16.gmra.mxu0 %v5768
        %v5977 = vpop.f32.mrf.mxu0
        %v5978 = vadd.f32 %v5797, %v5977
        %v5979 = vpop.f32.mrf.mxu0
        %v5980 = vadd.f32 %v5797, %v5979
        %5981 = vmatmul.bf16.gmra.mxu0 %v5769
        %v5982 = vpop.f32.mrf.mxu0
        %v5983 = vadd.f32 %v5797, %v5982
        %v5984 = vpop.f32.mrf.mxu0
        %v5985 = vadd.f32 %v5797, %v5984
        %5986 = vmatmul.bf16.gmra.mxu0 %v5770
        %v5987 = vpop.f32.mrf.mxu0
        %v5988 = vadd.f32 %v5797, %v5987
        %v5989 = vpop.f32.mrf.mxu0
        %v5990 = vadd.f32 %v5797, %v5989
        %5991 = vmatmul.bf16.gmra.mxu0 %v5771
        %v5992 = vpop.f32.mrf.mxu0
        %v5993 = vadd.f32 %v5797, %v5992
        %v5994 = vpop.f32.mrf.mxu0
        %v5995 = vadd.f32 %v5797, %v5994
        %5996 = vmatmul.bf16.gmra.mxu0 %v5772
        %v5997 = vpop.f32.mrf.mxu0
        %v5998 = vadd.f32 %v5797, %v5997
        %v5999 = vpop.f32.mrf.mxu0
        %v6000 = vadd.f32 %v5797, %v5999
        %6001 = vmatmul.bf16.gmra.mxu0 %v5773
        %v6002 = vpop.f32.mrf.mxu0
        %v6003 = vadd.f32 %v5797, %v6002
        %v6004 = vpop.f32.mrf.mxu0
        %v6005 = vadd.f32 %v5797, %v6004
        %6006 = vmatmul.bf16.gmra.mxu0 %v5774
        %v6007 = vpop.f32.mrf.mxu0
        %v6008 = vadd.f32 %v5797, %v6007
        %v6009 = vpop.f32.mrf.mxu0
        %v6010 = vadd.f32 %v5797, %v6009
        %6011 = vmatmul.bf16.gmra.mxu0 %v5775
        %v6012 = vpop.f32.mrf.mxu0
        %v6013 = vadd.f32 %v5797, %v6012
        %v6014 = vpop.f32.mrf.mxu0
        %v6015 = vadd.f32 %v5797, %v6014
        %6016 = vmatmul.bf16.gmra.mxu0 %v5776
        %v6017 = vpop.f32.mrf.mxu0
        %v6018 = vadd.f32 %v5797, %v6017
        %v6019 = vpop.f32.mrf.mxu0
        %v6020 = vadd.f32 %v5797, %v6019
        %6021 = vmatmul.bf16.gmra.mxu0 %v5777
        %v6022 = vpop.f32.mrf.mxu0
        %v6023 = vadd.f32 %v5797, %v6022
        %v6024 = vpop.f32.mrf.mxu0
        %6025 = vdwg.mxu0
        %v6026 = vmax.f32 %v5890, 0.0
        %v6027 = vmax.f32 %v5963, 0.0
        %v6028 = vmax.f32 %v5892, 0.0
        %v6029 = vmax.f32 %v5965, 0.0
        %v6030 = vmax.f32 %v5895, 0.0
        %v6031 = vmax.f32 %v5968, 0.0
        %v6032 = vmax.f32 %v5897, 0.0
        %v6033 = vmax.f32 %v5970, 0.0
        %v6034 = vmax.f32 %v5900, 0.0
        %v6035 = vmax.f32 %v5973, 0.0
        %v6036 = vmax.f32 %v5902, 0.0
        %v6037 = vmax.f32 %v5975, 0.0
        %v6038 = vmax.f32 %v5905, 0.0
        %v6039 = vmax.f32 %v5978, 0.0
        %v6040 = vmax.f32 %v5907, 0.0
        %v6041 = vmax.f32 %v5980, 0.0
        %v6042 = vmax.f32 %v5910, 0.0
        %v6043 = vmax.f32 %v5983, 0.0
        %v6044 = vmax.f32 %v5912, 0.0
        %v6045 = vmax.f32 %v5985, 0.0
        %v6046 = vmax.f32 %v5915, 0.0
        %v6047 = vmax.f32 %v5988, 0.0
        %v6048 = vmax.f32 %v5917, 0.0
        %v6049 = vmax.f32 %v5990, 0.0
        %v6050 = vmax.f32 %v5920, 0.0
        %v6051 = vmax.f32 %v5993, 0.0
        %v6052 = vmax.f32 %v5922, 0.0
        %v6053 = vmax.f32 %v5995, 0.0
        %v6054 = vmax.f32 %v5925, 0.0
        %v6055 = vmax.f32 %v5998, 0.0
        %v6056 = vmax.f32 %v5927, 0.0
        %v6057 = vmax.f32 %v6000, 0.0
        %v6058 = vmax.f32 %v5930, 0.0
        %v6059 = vmax.f32 %v6003, 0.0
        %v6060 = vmax.f32 %v5932, 0.0
        %v6061 = vmax.f32 %v6005, 0.0
        %v6062 = vmax.f32 %v5935, 0.0
        %v6063 = vmax.f32 %v6008, 0.0
        %v6064 = vmax.f32 %v5937, 0.0
        %v6065 = vmax.f32 %v6010, 0.0
        %v6066 = vmax.f32 %v5940, 0.0
        %v6067 = vmax.f32 %v6013, 0.0
        %v6068 = vmax.f32 %v5942, 0.0
        %v6069 = vmax.f32 %v6015, 0.0
        %v6070 = vmax.f32 %v5945, 0.0
        %v6071 = vmax.f32 %v6018, 0.0
        %v6072 = vmax.f32 %v5947, 0.0
        %v6073 = vmax.f32 %v6020, 0.0
        %v6074 = vmax.f32 %v5950, 0.0
        %v6075 = vmax.f32 %v6023, 0.0
        %v6076 = vpack.c.bf16 %v4610, %v4608
        %v6077 = vpack.c.bf16 %v4615, %v4613
        %v6078 = vpack.c.bf16 %v4620, %v4618
        %v6079 = vpack.c.bf16 %v4625, %v4623
        %v6080 = vpack.c.bf16 %v4630, %v4628
        %v6081 = vpack.c.bf16 %v4635, %v4633
        %v6082 = vpack.c.bf16 %v4640, %v4638
        %v6083 = vpack.c.bf16 %v4645, %v4643
        %v6084 = vpack.c.bf16 %v4650, %v4648
        %v6085 = vpack.c.bf16 %v4655, %v4653
        %v6086 = vpack.c.bf16 %v4660, %v4658
        %v6087 = vpack.c.bf16 %v4665, %v4663
        %v6088 = vpack.c.bf16 %v4668, %v4668
        %v6089 = vld [vmem:[#allocation10] sm:$0xff]
        %v6090 = vld [vmem:[#allocation10 + $0x8] sm:$0xff]
        %v6091 = vld [vmem:[#allocation10 + $0x10] sm:$0xff]
        %v6092 = vld [vmem:[#allocation10 + $0x18] sm:$0xff]
        %v6093 = vld [vmem:[#allocation10 + $0x20] sm:$0xff]
        %v6094 = vld [vmem:[#allocation10 + $0x28] sm:$0xff]
        %v6095 = vld [vmem:[#allocation10 + $0x30] sm:$0xff]
        %v6096 = vld [vmem:[#allocation10 + $0x38] sm:$0xff]
        %v6097 = vld [vmem:[#allocation11] sm:$0x3]
        %v6099 = vperm.slane %v6097, 0
        %v6100 = vperm.slane %v6097, 1
        %v6111 = vunpack.c.l.b16 %v6089
        %v6112 = vunpack.c.h.b16 %v6089
        %v6113 = vunpack.c.l.b16 %v6090
        %v6114 = vunpack.c.h.b16 %v6090
        %v6115 = vunpack.c.l.b16 %v6091
        %v6116 = vunpack.c.h.b16 %v6091
        %v6117 = vunpack.c.l.b16 %v6092
        %v6118 = vunpack.c.h.b16 %v6092
        %v6119 = vunpack.c.l.b16 %v6093
        %v6120 = vunpack.c.h.b16 %v6093
        %v6121 = vunpack.c.l.b16 %v6094
        %v6122 = vunpack.c.h.b16 %v6094
        %v6123 = vunpack.c.l.b16 %v6095
        %v6124 = vunpack.c.h.b16 %v6095
        %v6125 = vunpack.c.l.b16 %v6096
        %v6126 = vunpack.c.h.b16 %v6096
        %v6127 = vpack.c.b16 %v6113, %v6111
        %v6128 = vpack.c.b16 %v6114, %v6112
        %v6129 = vpack.c.b16 %v6117, %v6115
        %v6130 = vpack.c.b16 %v6118, %v6116
        %v6131 = vpack.c.b16 %v6121, %v6119
        %v6132 = vpack.c.b16 %v6122, %v6120
        %v6133 = vpack.c.b16 %v6125, %v6123
        %v6134 = vpack.c.b16 %v6126, %v6124
        %v6144 = vsel %vm1870, %v6076, 0
        %v6147 = vsel %vm1870, %v6077, 0
        %v6150 = vsel %vm1870, %v6078, 0
        %v6153 = vsel %vm1870, %v6079, 0
        %v6156 = vsel %vm1870, %v6080, 0
        %v6159 = vsel %vm1870, %v6081, 0
        %v6162 = vsel %vm1870, %v6082, 0
        %v6165 = vsel %vm1870, %v6083, 0
        %v6168 = vsel %vm1870, %v6084, 0
        %v6171 = vsel %vm1870, %v6085, 0
        %v6174 = vsel %vm1870, %v6086, 0
        %v6177 = vsel %vm1870, %v6087, 0
        %v6180 = vsel %vm1870, %v6088, 0
        %6182 = vmatpush.bf16.msra.mxu0 0
        %6183 = vmatpush.bf16.msra.mxu0 0
        %6184 = vmatpush.bf16.msra.mxu0 0
        %6185 = vmatpush.bf16.msra.mxu0 0
        %6186 = vmatpush.bf16.msra.mxu0 %v6133
        %6187 = vmatpush.bf16.msra.mxu0 %v6131
        %6188 = vmatpush.bf16.msra.mxu0 %v6129
        %6189 = vmatpush.bf16.msra.mxu0 %v6127
        %6190 = vmatmul.bf16.gmra.mxu0 %v6144
        %v6191 = vpop.f32.mrf.mxu0
        %v6192 = vadd.f32 %v6099, %v6191
        %v6193 = vpop.f32.mrf.mxu0
        %v6194 = vadd.f32 %v6099, %v6193
        %6195 = vmatmul.bf16.gmra.mxu0 %v6147
        %v6196 = vpop.f32.mrf.mxu0
        %v6197 = vadd.f32 %v6099, %v6196
        %v6198 = vpop.f32.mrf.mxu0
        %v6199 = vadd.f32 %v6099, %v6198
        %6200 = vmatmul.bf16.gmra.mxu0 %v6150
        %v6201 = vpop.f32.mrf.mxu0
        %v6202 = vadd.f32 %v6099, %v6201
        %v6203 = vpop.f32.mrf.mxu0
        %v6204 = vadd.f32 %v6099, %v6203
        %6205 = vmatmul.bf16.gmra.mxu0 %v6153
        %v6206 = vpop.f32.mrf.mxu0
        %v6207 = vadd.f32 %v6099, %v6206
        %v6208 = vpop.f32.mrf.mxu0
        %v6209 = vadd.f32 %v6099, %v6208
        %6210 = vmatmul.bf16.gmra.mxu0 %v6156
        %v6211 = vpop.f32.mrf.mxu0
        %v6212 = vadd.f32 %v6099, %v6211
        %v6213 = vpop.f32.mrf.mxu0
        %v6214 = vadd.f32 %v6099, %v6213
        %6215 = vmatmul.bf16.gmra.mxu0 %v6159
        %v6216 = vpop.f32.mrf.mxu0
        %v6217 = vadd.f32 %v6099, %v6216
        %v6218 = vpop.f32.mrf.mxu0
        %v6219 = vadd.f32 %v6099, %v6218
        %6220 = vmatmul.bf16.gmra.mxu0 %v6162
        %v6221 = vpop.f32.mrf.mxu0
        %v6222 = vadd.f32 %v6099, %v6221
        %v6223 = vpop.f32.mrf.mxu0
        %v6224 = vadd.f32 %v6099, %v6223
        %6225 = vmatmul.bf16.gmra.mxu0 %v6165
        %v6226 = vpop.f32.mrf.mxu0
        %v6227 = vadd.f32 %v6099, %v6226
        %v6228 = vpop.f32.mrf.mxu0
        %v6229 = vadd.f32 %v6099, %v6228
        %6230 = vmatmul.bf16.gmra.mxu0 %v6168
        %v6231 = vpop.f32.mrf.mxu0
        %v6232 = vadd.f32 %v6099, %v6231
        %v6233 = vpop.f32.mrf.mxu0
        %v6234 = vadd.f32 %v6099, %v6233
        %6235 = vmatmul.bf16.gmra.mxu0 %v6171
        %v6236 = vpop.f32.mrf.mxu0
        %v6237 = vadd.f32 %v6099, %v6236
        %v6238 = vpop.f32.mrf.mxu0
        %v6239 = vadd.f32 %v6099, %v6238
        %6240 = vmatmul.bf16.gmra.mxu0 %v6174
        %v6241 = vpop.f32.mrf.mxu0
        %v6242 = vadd.f32 %v6099, %v6241
        %v6243 = vpop.f32.mrf.mxu0
        %v6244 = vadd.f32 %v6099, %v6243
        %6245 = vmatmul.bf16.gmra.mxu0 %v6177
        %v6246 = vpop.f32.mrf.mxu0
        %v6247 = vadd.f32 %v6099, %v6246
        %v6248 = vpop.f32.mrf.mxu0
        %v6249 = vadd.f32 %v6099, %v6248
        %6250 = vmatmul.bf16.gmra.mxu0 %v6180
        %v6251 = vpop.f32.mrf.mxu0
        %v6252 = vadd.f32 %v6099, %v6251
        %v6253 = vpop.f32.mrf.mxu0
        %6254 = vdwg.mxu0
        %6255 = vmatpush.bf16.msra.mxu0 0
        %6256 = vmatpush.bf16.msra.mxu0 0
        %6257 = vmatpush.bf16.msra.mxu0 0
        %6258 = vmatpush.bf16.msra.mxu0 0
        %6259 = vmatpush.bf16.msra.mxu0 %v6134
        %6260 = vmatpush.bf16.msra.mxu0 %v6132
        %6261 = vmatpush.bf16.msra.mxu0 %v6130
        %6262 = vmatpush.bf16.msra.mxu0 %v6128
        %6263 = vmatmul.bf16.gmra.mxu0 %v6144
        %v6264 = vpop.f32.mrf.mxu0
        %v6265 = vadd.f32 %v6100, %v6264
        %v6266 = vpop.f32.mrf.mxu0
        %v6267 = vadd.f32 %v6100, %v6266
        %6268 = vmatmul.bf16.gmra.mxu0 %v6147
        %v6269 = vpop.f32.mrf.mxu0
        %v6270 = vadd.f32 %v6100, %v6269
        %v6271 = vpop.f32.mrf.mxu0
        %v6272 = vadd.f32 %v6100, %v6271
        %6273 = vmatmul.bf16.gmra.mxu0 %v6150
        %v6274 = vpop.f32.mrf.mxu0
        %v6275 = vadd.f32 %v6100, %v6274
        %v6276 = vpop.f32.mrf.mxu0
        %v6277 = vadd.f32 %v6100, %v6276
        %6278 = vmatmul.bf16.gmra.mxu0 %v6153
        %v6279 = vpop.f32.mrf.mxu0
        %v6280 = vadd.f32 %v6100, %v6279
        %v6281 = vpop.f32.mrf.mxu0
        %v6282 = vadd.f32 %v6100, %v6281
        %6283 = vmatmul.bf16.gmra.mxu0 %v6156
        %v6284 = vpop.f32.mrf.mxu0
        %v6285 = vadd.f32 %v6100, %v6284
        %v6286 = vpop.f32.mrf.mxu0
        %v6287 = vadd.f32 %v6100, %v6286
        %6288 = vmatmul.bf16.gmra.mxu0 %v6159
        %v6289 = vpop.f32.mrf.mxu0
        %v6290 = vadd.f32 %v6100, %v6289
        %v6291 = vpop.f32.mrf.mxu0
        %v6292 = vadd.f32 %v6100, %v6291
        %6293 = vmatmul.bf16.gmra.mxu0 %v6162
        %v6294 = vpop.f32.mrf.mxu0
        %v6295 = vadd.f32 %v6100, %v6294
        %v6296 = vpop.f32.mrf.mxu0
        %v6297 = vadd.f32 %v6100, %v6296
        %6298 = vmatmul.bf16.gmra.mxu0 %v6165
        %v6299 = vpop.f32.mrf.mxu0
        %v6300 = vadd.f32 %v6100, %v6299
        %v6301 = vpop.f32.mrf.mxu0
        %v6302 = vadd.f32 %v6100, %v6301
        %6303 = vmatmul.bf16.gmra.mxu0 %v6168
        %v6304 = vpop.f32.mrf.mxu0
        %v6305 = vadd.f32 %v6100, %v6304
        %v6306 = vpop.f32.mrf.mxu0
        %v6307 = vadd.f32 %v6100, %v6306
        %6308 = vmatmul.bf16.gmra.mxu0 %v6171
        %v6309 = vpop.f32.mrf.mxu0
        %v6310 = vadd.f32 %v6100, %v6309
        %v6311 = vpop.f32.mrf.mxu0
        %v6312 = vadd.f32 %v6100, %v6311
        %6313 = vmatmul.bf16.gmra.mxu0 %v6174
        %v6314 = vpop.f32.mrf.mxu0
        %v6315 = vadd.f32 %v6100, %v6314
        %v6316 = vpop.f32.mrf.mxu0
        %v6317 = vadd.f32 %v6100, %v6316
        %6318 = vmatmul.bf16.gmra.mxu0 %v6177
        %v6319 = vpop.f32.mrf.mxu0
        %v6320 = vadd.f32 %v6100, %v6319
        %v6321 = vpop.f32.mrf.mxu0
        %v6322 = vadd.f32 %v6100, %v6321
        %6323 = vmatmul.bf16.gmra.mxu0 %v6180
        %v6324 = vpop.f32.mrf.mxu0
        %v6325 = vadd.f32 %v6100, %v6324
        %v6326 = vpop.f32.mrf.mxu0
        %6327 = vdwg.mxu0
        %v6328 = vmax.f32 %v6192, 0.0
        %v6329 = vmax.f32 %v6265, 0.0
        %v6330 = vmax.f32 %v6194, 0.0
        %v6331 = vmax.f32 %v6267, 0.0
        %v6332 = vmax.f32 %v6197, 0.0
        %v6333 = vmax.f32 %v6270, 0.0
        %v6334 = vmax.f32 %v6199, 0.0
        %v6335 = vmax.f32 %v6272, 0.0
        %v6336 = vmax.f32 %v6202, 0.0
        %v6337 = vmax.f32 %v6275, 0.0
        %v6338 = vmax.f32 %v6204, 0.0
        %v6339 = vmax.f32 %v6277, 0.0
        %v6340 = vmax.f32 %v6207, 0.0
        %v6341 = vmax.f32 %v6280, 0.0
        %v6342 = vmax.f32 %v6209, 0.0
        %v6343 = vmax.f32 %v6282, 0.0
        %v6344 = vmax.f32 %v6212, 0.0
        %v6345 = vmax.f32 %v6285, 0.0
        %v6346 = vmax.f32 %v6214, 0.0
        %v6347 = vmax.f32 %v6287, 0.0
        %v6348 = vmax.f32 %v6217, 0.0
        %v6349 = vmax.f32 %v6290, 0.0
        %v6350 = vmax.f32 %v6219, 0.0
        %v6351 = vmax.f32 %v6292, 0.0
        %v6352 = vmax.f32 %v6222, 0.0
        %v6353 = vmax.f32 %v6295, 0.0
        %v6354 = vmax.f32 %v6224, 0.0
        %v6355 = vmax.f32 %v6297, 0.0
        %v6356 = vmax.f32 %v6227, 0.0
        %v6357 = vmax.f32 %v6300, 0.0
        %v6358 = vmax.f32 %v6229, 0.0
        %v6359 = vmax.f32 %v6302, 0.0
        %v6360 = vmax.f32 %v6232, 0.0
        %v6361 = vmax.f32 %v6305, 0.0
        %v6362 = vmax.f32 %v6234, 0.0
        %v6363 = vmax.f32 %v6307, 0.0
        %v6364 = vmax.f32 %v6237, 0.0
        %v6365 = vmax.f32 %v6310, 0.0
        %v6366 = vmax.f32 %v6239, 0.0
        %v6367 = vmax.f32 %v6312, 0.0
        %v6368 = vmax.f32 %v6242, 0.0
        %v6369 = vmax.f32 %v6315, 0.0
        %v6370 = vmax.f32 %v6244, 0.0
        %v6371 = vmax.f32 %v6317, 0.0
        %v6372 = vmax.f32 %v6247, 0.0
        %v6373 = vmax.f32 %v6320, 0.0
        %v6374 = vmax.f32 %v6249, 0.0
        %v6375 = vmax.f32 %v6322, 0.0
        %v6376 = vmax.f32 %v6252, 0.0
        %v6377 = vmax.f32 %v6325, 0.0
        %v6378 = vpack.c.bf16 %v4099, %v4097
        %v6379 = vpack.c.bf16 %v4104, %v4102
        %v6380 = vpack.c.bf16 %v4109, %v4107
        %v6381 = vpack.c.bf16 %v4114, %v4112
        %v6382 = vpack.c.bf16 %v4119, %v4117
        %v6383 = vpack.c.bf16 %v4124, %v4122
        %v6384 = vpack.c.bf16 %v4129, %v4127
        %v6385 = vpack.c.bf16 %v4134, %v4132
        %v6386 = vpack.c.bf16 %v4139, %v4137
        %v6387 = vpack.c.bf16 %v4144, %v4142
        %v6388 = vpack.c.bf16 %v4149, %v4147
        %v6389 = vpack.c.bf16 %v4154, %v4152
        %v6390 = vpack.c.bf16 %v4157, %v4157
        %v6391 = vld [vmem:[#allocation13] sm:$0xff]
        %v6392 = vld [vmem:[#allocation13 + $0x8] sm:$0xff]
        %v6393 = vld [vmem:[#allocation13 + $0x10] sm:$0xff]
        %v6394 = vld [vmem:[#allocation13 + $0x18] sm:$0xff]
        %v6395 = vld [vmem:[#allocation13 + $0x20] sm:$0xff]
        %v6396 = vld [vmem:[#allocation13 + $0x28] sm:$0xff]
        %v6397 = vld [vmem:[#allocation13 + $0x30] sm:$0xff]
        %v6398 = vld [vmem:[#allocation13 + $0x38] sm:$0xff]
        %v6399 = vld [vmem:[#allocation13 + $0x40] sm:$0xff]
        %v6400 = vld [vmem:[#allocation13 + $0x48] sm:$0xff]
        %v6401 = vld [vmem:[#allocation13 + $0x50] sm:$0xff]
        %v6402 = vld [vmem:[#allocation13 + $0x58] sm:$0xff]
        %v6403 = vld [vmem:[#allocation13 + $0x60] sm:$0xff]
        %v6404 = vld [vmem:[#allocation13 + $0x68] sm:$0xff]
        %v6405 = vld [vmem:[#allocation13 + $0x70] sm:$0xff]
        %v6406 = vld [vmem:[#allocation13 + $0x78] sm:$0xff]
        %v6407 = vld [vmem:[#allocation14] sm:$0x3]
        %v6409 = vperm.slane %v6407, 0
        %v6410 = vperm.slane %v6407, 1
        %v6429 = vunpack.c.l.b16 %v6391
        %v6430 = vunpack.c.h.b16 %v6391
        %v6431 = vunpack.c.l.b16 %v6392
        %v6432 = vunpack.c.h.b16 %v6392
        %v6433 = vunpack.c.l.b16 %v6393
        %v6434 = vunpack.c.h.b16 %v6393
        %v6435 = vunpack.c.l.b16 %v6394
        %v6436 = vunpack.c.h.b16 %v6394
        %v6437 = vunpack.c.l.b16 %v6395
        %v6438 = vunpack.c.h.b16 %v6395
        %v6439 = vunpack.c.l.b16 %v6396
        %v6440 = vunpack.c.h.b16 %v6396
        %v6441 = vunpack.c.l.b16 %v6397
        %v6442 = vunpack.c.h.b16 %v6397
        %v6443 = vunpack.c.l.b16 %v6398
        %v6444 = vunpack.c.h.b16 %v6398
        %v6445 = vunpack.c.l.b16 %v6399
        %v6446 = vunpack.c.h.b16 %v6399
        %v6447 = vunpack.c.l.b16 %v6400
        %v6448 = vunpack.c.h.b16 %v6400
        %v6449 = vunpack.c.l.b16 %v6401
        %v6450 = vunpack.c.h.b16 %v6401
        %v6451 = vunpack.c.l.b16 %v6402
        %v6452 = vunpack.c.h.b16 %v6402
        %v6453 = vunpack.c.l.b16 %v6403
        %v6454 = vunpack.c.h.b16 %v6403
        %v6455 = vunpack.c.l.b16 %v6404
        %v6456 = vunpack.c.h.b16 %v6404
        %v6457 = vunpack.c.l.b16 %v6405
        %v6458 = vunpack.c.h.b16 %v6405
        %v6459 = vunpack.c.l.b16 %v6406
        %v6460 = vunpack.c.h.b16 %v6406
        %v6461 = vpack.c.b16 %v6431, %v6429
        %v6462 = vpack.c.b16 %v6432, %v6430
        %v6463 = vpack.c.b16 %v6435, %v6433
        %v6464 = vpack.c.b16 %v6436, %v6434
        %v6465 = vpack.c.b16 %v6439, %v6437
        %v6466 = vpack.c.b16 %v6440, %v6438
        %v6467 = vpack.c.b16 %v6443, %v6441
        %v6468 = vpack.c.b16 %v6444, %v6442
        %v6469 = vpack.c.b16 %v6447, %v6445
        %v6470 = vpack.c.b16 %v6448, %v6446
        %v6471 = vpack.c.b16 %v6451, %v6449
        %v6472 = vpack.c.b16 %v6452, %v6450
        %v6473 = vpack.c.b16 %v6455, %v6453
        %v6474 = vpack.c.b16 %v6456, %v6454
        %v6475 = vpack.c.b16 %v6459, %v6457
        %v6476 = vpack.c.b16 %v6460, %v6458
        %6493 = vmatpush.bf16.msra.mxu0 %v6475
        %6494 = vmatpush.bf16.msra.mxu0 %v6473
        %6495 = vmatpush.bf16.msra.mxu0 %v6471
        %6496 = vmatpush.bf16.msra.mxu0 %v6469
        %6497 = vmatpush.bf16.msra.mxu0 %v6467
        %6498 = vmatpush.bf16.msra.mxu0 %v6465
        %6499 = vmatpush.bf16.msra.mxu0 %v6463
        %6500 = vmatpush.bf16.msra.mxu0 %v6461
        %6501 = vmatmul.bf16.gmra.mxu0 %v6378
        %v6502 = vpop.f32.mrf.mxu0
        %v6503 = vadd.f32 %v6409, %v6502
        %v6504 = vpop.f32.mrf.mxu0
        %v6505 = vadd.f32 %v6409, %v6504
        %6506 = vmatmul.bf16.gmra.mxu0 %v6379
        %v6507 = vpop.f32.mrf.mxu0
        %v6508 = vadd.f32 %v6409, %v6507
        %v6509 = vpop.f32.mrf.mxu0
        %v6510 = vadd.f32 %v6409, %v6509
        %6511 = vmatmul.bf16.gmra.mxu0 %v6380
        %v6512 = vpop.f32.mrf.mxu0
        %v6513 = vadd.f32 %v6409, %v6512
        %v6514 = vpop.f32.mrf.mxu0
        %v6515 = vadd.f32 %v6409, %v6514
        %6516 = vmatmul.bf16.gmra.mxu0 %v6381
        %v6517 = vpop.f32.mrf.mxu0
        %v6518 = vadd.f32 %v6409, %v6517
        %v6519 = vpop.f32.mrf.mxu0
        %v6520 = vadd.f32 %v6409, %v6519
        %6521 = vmatmul.bf16.gmra.mxu0 %v6382
        %v6522 = vpop.f32.mrf.mxu0
        %v6523 = vadd.f32 %v6409, %v6522
        %v6524 = vpop.f32.mrf.mxu0
        %v6525 = vadd.f32 %v6409, %v6524
        %6526 = vmatmul.bf16.gmra.mxu0 %v6383
        %v6527 = vpop.f32.mrf.mxu0
        %v6528 = vadd.f32 %v6409, %v6527
        %v6529 = vpop.f32.mrf.mxu0
        %v6530 = vadd.f32 %v6409, %v6529
        %6531 = vmatmul.bf16.gmra.mxu0 %v6384
        %v6532 = vpop.f32.mrf.mxu0
        %v6533 = vadd.f32 %v6409, %v6532
        %v6534 = vpop.f32.mrf.mxu0
        %v6535 = vadd.f32 %v6409, %v6534
        %6536 = vmatmul.bf16.gmra.mxu0 %v6385
        %v6537 = vpop.f32.mrf.mxu0
        %v6538 = vadd.f32 %v6409, %v6537
        %v6539 = vpop.f32.mrf.mxu0
        %v6540 = vadd.f32 %v6409, %v6539
        %6541 = vmatmul.bf16.gmra.mxu0 %v6386
        %v6542 = vpop.f32.mrf.mxu0
        %v6543 = vadd.f32 %v6409, %v6542
        %v6544 = vpop.f32.mrf.mxu0
        %v6545 = vadd.f32 %v6409, %v6544
        %6546 = vmatmul.bf16.gmra.mxu0 %v6387
        %v6547 = vpop.f32.mrf.mxu0
        %v6548 = vadd.f32 %v6409, %v6547
        %v6549 = vpop.f32.mrf.mxu0
        %v6550 = vadd.f32 %v6409, %v6549
        %6551 = vmatmul.bf16.gmra.mxu0 %v6388
        %v6552 = vpop.f32.mrf.mxu0
        %v6553 = vadd.f32 %v6409, %v6552
        %v6554 = vpop.f32.mrf.mxu0
        %v6555 = vadd.f32 %v6409, %v6554
        %6556 = vmatmul.bf16.gmra.mxu0 %v6389
        %v6557 = vpop.f32.mrf.mxu0
        %v6558 = vadd.f32 %v6409, %v6557
        %v6559 = vpop.f32.mrf.mxu0
        %v6560 = vadd.f32 %v6409, %v6559
        %6561 = vmatmul.bf16.gmra.mxu0 %v6390
        %v6562 = vpop.f32.mrf.mxu0
        %v6563 = vadd.f32 %v6409, %v6562
        %v6564 = vpop.f32.mrf.mxu0
        %6565 = vdwg.mxu0
        %6566 = vmatpush.bf16.msra.mxu0 %v6476
        %6567 = vmatpush.bf16.msra.mxu0 %v6474
        %6568 = vmatpush.bf16.msra.mxu0 %v6472
        %6569 = vmatpush.bf16.msra.mxu0 %v6470
        %6570 = vmatpush.bf16.msra.mxu0 %v6468
        %6571 = vmatpush.bf16.msra.mxu0 %v6466
        %6572 = vmatpush.bf16.msra.mxu0 %v6464
        %6573 = vmatpush.bf16.msra.mxu0 %v6462
        %6574 = vmatmul.bf16.gmra.mxu0 %v6378
        %v6575 = vpop.f32.mrf.mxu0
        %v6576 = vadd.f32 %v6410, %v6575
        %v6577 = vpop.f32.mrf.mxu0
        %v6578 = vadd.f32 %v6410, %v6577
        %6579 = vmatmul.bf16.gmra.mxu0 %v6379
        %v6580 = vpop.f32.mrf.mxu0
        %v6581 = vadd.f32 %v6410, %v6580
        %v6582 = vpop.f32.mrf.mxu0
        %v6583 = vadd.f32 %v6410, %v6582
        %6584 = vmatmul.bf16.gmra.mxu0 %v6380
        %v6585 = vpop.f32.mrf.mxu0
        %v6586 = vadd.f32 %v6410, %v6585
        %v6587 = vpop.f32.mrf.mxu0
        %v6588 = vadd.f32 %v6410, %v6587
        %6589 = vmatmul.bf16.gmra.mxu0 %v6381
        %v6590 = vpop.f32.mrf.mxu0
        %v6591 = vadd.f32 %v6410, %v6590
        %v6592 = vpop.f32.mrf.mxu0
        %v6593 = vadd.f32 %v6410, %v6592
        %6594 = vmatmul.bf16.gmra.mxu0 %v6382
        %v6595 = vpop.f32.mrf.mxu0
        %v6596 = vadd.f32 %v6410, %v6595
        %v6597 = vpop.f32.mrf.mxu0
        %v6598 = vadd.f32 %v6410, %v6597
        %6599 = vmatmul.bf16.gmra.mxu0 %v6383
        %v6600 = vpop.f32.mrf.mxu0
        %v6601 = vadd.f32 %v6410, %v6600
        %v6602 = vpop.f32.mrf.mxu0
        %v6603 = vadd.f32 %v6410, %v6602
        %6604 = vmatmul.bf16.gmra.mxu0 %v6384
        %v6605 = vpop.f32.mrf.mxu0
        %v6606 = vadd.f32 %v6410, %v6605
        %v6607 = vpop.f32.mrf.mxu0
        %v6608 = vadd.f32 %v6410, %v6607
        %6609 = vmatmul.bf16.gmra.mxu0 %v6385
        %v6610 = vpop.f32.mrf.mxu0
        %v6611 = vadd.f32 %v6410, %v6610
        %v6612 = vpop.f32.mrf.mxu0
        %v6613 = vadd.f32 %v6410, %v6612
        %6614 = vmatmul.bf16.gmra.mxu0 %v6386
        %v6615 = vpop.f32.mrf.mxu0
        %v6616 = vadd.f32 %v6410, %v6615
        %v6617 = vpop.f32.mrf.mxu0
        %v6618 = vadd.f32 %v6410, %v6617
        %6619 = vmatmul.bf16.gmra.mxu0 %v6387
        %v6620 = vpop.f32.mrf.mxu0
        %v6621 = vadd.f32 %v6410, %v6620
        %v6622 = vpop.f32.mrf.mxu0
        %v6623 = vadd.f32 %v6410, %v6622
        %6624 = vmatmul.bf16.gmra.mxu0 %v6388
        %v6625 = vpop.f32.mrf.mxu0
        %v6626 = vadd.f32 %v6410, %v6625
        %v6627 = vpop.f32.mrf.mxu0
        %v6628 = vadd.f32 %v6410, %v6627
        %6629 = vmatmul.bf16.gmra.mxu0 %v6389
        %v6630 = vpop.f32.mrf.mxu0
        %v6631 = vadd.f32 %v6410, %v6630
        %v6632 = vpop.f32.mrf.mxu0
        %v6633 = vadd.f32 %v6410, %v6632
        %6634 = vmatmul.bf16.gmra.mxu0 %v6390
        %v6635 = vpop.f32.mrf.mxu0
        %v6636 = vadd.f32 %v6410, %v6635
        %v6637 = vpop.f32.mrf.mxu0
        %6638 = vdwg.mxu0
        %v6639 = vmax.f32 %v6503, 0.0
        %v6640 = vmax.f32 %v6576, 0.0
        %v6641 = vmax.f32 %v6505, 0.0
        %v6642 = vmax.f32 %v6578, 0.0
        %v6643 = vmax.f32 %v6508, 0.0
        %v6644 = vmax.f32 %v6581, 0.0
        %v6645 = vmax.f32 %v6510, 0.0
        %v6646 = vmax.f32 %v6583, 0.0
        %v6647 = vmax.f32 %v6513, 0.0
        %v6648 = vmax.f32 %v6586, 0.0
        %v6649 = vmax.f32 %v6515, 0.0
        %v6650 = vmax.f32 %v6588, 0.0
        %v6651 = vmax.f32 %v6518, 0.0
        %v6652 = vmax.f32 %v6591, 0.0
        %v6653 = vmax.f32 %v6520, 0.0
        %v6654 = vmax.f32 %v6593, 0.0
        %v6655 = vmax.f32 %v6523, 0.0
        %v6656 = vmax.f32 %v6596, 0.0
        %v6657 = vmax.f32 %v6525, 0.0
        %v6658 = vmax.f32 %v6598, 0.0
        %v6659 = vmax.f32 %v6528, 0.0
        %v6660 = vmax.f32 %v6601, 0.0
        %v6661 = vmax.f32 %v6530, 0.0
        %v6662 = vmax.f32 %v6603, 0.0
        %v6663 = vmax.f32 %v6533, 0.0
        %v6664 = vmax.f32 %v6606, 0.0
        %v6665 = vmax.f32 %v6535, 0.0
        %v6666 = vmax.f32 %v6608, 0.0
        %v6667 = vmax.f32 %v6538, 0.0
        %v6668 = vmax.f32 %v6611, 0.0
        %v6669 = vmax.f32 %v6540, 0.0
        %v6670 = vmax.f32 %v6613, 0.0
        %v6671 = vmax.f32 %v6543, 0.0
        %v6672 = vmax.f32 %v6616, 0.0
        %v6673 = vmax.f32 %v6545, 0.0
        %v6674 = vmax.f32 %v6618, 0.0
        %v6675 = vmax.f32 %v6548, 0.0
        %v6676 = vmax.f32 %v6621, 0.0
        %v6677 = vmax.f32 %v6550, 0.0
        %v6678 = vmax.f32 %v6623, 0.0
        %v6679 = vmax.f32 %v6553, 0.0
        %v6680 = vmax.f32 %v6626, 0.0
        %v6681 = vmax.f32 %v6555, 0.0
        %v6682 = vmax.f32 %v6628, 0.0
        %v6683 = vmax.f32 %v6558, 0.0
        %v6684 = vmax.f32 %v6631, 0.0
        %v6685 = vmax.f32 %v6560, 0.0
        %v6686 = vmax.f32 %v6633, 0.0
        %v6687 = vmax.f32 %v6563, 0.0
        %v6688 = vmax.f32 %v6636, 0.0
        %v6689 = vmul.f32 %v6328, 0.52771854
        %v6690 = vmul.f32 %v6329, 0.52771854
        %v6691 = vmul.f32 %v6330, 0.52771854
        %v6692 = vmul.f32 %v6331, 0.52771854
        %v6693 = vmul.f32 %v6332, 0.52771854
        %v6694 = vmul.f32 %v6333, 0.52771854
        %v6695 = vmul.f32 %v6334, 0.52771854
        %v6696 = vmul.f32 %v6335, 0.52771854
        %v6697 = vmul.f32 %v6336, 0.52771854
        %v6698 = vmul.f32 %v6337, 0.52771854
        %v6699 = vmul.f32 %v6338, 0.52771854
        %v6700 = vmul.f32 %v6339, 0.52771854
        %v6701 = vmul.f32 %v6340, 0.52771854
        %v6702 = vmul.f32 %v6341, 0.52771854
        %v6703 = vmul.f32 %v6342, 0.52771854
        %v6704 = vmul.f32 %v6343, 0.52771854
        %v6705 = vmul.f32 %v6344, 0.52771854
        %v6706 = vmul.f32 %v6345, 0.52771854
        %v6707 = vmul.f32 %v6346, 0.52771854
        %v6708 = vmul.f32 %v6347, 0.52771854
        %v6709 = vmul.f32 %v6348, 0.52771854
        %v6710 = vmul.f32 %v6349, 0.52771854
        %v6711 = vmul.f32 %v6350, 0.52771854
        %v6712 = vmul.f32 %v6351, 0.52771854
        %v6713 = vmul.f32 %v6352, 0.52771854
        %v6714 = vmul.f32 %v6353, 0.52771854
        %v6715 = vmul.f32 %v6354, 0.52771854
        %v6716 = vmul.f32 %v6355, 0.52771854
        %v6717 = vmul.f32 %v6356, 0.52771854
        %v6718 = vmul.f32 %v6357, 0.52771854
        %v6719 = vmul.f32 %v6358, 0.52771854
        %v6720 = vmul.f32 %v6359, 0.52771854
        %v6721 = vmul.f32 %v6360, 0.52771854
        %v6722 = vmul.f32 %v6361, 0.52771854
        %v6723 = vmul.f32 %v6362, 0.52771854
        %v6724 = vmul.f32 %v6363, 0.52771854
        %v6725 = vmul.f32 %v6364, 0.52771854
        %v6726 = vmul.f32 %v6365, 0.52771854
        %v6727 = vmul.f32 %v6366, 0.52771854
        %v6728 = vmul.f32 %v6367, 0.52771854
        %v6729 = vmul.f32 %v6368, 0.52771854
        %v6730 = vmul.f32 %v6369, 0.52771854
        %v6731 = vmul.f32 %v6370, 0.52771854
        %v6732 = vmul.f32 %v6371, 0.52771854
        %v6733 = vmul.f32 %v6372, 0.52771854
        %v6734 = vmul.f32 %v6373, 0.52771854
        %v6735 = vmul.f32 %v6374, 0.52771854
        %v6736 = vmul.f32 %v6375, 0.52771854
        %v6737 = vmul.f32 %v6376, 0.52771854
        %v6738 = vmul.f32 %v6377, 0.52771854
        %v6739 = vmul.f32 %v6639, 0.47228146
        %v6740 = vmul.f32 %v6640, 0.47228146
        %v6741 = vmul.f32 %v6641, 0.47228146
        %v6742 = vmul.f32 %v6642, 0.47228146
        %v6743 = vmul.f32 %v6643, 0.47228146
        %v6744 = vmul.f32 %v6644, 0.47228146
        %v6745 = vmul.f32 %v6645, 0.47228146
        %v6746 = vmul.f32 %v6646, 0.47228146
        %v6747 = vmul.f32 %v6647, 0.47228146
        %v6748 = vmul.f32 %v6648, 0.47228146
        %v6749 = vmul.f32 %v6649, 0.47228146
        %v6750 = vmul.f32 %v6650, 0.47228146
        %v6751 = vmul.f32 %v6651, 0.47228146
        %v6752 = vmul.f32 %v6652, 0.47228146
        %v6753 = vmul.f32 %v6653, 0.47228146
        %v6754 = vmul.f32 %v6654, 0.47228146
        %v6755 = vmul.f32 %v6655, 0.47228146
        %v6756 = vmul.f32 %v6656, 0.47228146
        %v6757 = vmul.f32 %v6657, 0.47228146
        %v6758 = vmul.f32 %v6658, 0.47228146
        %v6759 = vmul.f32 %v6659, 0.47228146
        %v6760 = vmul.f32 %v6660, 0.47228146
        %v6761 = vmul.f32 %v6661, 0.47228146
        %v6762 = vmul.f32 %v6662, 0.47228146
        %v6763 = vmul.f32 %v6663, 0.47228146
        %v6764 = vmul.f32 %v6664, 0.47228146
        %v6765 = vmul.f32 %v6665, 0.47228146
        %v6766 = vmul.f32 %v6666, 0.47228146
        %v6767 = vmul.f32 %v6667, 0.47228146
        %v6768 = vmul.f32 %v6668, 0.47228146
        %v6769 = vmul.f32 %v6669, 0.47228146
        %v6770 = vmul.f32 %v6670, 0.47228146
        %v6771 = vmul.f32 %v6671, 0.47228146
        %v6772 = vmul.f32 %v6672, 0.47228146
        %v6773 = vmul.f32 %v6673, 0.47228146
        %v6774 = vmul.f32 %v6674, 0.47228146
        %v6775 = vmul.f32 %v6675, 0.47228146
        %v6776 = vmul.f32 %v6676, 0.47228146
        %v6777 = vmul.f32 %v6677, 0.47228146
        %v6778 = vmul.f32 %v6678, 0.47228146
        %v6779 = vmul.f32 %v6679, 0.47228146
        %v6780 = vmul.f32 %v6680, 0.47228146
        %v6781 = vmul.f32 %v6681, 0.47228146
        %v6782 = vmul.f32 %v6682, 0.47228146
        %v6783 = vmul.f32 %v6683, 0.47228146
        %v6784 = vmul.f32 %v6684, 0.47228146
        %v6785 = vmul.f32 %v6685, 0.47228146
        %v6786 = vmul.f32 %v6686, 0.47228146
        %v6787 = vmul.f32 %v6687, 0.47228146
        %v6788 = vmul.f32 %v6688, 0.47228146
        %v6789 = vadd.f32 %v6689, %v6739
        %v6790 = vadd.f32 %v6690, %v6740
        %v6791 = vadd.f32 %v6691, %v6741
        %v6792 = vadd.f32 %v6692, %v6742
        %v6793 = vadd.f32 %v6693, %v6743
        %v6794 = vadd.f32 %v6694, %v6744
        %v6795 = vadd.f32 %v6695, %v6745
        %v6796 = vadd.f32 %v6696, %v6746
        %v6797 = vadd.f32 %v6697, %v6747
        %v6798 = vadd.f32 %v6698, %v6748
        %v6799 = vadd.f32 %v6699, %v6749
        %v6800 = vadd.f32 %v6700, %v6750
        %v6801 = vadd.f32 %v6701, %v6751
        %v6802 = vadd.f32 %v6702, %v6752
        %v6803 = vadd.f32 %v6703, %v6753
        %v6804 = vadd.f32 %v6704, %v6754
        %v6805 = vadd.f32 %v6705, %v6755
        %v6806 = vadd.f32 %v6706, %v6756
        %v6807 = vadd.f32 %v6707, %v6757
        %v6808 = vadd.f32 %v6708, %v6758
        %v6809 = vadd.f32 %v6709, %v6759
        %v6810 = vadd.f32 %v6710, %v6760
        %v6811 = vadd.f32 %v6711, %v6761
        %v6812 = vadd.f32 %v6712, %v6762
        %v6813 = vadd.f32 %v6713, %v6763
        %v6814 = vadd.f32 %v6714, %v6764
        %v6815 = vadd.f32 %v6715, %v6765
        %v6816 = vadd.f32 %v6716, %v6766
        %v6817 = vadd.f32 %v6717, %v6767
        %v6818 = vadd.f32 %v6718, %v6768
        %v6819 = vadd.f32 %v6719, %v6769
        %v6820 = vadd.f32 %v6720, %v6770
        %v6821 = vadd.f32 %v6721, %v6771
        %v6822 = vadd.f32 %v6722, %v6772
        %v6823 = vadd.f32 %v6723, %v6773
        %v6824 = vadd.f32 %v6724, %v6774
        %v6825 = vadd.f32 %v6725, %v6775
        %v6826 = vadd.f32 %v6726, %v6776
        %v6827 = vadd.f32 %v6727, %v6777
        %v6828 = vadd.f32 %v6728, %v6778
        %v6829 = vadd.f32 %v6729, %v6779
        %v6830 = vadd.f32 %v6730, %v6780
        %v6831 = vadd.f32 %v6731, %v6781
        %v6832 = vadd.f32 %v6732, %v6782
        %v6833 = vadd.f32 %v6733, %v6783
        %v6834 = vadd.f32 %v6734, %v6784
        %v6835 = vadd.f32 %v6735, %v6785
        %v6836 = vadd.f32 %v6736, %v6786
        %v6837 = vadd.f32 %v6737, %v6787
        %v6838 = vadd.f32 %v6738, %v6788
        %v6839 = vmul.f32 %v6789, 0.47142282
        %v6840 = vmul.f32 %v6790, 0.47142282
        %v6841 = vmul.f32 %v6791, 0.47142282
        %v6842 = vmul.f32 %v6792, 0.47142282
        %v6843 = vmul.f32 %v6793, 0.47142282
        %v6844 = vmul.f32 %v6794, 0.47142282
        %v6845 = vmul.f32 %v6795, 0.47142282
        %v6846 = vmul.f32 %v6796, 0.47142282
        %v6847 = vmul.f32 %v6797, 0.47142282
        %v6848 = vmul.f32 %v6798, 0.47142282
        %v6849 = vmul.f32 %v6799, 0.47142282
        %v6850 = vmul.f32 %v6800, 0.47142282
        %v6851 = vmul.f32 %v6801, 0.47142282
        %v6852 = vmul.f32 %v6802, 0.47142282
        %v6853 = vmul.f32 %v6803, 0.47142282
        %v6854 = vmul.f32 %v6804, 0.47142282
        %v6855 = vmul.f32 %v6805, 0.47142282
        %v6856 = vmul.f32 %v6806, 0.47142282
        %v6857 = vmul.f32 %v6807, 0.47142282
        %v6858 = vmul.f32 %v6808, 0.47142282
        %v6859 = vmul.f32 %v6809, 0.47142282
        %v6860 = vmul.f32 %v6810, 0.47142282
        %v6861 = vmul.f32 %v6811, 0.47142282
        %v6862 = vmul.f32 %v6812, 0.47142282
        %v6863 = vmul.f32 %v6813, 0.47142282
        %v6864 = vmul.f32 %v6814, 0.47142282
        %v6865 = vmul.f32 %v6815, 0.47142282
        %v6866 = vmul.f32 %v6816, 0.47142282
        %v6867 = vmul.f32 %v6817, 0.47142282
        %v6868 = vmul.f32 %v6818, 0.47142282
        %v6869 = vmul.f32 %v6819, 0.47142282
        %v6870 = vmul.f32 %v6820, 0.47142282
        %v6871 = vmul.f32 %v6821, 0.47142282
        %v6872 = vmul.f32 %v6822, 0.47142282
        %v6873 = vmul.f32 %v6823, 0.47142282
        %v6874 = vmul.f32 %v6824, 0.47142282
        %v6875 = vmul.f32 %v6825, 0.47142282
        %v6876 = vmul.f32 %v6826, 0.47142282
        %v6877 = vmul.f32 %v6827, 0.47142282
        %v6878 = vmul.f32 %v6828, 0.47142282
        %v6879 = vmul.f32 %v6829, 0.47142282
        %v6880 = vmul.f32 %v6830, 0.47142282
        %v6881 = vmul.f32 %v6831, 0.47142282
        %v6882 = vmul.f32 %v6832, 0.47142282
        %v6883 = vmul.f32 %v6833, 0.47142282
        %v6884 = vmul.f32 %v6834, 0.47142282
        %v6885 = vmul.f32 %v6835, 0.47142282
        %v6886 = vmul.f32 %v6836, 0.47142282
        %v6887 = vmul.f32 %v6837, 0.47142282
        %v6888 = vmul.f32 %v6838, 0.47142282
        %v6889 = vmul.f32 %v6026, 0.52857715
        %v6890 = vmul.f32 %v6027, 0.52857715
        %v6891 = vmul.f32 %v6028, 0.52857715
        %v6892 = vmul.f32 %v6029, 0.52857715
        %v6893 = vmul.f32 %v6030, 0.52857715
        %v6894 = vmul.f32 %v6031, 0.52857715
        %v6895 = vmul.f32 %v6032, 0.52857715
        %v6896 = vmul.f32 %v6033, 0.52857715
        %v6897 = vmul.f32 %v6034, 0.52857715
        %v6898 = vmul.f32 %v6035, 0.52857715
        %v6899 = vmul.f32 %v6036, 0.52857715
        %v6900 = vmul.f32 %v6037, 0.52857715
        %v6901 = vmul.f32 %v6038, 0.52857715
        %v6902 = vmul.f32 %v6039, 0.52857715
        %v6903 = vmul.f32 %v6040, 0.52857715
        %v6904 = vmul.f32 %v6041, 0.52857715
        %v6905 = vmul.f32 %v6042, 0.52857715
        %v6906 = vmul.f32 %v6043, 0.52857715
        %v6907 = vmul.f32 %v6044, 0.52857715
        %v6908 = vmul.f32 %v6045, 0.52857715
        %v6909 = vmul.f32 %v6046, 0.52857715
        %v6910 = vmul.f32 %v6047, 0.52857715
        %v6911 = vmul.f32 %v6048, 0.52857715
        %v6912 = vmul.f32 %v6049, 0.52857715
        %v6913 = vmul.f32 %v6050, 0.52857715
        %v6914 = vmul.f32 %v6051, 0.52857715
        %v6915 = vmul.f32 %v6052, 0.52857715
        %v6916 = vmul.f32 %v6053, 0.52857715
        %v6917 = vmul.f32 %v6054, 0.52857715
        %v6918 = vmul.f32 %v6055, 0.52857715
        %v6919 = vmul.f32 %v6056, 0.52857715
        %v6920 = vmul.f32 %v6057, 0.52857715
        %v6921 = vmul.f32 %v6058, 0.52857715
        %v6922 = vmul.f32 %v6059, 0.52857715
        %v6923 = vmul.f32 %v6060, 0.52857715
        %v6924 = vmul.f32 %v6061, 0.52857715
        %v6925 = vmul.f32 %v6062, 0.52857715
        %v6926 = vmul.f32 %v6063, 0.52857715
        %v6927 = vmul.f32 %v6064, 0.52857715
        %v6928 = vmul.f32 %v6065, 0.52857715
        %v6929 = vmul.f32 %v6066, 0.52857715
        %v6930 = vmul.f32 %v6067, 0.52857715
        %v6931 = vmul.f32 %v6068, 0.52857715
        %v6932 = vmul.f32 %v6069, 0.52857715
        %v6933 = vmul.f32 %v6070, 0.52857715
        %v6934 = vmul.f32 %v6071, 0.52857715
        %v6935 = vmul.f32 %v6072, 0.52857715
        %v6936 = vmul.f32 %v6073, 0.52857715
        %v6937 = vmul.f32 %v6074, 0.52857715
        %v6938 = vmul.f32 %v6075, 0.52857715
        %v6939 = vadd.f32 %v6839, %v6889
        %v6940 = vadd.f32 %v6840, %v6890
        %v6941 = vadd.f32 %v6841, %v6891
        %v6942 = vadd.f32 %v6842, %v6892
        %v6943 = vadd.f32 %v6843, %v6893
        %v6944 = vadd.f32 %v6844, %v6894
        %v6945 = vadd.f32 %v6845, %v6895
        %v6946 = vadd.f32 %v6846, %v6896
        %v6947 = vadd.f32 %v6847, %v6897
        %v6948 = vadd.f32 %v6848, %v6898
        %v6949 = vadd.f32 %v6849, %v6899
        %v6950 = vadd.f32 %v6850, %v6900
        %v6951 = vadd.f32 %v6851, %v6901
        %v6952 = vadd.f32 %v6852, %v6902
        %v6953 = vadd.f32 %v6853, %v6903
        %v6954 = vadd.f32 %v6854, %v6904
        %v6955 = vadd.f32 %v6855, %v6905
        %v6956 = vadd.f32 %v6856, %v6906
        %v6957 = vadd.f32 %v6857, %v6907
        %v6958 = vadd.f32 %v6858, %v6908
        %v6959 = vadd.f32 %v6859, %v6909
        %v6960 = vadd.f32 %v6860, %v6910
        %v6961 = vadd.f32 %v6861, %v6911
        %v6962 = vadd.f32 %v6862, %v6912
        %v6963 = vadd.f32 %v6863, %v6913
        %v6964 = vadd.f32 %v6864, %v6914
        %v6965 = vadd.f32 %v6865, %v6915
        %v6966 = vadd.f32 %v6866, %v6916
        %v6967 = vadd.f32 %v6867, %v6917
        %v6968 = vadd.f32 %v6868, %v6918
        %v6969 = vadd.f32 %v6869, %v6919
        %v6970 = vadd.f32 %v6870, %v6920
        %v6971 = vadd.f32 %v6871, %v6921
        %v6972 = vadd.f32 %v6872, %v6922
        %v6973 = vadd.f32 %v6873, %v6923
        %v6974 = vadd.f32 %v6874, %v6924
        %v6975 = vadd.f32 %v6875, %v6925
        %v6976 = vadd.f32 %v6876, %v6926
        %v6977 = vadd.f32 %v6877, %v6927
        %v6978 = vadd.f32 %v6878, %v6928
        %v6979 = vadd.f32 %v6879, %v6929
        %v6980 = vadd.f32 %v6880, %v6930
        %v6981 = vadd.f32 %v6881, %v6931
        %v6982 = vadd.f32 %v6882, %v6932
        %v6983 = vadd.f32 %v6883, %v6933
        %v6984 = vadd.f32 %v6884, %v6934
        %v6985 = vadd.f32 %v6885, %v6935
        %v6986 = vadd.f32 %v6886, %v6936
        %v6987 = vadd.f32 %v6887, %v6937
        %v6988 = vadd.f32 %v6888, %v6938
        %v6989 = vld [vmem:[%s21] sm:$0xff]
        %v6990 = vld [vmem:[%s21 + $0x8] sm:$0xff]
        %v6991 = vld [vmem:[%s21 + $0x10] sm:$0xff]
        %v6992 = vld [vmem:[%s21 + $0x18] sm:$0xff]
        %v6993 = vld [vmem:[%s21 + $0x20] sm:$0xff]
        %v6994 = vld [vmem:[%s21 + $0x28] sm:$0xff]
        %v6995 = vld [vmem:[%s21 + $0x30] sm:$0xff]
        %v6996 = vld [vmem:[%s21 + $0x38] sm:$0xff]
        %v6997 = vld [vmem:[%s21 + $0x40] sm:$0xff]
        %v6998 = vld [vmem:[%s21 + $0x48] sm:$0xff]
        %v6999 = vld [vmem:[%s21 + $0x50] sm:$0xff]
        %v7000 = vld [vmem:[%s21 + $0x58] sm:$0xff]
        %v7001 = vld [vmem:[%s21 + $0x60] sm:$0x11]
        %v7002 = vpack.c.bf16 %v6941, %v6939
        %v7003 = vpack.c.bf16 %v6942, %v6940
        %v7004 = vpack.c.bf16 %v6945, %v6943
        %v7005 = vpack.c.bf16 %v6946, %v6944
        %v7006 = vpack.c.bf16 %v6949, %v6947
        %v7007 = vpack.c.bf16 %v6950, %v6948
        %v7008 = vpack.c.bf16 %v6953, %v6951
        %v7009 = vpack.c.bf16 %v6954, %v6952
        %v7010 = vpack.c.bf16 %v6957, %v6955
        %v7011 = vpack.c.bf16 %v6958, %v6956
        %v7012 = vpack.c.bf16 %v6961, %v6959
        %v7013 = vpack.c.bf16 %v6962, %v6960
        %v7014 = vpack.c.bf16 %v6965, %v6963
        %v7015 = vpack.c.bf16 %v6966, %v6964
        %v7016 = vpack.c.bf16 %v6969, %v6967
        %v7017 = vpack.c.bf16 %v6970, %v6968
        %v7018 = vpack.c.bf16 %v6973, %v6971
        %v7019 = vpack.c.bf16 %v6974, %v6972
        %v7020 = vpack.c.bf16 %v6977, %v6975
        %v7021 = vpack.c.bf16 %v6978, %v6976
        %v7022 = vpack.c.bf16 %v6981, %v6979
        %v7023 = vpack.c.bf16 %v6982, %v6980
        %v7024 = vpack.c.bf16 %v6985, %v6983
        %v7025 = vpack.c.bf16 %v6986, %v6984
        %v7026 = vpack.c.bf16 %v6987, %v6987
        %v7027 = vpack.c.bf16 %v6988, %v6988
        %v7041 = vunpack.c.l.b16 %v6989
        %v7042 = vunpack.c.h.b16 %v6989
        %v7043 = vunpack.c.l.b16 %v6990
        %v7044 = vunpack.c.h.b16 %v6990
        %v7045 = vunpack.c.l.b16 %v6991
        %v7046 = vunpack.c.h.b16 %v6991
        %v7047 = vunpack.c.l.b16 %v6992
        %v7048 = vunpack.c.h.b16 %v6992
        %v7049 = vunpack.c.l.b16 %v6993
        %v7050 = vunpack.c.h.b16 %v6993
        %v7051 = vunpack.c.l.b16 %v6994
        %v7052 = vunpack.c.h.b16 %v6994
        %v7053 = vunpack.c.l.b16 %v6995
        %v7054 = vunpack.c.h.b16 %v6995
        %v7055 = vunpack.c.l.b16 %v6996
        %v7056 = vunpack.c.h.b16 %v6996
        %v7057 = vunpack.c.l.b16 %v6997
        %v7058 = vunpack.c.h.b16 %v6997
        %v7059 = vunpack.c.l.b16 %v6998
        %v7060 = vunpack.c.h.b16 %v6998
        %v7061 = vunpack.c.l.b16 %v6999
        %v7062 = vunpack.c.h.b16 %v6999
        %v7063 = vunpack.c.l.b16 %v7000
        %v7064 = vunpack.c.h.b16 %v7000
        %v7065 = vunpack.c.l.b16 %v7001
        %v7066 = vunpack.c.h.b16 %v7001
        %v7067 = vpack.c.b16 %v7043, %v7041
        %v7068 = vpack.c.b16 %v7044, %v7042
        %v7069 = vpack.c.b16 %v7047, %v7045
        %v7070 = vpack.c.b16 %v7048, %v7046
        %v7071 = vpack.c.b16 %v7051, %v7049
        %v7072 = vpack.c.b16 %v7052, %v7050
        %v7073 = vpack.c.b16 %v7055, %v7053
        %v7074 = vpack.c.b16 %v7056, %v7054
        %v7075 = vpack.c.b16 %v7059, %v7057
        %v7076 = vpack.c.b16 %v7060, %v7058
        %v7077 = vpack.c.b16 %v7063, %v7061
        %v7078 = vpack.c.b16 %v7064, %v7062
        %v7079 = vpack.c.b16 %v7065, %v7065
        %v7080 = vpack.c.b16 %v7066, %v7066
        %vm7088 = vcmask 556032
        %v7090 = vsel %vm7088, %v7068, 0
        %v7093 = vsel %vm7088, %v7070, 0
        %v7096 = vsel %vm7088, %v7072, 0
        %v7099 = vsel %vm7088, %v7074, 0
        %v7102 = vsel %vm7088, %v7076, 0
        %v7105 = vsel %vm7088, %v7078, 0
        %v7108 = vsel %vm7088, %v7080, 0
        %vm7110 = vcmask 1041408
        %v7112 = vsel %vm7110, %v7026, 0
        %v7115 = vsel %vm7110, %v7027, 0
        %7117 = vmatpush.bf16.msra.mxu0 %v7016
        %7118 = vmatpush.bf16.msra.mxu0 %v7014
        %7119 = vmatpush.bf16.msra.mxu0 %v7012
        %7120 = vmatpush.bf16.msra.mxu0 %v7010
        %7121 = vmatpush.bf16.msra.mxu0 %v7008
        %7122 = vmatpush.bf16.msra.mxu0 %v7006
        %7123 = vmatpush.bf16.msra.mxu0 %v7004
        %7124 = vmatpush.bf16.msra.mxu0 %v7002
        %7125 = vmatmul.bf16.gmra.mxu0 %v7067
        %v7126 = vpop.f32.mrf.mxu0
        %v7127 = vadd.f32 0.0, %v7126
        %v7128 = vpop.f32.mrf.mxu0
        %v7129 = vadd.f32 0.0, %v7128
        %7130 = vmatmul.bf16.gmra.mxu0 %v7069
        %v7131 = vpop.f32.mrf.mxu0
        %v7132 = vadd.f32 0.0, %v7131
        %v7133 = vpop.f32.mrf.mxu0
        %v7134 = vadd.f32 0.0, %v7133
        %7135 = vmatmul.bf16.gmra.mxu0 %v7071
        %v7136 = vpop.f32.mrf.mxu0
        %v7137 = vadd.f32 0.0, %v7136
        %v7138 = vpop.f32.mrf.mxu0
        %v7139 = vadd.f32 0.0, %v7138
        %7140 = vmatmul.bf16.gmra.mxu0 %v7073
        %v7141 = vpop.f32.mrf.mxu0
        %v7142 = vadd.f32 0.0, %v7141
        %v7143 = vpop.f32.mrf.mxu0
        %v7144 = vadd.f32 0.0, %v7143
        %7145 = vmatmul.bf16.gmra.mxu0 %v7075
        %v7146 = vpop.f32.mrf.mxu0
        %v7147 = vadd.f32 0.0, %v7146
        %v7148 = vpop.f32.mrf.mxu0
        %v7149 = vadd.f32 0.0, %v7148
        %7150 = vmatmul.bf16.gmra.mxu0 %v7077
        %v7151 = vpop.f32.mrf.mxu0
        %v7152 = vadd.f32 0.0, %v7151
        %v7153 = vpop.f32.mrf.mxu0
        %v7154 = vadd.f32 0.0, %v7153
        %7155 = vmatmul.bf16.gmra.mxu0 %v7079
        %v7156 = vpop.f32.mrf.mxu0
        %v7157 = vadd.f32 0.0, %v7156
        %v7158 = vpop.f32.mrf.mxu0
        %7159 = vdwg.mxu0
        %7160 = vmatpush.bf16.msra.mxu0 0
        %7161 = vmatpush.bf16.msra.mxu0 0
        %7162 = vmatpush.bf16.msra.mxu0 0
        %7163 = vmatpush.bf16.msra.mxu0 %v7112
        %7164 = vmatpush.bf16.msra.mxu0 %v7024
        %7165 = vmatpush.bf16.msra.mxu0 %v7022
        %7166 = vmatpush.bf16.msra.mxu0 %v7020
        %7167 = vmatpush.bf16.msra.mxu0 %v7018
        %7168 = vmatmul.bf16.gmra.mxu0 %v7090
        %v7169 = vpop.f32.mrf.mxu0
        %v7170 = vadd.f32 %v7127, %v7169
        %v7171 = vpop.f32.mrf.mxu0
        %v7172 = vadd.f32 %v7129, %v7171
        %7173 = vmatmul.bf16.gmra.mxu0 %v7093
        %v7174 = vpop.f32.mrf.mxu0
        %v7175 = vadd.f32 %v7132, %v7174
        %v7176 = vpop.f32.mrf.mxu0
        %v7177 = vadd.f32 %v7134, %v7176
        %7178 = vmatmul.bf16.gmra.mxu0 %v7096
        %v7179 = vpop.f32.mrf.mxu0
        %v7180 = vadd.f32 %v7137, %v7179
        %v7181 = vpop.f32.mrf.mxu0
        %v7182 = vadd.f32 %v7139, %v7181
        %7183 = vmatmul.bf16.gmra.mxu0 %v7099
        %v7184 = vpop.f32.mrf.mxu0
        %v7185 = vadd.f32 %v7142, %v7184
        %v7186 = vpop.f32.mrf.mxu0
        %v7187 = vadd.f32 %v7144, %v7186
        %7188 = vmatmul.bf16.gmra.mxu0 %v7102
        %v7189 = vpop.f32.mrf.mxu0
        %v7190 = vadd.f32 %v7147, %v7189
        %v7191 = vpop.f32.mrf.mxu0
        %v7192 = vadd.f32 %v7149, %v7191
        %7193 = vmatmul.bf16.gmra.mxu0 %v7105
        %v7194 = vpop.f32.mrf.mxu0
        %v7195 = vadd.f32 %v7152, %v7194
        %v7196 = vpop.f32.mrf.mxu0
        %v7197 = vadd.f32 %v7154, %v7196
        %7198 = vmatmul.bf16.gmra.mxu0 %v7108
        %v7199 = vpop.f32.mrf.mxu0
        %v7200 = vadd.f32 %v7157, %v7199
        %v7201 = vpop.f32.mrf.mxu0
        %7202 = vdwg.mxu0
        %7203 = vmatpush.bf16.msra.mxu0 %v7017
        %7204 = vmatpush.bf16.msra.mxu0 %v7015
        %7205 = vmatpush.bf16.msra.mxu0 %v7013
        %7206 = vmatpush.bf16.msra.mxu0 %v7011
        %7207 = vmatpush.bf16.msra.mxu0 %v7009
        %7208 = vmatpush.bf16.msra.mxu0 %v7007
        %7209 = vmatpush.bf16.msra.mxu0 %v7005
        %7210 = vmatpush.bf16.msra.mxu0 %v7003
        %7211 = vmatmul.bf16.gmra.mxu0 %v7067
        %v7212 = vpop.f32.mrf.mxu0
        %v7213 = vadd.f32 0.0, %v7212
        %v7214 = vpop.f32.mrf.mxu0
        %v7215 = vadd.f32 0.0, %v7214
        %7216 = vmatmul.bf16.gmra.mxu0 %v7069
        %v7217 = vpop.f32.mrf.mxu0
        %v7218 = vadd.f32 0.0, %v7217
        %v7219 = vpop.f32.mrf.mxu0
        %v7220 = vadd.f32 0.0, %v7219
        %7221 = vmatmul.bf16.gmra.mxu0 %v7071
        %v7222 = vpop.f32.mrf.mxu0
        %v7223 = vadd.f32 0.0, %v7222
        %v7224 = vpop.f32.mrf.mxu0
        %v7225 = vadd.f32 0.0, %v7224
        %7226 = vmatmul.bf16.gmra.mxu0 %v7073
        %v7227 = vpop.f32.mrf.mxu0
        %v7228 = vadd.f32 0.0, %v7227
        %v7229 = vpop.f32.mrf.mxu0
        %v7230 = vadd.f32 0.0, %v7229
        %7231 = vmatmul.bf16.gmra.mxu0 %v7075
        %v7232 = vpop.f32.mrf.mxu0
        %v7233 = vadd.f32 0.0, %v7232
        %v7234 = vpop.f32.mrf.mxu0
        %v7235 = vadd.f32 0.0, %v7234
        %7236 = vmatmul.bf16.gmra.mxu0 %v7077
        %v7237 = vpop.f32.mrf.mxu0
        %v7238 = vadd.f32 0.0, %v7237
        %v7239 = vpop.f32.mrf.mxu0
        %v7240 = vadd.f32 0.0, %v7239
        %7241 = vmatmul.bf16.gmra.mxu0 %v7079
        %v7242 = vpop.f32.mrf.mxu0
        %v7243 = vadd.f32 0.0, %v7242
        %v7244 = vpop.f32.mrf.mxu0
        %7245 = vdwg.mxu0
        %7246 = vmatpush.bf16.msra.mxu0 0
        %7247 = vmatpush.bf16.msra.mxu0 0
        %7248 = vmatpush.bf16.msra.mxu0 0
        %7249 = vmatpush.bf16.msra.mxu0 %v7115
        %7250 = vmatpush.bf16.msra.mxu0 %v7025
        %7251 = vmatpush.bf16.msra.mxu0 %v7023
        %7252 = vmatpush.bf16.msra.mxu0 %v7021
        %7253 = vmatpush.bf16.msra.mxu0 %v7019
        %7254 = vmatmul.bf16.gmra.mxu0 %v7090
        %v7255 = vpop.f32.mrf.mxu0
        %v7256 = vadd.f32 %v7213, %v7255
        %v7257 = vpop.f32.mrf.mxu0
        %v7258 = vadd.f32 %v7215, %v7257
        %7259 = vmatmul.bf16.gmra.mxu0 %v7093
        %v7260 = vpop.f32.mrf.mxu0
        %v7261 = vadd.f32 %v7218, %v7260
        %v7262 = vpop.f32.mrf.mxu0
        %v7263 = vadd.f32 %v7220, %v7262
        %7264 = vmatmul.bf16.gmra.mxu0 %v7096
        %v7265 = vpop.f32.mrf.mxu0
        %v7266 = vadd.f32 %v7223, %v7265
        %v7267 = vpop.f32.mrf.mxu0
        %v7268 = vadd.f32 %v7225, %v7267
        %7269 = vmatmul.bf16.gmra.mxu0 %v7099
        %v7270 = vpop.f32.mrf.mxu0
        %v7271 = vadd.f32 %v7228, %v7270
        %v7272 = vpop.f32.mrf.mxu0
        %v7273 = vadd.f32 %v7230, %v7272
        %7274 = vmatmul.bf16.gmra.mxu0 %v7102
        %v7275 = vpop.f32.mrf.mxu0
        %v7276 = vadd.f32 %v7233, %v7275
        %v7277 = vpop.f32.mrf.mxu0
        %v7278 = vadd.f32 %v7235, %v7277
        %7279 = vmatmul.bf16.gmra.mxu0 %v7105
        %v7280 = vpop.f32.mrf.mxu0
        %v7281 = vadd.f32 %v7238, %v7280
        %v7282 = vpop.f32.mrf.mxu0
        %v7283 = vadd.f32 %v7240, %v7282
        %7284 = vmatmul.bf16.gmra.mxu0 %v7108
        %v7285 = vpop.f32.mrf.mxu0
        %v7286 = vadd.f32 %v7243, %v7285
        %v7287 = vpop.f32.mrf.mxu0
        %7288 = vdwg.mxu0
        %v7289 = vpack.c.bf16 %v7172, %v7170
        %v7290 = vpack.c.bf16 %v7258, %v7256
        %v7291 = vpack.c.bf16 %v7177, %v7175
        %v7292 = vpack.c.bf16 %v7263, %v7261
        %v7293 = vpack.c.bf16 %v7182, %v7180
        %v7294 = vpack.c.bf16 %v7268, %v7266
        %v7295 = vpack.c.bf16 %v7185, %v7185
        %v7296 = vpack.c.bf16 %v7271, %v7271
        %v7297 = vld [vmem:[%s11] sm:$0xff]
        %v7298 = vld [vmem:[%s11 + $0x8] sm:$0xff]
        %v7299 = vld [vmem:[%s11 + $0x10] sm:$0xff]
        %v7300 = vld [vmem:[%s11 + $0x18] sm:$0xff]
        %v7301 = vld [vmem:[%s11 + $0x20] sm:$0xff]
        %v7302 = vld [vmem:[%s11 + $0x28] sm:$0xff]
        %v7303 = vld [vmem:[%s11 + $0x30] sm:$0xff]
        %v7304 = vld [vmem:[%s11 + $0x38] sm:$0xff]
        %v7305 = vld [vmem:[%s11 + $0x40] sm:$0xff]
        %v7306 = vld [vmem:[%s11 + $0x48] sm:$0xff]
        %v7307 = vld [vmem:[%s11 + $0x50] sm:$0xff]
        %v7308 = vld [vmem:[%s11 + $0x58] sm:$0xff]
        %v7309 = vld [vmem:[%s11 + $0x60] sm:$0xff]
        %v7310 = vld [vmem:[%s11 + $0x68] sm:$0xff]
        %v7311 = vld [vmem:[%s11 + $0x70] sm:$0xff]
        %v7312 = vld [vmem:[%s11 + $0x78] sm:$0xff]
        %v7313 = vld [vmem:[%s11 + $0x80] sm:$0xff]
        %v7314 = vld [vmem:[%s11 + $0x88] sm:$0xff]
        %v7315 = vld [vmem:[%s11 + $0x90] sm:$0xff]
        %v7316 = vld [vmem:[%s11 + $0x98] sm:$0xff]
        %v7317 = vld [vmem:[%s11 + $0xa0] sm:$0xff]
        %v7318 = vld [vmem:[%s11 + $0xa8] sm:$0xff]
        %v7319 = vld [vmem:[%s11 + $0xb0] sm:$0xff]
        %v7320 = vld [vmem:[%s11 + $0xb8] sm:$0xff]
        %v7321 = vld [vmem:[%s11 + $0xc0] sm:$0xff]
        %v7322 = vld [vmem:[%s11 + $0xc8] sm:$0xff]
        %v7323 = vld [vmem:[%s11 + $0xd0] sm:$0xff]
        %v7324 = vld [vmem:[%s11 + $0xd8] sm:$0xff]
        %v7325 = vld [vmem:[%s11 + $0xe0] sm:$0xff]
        %v7326 = vld [vmem:[%s11 + $0xe8] sm:$0xff]
        %v7327 = vld [vmem:[%s11 + $0xf0] sm:$0xff]
        %v7328 = vld [vmem:[%s11 + $0xf8] sm:$0xff]
        %v7329 = vld [vmem:[%s11 + $0x100] sm:$0xff]
        %v7330 = vld [vmem:[%s11 + $0x108] sm:$0xff]
        %v7331 = vld [vmem:[%s11 + $0x110] sm:$0xff]
        %v7332 = vld [vmem:[%s11 + $0x118] sm:$0xff]
        %v7333 = vld [vmem:[%s11 + $0x120] sm:$0xff]
        %v7334 = vld [vmem:[%s11 + $0x128] sm:$0xff]
        %v7335 = vld [vmem:[%s11 + $0x130] sm:$0xff]
        %v7336 = vld [vmem:[%s11 + $0x138] sm:$0xff]
        %v7337 = vld [vmem:[%s11 + $0x140] sm:$0xff]
        %v7338 = vld [vmem:[%s11 + $0x148] sm:$0xff]
        %v7339 = vld [vmem:[%s11 + $0x150] sm:$0xff]
        %v7340 = vld [vmem:[%s11 + $0x158] sm:$0xff]
        %v7341 = vld [vmem:[%s11 + $0x160] sm:$0xff]
        %v7342 = vld [vmem:[%s11 + $0x168] sm:$0xff]
        %v7343 = vld [vmem:[%s11 + $0x170] sm:$0xff]
        %v7344 = vld [vmem:[%s11 + $0x178] sm:$0xff]
        %v7345 = vld [vmem:[%s11 + $0x180] sm:$0xff]
        %v7346 = vld [vmem:[%s11 + $0x188] sm:$0xff]
        %v7347 = vld [vmem:[%s11 + $0x190] sm:$0xff]
        %v7348 = vld [vmem:[%s11 + $0x198] sm:$0xff]
        %v7349 = vld [vmem:[%s11 + $0x1a0] sm:$0xff]
        %v7350 = vld [vmem:[%s11 + $0x1a8] sm:$0xff]
        %v7351 = vld [vmem:[%s11 + $0x1b0] sm:$0xff]
        %v7352 = vld [vmem:[%s11 + $0x1b8] sm:$0xff]
        %v7353 = vld [vmem:[%s11 + $0x1c0] sm:$0xff]
        %v7354 = vld [vmem:[%s11 + $0x1c8] sm:$0xff]
        %v7355 = vld [vmem:[%s11 + $0x1d0] sm:$0xff]
        %v7356 = vld [vmem:[%s11 + $0x1d8] sm:$0xff]
        %v7357 = vld [vmem:[%s11 + $0x1e0] sm:$0xff]
        %v7358 = vld [vmem:[%s11 + $0x1e8] sm:$0xff]
        %v7359 = vld [vmem:[%s11 + $0x1f0] sm:$0xff]
        %v7360 = vld [vmem:[%s11 + $0x1f8] sm:$0xff]
        %v7361 = vld [vmem:[#allocation16] sm:$0xf]
        %v7363 = vperm.slane %v7361, 0
        %v7364 = vperm.slane %v7361, 1
        %v7365 = vperm.slane %v7361, 2
        %v7366 = vperm.slane %v7361, 3
        %v7435 = vunpack.c.l.b16 %v7297
        %v7436 = vunpack.c.h.b16 %v7297
        %v7437 = vunpack.c.l.b16 %v7298
        %v7438 = vunpack.c.h.b16 %v7298
        %v7439 = vunpack.c.l.b16 %v7299
        %v7440 = vunpack.c.h.b16 %v7299
        %v7441 = vunpack.c.l.b16 %v7300
        %v7442 = vunpack.c.h.b16 %v7300
        %v7443 = vunpack.c.l.b16 %v7301
        %v7444 = vunpack.c.h.b16 %v7301
        %v7445 = vunpack.c.l.b16 %v7302
        %v7446 = vunpack.c.h.b16 %v7302
        %v7447 = vunpack.c.l.b16 %v7303
        %v7448 = vunpack.c.h.b16 %v7303
        %v7449 = vunpack.c.l.b16 %v7304
        %v7450 = vunpack.c.h.b16 %v7304
        %v7451 = vunpack.c.l.b16 %v7305
        %v7452 = vunpack.c.h.b16 %v7305
        %v7453 = vunpack.c.l.b16 %v7306
        %v7454 = vunpack.c.h.b16 %v7306
        %v7455 = vunpack.c.l.b16 %v7307
        %v7456 = vunpack.c.h.b16 %v7307
        %v7457 = vunpack.c.l.b16 %v7308
        %v7458 = vunpack.c.h.b16 %v7308
        %v7459 = vunpack.c.l.b16 %v7309
        %v7460 = vunpack.c.h.b16 %v7309
        %v7461 = vunpack.c.l.b16 %v7310
        %v7462 = vunpack.c.h.b16 %v7310
        %v7463 = vunpack.c.l.b16 %v7311
        %v7464 = vunpack.c.h.b16 %v7311
        %v7465 = vunpack.c.l.b16 %v7312
        %v7466 = vunpack.c.h.b16 %v7312
        %v7467 = vunpack.c.l.b16 %v7313
        %v7468 = vunpack.c.h.b16 %v7313
        %v7469 = vunpack.c.l.b16 %v7314
        %v7470 = vunpack.c.h.b16 %v7314
        %v7471 = vunpack.c.l.b16 %v7315
        %v7472 = vunpack.c.h.b16 %v7315
        %v7473 = vunpack.c.l.b16 %v7316
        %v7474 = vunpack.c.h.b16 %v7316
        %v7475 = vunpack.c.l.b16 %v7317
        %v7476 = vunpack.c.h.b16 %v7317
        %v7477 = vunpack.c.l.b16 %v7318
        %v7478 = vunpack.c.h.b16 %v7318
        %v7479 = vunpack.c.l.b16 %v7319
        %v7480 = vunpack.c.h.b16 %v7319
        %v7481 = vunpack.c.l.b16 %v7320
        %v7482 = vunpack.c.h.b16 %v7320
        %v7483 = vunpack.c.l.b16 %v7321
        %v7484 = vunpack.c.h.b16 %v7321
        %v7485 = vunpack.c.l.b16 %v7322
        %v7486 = vunpack.c.h.b16 %v7322
        %v7487 = vunpack.c.l.b16 %v7323
        %v7488 = vunpack.c.h.b16 %v7323
        %v7489 = vunpack.c.l.b16 %v7324
        %v7490 = vunpack.c.h.b16 %v7324
        %v7491 = vunpack.c.l.b16 %v7325
        %v7492 = vunpack.c.h.b16 %v7325
        %v7493 = vunpack.c.l.b16 %v7326
        %v7494 = vunpack.c.h.b16 %v7326
        %v7495 = vunpack.c.l.b16 %v7327
        %v7496 = vunpack.c.h.b16 %v7327
        %v7497 = vunpack.c.l.b16 %v7328
        %v7498 = vunpack.c.h.b16 %v7328
        %v7499 = vunpack.c.l.b16 %v7329
        %v7500 = vunpack.c.h.b16 %v7329
        %v7501 = vunpack.c.l.b16 %v7330
        %v7502 = vunpack.c.h.b16 %v7330
        %v7503 = vunpack.c.l.b16 %v7331
        %v7504 = vunpack.c.h.b16 %v7331
        %v7505 = vunpack.c.l.b16 %v7332
        %v7506 = vunpack.c.h.b16 %v7332
        %v7507 = vunpack.c.l.b16 %v7333
        %v7508 = vunpack.c.h.b16 %v7333
        %v7509 = vunpack.c.l.b16 %v7334
        %v7510 = vunpack.c.h.b16 %v7334
        %v7511 = vunpack.c.l.b16 %v7335
        %v7512 = vunpack.c.h.b16 %v7335
        %v7513 = vunpack.c.l.b16 %v7336
        %v7514 = vunpack.c.h.b16 %v7336
        %v7515 = vunpack.c.l.b16 %v7337
        %v7516 = vunpack.c.h.b16 %v7337
        %v7517 = vunpack.c.l.b16 %v7338
        %v7518 = vunpack.c.h.b16 %v7338
        %v7519 = vunpack.c.l.b16 %v7339
        %v7520 = vunpack.c.h.b16 %v7339
        %v7521 = vunpack.c.l.b16 %v7340
        %v7522 = vunpack.c.h.b16 %v7340
        %v7523 = vunpack.c.l.b16 %v7341
        %v7524 = vunpack.c.h.b16 %v7341
        %v7525 = vunpack.c.l.b16 %v7342
        %v7526 = vunpack.c.h.b16 %v7342
        %v7527 = vunpack.c.l.b16 %v7343
        %v7528 = vunpack.c.h.b16 %v7343
        %v7529 = vunpack.c.l.b16 %v7344
        %v7530 = vunpack.c.h.b16 %v7344
        %v7531 = vunpack.c.l.b16 %v7345
        %v7532 = vunpack.c.h.b16 %v7345
        %v7533 = vunpack.c.l.b16 %v7346
        %v7534 = vunpack.c.h.b16 %v7346
        %v7535 = vunpack.c.l.b16 %v7347
        %v7536 = vunpack.c.h.b16 %v7347
        %v7537 = vunpack.c.l.b16 %v7348
        %v7538 = vunpack.c.h.b16 %v7348
        %v7539 = vunpack.c.l.b16 %v7349
        %v7540 = vunpack.c.h.b16 %v7349
        %v7541 = vunpack.c.l.b16 %v7350
        %v7542 = vunpack.c.h.b16 %v7350
        %v7543 = vunpack.c.l.b16 %v7351
        %v7544 = vunpack.c.h.b16 %v7351
        %v7545 = vunpack.c.l.b16 %v7352
        %v7546 = vunpack.c.h.b16 %v7352
        %v7547 = vunpack.c.l.b16 %v7353
        %v7548 = vunpack.c.h.b16 %v7353
        %v7549 = vunpack.c.l.b16 %v7354
        %v7550 = vunpack.c.h.b16 %v7354
        %v7551 = vunpack.c.l.b16 %v7355
        %v7552 = vunpack.c.h.b16 %v7355
        %v7553 = vunpack.c.l.b16 %v7356
        %v7554 = vunpack.c.h.b16 %v7356
        %v7555 = vunpack.c.l.b16 %v7357
        %v7556 = vunpack.c.h.b16 %v7357
        %v7557 = vunpack.c.l.b16 %v7358
        %v7558 = vunpack.c.h.b16 %v7358
        %v7559 = vunpack.c.l.b16 %v7359
        %v7560 = vunpack.c.h.b16 %v7359
        %v7561 = vunpack.c.l.b16 %v7360
        %v7562 = vunpack.c.h.b16 %v7360
        %v7563 = vpack.c.b16 %v7439, %v7435
        %v7564 = vpack.c.b16 %v7440, %v7436
        %v7565 = vpack.c.b16 %v7441, %v7437
        %v7566 = vpack.c.b16 %v7442, %v7438
        %v7567 = vpack.c.b16 %v7447, %v7443
        %v7568 = vpack.c.b16 %v7448, %v7444
        %v7569 = vpack.c.b16 %v7449, %v7445
        %v7570 = vpack.c.b16 %v7450, %v7446
        %v7571 = vpack.c.b16 %v7455, %v7451
        %v7572 = vpack.c.b16 %v7456, %v7452
        %v7573 = vpack.c.b16 %v7457, %v7453
        %v7574 = vpack.c.b16 %v7458, %v7454
        %v7575 = vpack.c.b16 %v7463, %v7459
        %v7576 = vpack.c.b16 %v7464, %v7460
        %v7577 = vpack.c.b16 %v7465, %v7461
        %v7578 = vpack.c.b16 %v7466, %v7462
        %v7579 = vpack.c.b16 %v7471, %v7467
        %v7580 = vpack.c.b16 %v7472, %v7468
        %v7581 = vpack.c.b16 %v7473, %v7469
        %v7582 = vpack.c.b16 %v7474, %v7470
        %v7583 = vpack.c.b16 %v7479, %v7475
        %v7584 = vpack.c.b16 %v7480, %v7476
        %v7585 = vpack.c.b16 %v7481, %v7477
        %v7586 = vpack.c.b16 %v7482, %v7478
        %v7587 = vpack.c.b16 %v7487, %v7483
        %v7588 = vpack.c.b16 %v7488, %v7484
        %v7589 = vpack.c.b16 %v7489, %v7485
        %v7590 = vpack.c.b16 %v7490, %v7486
        %v7591 = vpack.c.b16 %v7495, %v7491
        %v7592 = vpack.c.b16 %v7496, %v7492
        %v7593 = vpack.c.b16 %v7497, %v7493
        %v7594 = vpack.c.b16 %v7498, %v7494
        %v7595 = vpack.c.b16 %v7503, %v7499
        %v7596 = vpack.c.b16 %v7504, %v7500
        %v7597 = vpack.c.b16 %v7505, %v7501
        %v7598 = vpack.c.b16 %v7506, %v7502
        %v7599 = vpack.c.b16 %v7511, %v7507
        %v7600 = vpack.c.b16 %v7512, %v7508
        %v7601 = vpack.c.b16 %v7513, %v7509
        %v7602 = vpack.c.b16 %v7514, %v7510
        %v7603 = vpack.c.b16 %v7519, %v7515
        %v7604 = vpack.c.b16 %v7520, %v7516
        %v7605 = vpack.c.b16 %v7521, %v7517
        %v7606 = vpack.c.b16 %v7522, %v7518
        %v7607 = vpack.c.b16 %v7527, %v7523
        %v7608 = vpack.c.b16 %v7528, %v7524
        %v7609 = vpack.c.b16 %v7529, %v7525
        %v7610 = vpack.c.b16 %v7530, %v7526
        %v7611 = vpack.c.b16 %v7535, %v7531
        %v7612 = vpack.c.b16 %v7536, %v7532
        %v7613 = vpack.c.b16 %v7537, %v7533
        %v7614 = vpack.c.b16 %v7538, %v7534
        %v7615 = vpack.c.b16 %v7543, %v7539
        %v7616 = vpack.c.b16 %v7544, %v7540
        %v7617 = vpack.c.b16 %v7545, %v7541
        %v7618 = vpack.c.b16 %v7546, %v7542
        %v7619 = vpack.c.b16 %v7551, %v7547
        %v7620 = vpack.c.b16 %v7552, %v7548
        %v7621 = vpack.c.b16 %v7553, %v7549
        %v7622 = vpack.c.b16 %v7554, %v7550
        %v7623 = vpack.c.b16 %v7559, %v7555
        %v7624 = vpack.c.b16 %v7560, %v7556
        %v7625 = vpack.c.b16 %v7561, %v7557
        %v7626 = vpack.c.b16 %v7562, %v7558
        %7691 = vmatpush.bf16.msra.mxu0 %v7591
        %7692 = vmatpush.bf16.msra.mxu0 %v7587
        %7693 = vmatpush.bf16.msra.mxu0 %v7583
        %7694 = vmatpush.bf16.msra.mxu0 %v7579
        %7695 = vmatpush.bf16.msra.mxu0 %v7575
        %7696 = vmatpush.bf16.msra.mxu0 %v7571
        %7697 = vmatpush.bf16.msra.mxu0 %v7567
        %7698 = vmatpush.bf16.msra.mxu0 %v7563
        %7699 = vmatmul.bf16.gmra.mxu0 %v7289
        %v7700 = vpop.f32.mrf.mxu0
        %v7701 = vadd.f32 %v7363, %v7700
        %v7702 = vpop.f32.mrf.mxu0
        %v7703 = vadd.f32 %v7363, %v7702
        %7704 = vmatmul.bf16.gmra.mxu0 %v7291
        %v7705 = vpop.f32.mrf.mxu0
        %v7706 = vadd.f32 %v7363, %v7705
        %v7707 = vpop.f32.mrf.mxu0
        %v7708 = vadd.f32 %v7363, %v7707
        %7709 = vmatmul.bf16.gmra.mxu0 %v7293
        %v7710 = vpop.f32.mrf.mxu0
        %v7711 = vadd.f32 %v7363, %v7710
        %v7712 = vpop.f32.mrf.mxu0
        %v7713 = vadd.f32 %v7363, %v7712
        %7714 = vmatmul.bf16.gmra.mxu0 %v7295
        %v7715 = vpop.f32.mrf.mxu0
        %v7716 = vadd.f32 %v7363, %v7715
        %v7717 = vpop.f32.mrf.mxu0
        %7718 = vdwg.mxu0
        %7719 = vmatpush.bf16.msra.mxu0 %v7623
        %7720 = vmatpush.bf16.msra.mxu0 %v7619
        %7721 = vmatpush.bf16.msra.mxu0 %v7615
        %7722 = vmatpush.bf16.msra.mxu0 %v7611
        %7723 = vmatpush.bf16.msra.mxu0 %v7607
        %7724 = vmatpush.bf16.msra.mxu0 %v7603
        %7725 = vmatpush.bf16.msra.mxu0 %v7599
        %7726 = vmatpush.bf16.msra.mxu0 %v7595
        %7727 = vmatmul.bf16.gmra.mxu0 %v7290
        %v7728 = vpop.f32.mrf.mxu0
        %v7729 = vadd.f32 %v7701, %v7728
        %v7730 = vpop.f32.mrf.mxu0
        %v7731 = vadd.f32 %v7703, %v7730
        %7732 = vmatmul.bf16.gmra.mxu0 %v7292
        %v7733 = vpop.f32.mrf.mxu0
        %v7734 = vadd.f32 %v7706, %v7733
        %v7735 = vpop.f32.mrf.mxu0
        %v7736 = vadd.f32 %v7708, %v7735
        %7737 = vmatmul.bf16.gmra.mxu0 %v7294
        %v7738 = vpop.f32.mrf.mxu0
        %v7739 = vadd.f32 %v7711, %v7738
        %v7740 = vpop.f32.mrf.mxu0
        %v7741 = vadd.f32 %v7713, %v7740
        %7742 = vmatmul.bf16.gmra.mxu0 %v7296
        %v7743 = vpop.f32.mrf.mxu0
        %v7744 = vadd.f32 %v7716, %v7743
        %v7745 = vpop.f32.mrf.mxu0
        %7746 = vdwg.mxu0
        %7747 = vmatpush.bf16.msra.mxu0 %v7592
        %7748 = vmatpush.bf16.msra.mxu0 %v7588
        %7749 = vmatpush.bf16.msra.mxu0 %v7584
        %7750 = vmatpush.bf16.msra.mxu0 %v7580
        %7751 = vmatpush.bf16.msra.mxu0 %v7576
        %7752 = vmatpush.bf16.msra.mxu0 %v7572
        %7753 = vmatpush.bf16.msra.mxu0 %v7568
        %7754 = vmatpush.bf16.msra.mxu0 %v7564
        %7755 = vmatmul.bf16.gmra.mxu0 %v7289
        %v7756 = vpop.f32.mrf.mxu0
        %v7757 = vadd.f32 %v7364, %v7756
        %v7758 = vpop.f32.mrf.mxu0
        %v7759 = vadd.f32 %v7364, %v7758
        %7760 = vmatmul.bf16.gmra.mxu0 %v7291
        %v7761 = vpop.f32.mrf.mxu0
        %v7762 = vadd.f32 %v7364, %v7761
        %v7763 = vpop.f32.mrf.mxu0
        %v7764 = vadd.f32 %v7364, %v7763
        %7765 = vmatmul.bf16.gmra.mxu0 %v7293
        %v7766 = vpop.f32.mrf.mxu0
        %v7767 = vadd.f32 %v7364, %v7766
        %v7768 = vpop.f32.mrf.mxu0
        %v7769 = vadd.f32 %v7364, %v7768
        %7770 = vmatmul.bf16.gmra.mxu0 %v7295
        %v7771 = vpop.f32.mrf.mxu0
        %v7772 = vadd.f32 %v7364, %v7771
        %v7773 = vpop.f32.mrf.mxu0
        %7774 = vdwg.mxu0
        %7775 = vmatpush.bf16.msra.mxu0 %v7624
        %7776 = vmatpush.bf16.msra.mxu0 %v7620
        %7777 = vmatpush.bf16.msra.mxu0 %v7616
        %7778 = vmatpush.bf16.msra.mxu0 %v7612
        %7779 = vmatpush.bf16.msra.mxu0 %v7608
        %7780 = vmatpush.bf16.msra.mxu0 %v7604
        %7781 = vmatpush.bf16.msra.mxu0 %v7600
        %7782 = vmatpush.bf16.msra.mxu0 %v7596
        %7783 = vmatmul.bf16.gmra.mxu0 %v7290
        %v7784 = vpop.f32.mrf.mxu0
        %v7785 = vadd.f32 %v7757, %v7784
        %v7786 = vpop.f32.mrf.mxu0
        %v7787 = vadd.f32 %v7759, %v7786
        %7788 = vmatmul.bf16.gmra.mxu0 %v7292
        %v7789 = vpop.f32.mrf.mxu0
        %v7790 = vadd.f32 %v7762, %v7789
        %v7791 = vpop.f32.mrf.mxu0
        %v7792 = vadd.f32 %v7764, %v7791
        %7793 = vmatmul.bf16.gmra.mxu0 %v7294
        %v7794 = vpop.f32.mrf.mxu0
        %v7795 = vadd.f32 %v7767, %v7794
        %v7796 = vpop.f32.mrf.mxu0
        %v7797 = vadd.f32 %v7769, %v7796
        %7798 = vmatmul.bf16.gmra.mxu0 %v7296
        %v7799 = vpop.f32.mrf.mxu0
        %v7800 = vadd.f32 %v7772, %v7799
        %v7801 = vpop.f32.mrf.mxu0
        %7802 = vdwg.mxu0
        %7803 = vmatpush.bf16.msra.mxu0 %v7593
        %7804 = vmatpush.bf16.msra.mxu0 %v7589
        %7805 = vmatpush.bf16.msra.mxu0 %v7585
        %7806 = vmatpush.bf16.msra.mxu0 %v7581
        %7807 = vmatpush.bf16.msra.mxu0 %v7577
        %7808 = vmatpush.bf16.msra.mxu0 %v7573
        %7809 = vmatpush.bf16.msra.mxu0 %v7569
        %7810 = vmatpush.bf16.msra.mxu0 %v7565
        %7811 = vmatmul.bf16.gmra.mxu0 %v7289
        %v7812 = vpop.f32.mrf.mxu0
        %v7813 = vadd.f32 %v7365, %v7812
        %v7814 = vpop.f32.mrf.mxu0
        %v7815 = vadd.f32 %v7365, %v7814
        %7816 = vmatmul.bf16.gmra.mxu0 %v7291
        %v7817 = vpop.f32.mrf.mxu0
        %v7818 = vadd.f32 %v7365, %v7817
        %v7819 = vpop.f32.mrf.mxu0
        %v7820 = vadd.f32 %v7365, %v7819
        %7821 = vmatmul.bf16.gmra.mxu0 %v7293
        %v7822 = vpop.f32.mrf.mxu0
        %v7823 = vadd.f32 %v7365, %v7822
        %v7824 = vpop.f32.mrf.mxu0
        %v7825 = vadd.f32 %v7365, %v7824
        %7826 = vmatmul.bf16.gmra.mxu0 %v7295
        %v7827 = vpop.f32.mrf.mxu0
        %v7828 = vadd.f32 %v7365, %v7827
        %v7829 = vpop.f32.mrf.mxu0
        %7830 = vdwg.mxu0
        %7831 = vmatpush.bf16.msra.mxu0 %v7625
        %7832 = vmatpush.bf16.msra.mxu0 %v7621
        %7833 = vmatpush.bf16.msra.mxu0 %v7617
        %7834 = vmatpush.bf16.msra.mxu0 %v7613
        %7835 = vmatpush.bf16.msra.mxu0 %v7609
        %7836 = vmatpush.bf16.msra.mxu0 %v7605
        %7837 = vmatpush.bf16.msra.mxu0 %v7601
        %7838 = vmatpush.bf16.msra.mxu0 %v7597
        %7839 = vmatmul.bf16.gmra.mxu0 %v7290
        %v7840 = vpop.f32.mrf.mxu0
        %v7841 = vadd.f32 %v7813, %v7840
        %v7842 = vpop.f32.mrf.mxu0
        %v7843 = vadd.f32 %v7815, %v7842
        %7844 = vmatmul.bf16.gmra.mxu0 %v7292
        %v7845 = vpop.f32.mrf.mxu0
        %v7846 = vadd.f32 %v7818, %v7845
        %v7847 = vpop.f32.mrf.mxu0
        %v7848 = vadd.f32 %v7820, %v7847
        %7849 = vmatmul.bf16.gmra.mxu0 %v7294
        %v7850 = vpop.f32.mrf.mxu0
        %v7851 = vadd.f32 %v7823, %v7850
        %v7852 = vpop.f32.mrf.mxu0
        %v7853 = vadd.f32 %v7825, %v7852
        %7854 = vmatmul.bf16.gmra.mxu0 %v7296
        %v7855 = vpop.f32.mrf.mxu0
        %v7856 = vadd.f32 %v7828, %v7855
        %v7857 = vpop.f32.mrf.mxu0
        %7858 = vdwg.mxu0
        %7859 = vmatpush.bf16.msra.mxu0 %v7594
        %7860 = vmatpush.bf16.msra.mxu0 %v7590
        %7861 = vmatpush.bf16.msra.mxu0 %v7586
        %7862 = vmatpush.bf16.msra.mxu0 %v7582
        %7863 = vmatpush.bf16.msra.mxu0 %v7578
        %7864 = vmatpush.bf16.msra.mxu0 %v7574
        %7865 = vmatpush.bf16.msra.mxu0 %v7570
        %7866 = vmatpush.bf16.msra.mxu0 %v7566
        %7867 = vmatmul.bf16.gmra.mxu0 %v7289
        %v7868 = vpop.f32.mrf.mxu0
        %v7869 = vadd.f32 %v7366, %v7868
        %v7870 = vpop.f32.mrf.mxu0
        %v7871 = vadd.f32 %v7366, %v7870
        %7872 = vmatmul.bf16.gmra.mxu0 %v7291
        %v7873 = vpop.f32.mrf.mxu0
        %v7874 = vadd.f32 %v7366, %v7873
        %v7875 = vpop.f32.mrf.mxu0
        %v7876 = vadd.f32 %v7366, %v7875
        %7877 = vmatmul.bf16.gmra.mxu0 %v7293
        %v7878 = vpop.f32.mrf.mxu0
        %v7879 = vadd.f32 %v7366, %v7878
        %v7880 = vpop.f32.mrf.mxu0
        %v7881 = vadd.f32 %v7366, %v7880
        %7882 = vmatmul.bf16.gmra.mxu0 %v7295
        %v7883 = vpop.f32.mrf.mxu0
        %v7884 = vadd.f32 %v7366, %v7883
        %v7885 = vpop.f32.mrf.mxu0
        %7886 = vdwg.mxu0
        %7887 = vmatpush.bf16.msra.mxu0 %v7626
        %7888 = vmatpush.bf16.msra.mxu0 %v7622
        %7889 = vmatpush.bf16.msra.mxu0 %v7618
        %7890 = vmatpush.bf16.msra.mxu0 %v7614
        %7891 = vmatpush.bf16.msra.mxu0 %v7610
        %7892 = vmatpush.bf16.msra.mxu0 %v7606
        %7893 = vmatpush.bf16.msra.mxu0 %v7602
        %7894 = vmatpush.bf16.msra.mxu0 %v7598
        %7895 = vmatmul.bf16.gmra.mxu0 %v7290
        %v7896 = vpop.f32.mrf.mxu0
        %v7897 = vadd.f32 %v7869, %v7896
        %v7898 = vpop.f32.mrf.mxu0
        %v7899 = vadd.f32 %v7871, %v7898
        %7900 = vmatmul.bf16.gmra.mxu0 %v7292
        %v7901 = vpop.f32.mrf.mxu0
        %v7902 = vadd.f32 %v7874, %v7901
        %v7903 = vpop.f32.mrf.mxu0
        %v7904 = vadd.f32 %v7876, %v7903
        %7905 = vmatmul.bf16.gmra.mxu0 %v7294
        %v7906 = vpop.f32.mrf.mxu0
        %v7907 = vadd.f32 %v7879, %v7906
        %v7908 = vpop.f32.mrf.mxu0
        %v7909 = vadd.f32 %v7881, %v7908
        %7910 = vmatmul.bf16.gmra.mxu0 %v7296
        %v7911 = vpop.f32.mrf.mxu0
        %v7912 = vadd.f32 %v7884, %v7911
        %v7913 = vpop.f32.mrf.mxu0
        %7914 = vdwg.mxu0
        %v7915 = vmax.f32 %v7729, 0.0
        %v7916 = vmax.f32 %v7785, 0.0
        %v7917 = vmax.f32 %v7841, 0.0
        %v7918 = vmax.f32 %v7897, 0.0
        %v7919 = vmax.f32 %v7731, 0.0
        %v7920 = vmax.f32 %v7787, 0.0
        %v7921 = vmax.f32 %v7843, 0.0
        %v7922 = vmax.f32 %v7899, 0.0
        %v7923 = vmax.f32 %v7734, 0.0
        %v7924 = vmax.f32 %v7790, 0.0
        %v7925 = vmax.f32 %v7846, 0.0
        %v7926 = vmax.f32 %v7902, 0.0
        %v7927 = vmax.f32 %v7736, 0.0
        %v7928 = vmax.f32 %v7792, 0.0
        %v7929 = vmax.f32 %v7848, 0.0
        %v7930 = vmax.f32 %v7904, 0.0
        %v7931 = vmax.f32 %v7739, 0.0
        %v7932 = vmax.f32 %v7795, 0.0
        %v7933 = vmax.f32 %v7851, 0.0
        %v7934 = vmax.f32 %v7907, 0.0
        %v7935 = vmax.f32 %v7741, 0.0
        %v7936 = vmax.f32 %v7797, 0.0
        %v7937 = vmax.f32 %v7853, 0.0
        %v7938 = vmax.f32 %v7909, 0.0
        %v7939 = vmax.f32 %v7744, 0.0
        %v7940 = vmax.f32 %v7800, 0.0
        %v7941 = vmax.f32 %v7856, 0.0
        %v7942 = vmax.f32 %v7912, 0.0
        %v7943 = vld [vmem:[#allocation19] sm:$0xff]
        %v7944 = vld [vmem:[#allocation19 + $0x8] sm:$0xff]
        %v7945 = vld [vmem:[#allocation19 + $0x10] sm:$0xff]
        %v7946 = vld [vmem:[#allocation19 + $0x18] sm:$0xff]
        %v7947 = vld [vmem:[#allocation19 + $0x20] sm:$0xff]
        %v7948 = vld [vmem:[#allocation19 + $0x28] sm:$0xff]
        %v7949 = vld [vmem:[#allocation19 + $0x30] sm:$0x11]
        %v7957 = vunpack.c.l.b16 %v7943
        %v7958 = vunpack.c.h.b16 %v7943
        %v7959 = vunpack.c.l.b16 %v7944
        %v7960 = vunpack.c.h.b16 %v7944
        %v7961 = vunpack.c.l.b16 %v7945
        %v7962 = vunpack.c.h.b16 %v7945
        %v7963 = vunpack.c.l.b16 %v7946
        %v7964 = vunpack.c.h.b16 %v7946
        %v7965 = vunpack.c.l.b16 %v7947
        %v7966 = vunpack.c.h.b16 %v7947
        %v7967 = vunpack.c.l.b16 %v7948
        %v7968 = vunpack.c.h.b16 %v7948
        %v7969 = vunpack.c.l.b16 %v7949
        %v7970 = vunpack.c.h.b16 %v7949
        %v7971 = vpack.c.b16 %v7959, %v7957
        %v7972 = vpack.c.b16 %v7960, %v7958
        %v7973 = vpack.c.b16 %v7963, %v7961
        %v7974 = vpack.c.b16 %v7964, %v7962
        %v7975 = vpack.c.b16 %v7967, %v7965
        %v7976 = vpack.c.b16 %v7968, %v7966
        %v7977 = vpack.c.b16 %v7969, %v7969
        %v7978 = vpack.c.b16 %v7970, %v7970
        %v7984 = vsel %vm7088, %v7972, 0
        %v7987 = vsel %vm7088, %v7974, 0
        %v7990 = vsel %vm7088, %v7976, 0
        %v7993 = vsel %vm7088, %v7978, 0
        %v7995 = vsel %vm7110, %v6088, 0
        %7997 = vmatpush.bf16.msra.mxu0 %v6083
        %7998 = vmatpush.bf16.msra.mxu0 %v6082
        %7999 = vmatpush.bf16.msra.mxu0 %v6081
        %8000 = vmatpush.bf16.msra.mxu0 %v6080
        %8001 = vmatpush.bf16.msra.mxu0 %v6079
        %8002 = vmatpush.bf16.msra.mxu0 %v6078
        %8003 = vmatpush.bf16.msra.mxu0 %v6077
        %8004 = vmatpush.bf16.msra.mxu0 %v6076
        %8005 = vmatmul.bf16.gmra.mxu0 %v7971
        %v8006 = vpop.f32.mrf.mxu0
        %v8007 = vadd.f32 0.0, %v8006
        %v8008 = vpop.f32.mrf.mxu0
        %v8009 = vadd.f32 0.0, %v8008
        %8010 = vmatmul.bf16.gmra.mxu0 %v7973
        %v8011 = vpop.f32.mrf.mxu0
        %v8012 = vadd.f32 0.0, %v8011
        %v8013 = vpop.f32.mrf.mxu0
        %v8014 = vadd.f32 0.0, %v8013
        %8015 = vmatmul.bf16.gmra.mxu0 %v7975
        %v8016 = vpop.f32.mrf.mxu0
        %v8017 = vadd.f32 0.0, %v8016
        %v8018 = vpop.f32.mrf.mxu0
        %v8019 = vadd.f32 0.0, %v8018
        %8020 = vmatmul.bf16.gmra.mxu0 %v7977
        %v8021 = vpop.f32.mrf.mxu0
        %v8022 = vadd.f32 0.0, %v8021
        %v8023 = vpop.f32.mrf.mxu0
        %8024 = vdwg.mxu0
        %8025 = vmatpush.bf16.msra.mxu0 0
        %8026 = vmatpush.bf16.msra.mxu0 0
        %8027 = vmatpush.bf16.msra.mxu0 0
        %8028 = vmatpush.bf16.msra.mxu0 %v7995
        %8029 = vmatpush.bf16.msra.mxu0 %v6087
        %8030 = vmatpush.bf16.msra.mxu0 %v6086
        %8031 = vmatpush.bf16.msra.mxu0 %v6085
        %8032 = vmatpush.bf16.msra.mxu0 %v6084
        %8033 = vmatmul.bf16.gmra.mxu0 %v7984
        %v8034 = vpop.f32.mrf.mxu0
        %v8035 = vadd.f32 %v8007, %v8034
        %v8036 = vpop.f32.mrf.mxu0
        %v8037 = vadd.f32 %v8009, %v8036
        %8038 = vmatmul.bf16.gmra.mxu0 %v7987
        %v8039 = vpop.f32.mrf.mxu0
        %v8040 = vadd.f32 %v8012, %v8039
        %v8041 = vpop.f32.mrf.mxu0
        %v8042 = vadd.f32 %v8014, %v8041
        %8043 = vmatmul.bf16.gmra.mxu0 %v7990
        %v8044 = vpop.f32.mrf.mxu0
        %v8045 = vadd.f32 %v8017, %v8044
        %v8046 = vpop.f32.mrf.mxu0
        %v8047 = vadd.f32 %v8019, %v8046
        %8048 = vmatmul.bf16.gmra.mxu0 %v7993
        %v8049 = vpop.f32.mrf.mxu0
        %v8050 = vadd.f32 %v8022, %v8049
        %v8051 = vpop.f32.mrf.mxu0
        %8052 = vdwg.mxu0
        %v8053 = vpack.c.bf16 %v8037, %v8035
        %v8054 = vpack.c.bf16 %v8042, %v8040
        %v8055 = vpack.c.bf16 %v8047, %v8045
        %v8056 = vpack.c.bf16 %v8050, %v8050
        %v8057 = vld [vmem:[%s13] sm:$0xff]
        %v8058 = vld [vmem:[%s13 + $0x8] sm:$0xff]
        %v8059 = vld [vmem:[%s13 + $0x10] sm:$0xff]
        %v8060 = vld [vmem:[%s13 + $0x18] sm:$0xff]
        %v8061 = vld [vmem:[%s13 + $0x20] sm:$0xff]
        %v8062 = vld [vmem:[%s13 + $0x28] sm:$0xff]
        %v8063 = vld [vmem:[%s13 + $0x30] sm:$0xff]
        %v8064 = vld [vmem:[%s13 + $0x38] sm:$0xff]
        %v8065 = vld [vmem:[%s13 + $0x40] sm:$0xff]
        %v8066 = vld [vmem:[%s13 + $0x48] sm:$0xff]
        %v8067 = vld [vmem:[%s13 + $0x50] sm:$0xff]
        %v8068 = vld [vmem:[%s13 + $0x58] sm:$0xff]
        %v8069 = vld [vmem:[%s13 + $0x60] sm:$0xff]
        %v8070 = vld [vmem:[%s13 + $0x68] sm:$0xff]
        %v8071 = vld [vmem:[%s13 + $0x70] sm:$0xff]
        %v8072 = vld [vmem:[%s13 + $0x78] sm:$0xff]
        %v8073 = vld [vmem:[#allocation17] sm:$0xf]
        %v8075 = vperm.slane %v8073, 0
        %v8076 = vperm.slane %v8073, 1
        %v8077 = vperm.slane %v8073, 2
        %v8078 = vperm.slane %v8073, 3
        %v8099 = vunpack.c.l.b16 %v8057
        %v8100 = vunpack.c.h.b16 %v8057
        %v8101 = vunpack.c.l.b16 %v8058
        %v8102 = vunpack.c.h.b16 %v8058
        %v8103 = vunpack.c.l.b16 %v8059
        %v8104 = vunpack.c.h.b16 %v8059
        %v8105 = vunpack.c.l.b16 %v8060
        %v8106 = vunpack.c.h.b16 %v8060
        %v8107 = vunpack.c.l.b16 %v8061
        %v8108 = vunpack.c.h.b16 %v8061
        %v8109 = vunpack.c.l.b16 %v8062
        %v8110 = vunpack.c.h.b16 %v8062
        %v8111 = vunpack.c.l.b16 %v8063
        %v8112 = vunpack.c.h.b16 %v8063
        %v8113 = vunpack.c.l.b16 %v8064
        %v8114 = vunpack.c.h.b16 %v8064
        %v8115 = vunpack.c.l.b16 %v8065
        %v8116 = vunpack.c.h.b16 %v8065
        %v8117 = vunpack.c.l.b16 %v8066
        %v8118 = vunpack.c.h.b16 %v8066
        %v8119 = vunpack.c.l.b16 %v8067
        %v8120 = vunpack.c.h.b16 %v8067
        %v8121 = vunpack.c.l.b16 %v8068
        %v8122 = vunpack.c.h.b16 %v8068
        %v8123 = vunpack.c.l.b16 %v8069
        %v8124 = vunpack.c.h.b16 %v8069
        %v8125 = vunpack.c.l.b16 %v8070
        %v8126 = vunpack.c.h.b16 %v8070
        %v8127 = vunpack.c.l.b16 %v8071
        %v8128 = vunpack.c.h.b16 %v8071
        %v8129 = vunpack.c.l.b16 %v8072
        %v8130 = vunpack.c.h.b16 %v8072
        %v8131 = vpack.c.b16 %v8103, %v8099
        %v8132 = vpack.c.b16 %v8104, %v8100
        %v8133 = vpack.c.b16 %v8105, %v8101
        %v8134 = vpack.c.b16 %v8106, %v8102
        %v8135 = vpack.c.b16 %v8111, %v8107
        %v8136 = vpack.c.b16 %v8112, %v8108
        %v8137 = vpack.c.b16 %v8113, %v8109
        %v8138 = vpack.c.b16 %v8114, %v8110
        %v8139 = vpack.c.b16 %v8119, %v8115
        %v8140 = vpack.c.b16 %v8120, %v8116
        %v8141 = vpack.c.b16 %v8121, %v8117
        %v8142 = vpack.c.b16 %v8122, %v8118
        %v8143 = vpack.c.b16 %v8127, %v8123
        %v8144 = vpack.c.b16 %v8128, %v8124
        %v8145 = vpack.c.b16 %v8129, %v8125
        %v8146 = vpack.c.b16 %v8130, %v8126
        %v8164 = vsel %vm1870, %v8053, 0
        %v8167 = vsel %vm1870, %v8054, 0
        %v8170 = vsel %vm1870, %v8055, 0
        %v8173 = vsel %vm1870, %v8056, 0
        %8175 = vmatpush.bf16.msra.mxu0 0
        %8176 = vmatpush.bf16.msra.mxu0 0
        %8177 = vmatpush.bf16.msra.mxu0 0
        %8178 = vmatpush.bf16.msra.mxu0 0
        %8179 = vmatpush.bf16.msra.mxu0 %v8143
        %8180 = vmatpush.bf16.msra.mxu0 %v8139
        %8181 = vmatpush.bf16.msra.mxu0 %v8135
        %8182 = vmatpush.bf16.msra.mxu0 %v8131
        %8183 = vmatmul.bf16.gmra.mxu0 %v8164
        %v8184 = vpop.f32.mrf.mxu0
        %v8185 = vadd.f32 %v8075, %v8184
        %v8186 = vpop.f32.mrf.mxu0
        %v8187 = vadd.f32 %v8075, %v8186
        %8188 = vmatmul.bf16.gmra.mxu0 %v8167
        %v8189 = vpop.f32.mrf.mxu0
        %v8190 = vadd.f32 %v8075, %v8189
        %v8191 = vpop.f32.mrf.mxu0
        %v8192 = vadd.f32 %v8075, %v8191
        %8193 = vmatmul.bf16.gmra.mxu0 %v8170
        %v8194 = vpop.f32.mrf.mxu0
        %v8195 = vadd.f32 %v8075, %v8194
        %v8196 = vpop.f32.mrf.mxu0
        %v8197 = vadd.f32 %v8075, %v8196
        %8198 = vmatmul.bf16.gmra.mxu0 %v8173
        %v8199 = vpop.f32.mrf.mxu0
        %v8200 = vadd.f32 %v8075, %v8199
        %v8201 = vpop.f32.mrf.mxu0
        %8202 = vdwg.mxu0
        %8203 = vmatpush.bf16.msra.mxu0 0
        %8204 = vmatpush.bf16.msra.mxu0 0
        %8205 = vmatpush.bf16.msra.mxu0 0
        %8206 = vmatpush.bf16.msra.mxu0 0
        %8207 = vmatpush.bf16.msra.mxu0 %v8144
        %8208 = vmatpush.bf16.msra.mxu0 %v8140
        %8209 = vmatpush.bf16.msra.mxu0 %v8136
        %8210 = vmatpush.bf16.msra.mxu0 %v8132
        %8211 = vmatmul.bf16.gmra.mxu0 %v8164
        %v8212 = vpop.f32.mrf.mxu0
        %v8213 = vadd.f32 %v8076, %v8212
        %v8214 = vpop.f32.mrf.mxu0
        %v8215 = vadd.f32 %v8076, %v8214
        %8216 = vmatmul.bf16.gmra.mxu0 %v8167
        %v8217 = vpop.f32.mrf.mxu0
        %v8218 = vadd.f32 %v8076, %v8217
        %v8219 = vpop.f32.mrf.mxu0
        %v8220 = vadd.f32 %v8076, %v8219
        %8221 = vmatmul.bf16.gmra.mxu0 %v8170
        %v8222 = vpop.f32.mrf.mxu0
        %v8223 = vadd.f32 %v8076, %v8222
        %v8224 = vpop.f32.mrf.mxu0
        %v8225 = vadd.f32 %v8076, %v8224
        %8226 = vmatmul.bf16.gmra.mxu0 %v8173
        %v8227 = vpop.f32.mrf.mxu0
        %v8228 = vadd.f32 %v8076, %v8227
        %v8229 = vpop.f32.mrf.mxu0
        %8230 = vdwg.mxu0
        %8231 = vmatpush.bf16.msra.mxu0 0
        %8232 = vmatpush.bf16.msra.mxu0 0
        %8233 = vmatpush.bf16.msra.mxu0 0
        %8234 = vmatpush.bf16.msra.mxu0 0
        %8235 = vmatpush.bf16.msra.mxu0 %v8145
        %8236 = vmatpush.bf16.msra.mxu0 %v8141
        %8237 = vmatpush.bf16.msra.mxu0 %v8137
        %8238 = vmatpush.bf16.msra.mxu0 %v8133
        %8239 = vmatmul.bf16.gmra.mxu0 %v8164
        %v8240 = vpop.f32.mrf.mxu0
        %v8241 = vadd.f32 %v8077, %v8240
        %v8242 = vpop.f32.mrf.mxu0
        %v8243 = vadd.f32 %v8077, %v8242
        %8244 = vmatmul.bf16.gmra.mxu0 %v8167
        %v8245 = vpop.f32.mrf.mxu0
        %v8246 = vadd.f32 %v8077, %v8245
        %v8247 = vpop.f32.mrf.mxu0
        %v8248 = vadd.f32 %v8077, %v8247
        %8249 = vmatmul.bf16.gmra.mxu0 %v8170
        %v8250 = vpop.f32.mrf.mxu0
        %v8251 = vadd.f32 %v8077, %v8250
        %v8252 = vpop.f32.mrf.mxu0
        %v8253 = vadd.f32 %v8077, %v8252
        %8254 = vmatmul.bf16.gmra.mxu0 %v8173
        %v8255 = vpop.f32.mrf.mxu0
        %v8256 = vadd.f32 %v8077, %v8255
        %v8257 = vpop.f32.mrf.mxu0
        %8258 = vdwg.mxu0
        %8259 = vmatpush.bf16.msra.mxu0 0
        %8260 = vmatpush.bf16.msra.mxu0 0
        %8261 = vmatpush.bf16.msra.mxu0 0
        %8262 = vmatpush.bf16.msra.mxu0 0
        %8263 = vmatpush.bf16.msra.mxu0 %v8146
        %8264 = vmatpush.bf16.msra.mxu0 %v8142
        %8265 = vmatpush.bf16.msra.mxu0 %v8138
        %8266 = vmatpush.bf16.msra.mxu0 %v8134
        %8267 = vmatmul.bf16.gmra.mxu0 %v8164
        %v8268 = vpop.f32.mrf.mxu0
        %v8269 = vadd.f32 %v8078, %v8268
        %v8270 = vpop.f32.mrf.mxu0
        %v8271 = vadd.f32 %v8078, %v8270
        %8272 = vmatmul.bf16.gmra.mxu0 %v8167
        %v8273 = vpop.f32.mrf.mxu0
        %v8274 = vadd.f32 %v8078, %v8273
        %v8275 = vpop.f32.mrf.mxu0
        %v8276 = vadd.f32 %v8078, %v8275
        %8277 = vmatmul.bf16.gmra.mxu0 %v8170
        %v8278 = vpop.f32.mrf.mxu0
        %v8279 = vadd.f32 %v8078, %v8278
        %v8280 = vpop.f32.mrf.mxu0
        %v8281 = vadd.f32 %v8078, %v8280
        %8282 = vmatmul.bf16.gmra.mxu0 %v8173
        %v8283 = vpop.f32.mrf.mxu0
        %v8284 = vadd.f32 %v8078, %v8283
        %v8285 = vpop.f32.mrf.mxu0
        %8286 = vdwg.mxu0
        %v8287 = vmax.f32 %v8185, 0.0
        %v8288 = vmax.f32 %v8213, 0.0
        %v8289 = vmax.f32 %v8241, 0.0
        %v8290 = vmax.f32 %v8269, 0.0
        %v8291 = vmax.f32 %v8187, 0.0
        %v8292 = vmax.f32 %v8215, 0.0
        %v8293 = vmax.f32 %v8243, 0.0
        %v8294 = vmax.f32 %v8271, 0.0
        %v8295 = vmax.f32 %v8190, 0.0
        %v8296 = vmax.f32 %v8218, 0.0
        %v8297 = vmax.f32 %v8246, 0.0
        %v8298 = vmax.f32 %v8274, 0.0
        %v8299 = vmax.f32 %v8192, 0.0
        %v8300 = vmax.f32 %v8220, 0.0
        %v8301 = vmax.f32 %v8248, 0.0
        %v8302 = vmax.f32 %v8276, 0.0
        %v8303 = vmax.f32 %v8195, 0.0
        %v8304 = vmax.f32 %v8223, 0.0
        %v8305 = vmax.f32 %v8251, 0.0
        %v8306 = vmax.f32 %v8279, 0.0
        %v8307 = vmax.f32 %v8197, 0.0
        %v8308 = vmax.f32 %v8225, 0.0
        %v8309 = vmax.f32 %v8253, 0.0
        %v8310 = vmax.f32 %v8281, 0.0
        %v8311 = vmax.f32 %v8200, 0.0
        %v8312 = vmax.f32 %v8228, 0.0
        %v8313 = vmax.f32 %v8256, 0.0
        %v8314 = vmax.f32 %v8284, 0.0
        %v8315 = vpack.c.bf16 %v7187, %v7185
        %v8316 = vpack.c.bf16 %v7273, %v7271
        %v8317 = vpack.c.bf16 %v7192, %v7190
        %v8318 = vpack.c.bf16 %v7278, %v7276
        %v8319 = vpack.c.bf16 %v7197, %v7195
        %v8320 = vpack.c.bf16 %v7283, %v7281
        %v8321 = vpack.c.bf16 %v7200, %v7200
        %v8322 = vpack.c.bf16 %v7286, %v7286
        %v8323 = vld [vmem:[%s15] sm:$0xff]
        %v8324 = vld [vmem:[%s15 + $0x8] sm:$0xff]
        %v8325 = vld [vmem:[%s15 + $0x10] sm:$0xff]
        %v8326 = vld [vmem:[%s15 + $0x18] sm:$0xff]
        %v8327 = vld [vmem:[%s15 + $0x20] sm:$0xff]
        %v8328 = vld [vmem:[%s15 + $0x28] sm:$0xff]
        %v8329 = vld [vmem:[%s15 + $0x30] sm:$0xff]
        %v8330 = vld [vmem:[%s15 + $0x38] sm:$0xff]
        %v8331 = vld [vmem:[%s15 + $0x40] sm:$0xff]
        %v8332 = vld [vmem:[%s15 + $0x48] sm:$0xff]
        %v8333 = vld [vmem:[%s15 + $0x50] sm:$0xff]
        %v8334 = vld [vmem:[%s15 + $0x58] sm:$0xff]
        %v8335 = vld [vmem:[%s15 + $0x60] sm:$0xff]
        %v8336 = vld [vmem:[%s15 + $0x68] sm:$0xff]
        %v8337 = vld [vmem:[%s15 + $0x70] sm:$0xff]
        %v8338 = vld [vmem:[%s15 + $0x78] sm:$0xff]
        %v8339 = vld [vmem:[%s15 + $0x80] sm:$0xff]
        %v8340 = vld [vmem:[%s15 + $0x88] sm:$0xff]
        %v8341 = vld [vmem:[%s15 + $0x90] sm:$0xff]
        %v8342 = vld [vmem:[%s15 + $0x98] sm:$0xff]
        %v8343 = vld [vmem:[%s15 + $0xa0] sm:$0xff]
        %v8344 = vld [vmem:[%s15 + $0xa8] sm:$0xff]
        %v8345 = vld [vmem:[%s15 + $0xb0] sm:$0xff]
        %v8346 = vld [vmem:[%s15 + $0xb8] sm:$0xff]
        %v8347 = vld [vmem:[%s15 + $0xc0] sm:$0xff]
        %v8348 = vld [vmem:[%s15 + $0xc8] sm:$0xff]
        %v8349 = vld [vmem:[%s15 + $0xd0] sm:$0xff]
        %v8350 = vld [vmem:[%s15 + $0xd8] sm:$0xff]
        %v8351 = vld [vmem:[%s15 + $0xe0] sm:$0xff]
        %v8352 = vld [vmem:[%s15 + $0xe8] sm:$0xff]
        %v8353 = vld [vmem:[%s15 + $0xf0] sm:$0xff]
        %v8354 = vld [vmem:[%s15 + $0xf8] sm:$0xff]
        %v8355 = vld [vmem:[%s15 + $0x100] sm:$0xff]
        %v8356 = vld [vmem:[%s15 + $0x108] sm:$0xff]
        %v8357 = vld [vmem:[%s15 + $0x110] sm:$0xff]
        %v8358 = vld [vmem:[%s15 + $0x118] sm:$0xff]
        %v8359 = vld [vmem:[%s15 + $0x120] sm:$0xff]
        %v8360 = vld [vmem:[%s15 + $0x128] sm:$0xff]
        %v8361 = vld [vmem:[%s15 + $0x130] sm:$0xff]
        %v8362 = vld [vmem:[%s15 + $0x138] sm:$0xff]
        %v8363 = vld [vmem:[%s15 + $0x140] sm:$0xff]
        %v8364 = vld [vmem:[%s15 + $0x148] sm:$0xff]
        %v8365 = vld [vmem:[%s15 + $0x150] sm:$0xff]
        %v8366 = vld [vmem:[%s15 + $0x158] sm:$0xff]
        %v8367 = vld [vmem:[%s15 + $0x160] sm:$0xff]
        %v8368 = vld [vmem:[%s15 + $0x168] sm:$0xff]
        %v8369 = vld [vmem:[%s15 + $0x170] sm:$0xff]
        %v8370 = vld [vmem:[%s15 + $0x178] sm:$0xff]
        %v8371 = vld [vmem:[%s15 + $0x180] sm:$0xff]
        %v8372 = vld [vmem:[%s15 + $0x188] sm:$0xff]
        %v8373 = vld [vmem:[%s15 + $0x190] sm:$0xff]
        %v8374 = vld [vmem:[%s15 + $0x198] sm:$0xff]
        %v8375 = vld [vmem:[%s15 + $0x1a0] sm:$0xff]
        %v8376 = vld [vmem:[%s15 + $0x1a8] sm:$0xff]
        %v8377 = vld [vmem:[%s15 + $0x1b0] sm:$0xff]
        %v8378 = vld [vmem:[%s15 + $0x1b8] sm:$0xff]
        %v8379 = vld [vmem:[%s15 + $0x1c0] sm:$0xff]
        %v8380 = vld [vmem:[%s15 + $0x1c8] sm:$0xff]
        %v8381 = vld [vmem:[%s15 + $0x1d0] sm:$0xff]
        %v8382 = vld [vmem:[%s15 + $0x1d8] sm:$0xff]
        %v8383 = vld [vmem:[%s15 + $0x1e0] sm:$0xff]
        %v8384 = vld [vmem:[%s15 + $0x1e8] sm:$0xff]
        %v8385 = vld [vmem:[%s15 + $0x1f0] sm:$0xff]
        %v8386 = vld [vmem:[%s15 + $0x1f8] sm:$0xff]
        %v8387 = vld [vmem:[%s16] sm:$0xf]
        %v8389 = vperm.slane %v8387, 0
        %v8390 = vperm.slane %v8387, 1
        %v8391 = vperm.slane %v8387, 2
        %v8392 = vperm.slane %v8387, 3
        %vm8397 = vsmask.f32 7424
        %v8399 = vshrl.u32 %v8315, 16
        %v8401 = vshll.u32 %v8315, 16
        %v8403 = vrot.slane %v8401, 1
        %v8404 = vor.u32 %v8399, %v8403
        %v8406 = vshll.u32 %v8317, 16
        %v8408 = vrot.slane %v8406, 1
        %v8409 = vsel %vm8397, %v8404, %v8408
        %v8411 = vshrl.u32 %v8316, 16
        %v8413 = vshll.u32 %v8316, 16
        %v8415 = vrot.slane %v8413, 1
        %v8416 = vor.u32 %v8411, %v8415
        %v8418 = vshll.u32 %v8318, 16
        %v8420 = vrot.slane %v8418, 1
        %v8421 = vsel %vm8397, %v8416, %v8420
        %v8422 = vshrl.u32 %v8317, 16
        %v8424 = vor.u32 %v8422, %v8408
        %v8426 = vshll.u32 %v8319, 16
        %v8428 = vrot.slane %v8426, 1
        %v8429 = vsel %vm8397, %v8424, %v8428
        %v8430 = vshrl.u32 %v8318, 16
        %v8432 = vor.u32 %v8430, %v8420
        %v8434 = vshll.u32 %v8320, 16
        %v8436 = vrot.slane %v8434, 1
        %v8437 = vsel %vm8397, %v8432, %v8436
        %v8438 = vshrl.u32 %v8319, 16
        %v8440 = vor.u32 %v8438, %v8428
        %v8442 = vshll.u32 %v8321, 16
        %v8444 = vrot.slane %v8442, 1
        %v8445 = vsel %vm8397, %v8440, %v8444
        %v8446 = vshrl.u32 %v8320, 16
        %v8448 = vor.u32 %v8446, %v8436
        %v8450 = vshll.u32 %v8322, 16
        %v8452 = vrot.slane %v8450, 1
        %v8453 = vsel %vm8397, %v8448, %v8452
        %v8454 = vshrl.u32 %v8321, 16
        %v8456 = vshrl.u32 %v8322, 16
        %v8530 = vunpack.c.l.b16 %v8323
        %v8531 = vunpack.c.h.b16 %v8323
        %v8532 = vunpack.c.l.b16 %v8324
        %v8533 = vunpack.c.h.b16 %v8324
        %v8534 = vunpack.c.l.b16 %v8325
        %v8535 = vunpack.c.h.b16 %v8325
        %v8536 = vunpack.c.l.b16 %v8326
        %v8537 = vunpack.c.h.b16 %v8326
        %v8538 = vunpack.c.l.b16 %v8327
        %v8539 = vunpack.c.h.b16 %v8327
        %v8540 = vunpack.c.l.b16 %v8328
        %v8541 = vunpack.c.h.b16 %v8328
        %v8542 = vunpack.c.l.b16 %v8329
        %v8543 = vunpack.c.h.b16 %v8329
        %v8544 = vunpack.c.l.b16 %v8330
        %v8545 = vunpack.c.h.b16 %v8330
        %v8546 = vunpack.c.l.b16 %v8331
        %v8547 = vunpack.c.h.b16 %v8331
        %v8548 = vunpack.c.l.b16 %v8332
        %v8549 = vunpack.c.h.b16 %v8332
        %v8550 = vunpack.c.l.b16 %v8333
        %v8551 = vunpack.c.h.b16 %v8333
        %v8552 = vunpack.c.l.b16 %v8334
        %v8553 = vunpack.c.h.b16 %v8334
        %v8554 = vunpack.c.l.b16 %v8335
        %v8555 = vunpack.c.h.b16 %v8335
        %v8556 = vunpack.c.l.b16 %v8336
        %v8557 = vunpack.c.h.b16 %v8336
        %v8558 = vunpack.c.l.b16 %v8337
        %v8559 = vunpack.c.h.b16 %v8337
        %v8560 = vunpack.c.l.b16 %v8338
        %v8561 = vunpack.c.h.b16 %v8338
        %v8562 = vunpack.c.l.b16 %v8339
        %v8563 = vunpack.c.h.b16 %v8339
        %v8564 = vunpack.c.l.b16 %v8340
        %v8565 = vunpack.c.h.b16 %v8340
        %v8566 = vunpack.c.l.b16 %v8341
        %v8567 = vunpack.c.h.b16 %v8341
        %v8568 = vunpack.c.l.b16 %v8342
        %v8569 = vunpack.c.h.b16 %v8342
        %v8570 = vunpack.c.l.b16 %v8343
        %v8571 = vunpack.c.h.b16 %v8343
        %v8572 = vunpack.c.l.b16 %v8344
        %v8573 = vunpack.c.h.b16 %v8344
        %v8574 = vunpack.c.l.b16 %v8345
        %v8575 = vunpack.c.h.b16 %v8345
        %v8576 = vunpack.c.l.b16 %v8346
        %v8577 = vunpack.c.h.b16 %v8346
        %v8578 = vunpack.c.l.b16 %v8347
        %v8579 = vunpack.c.h.b16 %v8347
        %v8580 = vunpack.c.l.b16 %v8348
        %v8581 = vunpack.c.h.b16 %v8348
        %v8582 = vunpack.c.l.b16 %v8349
        %v8583 = vunpack.c.h.b16 %v8349
        %v8584 = vunpack.c.l.b16 %v8350
        %v8585 = vunpack.c.h.b16 %v8350
        %v8586 = vunpack.c.l.b16 %v8351
        %v8587 = vunpack.c.h.b16 %v8351
        %v8588 = vunpack.c.l.b16 %v8352
        %v8589 = vunpack.c.h.b16 %v8352
        %v8590 = vunpack.c.l.b16 %v8353
        %v8591 = vunpack.c.h.b16 %v8353
        %v8592 = vunpack.c.l.b16 %v8354
        %v8593 = vunpack.c.h.b16 %v8354
        %v8594 = vunpack.c.l.b16 %v8355
        %v8595 = vunpack.c.h.b16 %v8355
        %v8596 = vunpack.c.l.b16 %v8356
        %v8597 = vunpack.c.h.b16 %v8356
        %v8598 = vunpack.c.l.b16 %v8357
        %v8599 = vunpack.c.h.b16 %v8357
        %v8600 = vunpack.c.l.b16 %v8358
        %v8601 = vunpack.c.h.b16 %v8358
        %v8602 = vunpack.c.l.b16 %v8359
        %v8603 = vunpack.c.h.b16 %v8359
        %v8604 = vunpack.c.l.b16 %v8360
        %v8605 = vunpack.c.h.b16 %v8360
        %v8606 = vunpack.c.l.b16 %v8361
        %v8607 = vunpack.c.h.b16 %v8361
        %v8608 = vunpack.c.l.b16 %v8362
        %v8609 = vunpack.c.h.b16 %v8362
        %v8610 = vunpack.c.l.b16 %v8363
        %v8611 = vunpack.c.h.b16 %v8363
        %v8612 = vunpack.c.l.b16 %v8364
        %v8613 = vunpack.c.h.b16 %v8364
        %v8614 = vunpack.c.l.b16 %v8365
        %v8615 = vunpack.c.h.b16 %v8365
        %v8616 = vunpack.c.l.b16 %v8366
        %v8617 = vunpack.c.h.b16 %v8366
        %v8618 = vunpack.c.l.b16 %v8367
        %v8619 = vunpack.c.h.b16 %v8367
        %v8620 = vunpack.c.l.b16 %v8368
        %v8621 = vunpack.c.h.b16 %v8368
        %v8622 = vunpack.c.l.b16 %v8369
        %v8623 = vunpack.c.h.b16 %v8369
        %v8624 = vunpack.c.l.b16 %v8370
        %v8625 = vunpack.c.h.b16 %v8370
        %v8626 = vunpack.c.l.b16 %v8371
        %v8627 = vunpack.c.h.b16 %v8371
        %v8628 = vunpack.c.l.b16 %v8372
        %v8629 = vunpack.c.h.b16 %v8372
        %v8630 = vunpack.c.l.b16 %v8373
        %v8631 = vunpack.c.h.b16 %v8373
        %v8632 = vunpack.c.l.b16 %v8374
        %v8633 = vunpack.c.h.b16 %v8374
        %v8634 = vunpack.c.l.b16 %v8375
        %v8635 = vunpack.c.h.b16 %v8375
        %v8636 = vunpack.c.l.b16 %v8376
        %v8637 = vunpack.c.h.b16 %v8376
        %v8638 = vunpack.c.l.b16 %v8377
        %v8639 = vunpack.c.h.b16 %v8377
        %v8640 = vunpack.c.l.b16 %v8378
        %v8641 = vunpack.c.h.b16 %v8378
        %v8642 = vunpack.c.l.b16 %v8379
        %v8643 = vunpack.c.h.b16 %v8379
        %v8644 = vunpack.c.l.b16 %v8380
        %v8645 = vunpack.c.h.b16 %v8380
        %v8646 = vunpack.c.l.b16 %v8381
        %v8647 = vunpack.c.h.b16 %v8381
        %v8648 = vunpack.c.l.b16 %v8382
        %v8649 = vunpack.c.h.b16 %v8382
        %v8650 = vunpack.c.l.b16 %v8383
        %v8651 = vunpack.c.h.b16 %v8383
        %v8652 = vunpack.c.l.b16 %v8384
        %v8653 = vunpack.c.h.b16 %v8384
        %v8654 = vunpack.c.l.b16 %v8385
        %v8655 = vunpack.c.h.b16 %v8385
        %v8656 = vunpack.c.l.b16 %v8386
        %v8657 = vunpack.c.h.b16 %v8386
        %v8658 = vpack.c.b16 %v8534, %v8530
        %v8659 = vpack.c.b16 %v8535, %v8531
        %v8660 = vpack.c.b16 %v8536, %v8532
        %v8661 = vpack.c.b16 %v8537, %v8533
        %v8662 = vpack.c.b16 %v8542, %v8538
        %v8663 = vpack.c.b16 %v8543, %v8539
        %v8664 = vpack.c.b16 %v8544, %v8540
        %v8665 = vpack.c.b16 %v8545, %v8541
        %v8666 = vpack.c.b16 %v8550, %v8546
        %v8667 = vpack.c.b16 %v8551, %v8547
        %v8668 = vpack.c.b16 %v8552, %v8548
        %v8669 = vpack.c.b16 %v8553, %v8549
        %v8670 = vpack.c.b16 %v8558, %v8554
        %v8671 = vpack.c.b16 %v8559, %v8555
        %v8672 = vpack.c.b16 %v8560, %v8556
        %v8673 = vpack.c.b16 %v8561, %v8557
        %v8674 = vpack.c.b16 %v8566, %v8562
        %v8675 = vpack.c.b16 %v8567, %v8563
        %v8676 = vpack.c.b16 %v8568, %v8564
        %v8677 = vpack.c.b16 %v8569, %v8565
        %v8678 = vpack.c.b16 %v8574, %v8570
        %v8679 = vpack.c.b16 %v8575, %v8571
        %v8680 = vpack.c.b16 %v8576, %v8572
        %v8681 = vpack.c.b16 %v8577, %v8573
        %v8682 = vpack.c.b16 %v8582, %v8578
        %v8683 = vpack.c.b16 %v8583, %v8579
        %v8684 = vpack.c.b16 %v8584, %v8580
        %v8685 = vpack.c.b16 %v8585, %v8581
        %v8686 = vpack.c.b16 %v8590, %v8586
        %v8687 = vpack.c.b16 %v8591, %v8587
        %v8688 = vpack.c.b16 %v8592, %v8588
        %v8689 = vpack.c.b16 %v8593, %v8589
        %v8690 = vpack.c.b16 %v8598, %v8594
        %v8691 = vpack.c.b16 %v8599, %v8595
        %v8692 = vpack.c.b16 %v8600, %v8596
        %v8693 = vpack.c.b16 %v8601, %v8597
        %v8694 = vpack.c.b16 %v8606, %v8602
        %v8695 = vpack.c.b16 %v8607, %v8603
        %v8696 = vpack.c.b16 %v8608, %v8604
        %v8697 = vpack.c.b16 %v8609, %v8605
        %v8698 = vpack.c.b16 %v8614, %v8610
        %v8699 = vpack.c.b16 %v8615, %v8611
        %v8700 = vpack.c.b16 %v8616, %v8612
        %v8701 = vpack.c.b16 %v8617, %v8613
        %v8702 = vpack.c.b16 %v8622, %v8618
        %v8703 = vpack.c.b16 %v8623, %v8619
        %v8704 = vpack.c.b16 %v8624, %v8620
        %v8705 = vpack.c.b16 %v8625, %v8621
        %v8706 = vpack.c.b16 %v8630, %v8626
        %v8707 = vpack.c.b16 %v8631, %v8627
        %v8708 = vpack.c.b16 %v8632, %v8628
        %v8709 = vpack.c.b16 %v8633, %v8629
        %v8710 = vpack.c.b16 %v8638, %v8634
        %v8711 = vpack.c.b16 %v8639, %v8635
        %v8712 = vpack.c.b16 %v8640, %v8636
        %v8713 = vpack.c.b16 %v8641, %v8637
        %v8714 = vpack.c.b16 %v8646, %v8642
        %v8715 = vpack.c.b16 %v8647, %v8643
        %v8716 = vpack.c.b16 %v8648, %v8644
        %v8717 = vpack.c.b16 %v8649, %v8645
        %v8718 = vpack.c.b16 %v8654, %v8650
        %v8719 = vpack.c.b16 %v8655, %v8651
        %v8720 = vpack.c.b16 %v8656, %v8652
        %v8721 = vpack.c.b16 %v8657, %v8653
        %8786 = vmatpush.bf16.msra.mxu0 %v8686
        %8787 = vmatpush.bf16.msra.mxu0 %v8682
        %8788 = vmatpush.bf16.msra.mxu0 %v8678
        %8789 = vmatpush.bf16.msra.mxu0 %v8674
        %8790 = vmatpush.bf16.msra.mxu0 %v8670
        %8791 = vmatpush.bf16.msra.mxu0 %v8666
        %8792 = vmatpush.bf16.msra.mxu0 %v8662
        %8793 = vmatpush.bf16.msra.mxu0 %v8658
        %8794 = vmatmul.bf16.gmra.mxu0 %v8409
        %v8795 = vpop.f32.mrf.mxu0
        %v8796 = vadd.f32 %v8389, %v8795
        %v8797 = vpop.f32.mrf.mxu0
        %v8798 = vadd.f32 %v8389, %v8797
        %8799 = vmatmul.bf16.gmra.mxu0 %v8429
        %v8800 = vpop.f32.mrf.mxu0
        %v8801 = vadd.f32 %v8389, %v8800
        %v8802 = vpop.f32.mrf.mxu0
        %v8803 = vadd.f32 %v8389, %v8802
        %8804 = vmatmul.bf16.gmra.mxu0 %v8445
        %v8805 = vpop.f32.mrf.mxu0
        %v8806 = vadd.f32 %v8389, %v8805
        %v8807 = vpop.f32.mrf.mxu0
        %v8808 = vadd.f32 %v8389, %v8807
        %8809 = vmatmul.bf16.gmra.mxu0 %v8454
        %v8810 = vpop.f32.mrf.mxu0
        %v8811 = vadd.f32 %v8389, %v8810
        %v8812 = vpop.f32.mrf.mxu0
        %8813 = vdwg.mxu0
        %8814 = vmatpush.bf16.msra.mxu0 %v8718
        %8815 = vmatpush.bf16.msra.mxu0 %v8714
        %8816 = vmatpush.bf16.msra.mxu0 %v8710
        %8817 = vmatpush.bf16.msra.mxu0 %v8706
        %8818 = vmatpush.bf16.msra.mxu0 %v8702
        %8819 = vmatpush.bf16.msra.mxu0 %v8698
        %8820 = vmatpush.bf16.msra.mxu0 %v8694
        %8821 = vmatpush.bf16.msra.mxu0 %v8690
        %8822 = vmatmul.bf16.gmra.mxu0 %v8421
        %v8823 = vpop.f32.mrf.mxu0
        %v8824 = vadd.f32 %v8796, %v8823
        %v8825 = vpop.f32.mrf.mxu0
        %v8826 = vadd.f32 %v8798, %v8825
        %8827 = vmatmul.bf16.gmra.mxu0 %v8437
        %v8828 = vpop.f32.mrf.mxu0
        %v8829 = vadd.f32 %v8801, %v8828
        %v8830 = vpop.f32.mrf.mxu0
        %v8831 = vadd.f32 %v8803, %v8830
        %8832 = vmatmul.bf16.gmra.mxu0 %v8453
        %v8833 = vpop.f32.mrf.mxu0
        %v8834 = vadd.f32 %v8806, %v8833
        %v8835 = vpop.f32.mrf.mxu0
        %v8836 = vadd.f32 %v8808, %v8835
        %8837 = vmatmul.bf16.gmra.mxu0 %v8456
        %v8838 = vpop.f32.mrf.mxu0
        %v8839 = vadd.f32 %v8811, %v8838
        %v8840 = vpop.f32.mrf.mxu0
        %8841 = vdwg.mxu0
        %8842 = vmatpush.bf16.msra.mxu0 %v8687
        %8843 = vmatpush.bf16.msra.mxu0 %v8683
        %8844 = vmatpush.bf16.msra.mxu0 %v8679
        %8845 = vmatpush.bf16.msra.mxu0 %v8675
        %8846 = vmatpush.bf16.msra.mxu0 %v8671
        %8847 = vmatpush.bf16.msra.mxu0 %v8667
        %8848 = vmatpush.bf16.msra.mxu0 %v8663
        %8849 = vmatpush.bf16.msra.mxu0 %v8659
        %8850 = vmatmul.bf16.gmra.mxu0 %v8409
        %v8851 = vpop.f32.mrf.mxu0
        %v8852 = vadd.f32 %v8390, %v8851
        %v8853 = vpop.f32.mrf.mxu0
        %v8854 = vadd.f32 %v8390, %v8853
        %8855 = vmatmul.bf16.gmra.mxu0 %v8429
        %v8856 = vpop.f32.mrf.mxu0
        %v8857 = vadd.f32 %v8390, %v8856
        %v8858 = vpop.f32.mrf.mxu0
        %v8859 = vadd.f32 %v8390, %v8858
        %8860 = vmatmul.bf16.gmra.mxu0 %v8445
        %v8861 = vpop.f32.mrf.mxu0
        %v8862 = vadd.f32 %v8390, %v8861
        %v8863 = vpop.f32.mrf.mxu0
        %v8864 = vadd.f32 %v8390, %v8863
        %8865 = vmatmul.bf16.gmra.mxu0 %v8454
        %v8866 = vpop.f32.mrf.mxu0
        %v8867 = vadd.f32 %v8390, %v8866
        %v8868 = vpop.f32.mrf.mxu0
        %8869 = vdwg.mxu0
        %8870 = vmatpush.bf16.msra.mxu0 %v8719
        %8871 = vmatpush.bf16.msra.mxu0 %v8715
        %8872 = vmatpush.bf16.msra.mxu0 %v8711
        %8873 = vmatpush.bf16.msra.mxu0 %v8707
        %8874 = vmatpush.bf16.msra.mxu0 %v8703
        %8875 = vmatpush.bf16.msra.mxu0 %v8699
        %8876 = vmatpush.bf16.msra.mxu0 %v8695
        %8877 = vmatpush.bf16.msra.mxu0 %v8691
        %8878 = vmatmul.bf16.gmra.mxu0 %v8421
        %v8879 = vpop.f32.mrf.mxu0
        %v8880 = vadd.f32 %v8852, %v8879
        %v8881 = vpop.f32.mrf.mxu0
        %v8882 = vadd.f32 %v8854, %v8881
        %8883 = vmatmul.bf16.gmra.mxu0 %v8437
        %v8884 = vpop.f32.mrf.mxu0
        %v8885 = vadd.f32 %v8857, %v8884
        %v8886 = vpop.f32.mrf.mxu0
        %v8887 = vadd.f32 %v8859, %v8886
        %8888 = vmatmul.bf16.gmra.mxu0 %v8453
        %v8889 = vpop.f32.mrf.mxu0
        %v8890 = vadd.f32 %v8862, %v8889
        %v8891 = vpop.f32.mrf.mxu0
        %v8892 = vadd.f32 %v8864, %v8891
        %8893 = vmatmul.bf16.gmra.mxu0 %v8456
        %v8894 = vpop.f32.mrf.mxu0
        %v8895 = vadd.f32 %v8867, %v8894
        %v8896 = vpop.f32.mrf.mxu0
        %8897 = vdwg.mxu0
        %8898 = vmatpush.bf16.msra.mxu0 %v8688
        %8899 = vmatpush.bf16.msra.mxu0 %v8684
        %8900 = vmatpush.bf16.msra.mxu0 %v8680
        %8901 = vmatpush.bf16.msra.mxu0 %v8676
        %8902 = vmatpush.bf16.msra.mxu0 %v8672
        %8903 = vmatpush.bf16.msra.mxu0 %v8668
        %8904 = vmatpush.bf16.msra.mxu0 %v8664
        %8905 = vmatpush.bf16.msra.mxu0 %v8660
        %8906 = vmatmul.bf16.gmra.mxu0 %v8409
        %v8907 = vpop.f32.mrf.mxu0
        %v8908 = vadd.f32 %v8391, %v8907
        %v8909 = vpop.f32.mrf.mxu0
        %v8910 = vadd.f32 %v8391, %v8909
        %8911 = vmatmul.bf16.gmra.mxu0 %v8429
        %v8912 = vpop.f32.mrf.mxu0
        %v8913 = vadd.f32 %v8391, %v8912
        %v8914 = vpop.f32.mrf.mxu0
        %v8915 = vadd.f32 %v8391, %v8914
        %8916 = vmatmul.bf16.gmra.mxu0 %v8445
        %v8917 = vpop.f32.mrf.mxu0
        %v8918 = vadd.f32 %v8391, %v8917
        %v8919 = vpop.f32.mrf.mxu0
        %v8920 = vadd.f32 %v8391, %v8919
        %8921 = vmatmul.bf16.gmra.mxu0 %v8454
        %v8922 = vpop.f32.mrf.mxu0
        %v8923 = vadd.f32 %v8391, %v8922
        %v8924 = vpop.f32.mrf.mxu0
        %8925 = vdwg.mxu0
        %8926 = vmatpush.bf16.msra.mxu0 %v8720
        %8927 = vmatpush.bf16.msra.mxu0 %v8716
        %8928 = vmatpush.bf16.msra.mxu0 %v8712
        %8929 = vmatpush.bf16.msra.mxu0 %v8708
        %8930 = vmatpush.bf16.msra.mxu0 %v8704
        %8931 = vmatpush.bf16.msra.mxu0 %v8700
        %8932 = vmatpush.bf16.msra.mxu0 %v8696
        %8933 = vmatpush.bf16.msra.mxu0 %v8692
        %8934 = vmatmul.bf16.gmra.mxu0 %v8421
        %v8935 = vpop.f32.mrf.mxu0
        %v8936 = vadd.f32 %v8908, %v8935
        %v8937 = vpop.f32.mrf.mxu0
        %v8938 = vadd.f32 %v8910, %v8937
        %8939 = vmatmul.bf16.gmra.mxu0 %v8437
        %v8940 = vpop.f32.mrf.mxu0
        %v8941 = vadd.f32 %v8913, %v8940
        %v8942 = vpop.f32.mrf.mxu0
        %v8943 = vadd.f32 %v8915, %v8942
        %8944 = vmatmul.bf16.gmra.mxu0 %v8453
        %v8945 = vpop.f32.mrf.mxu0
        %v8946 = vadd.f32 %v8918, %v8945
        %v8947 = vpop.f32.mrf.mxu0
        %v8948 = vadd.f32 %v8920, %v8947
        %8949 = vmatmul.bf16.gmra.mxu0 %v8456
        %v8950 = vpop.f32.mrf.mxu0
        %v8951 = vadd.f32 %v8923, %v8950
        %v8952 = vpop.f32.mrf.mxu0
        %8953 = vdwg.mxu0
        %8954 = vmatpush.bf16.msra.mxu0 %v8689
        %8955 = vmatpush.bf16.msra.mxu0 %v8685
        %8956 = vmatpush.bf16.msra.mxu0 %v8681
        %8957 = vmatpush.bf16.msra.mxu0 %v8677
        %8958 = vmatpush.bf16.msra.mxu0 %v8673
        %8959 = vmatpush.bf16.msra.mxu0 %v8669
        %8960 = vmatpush.bf16.msra.mxu0 %v8665
        %8961 = vmatpush.bf16.msra.mxu0 %v8661
        %8962 = vmatmul.bf16.gmra.mxu0 %v8409
        %v8963 = vpop.f32.mrf.mxu0
        %v8964 = vadd.f32 %v8392, %v8963
        %v8965 = vpop.f32.mrf.mxu0
        %v8966 = vadd.f32 %v8392, %v8965
        %8967 = vmatmul.bf16.gmra.mxu0 %v8429
        %v8968 = vpop.f32.mrf.mxu0
        %v8969 = vadd.f32 %v8392, %v8968
        %v8970 = vpop.f32.mrf.mxu0
        %v8971 = vadd.f32 %v8392, %v8970
        %8972 = vmatmul.bf16.gmra.mxu0 %v8445
        %v8973 = vpop.f32.mrf.mxu0
        %v8974 = vadd.f32 %v8392, %v8973
        %v8975 = vpop.f32.mrf.mxu0
        %v8976 = vadd.f32 %v8392, %v8975
        %8977 = vmatmul.bf16.gmra.mxu0 %v8454
        %v8978 = vpop.f32.mrf.mxu0
        %v8979 = vadd.f32 %v8392, %v8978
        %v8980 = vpop.f32.mrf.mxu0
        %8981 = vdwg.mxu0
        %8982 = vmatpush.bf16.msra.mxu0 %v8721
        %8983 = vmatpush.bf16.msra.mxu0 %v8717
        %8984 = vmatpush.bf16.msra.mxu0 %v8713
        %8985 = vmatpush.bf16.msra.mxu0 %v8709
        %8986 = vmatpush.bf16.msra.mxu0 %v8705
        %8987 = vmatpush.bf16.msra.mxu0 %v8701
        %8988 = vmatpush.bf16.msra.mxu0 %v8697
        %8989 = vmatpush.bf16.msra.mxu0 %v8693
        %8990 = vmatmul.bf16.gmra.mxu0 %v8421
        %v8991 = vpop.f32.mrf.mxu0
        %v8992 = vadd.f32 %v8964, %v8991
        %v8993 = vpop.f32.mrf.mxu0
        %v8994 = vadd.f32 %v8966, %v8993
        %8995 = vmatmul.bf16.gmra.mxu0 %v8437
        %v8996 = vpop.f32.mrf.mxu0
        %v8997 = vadd.f32 %v8969, %v8996
        %v8998 = vpop.f32.mrf.mxu0
        %v8999 = vadd.f32 %v8971, %v8998
        %9000 = vmatmul.bf16.gmra.mxu0 %v8453
        %v9001 = vpop.f32.mrf.mxu0
        %v9002 = vadd.f32 %v8974, %v9001
        %v9003 = vpop.f32.mrf.mxu0
        %v9004 = vadd.f32 %v8976, %v9003
        %9005 = vmatmul.bf16.gmra.mxu0 %v8456
        %v9006 = vpop.f32.mrf.mxu0
        %v9007 = vadd.f32 %v8979, %v9006
        %v9008 = vpop.f32.mrf.mxu0
        %9009 = vdwg.mxu0
        %v9010 = vmax.f32 %v8824, 0.0
        %v9011 = vmax.f32 %v8880, 0.0
        %v9012 = vmax.f32 %v8936, 0.0
        %v9013 = vmax.f32 %v8992, 0.0
        %v9014 = vmax.f32 %v8826, 0.0
        %v9015 = vmax.f32 %v8882, 0.0
        %v9016 = vmax.f32 %v8938, 0.0
        %v9017 = vmax.f32 %v8994, 0.0
        %v9018 = vmax.f32 %v8829, 0.0
        %v9019 = vmax.f32 %v8885, 0.0
        %v9020 = vmax.f32 %v8941, 0.0
        %v9021 = vmax.f32 %v8997, 0.0
        %v9022 = vmax.f32 %v8831, 0.0
        %v9023 = vmax.f32 %v8887, 0.0
        %v9024 = vmax.f32 %v8943, 0.0
        %v9025 = vmax.f32 %v8999, 0.0
        %v9026 = vmax.f32 %v8834, 0.0
        %v9027 = vmax.f32 %v8890, 0.0
        %v9028 = vmax.f32 %v8946, 0.0
        %v9029 = vmax.f32 %v9002, 0.0
        %v9030 = vmax.f32 %v8836, 0.0
        %v9031 = vmax.f32 %v8892, 0.0
        %v9032 = vmax.f32 %v8948, 0.0
        %v9033 = vmax.f32 %v9004, 0.0
        %v9034 = vmax.f32 %v8839, 0.0
        %v9035 = vmax.f32 %v8895, 0.0
        %v9036 = vmax.f32 %v8951, 0.0
        %v9037 = vmax.f32 %v9007, 0.0
        %v9038 = vmul.f32 %v8287, 0.4351293
        %v9039 = vmul.f32 %v8288, 0.4351293
        %v9040 = vmul.f32 %v8289, 0.4351293
        %v9041 = vmul.f32 %v8290, 0.4351293
        %v9042 = vmul.f32 %v8291, 0.4351293
        %v9043 = vmul.f32 %v8292, 0.4351293
        %v9044 = vmul.f32 %v8293, 0.4351293
        %v9045 = vmul.f32 %v8294, 0.4351293
        %v9046 = vmul.f32 %v8295, 0.4351293
        %v9047 = vmul.f32 %v8296, 0.4351293
        %v9048 = vmul.f32 %v8297, 0.4351293
        %v9049 = vmul.f32 %v8298, 0.4351293
        %v9050 = vmul.f32 %v8299, 0.4351293
        %v9051 = vmul.f32 %v8300, 0.4351293
        %v9052 = vmul.f32 %v8301, 0.4351293
        %v9053 = vmul.f32 %v8302, 0.4351293
        %v9054 = vmul.f32 %v8303, 0.4351293
        %v9055 = vmul.f32 %v8304, 0.4351293
        %v9056 = vmul.f32 %v8305, 0.4351293
        %v9057 = vmul.f32 %v8306, 0.4351293
        %v9058 = vmul.f32 %v8307, 0.4351293
        %v9059 = vmul.f32 %v8308, 0.4351293
        %v9060 = vmul.f32 %v8309, 0.4351293
        %v9061 = vmul.f32 %v8310, 0.4351293
        %v9062 = vmul.f32 %v8311, 0.4351293
        %v9063 = vmul.f32 %v8312, 0.4351293
        %v9064 = vmul.f32 %v8313, 0.4351293
        %v9065 = vmul.f32 %v8314, 0.4351293
        %v9066 = vmul.f32 %v9010, 0.56487066
        %v9067 = vmul.f32 %v9011, 0.56487066
        %v9068 = vmul.f32 %v9012, 0.56487066
        %v9069 = vmul.f32 %v9013, 0.56487066
        %v9070 = vmul.f32 %v9014, 0.56487066
        %v9071 = vmul.f32 %v9015, 0.56487066
        %v9072 = vmul.f32 %v9016, 0.56487066
        %v9073 = vmul.f32 %v9017, 0.56487066
        %v9074 = vmul.f32 %v9018, 0.56487066
        %v9075 = vmul.f32 %v9019, 0.56487066
        %v9076 = vmul.f32 %v9020, 0.56487066
        %v9077 = vmul.f32 %v9021, 0.56487066
        %v9078 = vmul.f32 %v9022, 0.56487066
        %v9079 = vmul.f32 %v9023, 0.56487066
        %v9080 = vmul.f32 %v9024, 0.56487066
        %v9081 = vmul.f32 %v9025, 0.56487066
        %v9082 = vmul.f32 %v9026, 0.56487066
        %v9083 = vmul.f32 %v9027, 0.56487066
        %v9084 = vmul.f32 %v9028, 0.56487066
        %v9085 = vmul.f32 %v9029, 0.56487066
        %v9086 = vmul.f32 %v9030, 0.56487066
        %v9087 = vmul.f32 %v9031, 0.56487066
        %v9088 = vmul.f32 %v9032, 0.56487066
        %v9089 = vmul.f32 %v9033, 0.56487066
        %v9090 = vmul.f32 %v9034, 0.56487066
        %v9091 = vmul.f32 %v9035, 0.56487066
        %v9092 = vmul.f32 %v9036, 0.56487066
        %v9093 = vmul.f32 %v9037, 0.56487066
        %v9094 = vadd.f32 %v9038, %v9066
        %v9095 = vadd.f32 %v9039, %v9067
        %v9096 = vadd.f32 %v9040, %v9068
        %v9097 = vadd.f32 %v9041, %v9069
        %v9098 = vadd.f32 %v9042, %v9070
        %v9099 = vadd.f32 %v9043, %v9071
        %v9100 = vadd.f32 %v9044, %v9072
        %v9101 = vadd.f32 %v9045, %v9073
        %v9102 = vadd.f32 %v9046, %v9074
        %v9103 = vadd.f32 %v9047, %v9075
        %v9104 = vadd.f32 %v9048, %v9076
        %v9105 = vadd.f32 %v9049, %v9077
        %v9106 = vadd.f32 %v9050, %v9078
        %v9107 = vadd.f32 %v9051, %v9079
        %v9108 = vadd.f32 %v9052, %v9080
        %v9109 = vadd.f32 %v9053, %v9081
        %v9110 = vadd.f32 %v9054, %v9082
        %v9111 = vadd.f32 %v9055, %v9083
        %v9112 = vadd.f32 %v9056, %v9084
        %v9113 = vadd.f32 %v9057, %v9085
        %v9114 = vadd.f32 %v9058, %v9086
        %v9115 = vadd.f32 %v9059, %v9087
        %v9116 = vadd.f32 %v9060, %v9088
        %v9117 = vadd.f32 %v9061, %v9089
        %v9118 = vadd.f32 %v9062, %v9090
        %v9119 = vadd.f32 %v9063, %v9091
        %v9120 = vadd.f32 %v9064, %v9092
        %v9121 = vadd.f32 %v9065, %v9093
        %v9122 = vmul.f32 %v9094, 0.9260908
        %v9123 = vmul.f32 %v9095, 0.9260908
        %v9124 = vmul.f32 %v9096, 0.9260908
        %v9125 = vmul.f32 %v9097, 0.9260908
        %v9126 = vmul.f32 %v9098, 0.9260908
        %v9127 = vmul.f32 %v9099, 0.9260908
        %v9128 = vmul.f32 %v9100, 0.9260908
        %v9129 = vmul.f32 %v9101, 0.9260908
        %v9130 = vmul.f32 %v9102, 0.9260908
        %v9131 = vmul.f32 %v9103, 0.9260908
        %v9132 = vmul.f32 %v9104, 0.9260908
        %v9133 = vmul.f32 %v9105, 0.9260908
        %v9134 = vmul.f32 %v9106, 0.9260908
        %v9135 = vmul.f32 %v9107, 0.9260908
        %v9136 = vmul.f32 %v9108, 0.9260908
        %v9137 = vmul.f32 %v9109, 0.9260908
        %v9138 = vmul.f32 %v9110, 0.9260908
        %v9139 = vmul.f32 %v9111, 0.9260908
        %v9140 = vmul.f32 %v9112, 0.9260908
        %v9141 = vmul.f32 %v9113, 0.9260908
        %v9142 = vmul.f32 %v9114, 0.9260908
        %v9143 = vmul.f32 %v9115, 0.9260908
        %v9144 = vmul.f32 %v9116, 0.9260908
        %v9145 = vmul.f32 %v9117, 0.9260908
        %v9146 = vmul.f32 %v9118, 0.9260908
        %v9147 = vmul.f32 %v9119, 0.9260908
        %v9148 = vmul.f32 %v9120, 0.9260908
        %v9149 = vmul.f32 %v9121, 0.9260908
        %v9150 = vmul.f32 %v7915, 0.073909245
        %v9151 = vmul.f32 %v7916, 0.073909245
        %v9152 = vmul.f32 %v7917, 0.073909245
        %v9153 = vmul.f32 %v7918, 0.073909245
        %v9154 = vmul.f32 %v7919, 0.073909245
        %v9155 = vmul.f32 %v7920, 0.073909245
        %v9156 = vmul.f32 %v7921, 0.073909245
        %v9157 = vmul.f32 %v7922, 0.073909245
        %v9158 = vmul.f32 %v7923, 0.073909245
        %v9159 = vmul.f32 %v7924, 0.073909245
        %v9160 = vmul.f32 %v7925, 0.073909245
        %v9161 = vmul.f32 %v7926, 0.073909245
        %v9162 = vmul.f32 %v7927, 0.073909245
        %v9163 = vmul.f32 %v7928, 0.073909245
        %v9164 = vmul.f32 %v7929, 0.073909245
        %v9165 = vmul.f32 %v7930, 0.073909245
        %v9166 = vmul.f32 %v7931, 0.073909245
        %v9167 = vmul.f32 %v7932, 0.073909245
        %v9168 = vmul.f32 %v7933, 0.073909245
        %v9169 = vmul.f32 %v7934, 0.073909245
        %v9170 = vmul.f32 %v7935, 0.073909245
        %v9171 = vmul.f32 %v7936, 0.073909245
        %v9172 = vmul.f32 %v7937, 0.073909245
        %v9173 = vmul.f32 %v7938, 0.073909245
        %v9174 = vmul.f32 %v7939, 0.073909245
        %v9175 = vmul.f32 %v7940, 0.073909245
        %v9176 = vmul.f32 %v7941, 0.073909245
        %v9177 = vmul.f32 %v7942, 0.073909245
        %v9178 = vadd.f32 %v9122, %v9150
        %v9179 = vadd.f32 %v9123, %v9151
        %v9180 = vadd.f32 %v9124, %v9152
        %v9181 = vadd.f32 %v9125, %v9153
        %v9182 = vadd.f32 %v9126, %v9154
        %v9183 = vadd.f32 %v9127, %v9155
        %v9184 = vadd.f32 %v9128, %v9156
        %v9185 = vadd.f32 %v9129, %v9157
        %v9186 = vadd.f32 %v9130, %v9158
        %v9187 = vadd.f32 %v9131, %v9159
        %v9188 = vadd.f32 %v9132, %v9160
        %v9189 = vadd.f32 %v9133, %v9161
        %v9190 = vadd.f32 %v9134, %v9162
        %v9191 = vadd.f32 %v9135, %v9163
        %v9192 = vadd.f32 %v9136, %v9164
        %v9193 = vadd.f32 %v9137, %v9165
        %v9194 = vadd.f32 %v9138, %v9166
        %v9195 = vadd.f32 %v9139, %v9167
        %v9196 = vadd.f32 %v9140, %v9168
        %v9197 = vadd.f32 %v9141, %v9169
        %v9198 = vadd.f32 %v9142, %v9170
        %v9199 = vadd.f32 %v9143, %v9171
        %v9200 = vadd.f32 %v9144, %v9172
        %v9201 = vadd.f32 %v9145, %v9173
        %v9202 = vadd.f32 %v9146, %v9174
        %v9203 = vadd.f32 %v9147, %v9175
        %v9204 = vadd.f32 %v9148, %v9176
        %v9205 = vadd.f32 %v9149, %v9177
        %v9206 = vadd.f32 %v9178, %v9182
        %v9207 = vadd.f32 %v9206, %v9186
        %v9208 = vadd.f32 %v9207, %v9190
        %v9209 = vadd.f32 %v9208, %v9194
        %v9210 = vadd.f32 %v9209, %v9198
        %vm9211 = vcmask 1040384
        %v9212 = vsel %vm9211, %v9202, 0.0
        %v9213 = vadd.f32 %v9210, %v9212
        %v9214 = vrot.slane %v9213, 4
        %v9215 = vadd.f32 %v9213, %v9214
        %v9216 = vrot.slane %v9215, 2
        %v9217 = vadd.f32 %v9215, %v9216
        %v9218 = vrot.slane %v9217, 1
        %v9219 = vadd.f32 %v9217, %v9218
        %v9220 = vadd.f32 %v9179, %v9183
        %v9221 = vadd.f32 %v9220, %v9187
        %v9222 = vadd.f32 %v9221, %v9191
        %v9223 = vadd.f32 %v9222, %v9195
        %v9224 = vadd.f32 %v9223, %v9199
        %v9225 = vsel %vm9211, %v9203, 0.0
        %v9226 = vadd.f32 %v9224, %v9225
        %v9227 = vrot.slane %v9226, 4
        %v9228 = vadd.f32 %v9226, %v9227
        %v9229 = vrot.slane %v9228, 2
        %v9230 = vadd.f32 %v9228, %v9229
        %v9231 = vrot.slane %v9230, 1
        %v9232 = vadd.f32 %v9230, %v9231
        %v9233 = vadd.f32 %v9180, %v9184
        %v9234 = vadd.f32 %v9233, %v9188
        %v9235 = vadd.f32 %v9234, %v9192
        %v9236 = vadd.f32 %v9235, %v9196
        %v9237 = vadd.f32 %v9236, %v9200
        %v9238 = vsel %vm9211, %v9204, 0.0
        %v9239 = vadd.f32 %v9237, %v9238
        %v9240 = vrot.slane %v9239, 4
        %v9241 = vadd.f32 %v9239, %v9240
        %v9242 = vrot.slane %v9241, 2
        %v9243 = vadd.f32 %v9241, %v9242
        %v9244 = vrot.slane %v9243, 1
        %v9245 = vadd.f32 %v9243, %v9244
        %v9246 = vadd.f32 %v9181, %v9185
        %v9247 = vadd.f32 %v9246, %v9189
        %v9248 = vadd.f32 %v9247, %v9193
        %v9249 = vadd.f32 %v9248, %v9197
        %v9250 = vadd.f32 %v9249, %v9201
        %v9251 = vsel %vm9211, %v9205, 0.0
        %v9252 = vadd.f32 %v9250, %v9251
        %v9253 = vrot.slane %v9252, 4
        %v9254 = vadd.f32 %v9252, %v9253
        %v9255 = vrot.slane %v9254, 2
        %v9256 = vadd.f32 %v9254, %v9255
        %v9257 = vrot.slane %v9256, 1
        %v9258 = vadd.f32 %v9256, %v9257
        %v9259 = vrcp.pop 49.0
        %v9260 = vmul.f32 49.0, %v9259
        %v9261 = vsub.f32 1.0, %v9260
        %v9262 = vmul.f32 %v9259, %v9261
        %v9263 = vadd.f32 %v9259, %v9262
        %vm9264 = vweird.f32 %v9259
        %v9265 = vsel %vm9264, %v9259, %v9263
        %v9266 = vmul.f32 %v9219, %v9265
        %v9267 = vmul.f32 %v9232, %v9265
        %v9268 = vmul.f32 %v9245, %v9265
        %v9269 = vmul.f32 %v9258, %v9265
        %v9270 = vpack.c.bf16 %v9266, %v9266
        %v9271 = vpack.c.bf16 %v9267, %v9267
        %v9272 = vpack.c.bf16 %v9268, %v9268
        %v9273 = vpack.c.bf16 %v9269, %v9269
        %v9274 = vld [vmem:[%s17] sm:$0xf]
        %v9275 = vld [vmem:[%s17 + $0x4] sm:$0xf]
        %v9276 = vld [vmem:[%s17 + $0x8] sm:$0xf]
        %v9277 = vld [vmem:[%s17 + $0xc] sm:$0xf]
        %v9278 = vld [vmem:[%s17 + $0x10] sm:$0xf]
        %v9279 = vld [vmem:[%s17 + $0x14] sm:$0xf]
        %v9280 = vld [vmem:[%s17 + $0x18] sm:$0xf]
        %v9281 = vld [vmem:[%s17 + $0x1c] sm:$0xf]
        %v9282 = vld [vmem:[%s17 + $0x20] sm:$0xf]
        %v9283 = vld [vmem:[%s17 + $0x24] sm:$0xf]
        %v9284 = vld [vmem:[%s17 + $0x28] sm:$0xf]
        %v9285 = vld [vmem:[%s17 + $0x2c] sm:$0xf]
        %v9286 = vld [vmem:[%s17 + $0x30] sm:$0xf]
        %v9287 = vld [vmem:[%s17 + $0x34] sm:$0xf]
        %v9288 = vld [vmem:[%s17 + $0x38] sm:$0xf]
        %v9289 = vld [vmem:[%s17 + $0x3c] sm:$0xf]
        %v9290 = vld [vmem:[%s17 + $0x40] sm:$0xf]
        %v9291 = vld [vmem:[%s17 + $0x44] sm:$0xf]
        %v9292 = vld [vmem:[%s17 + $0x48] sm:$0xf]
        %v9293 = vld [vmem:[%s17 + $0x4c] sm:$0xf]
        %v9294 = vld [vmem:[%s17 + $0x50] sm:$0xf]
        %v9295 = vld [vmem:[%s17 + $0x54] sm:$0xf]
        %v9296 = vld [vmem:[%s17 + $0x58] sm:$0xf]
        %v9297 = vld [vmem:[%s17 + $0x5c] sm:$0xf]
        %v9298 = vld [vmem:[%s17 + $0x60] sm:$0xf]
        %v9299 = vld [vmem:[%s17 + $0x64] sm:$0xf]
        %v9300 = vld [vmem:[%s17 + $0x68] sm:$0xf]
        %v9301 = vld [vmem:[%s17 + $0x6c] sm:$0xf]
        %v9302 = vld [vmem:[%s17 + $0x70] sm:$0xf]
        %v9303 = vld [vmem:[%s17 + $0x74] sm:$0xf]
        %v9304 = vld [vmem:[%s17 + $0x78] sm:$0xf]
        %v9305 = vld [vmem:[%s17 + $0x7c] sm:$0xf]
        %v9306 = vld [vmem:[%s17 + $0x80] sm:$0xf]
        %v9307 = vld [vmem:[%s17 + $0x84] sm:$0xf]
        %v9308 = vld [vmem:[%s17 + $0x88] sm:$0xf]
        %v9309 = vld [vmem:[%s17 + $0x8c] sm:$0xf]
        %v9310 = vld [vmem:[%s17 + $0x90] sm:$0xf]
        %v9311 = vld [vmem:[%s17 + $0x94] sm:$0xf]
        %v9312 = vld [vmem:[%s17 + $0x98] sm:$0xf]
        %v9313 = vld [vmem:[%s17 + $0x9c] sm:$0xf]
        %v9314 = vld [vmem:[%s17 + $0xa0] sm:$0xf]
        %v9315 = vld [vmem:[%s17 + $0xa4] sm:$0xf]
        %v9316 = vld [vmem:[%s17 + $0xa8] sm:$0xf]
        %v9317 = vld [vmem:[%s17 + $0xac] sm:$0xf]
        %v9318 = vld [vmem:[%s17 + $0xb0] sm:$0xf]
        %v9319 = vld [vmem:[%s17 + $0xb4] sm:$0xf]
        %v9320 = vld [vmem:[%s17 + $0xb8] sm:$0xf]
        %v9321 = vld [vmem:[%s17 + $0xbc] sm:$0xf]
        %v9322 = vld [vmem:[%s17 + $0xc0] sm:$0xf]
        %v9323 = vld [vmem:[%s17 + $0xc4] sm:$0xf]
        %v9324 = vld [vmem:[%s17 + $0xc8] sm:$0xf]
        %v9325 = vld [vmem:[%s17 + $0xcc] sm:$0xf]
        %v9326 = vld [vmem:[%s17 + $0xd0] sm:$0xf]
        %v9327 = vld [vmem:[%s17 + $0xd4] sm:$0xf]
        %v9328 = vld [vmem:[%s17 + $0xd8] sm:$0xf]
        %v9329 = vld [vmem:[%s17 + $0xdc] sm:$0xf]
        %v9330 = vld [vmem:[%s17 + $0xe0] sm:$0xf]
        %v9331 = vld [vmem:[%s17 + $0xe4] sm:$0xf]
        %v9332 = vld [vmem:[%s17 + $0xe8] sm:$0xf]
        %v9333 = vld [vmem:[%s17 + $0xec] sm:$0xf]
        %v9334 = vld [vmem:[%s17 + $0xf0] sm:$0xf]
        %v9335 = vld [vmem:[%s17 + $0xf4] sm:$0xf]
        %v9336 = vld [vmem:[%s17 + $0xf8] sm:$0xf]
        %v9337 = vld [vmem:[%s17 + $0xfc] sm:$0xf]
        %v9338 = vld [vmem:[%s18] sm:$0x1]
        %v9403 = vunpack.c.l.b16 %v9274
        %v9404 = vunpack.c.l.b16 %v9275
        %v9405 = vunpack.c.l.b16 %v9276
        %v9406 = vunpack.c.l.b16 %v9277
        %v9407 = vunpack.c.l.b16 %v9278
        %v9408 = vunpack.c.l.b16 %v9279
        %v9409 = vunpack.c.l.b16 %v9280
        %v9410 = vunpack.c.l.b16 %v9281
        %v9411 = vunpack.c.l.b16 %v9282
        %v9412 = vunpack.c.l.b16 %v9283
        %v9413 = vunpack.c.l.b16 %v9284
        %v9414 = vunpack.c.l.b16 %v9285
        %v9415 = vunpack.c.l.b16 %v9286
        %v9416 = vunpack.c.l.b16 %v9287
        %v9417 = vunpack.c.l.b16 %v9288
        %v9418 = vunpack.c.l.b16 %v9289
        %v9419 = vunpack.c.l.b16 %v9290
        %v9420 = vunpack.c.l.b16 %v9291
        %v9421 = vunpack.c.l.b16 %v9292
        %v9422 = vunpack.c.l.b16 %v9293
        %v9423 = vunpack.c.l.b16 %v9294
        %v9424 = vunpack.c.l.b16 %v9295
        %v9425 = vunpack.c.l.b16 %v9296
        %v9426 = vunpack.c.l.b16 %v9297
        %v9427 = vunpack.c.l.b16 %v9298
        %v9428 = vunpack.c.l.b16 %v9299
        %v9429 = vunpack.c.l.b16 %v9300
        %v9430 = vunpack.c.l.b16 %v9301
        %v9431 = vunpack.c.l.b16 %v9302
        %v9432 = vunpack.c.l.b16 %v9303
        %v9433 = vunpack.c.l.b16 %v9304
        %v9434 = vunpack.c.l.b16 %v9305
        %v9435 = vunpack.c.l.b16 %v9306
        %v9436 = vunpack.c.l.b16 %v9307
        %v9437 = vunpack.c.l.b16 %v9308
        %v9438 = vunpack.c.l.b16 %v9309
        %v9439 = vunpack.c.l.b16 %v9310
        %v9440 = vunpack.c.l.b16 %v9311
        %v9441 = vunpack.c.l.b16 %v9312
        %v9442 = vunpack.c.l.b16 %v9313
        %v9443 = vunpack.c.l.b16 %v9314
        %v9444 = vunpack.c.l.b16 %v9315
        %v9445 = vunpack.c.l.b16 %v9316
        %v9446 = vunpack.c.l.b16 %v9317
        %v9447 = vunpack.c.l.b16 %v9318
        %v9448 = vunpack.c.l.b16 %v9319
        %v9449 = vunpack.c.l.b16 %v9320
        %v9450 = vunpack.c.l.b16 %v9321
        %v9451 = vunpack.c.l.b16 %v9322
        %v9452 = vunpack.c.l.b16 %v9323
        %v9453 = vunpack.c.l.b16 %v9324
        %v9454 = vunpack.c.l.b16 %v9325
        %v9455 = vunpack.c.l.b16 %v9326
        %v9456 = vunpack.c.l.b16 %v9327
        %v9457 = vunpack.c.l.b16 %v9328
        %v9458 = vunpack.c.l.b16 %v9329
        %v9459 = vunpack.c.l.b16 %v9330
        %v9460 = vunpack.c.l.b16 %v9331
        %v9461 = vunpack.c.l.b16 %v9332
        %v9462 = vunpack.c.l.b16 %v9333
        %v9463 = vunpack.c.l.b16 %v9334
        %v9464 = vunpack.c.l.b16 %v9335
        %v9465 = vunpack.c.l.b16 %v9336
        %v9466 = vunpack.c.l.b16 %v9337
        %v9467 = vpack.c.b16 %v9404, %v9403
        %v9468 = vpack.c.b16 %v9406, %v9405
        %v9469 = vpack.c.b16 %v9408, %v9407
        %v9470 = vpack.c.b16 %v9410, %v9409
        %v9471 = vpack.c.b16 %v9412, %v9411
        %v9472 = vpack.c.b16 %v9414, %v9413
        %v9473 = vpack.c.b16 %v9416, %v9415
        %v9474 = vpack.c.b16 %v9418, %v9417
        %v9475 = vpack.c.b16 %v9420, %v9419
        %v9476 = vpack.c.b16 %v9422, %v9421
        %v9477 = vpack.c.b16 %v9424, %v9423
        %v9478 = vpack.c.b16 %v9426, %v9425
        %v9479 = vpack.c.b16 %v9428, %v9427
        %v9480 = vpack.c.b16 %v9430, %v9429
        %v9481 = vpack.c.b16 %v9432, %v9431
        %v9482 = vpack.c.b16 %v9434, %v9433
        %v9483 = vpack.c.b16 %v9436, %v9435
        %v9484 = vpack.c.b16 %v9438, %v9437
        %v9485 = vpack.c.b16 %v9440, %v9439
        %v9486 = vpack.c.b16 %v9442, %v9441
        %v9487 = vpack.c.b16 %v9444, %v9443
        %v9488 = vpack.c.b16 %v9446, %v9445
        %v9489 = vpack.c.b16 %v9448, %v9447
        %v9490 = vpack.c.b16 %v9450, %v9449
        %v9491 = vpack.c.b16 %v9452, %v9451
        %v9492 = vpack.c.b16 %v9454, %v9453
        %v9493 = vpack.c.b16 %v9456, %v9455
        %v9494 = vpack.c.b16 %v9458, %v9457
        %v9495 = vpack.c.b16 %v9460, %v9459
        %v9496 = vpack.c.b16 %v9462, %v9461
        %v9497 = vpack.c.b16 %v9464, %v9463
        %v9498 = vpack.c.b16 %v9466, %v9465
        %9531 = vmatpush.bf16.msra.mxu0 %v9474
        %9532 = vmatpush.bf16.msra.mxu0 %v9473
        %9533 = vmatpush.bf16.msra.mxu0 %v9472
        %9534 = vmatpush.bf16.msra.mxu0 %v9471
        %9535 = vmatpush.bf16.msra.mxu0 %v9470
        %9536 = vmatpush.bf16.msra.mxu0 %v9469
        %9537 = vmatpush.bf16.msra.mxu0 %v9468
        %9538 = vmatpush.bf16.msra.mxu0 %v9467
        %9539 = vmatmul.bf16.gmra.mxu0 %v9270
        %v9540 = vpop.f32.mrf.mxu0
        %v9541 = vadd.f32 %v9338, %v9540
        %v9542 = vpop.f32.mrf.mxu0
        %9543 = vdwg.mxu0
        %9544 = vmatpush.bf16.msra.mxu0 %v9482
        %9545 = vmatpush.bf16.msra.mxu0 %v9481
        %9546 = vmatpush.bf16.msra.mxu0 %v9480
        %9547 = vmatpush.bf16.msra.mxu0 %v9479
        %9548 = vmatpush.bf16.msra.mxu0 %v9478
        %9549 = vmatpush.bf16.msra.mxu0 %v9477
        %9550 = vmatpush.bf16.msra.mxu0 %v9476
        %9551 = vmatpush.bf16.msra.mxu0 %v9475
        %9552 = vmatmul.bf16.gmra.mxu0 %v9271
        %v9553 = vpop.f32.mrf.mxu0
        %v9554 = vadd.f32 %v9541, %v9553
        %v9555 = vpop.f32.mrf.mxu0
        %9556 = vdwg.mxu0
        %9557 = vmatpush.bf16.msra.mxu0 %v9490
        %9558 = vmatpush.bf16.msra.mxu0 %v9489
        %9559 = vmatpush.bf16.msra.mxu0 %v9488
        %9560 = vmatpush.bf16.msra.mxu0 %v9487
        %9561 = vmatpush.bf16.msra.mxu0 %v9486
        %9562 = vmatpush.bf16.msra.mxu0 %v9485
        %9563 = vmatpush.bf16.msra.mxu0 %v9484
        %9564 = vmatpush.bf16.msra.mxu0 %v9483
        %9565 = vmatmul.bf16.gmra.mxu0 %v9272
        %v9566 = vpop.f32.mrf.mxu0
        %v9567 = vadd.f32 %v9554, %v9566
        %v9568 = vpop.f32.mrf.mxu0
        %9569 = vdwg.mxu0
        %9570 = vmatpush.bf16.msra.mxu0 %v9498
        %9571 = vmatpush.bf16.msra.mxu0 %v9497
        %9572 = vmatpush.bf16.msra.mxu0 %v9496
        %9573 = vmatpush.bf16.msra.mxu0 %v9495
        %9574 = vmatpush.bf16.msra.mxu0 %v9494
        %9575 = vmatpush.bf16.msra.mxu0 %v9493
        %9576 = vmatpush.bf16.msra.mxu0 %v9492
        %9577 = vmatpush.bf16.msra.mxu0 %v9491
        %9578 = vmatmul.bf16.gmra.mxu0 %v9273
        %v9579 = vpop.f32.mrf.mxu0
        %v9580 = vadd.f32 %v9567, %v9579
        %v9581 = vpop.f32.mrf.mxu0
        %9582 = vdwg.mxu0
        %vm9583 = vcmask 57344
        %9584 = vst.msk [vmem:[%s900] sm:$0x1] %vm9583, %v9580
        %vm9585 = vcmask 393216
        %9586 = vst.msk [vmem:[%s913] sm:$0x1] %vm9585, 1.0
        %s9587 = sand.u32 %s541, 1
        %s9588 = scalar_lea.sflag [#allocation4], %s9587
        %s9589 = sand.u32 %s541, 1
        %s9590 = scalar_lea.vmem [#allocation20], %s9589
        %p9591 = scmp.lt.s32.totalorder %s45, 1
        %s9592 = scalar_select %p9591, %s45, 1
        %s9593 = scalar_lea.vmem %s24, %s9592
        // Predicated region
        $region157: #{gmfanet_forward.1} parent=111 // pred_check
          %p9594 = pneg %p551
        $region158: #{gmfanet_forward.1} parent=111 // pred_check_branch
          %9596 = sbr.rel (%p9594) target = $region160
        $region159: #{gmfanet_forward.1} parent=111 // pred_region
          %9598 = vsyncadd %s9588, 0
          %s9599 = scalar_lea.hbm %s23, %s45
          %s9601 = sshll.u32 %s9590, 4
          %s9602 = int_to_ptr.vmem [resolvable:$true] %s9601
          %s9603 = sshll.u32 %s9599, 4
          %s9604 = int_to_ptr.hbm [resolvable:$true] %s9603
          %9606 = dma.vmem_to_hbm [thread:$0]  %s9602, 16, %s9604, %s9588
        $region160: #{gmfanet_forward.1} parent=111 // pred_fallthru
          _
        // Predicated region
        $region161: #{gmfanet_forward.1} parent=111 // pred_check
          %p9607 = pneg %p577
        $region162: #{gmfanet_forward.1} parent=111 // pred_check_branch
          %9609 = sbr.rel (%p9607) target = $region164
        $region163: #{gmfanet_forward.1} parent=111 // pred_region
          _
        $region164: #{gmfanet_forward.1} parent=111 // pred_fallthru
          _
      $region112: #{gmfanet_forward.1} parent=5 // pred_fallthru
        _
      %p9610 = scmp.le.s32.totalorder 2, %s40
      // Predicated region
      $region165: #{gmfanet_forward.1} parent=5 // pred_check
        %p9611 = pneg %p9610
      $region166: #{gmfanet_forward.1} parent=5 // pred_check_branch
        %9613 = sbr.rel (%p9611) target = $region168
      $region167: #{gmfanet_forward.1} parent=5 // pred_region
        %s9614 = ssub.s32 %s40, 2
        // Predicated region
        $region169: #{gmfanet_forward.1} parent=167 // pred_check
          %p9615 = pneg %p557
        $region170: #{gmfanet_forward.1} parent=167 // pred_check_branch
          %9617 = sbr.rel (%p9615) target = $region172
        $region171: #{gmfanet_forward.1} parent=167 // pred_region
          %s9618 = sand.u32 %s542, 1
          %s9619 = scalar_lea.sflag [#allocation4], %s9618
          %s9620 = sand.u32 %s542, 1
          %s9621 = scalar_lea.vmem [#allocation20], %s9620
          %9623 = dma.done %s9619, 16
        $region172: #{gmfanet_forward.1} parent=167 // pred_fallthru
          _
        // Predicated region
        $region173: #{gmfanet_forward.1} parent=167 // pred_check
          %p9624 = pneg %p583
        $region174: #{gmfanet_forward.1} parent=167 // pred_check_branch
          %9626 = sbr.rel (%p9624) target = $region176
        $region175: #{gmfanet_forward.1} parent=167 // pred_region
          %p9627 = scmp.lt.s32.totalorder %s46, 1
          %s9628 = scalar_select %p9627, %s46, 1
          %s9629 = scalar_lea.vmem %s24, %s9628
        $region176: #{gmfanet_forward.1} parent=167 // pred_fallthru
          _
      $region168: #{gmfanet_forward.1} parent=5 // pred_fallthru
        _
    $region6: #{gmfanet_forward.1} parent=1 // loop_footer
      %s44 = sadd.s32 1, %s40
    $region7: #{gmfanet_forward.1} parent=1 // loop_footer_branch
      %39 = sbr.rel target = $region3
    $region8: #{gmfanet_forward.1} parent=1 // loop_exit
      _
    %9630 = vsyncpa [#allocation3], 1
    %s9631 = scalar_lea.sflag [#allocation3], 1
    %9632 = vsyncpa %s9631, 1
    %9633 = vsyncpa [#allocation6], 1
    %9634 = vsyncpa [#allocation9], 1
    %9635 = vsyncpa [#allocation12], 1
    %9636 = vsyncpa [#allocation15], 1
    %9637 = vsyncpa [#allocation18], 1
    %9638 = vsyncpa [#allocation4], 1
    %s9639 = scalar_lea.sflag [#allocation4], 1
    %9640 = vsyncpa %s9639, 1

</llo_original>
